<compile_context>
chip_gen: v7x
topology: tpu7x:2x2x1
jax: 0.10.0
libtpu: 0.0.40
codegen_flags: <defaults>
</compile_context>

<pallas_src>
import functools

import jax
import jax.numpy as jnp
from jax.experimental import pallas as pl
from jax.experimental.pallas import tpu as pltpu

LANE = 128  # TPU lane width; channel axis is padded to a multiple of this.


# ----------------------------------------------------------------------------
# Kernel
# ----------------------------------------------------------------------------
def _basic_block_kernel(x_ref, w1_ref, b1_ref, w2_ref, b2_ref, out_ref, mid_ref):
    """Fused conv1+bn1+relu -> conv2+bn2 -> +residual -> relu, one batch elem.

    x_ref  : (1, Lin, Cp) bf16  spatially padded input, row-major flattened
                                over (H+3, Wp), Wp = W+2.
    w*_ref : bf16 folded conv weights; shape (5, 2*Cp, Cp) when taps are
             paired along K (Cp == 128), else (9, Cp, Cp).
    b*_ref : (1, Cp) f32        folded BN bias.
    out_ref: (1, M, Cp)         M = H*Wp flattened output (2 junk cols/row,
                                dropped by the wrapper).
    mid_ref: (Lin, Cp) bf16     VMEM scratch holding conv1's re-padded output.
    """
    Lin, Cp = x_ref.shape[1], x_ref.shape[2]
    M = out_ref.shape[1]          # H * Wp
    Wp = (Lin - M) // 3           # padded width (W + 2)
    W = Wp - 2
    paired = (w1_ref.shape[0] == 5)          # K = 2*Cp tap pairing
    offs = [ky * Wp + kx for ky in range(3) for kx in range(3)]

    def conv3x3(read_slice, w_ref):
        acc = jnp.zeros((M, Cp), jnp.float32)
        if paired:
            # 4 matmuls at K=2*Cp (two taps lane-concatenated) + 1 at K=Cp.
            for t in range(4):
                lhs = jnp.concatenate(
                    [read_slice(offs[2 * t]), read_slice(offs[2 * t + 1])],
                    axis=-1)
                acc += jnp.dot(lhs, w_ref[t],
                               preferred_element_type=jnp.float32)
            acc += jnp.dot(read_slice(offs[8]), w_ref[4, pl.ds(0, Cp), :],
                           preferred_element_type=jnp.float32)
        else:
            # 9 accumulating MXU matmuls, one per tap.
            for t in range(9):
                acc += jnp.dot(read_slice(offs[t]), w_ref[t],
                               preferred_element_type=jnp.float32)
        return acc

    # ---- stage 1: relu(bn1(conv1(x))), junk-column mask fused -------------
    acc1 = conv3x3(lambda off: x_ref[0, pl.ds(off, M), :], w1_ref)
    col_ok = (jax.lax.broadcasted_iota(jnp.int32, (M, 1), 0) % Wp) < W
    y1 = jnp.where(col_ok, jnp.maximum(acc1 + b1_ref[...], 0.0), 0.0)

    # Re-pad conv1's output in VMEM for conv2: zero ONLY the halo rows (the
    # interior M rows are fully overwritten, junk cols already zeroed above).
    mid_ref[pl.ds(0, Wp + 1), :] = jnp.zeros((Wp + 1, Cp), mid_ref.dtype)
    mid_ref[pl.ds(Wp + 1 + M, 2 * Wp - 1), :] = jnp.zeros(
        (2 * Wp - 1, Cp), mid_ref.dtype)
    mid_ref[pl.ds(Wp + 1, M), :] = y1.astype(mid_ref.dtype)

    # ---- stage 2: relu(bn2(conv2(y1)) + x) ---------------------------------
    acc2 = conv3x3(lambda off: mid_ref[pl.ds(off, M), :], w2_ref)
    res = x_ref[0, pl.ds(Wp + 1, M), :].astype(jnp.float32)
    out = jnp.maximum(acc2 + b2_ref[...] + res, 0.0)
    out_ref[0] = out.astype(out_ref.dtype)


# ----------------------------------------------------------------------------
# Wrapper
# ----------------------------------------------------------------------------
def _fold_bn_into_conv(w, gamma, beta, mean, var, cpad, pair_taps, eps=1e-5):
    """(Cout,Cin,3,3) weight + BN stats -> tap-major bf16 weight with the BN
    scale folded in (optionally K-paired to (5, 2*cpad, cpad)), plus a
    (1,cpad) f32 bias.  Padded channels stay zero."""
    cout, cin = w.shape[0], w.shape[1]
    scale = gamma / jnp.sqrt(var + eps)                       # (Cout,)
    bias = beta - mean * scale                                # (Cout,)
    wt = jnp.transpose(w, (2, 3, 1, 0)).reshape(9, cin, cout) * scale[None, None, :]
    wt = jnp.pad(wt, ((0, 0), (0, cpad - cin), (0, cpad - cout)))
    if pair_taps:
        # Pack taps (0,1),(2,3),(4,5),(6,7),(8,zero) along K -> (5, 2*cpad, cpad)
        wt = jnp.concatenate([wt, jnp.zeros((1, cpad, cpad), wt.dtype)], axis=0)
        wt = wt.reshape(5, 2 * cpad, cpad)
    bias = jnp.pad(bias, (0, cpad - cout)).reshape(1, cpad)
    return wt.astype(jnp.bfloat16), bias.astype(jnp.float32)


def basic_block_forward(x_nchw, params):
    """BasicBlock forward.  Input/output NCHW (PyTorch convention)."""
    N, C, H, W = x_nchw.shape
    Cp = max(LANE, -(-C // LANE) * LANE)      # lane-dense channel width
    Wp = W + 2
    Lin = (H + 3) * Wp                        # (H+2) pad rows + 1 safety row
    M = H * Wp
    pair_taps = (Cp == LANE)                  # K=256 pairing for Cp=128 layers

    # Layout pass in (one fused XLA copy): NCHW -> NHWC (bf16), spatial halo
    # pad (1 top, 2 bottom, 1 left, 1 right), channel pad to Cp, flatten (H,W).
    x = jnp.transpose(x_nchw, (0, 2, 3, 1)).astype(jnp.bfloat16)
    x = jnp.pad(x, ((0, 0), (1, 2), (1, 1), (0, Cp - C)))
    x = x.reshape(N, Lin, Cp)

    w1, b1 = _fold_bn_into_conv(params["conv1_w"], params["bn1_gamma"],
                                params["bn1_beta"], params["bn1_mean"],
                                params["bn1_var"], Cp, pair_taps)
    w2, b2 = _fold_bn_into_conv(params["conv2_w"], params["bn2_gamma"],
                                params["bn2_beta"], params["bn2_mean"],
                                params["bn2_var"], Cp, pair_taps)

    # Explicit VMEM budget (per grid step): x block x2 bufs (bf16), out x2,
    # single-buffered bf16 weights, mid scratch, plus headroom for the f32
    # (M,Cp) accumulator/temporary tiles.  Capped below v7x's 64 MiB.
    out_bytes = x_nchw.dtype.itemsize
    est_vmem = (2 * Lin * Cp * 2                 # x, double-buffered, bf16
                + 2 * M * Cp * out_bytes         # out, double-buffered
                + (w1.size + w2.size) * 2        # weights, single-buffered
                + 2 * 2 * Cp * 4                 # biases
                + Lin * Cp * 2                   # mid scratch, bf16
                + 5 * M * Cp * 4)                # f32 temporaries
    vmem_limit = int(min(56 * 2**20, max(24 * 2**20, 3 * est_vmem)))

    def _const_spec(shape):
        # Grid-invariant operand: single pipeline buffer (nothing to prefetch).
        return pl.BlockSpec(shape, lambda n: (0,) * len(shape),
                            pipeline_mode=pl.Buffered(1))

    out = pl.pallas_call(
        _basic_block_kernel,
        out_shape=jax.ShapeDtypeStruct((N, M, Cp), x_nchw.dtype),
        grid_spec=pltpu.PrefetchScalarGridSpec(
            num_scalar_prefetch=0,
            grid=(N,),
            in_specs=[
                pl.BlockSpec((1, Lin, Cp), lambda n: (n, 0, 0)),
                _const_spec(w1.shape),
                _const_spec(b1.shape),
                _const_spec(w2.shape),
                _const_spec(b2.shape),
            ],
            out_specs=pl.BlockSpec((1, M, Cp), lambda n: (n, 0, 0)),
            scratch_shapes=[pltpu.VMEM((Lin, Cp), jnp.bfloat16)],
        ),
        compiler_params=pltpu.CompilerParams(
            dimension_semantics=("parallel",),
            vmem_limit_bytes=vmem_limit),
    )(x, w1, b1, w2, b2)

    # Layout pass out: drop junk columns and padded channels, back to NCHW.
    out = out.reshape(N, H, Wp, Cp)[:, :, :W, :C]
    return jnp.transpose(out, (0, 3, 1, 2))


# ----------------------------------------------------------------------------
# Pure-JAX f32 reference (silent sanity check)
# ----------------------------------------------------------------------------
def _reference(x_nchw, params):
    def conv(x, w):
        return jax.lax.conv_general_dilated(
            x, w, window_strides=(1, 1), padding=((1, 1), (1, 1)),
            dimension_numbers=("NCHW", "OIHW", "NCHW"))

    def bn(x, g, b, m, v, eps=1e-5):
        g, b, m, v = (t.reshape(1, -1, 1, 1) for t in (g, b, m, v))
        return (x - m) / jnp.sqrt(v + eps) * g + b

    out = jax.nn.relu(bn(conv(x_nchw, params["conv1_w"]),
                         params["bn1_gamma"], params["bn1_beta"],
                         params["bn1_mean"], params["bn1_var"]))
    out = bn(conv(out, params["conv2_w"]),
             params["bn2_gamma"], params["bn2_beta"],
             params["bn2_mean"], params["bn2_var"])
    return jax.nn.relu(out + x_nchw)


# ----------------------------------------------------------------------------
if __name__ == "__main__":
    N, C, H, W = 2, 4, 16, 16          # inplanes = planes = 4, stride = 1
    key = jax.random.PRNGKey(0)
    keys = jax.random.split(key, 8)

    x = jax.random.normal(keys[0], (N, C, H, W), dtype=jnp.float32)

    params = {
        "conv1_w": 0.1 * jax.random.normal(keys[1], (C, C, 3, 3), jnp.float32),
        "conv2_w": 0.1 * jax.random.normal(keys[2], (C, C, 3, 3), jnp.float32),
        "bn1_gamma": 1.0 + 0.1 * jax.random.normal(keys[3], (C,), jnp.float32),
        "bn1_beta": 0.1 * jax.random.normal(keys[4], (C,), jnp.float32),
        "bn1_mean": 0.05 * jax.random.normal(keys[5], (C,), jnp.float32),
        "bn1_var": jnp.abs(jax.random.normal(keys[6], (C,), jnp.float32)) + 0.5,
        "bn2_gamma": 1.0 + 0.1 * jax.random.normal(keys[7], (C,), jnp.float32),
        "bn2_beta": jnp.linspace(-0.1, 0.1, C, dtype=jnp.float32),
        "bn2_mean": jnp.linspace(-0.05, 0.05, C, dtype=jnp.float32),
        "bn2_var": jnp.linspace(0.8, 1.2, C, dtype=jnp.float32),
    }

    fwd = jax.jit(functools.partial(basic_block_forward, params=params))
    out = fwd(x)
    jax.block_until_ready(out)

    ref = _reference(x, params)
    assert out.shape == (N, C, H, W)
    # bf16 MXU operands (x / weights / mid intermediate) -> bf16-level tolerance
    # vs. the f32 reference; bias/residual/ReLU math stays f32 in the kernel.
    assert jnp.allclose(out, ref, atol=3e-2, rtol=3e-2)

    print("KERNEL_OK")
</pallas_src>

<mosaic_0001>
module attributes {stable_mosaic.version = 11 : i64} {
  func.func @_basic_block_kernel(%arg0: i32, %arg1: memref<1x342x128xbf16, #tpu.memory_space<vmem>>, %arg2: memref<5x256x128xbf16, #tpu.memory_space<vmem>>, %arg3: memref<1x128xf32, #tpu.memory_space<vmem>>, %arg4: memref<5x256x128xbf16, #tpu.memory_space<vmem>>, %arg5: memref<1x128xf32, #tpu.memory_space<vmem>>, %arg6: memref<1x288x128xf32, #tpu.memory_space<vmem>>, %arg7: memref<342x128xbf16, #tpu.memory_space<vmem>>) attributes {dimension_semantics = [#tpu.dimension_semantics<parallel>], iteration_bounds = array<i64: 2>, scalar_prefetch = 0 : i64, scratch_operands = 1 : i64, tpu.core_type = #tpu.core_type<tc>, window_params = [{transform_indices = @transform_0, window_bounds = array<i64: 1, 342, 128>}, {pipeline_mode = #tpu.pipeline_mode<synchronous>, transform_indices = @transform_1, window_bounds = array<i64: 5, 256, 128>}, {pipeline_mode = #tpu.pipeline_mode<synchronous>, transform_indices = @transform_2, window_bounds = array<i64: 1, 128>}, {pipeline_mode = #tpu.pipeline_mode<synchronous>, transform_indices = @transform_3, window_bounds = array<i64: 5, 256, 128>}, {pipeline_mode = #tpu.pipeline_mode<synchronous>, transform_indices = @transform_4, window_bounds = array<i64: 1, 128>}, {transform_indices = @transform_5, window_bounds = array<i64: 1, 288, 128>}]} {
    %cst = arith.constant 0.000000e+00 : f32
    %0 = vector.broadcast %cst : f32 to vector<288x128xf32>
    %c0 = arith.constant 0 : index
    %c0_0 = arith.constant 0 : index
    %c0_1 = arith.constant 0 : index
    %1 = vector.load %arg1[%c0, %c0_0, %c0_1] : memref<1x342x128xbf16, #tpu.memory_space<vmem>>, vector<1x288x128xbf16>
    %2 = vector.shape_cast %1 : vector<1x288x128xbf16> to vector<288x128xbf16>
    %c0_2 = arith.constant 0 : index
    %c1 = arith.constant 1 : index
    %c0_3 = arith.constant 0 : index
    %3 = vector.load %arg1[%c0_2, %c1, %c0_3] : memref<1x342x128xbf16, #tpu.memory_space<vmem>>, vector<1x288x128xbf16>
    %4 = vector.shape_cast %3 : vector<1x288x128xbf16> to vector<288x128xbf16>
    %5 = tpu.concatenate %2, %4 in 1 : vector<288x128xbf16>, vector<288x128xbf16> -> vector<288x256xbf16>
    %c0_4 = arith.constant 0 : index
    %c0_5 = arith.constant 0 : index
    %c0_6 = arith.constant 0 : index
    %6 = vector.load %arg2[%c0_4, %c0_5, %c0_6] : memref<5x256x128xbf16, #tpu.memory_space<vmem>>, vector<1x256x128xbf16>
    %7 = vector.shape_cast %6 : vector<1x256x128xbf16> to vector<256x128xbf16>
    %cst_7 = arith.constant dense<0.000000e+00> : vector<288x128xf32>
    %8 = tpu.matmul %5, %7, %cst_7 {dimension_numbers = #tpu.dot_dimension_numbers<[1], [0], [0], [1], [0, 0, 1, 1], [], []>} : vector<288x256xbf16>, vector<256x128xbf16>, vector<288x128xf32> -> vector<288x128xf32>
    %9 = arith.addf %0, %8 : vector<288x128xf32>
    %c0_8 = arith.constant 0 : index
    %c2 = arith.constant 2 : index
    %c0_9 = arith.constant 0 : index
    %10 = vector.load %arg1[%c0_8, %c2, %c0_9] : memref<1x342x128xbf16, #tpu.memory_space<vmem>>, vector<1x288x128xbf16>
    %11 = vector.shape_cast %10 : vector<1x288x128xbf16> to vector<288x128xbf16>
    %c0_10 = arith.constant 0 : index
    %c18 = arith.constant 18 : index
    %c0_11 = arith.constant 0 : index
    %12 = vector.load %arg1[%c0_10, %c18, %c0_11] : memref<1x342x128xbf16, #tpu.memory_space<vmem>>, vector<1x288x128xbf16>
    %13 = vector.shape_cast %12 : vector<1x288x128xbf16> to vector<288x128xbf16>
    %14 = tpu.concatenate %11, %13 in 1 : vector<288x128xbf16>, vector<288x128xbf16> -> vector<288x256xbf16>
    %c1_12 = arith.constant 1 : index
    %c0_13 = arith.constant 0 : index
    %c0_14 = arith.constant 0 : index
    %15 = vector.load %arg2[%c1_12, %c0_13, %c0_14] : memref<5x256x128xbf16, #tpu.memory_space<vmem>>, vector<1x256x128xbf16>
    %16 = vector.shape_cast %15 : vector<1x256x128xbf16> to vector<256x128xbf16>
    %cst_15 = arith.constant dense<0.000000e+00> : vector<288x128xf32>
    %17 = tpu.matmul %14, %16, %cst_15 {dimension_numbers = #tpu.dot_dimension_numbers<[1], [0], [0], [1], [0, 0, 1, 1], [], []>} : vector<288x256xbf16>, vector<256x128xbf16>, vector<288x128xf32> -> vector<288x128xf32>
    %18 = arith.addf %9, %17 : vector<288x128xf32>
    %c0_16 = arith.constant 0 : index
    %c19 = arith.constant 19 : index
    %c0_17 = arith.constant 0 : index
    %19 = vector.load %arg1[%c0_16, %c19, %c0_17] : memref<1x342x128xbf16, #tpu.memory_space<vmem>>, vector<1x288x128xbf16>
    %20 = vector.shape_cast %19 : vector<1x288x128xbf16> to vector<288x128xbf16>
    %c0_18 = arith.constant 0 : index
    %c20 = arith.constant 20 : index
    %c0_19 = arith.constant 0 : index
    %21 = vector.load %arg1[%c0_18, %c20, %c0_19] : memref<1x342x128xbf16, #tpu.memory_space<vmem>>, vector<1x288x128xbf16>
    %22 = vector.shape_cast %21 : vector<1x288x128xbf16> to vector<288x128xbf16>
    %23 = tpu.concatenate %20, %22 in 1 : vector<288x128xbf16>, vector<288x128xbf16> -> vector<288x256xbf16>
    %c2_20 = arith.constant 2 : index
    %c0_21 = arith.constant 0 : index
    %c0_22 = arith.constant 0 : index
    %24 = vector.load %arg2[%c2_20, %c0_21, %c0_22] : memref<5x256x128xbf16, #tpu.memory_space<vmem>>, vector<1x256x128xbf16>
    %25 = vector.shape_cast %24 : vector<1x256x128xbf16> to vector<256x128xbf16>
    %cst_23 = arith.constant dense<0.000000e+00> : vector<288x128xf32>
    %26 = tpu.matmul %23, %25, %cst_23 {dimension_numbers = #tpu.dot_dimension_numbers<[1], [0], [0], [1], [0, 0, 1, 1], [], []>} : vector<288x256xbf16>, vector<256x128xbf16>, vector<288x128xf32> -> vector<288x128xf32>
    %27 = arith.addf %18, %26 : vector<288x128xf32>
    %c0_24 = arith.constant 0 : index
    %c36 = arith.constant 36 : index
    %c0_25 = arith.constant 0 : index
    %28 = vector.load %arg1[%c0_24, %c36, %c0_25] : memref<1x342x128xbf16, #tpu.memory_space<vmem>>, vector<1x288x128xbf16>
    %29 = vector.shape_cast %28 : vector<1x288x128xbf16> to vector<288x128xbf16>
    %c0_26 = arith.constant 0 : index
    %c37 = arith.constant 37 : index
    %c0_27 = arith.constant 0 : index
    %30 = vector.load %arg1[%c0_26, %c37, %c0_27] : memref<1x342x128xbf16, #tpu.memory_space<vmem>>, vector<1x288x128xbf16>
    %31 = vector.shape_cast %30 : vector<1x288x128xbf16> to vector<288x128xbf16>
    %32 = tpu.concatenate %29, %31 in 1 : vector<288x128xbf16>, vector<288x128xbf16> -> vector<288x256xbf16>
    %c3 = arith.constant 3 : index
    %c0_28 = arith.constant 0 : index
    %c0_29 = arith.constant 0 : index
    %33 = vector.load %arg2[%c3, %c0_28, %c0_29] : memref<5x256x128xbf16, #tpu.memory_space<vmem>>, vector<1x256x128xbf16>
    %34 = vector.shape_cast %33 : vector<1x256x128xbf16> to vector<256x128xbf16>
    %cst_30 = arith.constant dense<0.000000e+00> : vector<288x128xf32>
    %35 = tpu.matmul %32, %34, %cst_30 {dimension_numbers = #tpu.dot_dimension_numbers<[1], [0], [0], [1], [0, 0, 1, 1], [], []>} : vector<288x256xbf16>, vector<256x128xbf16>, vector<288x128xf32> -> vector<288x128xf32>
    %36 = arith.addf %27, %35 : vector<288x128xf32>
    %c0_31 = arith.constant 0 : index
    %c38 = arith.constant 38 : index
    %c0_32 = arith.constant 0 : index
    %37 = vector.load %arg1[%c0_31, %c38, %c0_32] : memref<1x342x128xbf16, #tpu.memory_space<vmem>>, vector<1x288x128xbf16>
    %38 = vector.shape_cast %37 : vector<1x288x128xbf16> to vector<288x128xbf16>
    %c4 = arith.constant 4 : index
    %c0_33 = arith.constant 0 : index
    %c0_34 = arith.constant 0 : index
    %39 = vector.load %arg2[%c4, %c0_33, %c0_34] : memref<5x256x128xbf16, #tpu.memory_space<vmem>>, vector<1x128x128xbf16>
    %40 = vector.shape_cast %39 : vector<1x128x128xbf16> to vector<128x128xbf16>
    %cst_35 = arith.constant dense<0.000000e+00> : vector<288x128xf32>
    %41 = tpu.matmul %38, %40, %cst_35 {dimension_numbers = #tpu.dot_dimension_numbers<[1], [0], [0], [1], [0, 0, 1, 1], [], []>} : vector<288x128xbf16>, vector<128x128xbf16>, vector<288x128xf32> -> vector<288x128xf32>
    %42 = arith.addf %36, %41 : vector<288x128xf32>
    %43 = tpu.iota {dimensions = array<i32: 0>} : vector<288x1xi32>
    %c18_i32 = arith.constant 18 : i32
    %c0_i32 = arith.constant 0 : i32
    %44 = arith.cmpi eq, %c18_i32, %c0_i32 : i32
    %c1_i32 = arith.constant 1 : i32
    %45 = arith.select %44, %c1_i32, %c18_i32 : i32
    %46 = vector.broadcast %45 : i32 to vector<288x1xi32>
    %47 = arith.remsi %43, %46 : vector<288x1xi32>
    %c0_i32_36 = arith.constant 0 : i32
    %48 = vector.broadcast %c0_i32_36 : i32 to vector<288x1xi32>
    %49 = arith.cmpi ne, %47, %48 : vector<288x1xi32>
    %c0_i32_37 = arith.constant 0 : i32
    %50 = vector.broadcast %c0_i32_37 : i32 to vector<288x1xi32>
    %51 = arith.cmpi slt, %47, %50 : vector<288x1xi32>
    %c0_i32_38 = arith.constant 0 : i32
    %52 = arith.cmpi slt, %45, %c0_i32_38 : i32
    %53 = vector.broadcast %52 : i1 to vector<288x1xi1>
    %54 = vector.broadcast %53 : vector<288x1xi1> to vector<288x1xi1>
    %55 = arith.xori %51, %54 : vector<288x1xi1>
    %56 = arith.andi %55, %49 : vector<288x1xi1>
    %57 = vector.broadcast %45 : i32 to vector<288x1xi32>
    %58 = arith.addi %47, %57 : vector<288x1xi32>
    %59 = arith.select %56, %58, %47 : vector<288x1xi1>, vector<288x1xi32>
    %c16_i32 = arith.constant 16 : i32
    %60 = vector.broadcast %c16_i32 : i32 to vector<288x1xi32>
    %61 = arith.cmpi slt, %59, %60 : vector<288x1xi32>
    %c0_39 = arith.constant 0 : index
    %c0_40 = arith.constant 0 : index
    %62 = vector.load %arg3[%c0_39, %c0_40] : memref<1x128xf32, #tpu.memory_space<vmem>>, vector<1x128xf32>
    %63 = vector.broadcast %62 : vector<1x128xf32> to vector<288x128xf32>
    %64 = arith.addf %42, %63 : vector<288x128xf32>
    %cst_41 = arith.constant 0.000000e+00 : f32
    %65 = vector.broadcast %cst_41 : f32 to vector<288x128xf32>
    %66 = arith.maximumf %64, %65 : vector<288x128xf32>
    %cst_42 = arith.constant 0.000000e+00 : f32
    %67 = vector.shape_cast %61 : vector<288x1xi1> to vector<288x1xi1>
    %68 = vector.broadcast %67 : vector<288x1xi1> to vector<288x128xi1>
    %69 = vector.broadcast %cst_42 : f32 to vector<288x128xf32>
    %70 = arith.select %68, %66, %69 : vector<288x128xi1>, vector<288x128xf32>
    %cst_43 = arith.constant 0.000000e+00 : bf16
    %71 = vector.broadcast %cst_43 : bf16 to vector<19x128xbf16>
    %c0_44 = arith.constant 0 : index
    %c0_45 = arith.constant 0 : index
    %72 = vector.load %arg7[%c0_44, %c0_45] : memref<342x128xbf16, #tpu.memory_space<vmem>>, vector<19x128xbf16>
    tpu.vector_store %arg7[%c0_44, %c0_45], %71 {strides = array<i32>} : memref<342x128xbf16, #tpu.memory_space<vmem>>, vector<19x128xbf16>,
    %cst_46 = arith.constant 0.000000e+00 : bf16
    %73 = vector.broadcast %cst_46 : bf16 to vector<35x128xbf16>
    %c307 = arith.constant 307 : index
    %c0_47 = arith.constant 0 : index
    %74 = vector.load %arg7[%c307, %c0_47] : memref<342x128xbf16, #tpu.memory_space<vmem>>, vector<35x128xbf16>
    tpu.vector_store %arg7[%c307, %c0_47], %73 {strides = array<i32>} : memref<342x128xbf16, #tpu.memory_space<vmem>>, vector<35x128xbf16>,
    %75 = arith.truncf %70 : vector<288x128xf32> to vector<288x128xbf16>
    %c19_48 = arith.constant 19 : index
    %c0_49 = arith.constant 0 : index
    %76 = vector.load %arg7[%c19_48, %c0_49] : memref<342x128xbf16, #tpu.memory_space<vmem>>, vector<288x128xbf16>
    tpu.vector_store %arg7[%c19_48, %c0_49], %75 {strides = array<i32>} : memref<342x128xbf16, #tpu.memory_space<vmem>>, vector<288x128xbf16>,
    %cst_50 = arith.constant 0.000000e+00 : f32
    %77 = vector.broadcast %cst_50 : f32 to vector<288x128xf32>
    %c0_51 = arith.constant 0 : index
    %c0_52 = arith.constant 0 : index
    %78 = vector.load %arg7[%c0_51, %c0_52] : memref<342x128xbf16, #tpu.memory_space<vmem>>, vector<288x128xbf16>
    %c1_53 = arith.constant 1 : index
    %c0_54 = arith.constant 0 : index
    %79 = vector.load %arg7[%c1_53, %c0_54] : memref<342x128xbf16, #tpu.memory_space<vmem>>, vector<288x128xbf16>
    %80 = tpu.concatenate %78, %79 in 1 : vector<288x128xbf16>, vector<288x128xbf16> -> vector<288x256xbf16>
    %c0_55 = arith.constant 0 : index
    %c0_56 = arith.constant 0 : index
    %c0_57 = arith.constant 0 : index
    %81 = vector.load %arg4[%c0_55, %c0_56, %c0_57] : memref<5x256x128xbf16, #tpu.memory_space<vmem>>, vector<1x256x128xbf16>
    %82 = vector.shape_cast %81 : vector<1x256x128xbf16> to vector<256x128xbf16>
    %cst_58 = arith.constant dense<0.000000e+00> : vector<288x128xf32>
    %83 = tpu.matmul %80, %82, %cst_58 {dimension_numbers = #tpu.dot_dimension_numbers<[1], [0], [0], [1], [0, 0, 1, 1], [], []>} : vector<288x256xbf16>, vector<256x128xbf16>, vector<288x128xf32> -> vector<288x128xf32>
    %84 = arith.addf %77, %83 : vector<288x128xf32>
    %c2_59 = arith.constant 2 : index
    %c0_60 = arith.constant 0 : index
    %85 = vector.load %arg7[%c2_59, %c0_60] : memref<342x128xbf16, #tpu.memory_space<vmem>>, vector<288x128xbf16>
    %c18_61 = arith.constant 18 : index
    %c0_62 = arith.constant 0 : index
    %86 = vector.load %arg7[%c18_61, %c0_62] : memref<342x128xbf16, #tpu.memory_space<vmem>>, vector<288x128xbf16>
    %87 = tpu.concatenate %85, %86 in 1 : vector<288x128xbf16>, vector<288x128xbf16> -> vector<288x256xbf16>
    %c1_63 = arith.constant 1 : index
    %c0_64 = arith.constant 0 : index
    %c0_65 = arith.constant 0 : index
    %88 = vector.load %arg4[%c1_63, %c0_64, %c0_65] : memref<5x256x128xbf16, #tpu.memory_space<vmem>>, vector<1x256x128xbf16>
    %89 = vector.shape_cast %88 : vector<1x256x128xbf16> to vector<256x128xbf16>
    %cst_66 = arith.constant dense<0.000000e+00> : vector<288x128xf32>
    %90 = tpu.matmul %87, %89, %cst_66 {dimension_numbers = #tpu.dot_dimension_numbers<[1], [0], [0], [1], [0, 0, 1, 1], [], []>} : vector<288x256xbf16>, vector<256x128xbf16>, vector<288x128xf32> -> vector<288x128xf32>
    %91 = arith.addf %84, %90 : vector<288x128xf32>
    %c19_67 = arith.constant 19 : index
    %c0_68 = arith.constant 0 : index
    %92 = vector.load %arg7[%c19_67, %c0_68] : memref<342x128xbf16, #tpu.memory_space<vmem>>, vector<288x128xbf16>
    %c20_69 = arith.constant 20 : index
    %c0_70 = arith.constant 0 : index
    %93 = vector.load %arg7[%c20_69, %c0_70] : memref<342x128xbf16, #tpu.memory_space<vmem>>, vector<288x128xbf16>
    %94 = tpu.concatenate %92, %93 in 1 : vector<288x128xbf16>, vector<288x128xbf16> -> vector<288x256xbf16>
    %c2_71 = arith.constant 2 : index
    %c0_72 = arith.constant 0 : index
    %c0_73 = arith.constant 0 : index
    %95 = vector.load %arg4[%c2_71, %c0_72, %c0_73] : memref<5x256x128xbf16, #tpu.memory_space<vmem>>, vector<1x256x128xbf16>
    %96 = vector.shape_cast %95 : vector<1x256x128xbf16> to vector<256x128xbf16>
    %cst_74 = arith.constant dense<0.000000e+00> : vector<288x128xf32>
    %97 = tpu.matmul %94, %96, %cst_74 {dimension_numbers = #tpu.dot_dimension_numbers<[1], [0], [0], [1], [0, 0, 1, 1], [], []>} : vector<288x256xbf16>, vector<256x128xbf16>, vector<288x128xf32> -> vector<288x128xf32>
    %98 = arith.addf %91, %97 : vector<288x128xf32>
    %c36_75 = arith.constant 36 : index
    %c0_76 = arith.constant 0 : index
    %99 = vector.load %arg7[%c36_75, %c0_76] : memref<342x128xbf16, #tpu.memory_space<vmem>>, vector<288x128xbf16>
    %c37_77 = arith.constant 37 : index
    %c0_78 = arith.constant 0 : index
    %100 = vector.load %arg7[%c37_77, %c0_78] : memref<342x128xbf16, #tpu.memory_space<vmem>>, vector<288x128xbf16>
    %101 = tpu.concatenate %99, %100 in 1 : vector<288x128xbf16>, vector<288x128xbf16> -> vector<288x256xbf16>
    %c3_79 = arith.constant 3 : index
    %c0_80 = arith.constant 0 : index
    %c0_81 = arith.constant 0 : index
    %102 = vector.load %arg4[%c3_79, %c0_80, %c0_81] : memref<5x256x128xbf16, #tpu.memory_space<vmem>>, vector<1x256x128xbf16>
    %103 = vector.shape_cast %102 : vector<1x256x128xbf16> to vector<256x128xbf16>
    %cst_82 = arith.constant dense<0.000000e+00> : vector<288x128xf32>
    %104 = tpu.matmul %101, %103, %cst_82 {dimension_numbers = #tpu.dot_dimension_numbers<[1], [0], [0], [1], [0, 0, 1, 1], [], []>} : vector<288x256xbf16>, vector<256x128xbf16>, vector<288x128xf32> -> vector<288x128xf32>
    %105 = arith.addf %98, %104 : vector<288x128xf32>
    %c38_83 = arith.constant 38 : index
    %c0_84 = arith.constant 0 : index
    %106 = vector.load %arg7[%c38_83, %c0_84] : memref<342x128xbf16, #tpu.memory_space<vmem>>, vector<288x128xbf16>
    %c4_85 = arith.constant 4 : index
    %c0_86 = arith.constant 0 : index
    %c0_87 = arith.constant 0 : index
    %107 = vector.load %arg4[%c4_85, %c0_86, %c0_87] : memref<5x256x128xbf16, #tpu.memory_space<vmem>>, vector<1x128x128xbf16>
    %108 = vector.shape_cast %107 : vector<1x128x128xbf16> to vector<128x128xbf16>
    %cst_88 = arith.constant dense<0.000000e+00> : vector<288x128xf32>
    %109 = tpu.matmul %106, %108, %cst_88 {dimension_numbers = #tpu.dot_dimension_numbers<[1], [0], [0], [1], [0, 0, 1, 1], [], []>} : vector<288x128xbf16>, vector<128x128xbf16>, vector<288x128xf32> -> vector<288x128xf32>
    %110 = arith.addf %105, %109 : vector<288x128xf32>
    %c0_89 = arith.constant 0 : index
    %c19_90 = arith.constant 19 : index
    %c0_91 = arith.constant 0 : index
    %111 = vector.load %arg1[%c0_89, %c19_90, %c0_91] : memref<1x342x128xbf16, #tpu.memory_space<vmem>>, vector<1x288x128xbf16>
    %112 = vector.shape_cast %111 : vector<1x288x128xbf16> to vector<288x128xbf16>
    %113 = arith.extf %112 : vector<288x128xbf16> to vector<288x128xf32>
    %c0_92 = arith.constant 0 : index
    %c0_93 = arith.constant 0 : index
    %114 = vector.load %arg5[%c0_92, %c0_93] : memref<1x128xf32, #tpu.memory_space<vmem>>, vector<1x128xf32>
    %115 = vector.broadcast %114 : vector<1x128xf32> to vector<288x128xf32>
    %116 = arith.addf %110, %115 : vector<288x128xf32>
    %117 = arith.addf %116, %113 : vector<288x128xf32>
    %cst_94 = arith.constant 0.000000e+00 : f32
    %118 = vector.broadcast %cst_94 : f32 to vector<288x128xf32>
    %119 = arith.maximumf %117, %118 : vector<288x128xf32>
    %c0_95 = arith.constant 0 : index
    %c0_96 = arith.constant 0 : index
    %c0_97 = arith.constant 0 : index
    %120 = vector.load %arg6[%c0_95, %c0_96, %c0_97] : memref<1x288x128xf32, #tpu.memory_space<vmem>>, vector<1x288x128xf32>
    %121 = vector.shape_cast %120 : vector<1x288x128xf32> to vector<288x128xf32>
    %122 = vector.shape_cast %119 : vector<288x128xf32> to vector<1x288x128xf32>
    tpu.vector_store %arg6[%c0_95, %c0_96, %c0_97], %122 {strides = array<i32>} : memref<1x288x128xf32, #tpu.memory_space<vmem>>, vector<1x288x128xf32>,
    return
  }
  func.func @transform_0(%arg0: i32) -> (i32, i32, i32) {
    %c0_i32 = arith.constant 0 : i32
    %c0_i32_0 = arith.constant 0 : i32
    %c0_i32_1 = arith.constant 0 : i32
    return %arg0, %c0_i32, %c0_i32_0 : i32, i32, i32
  }
  func.func @transform_1(%arg0: i32) -> (i32, i32, i32) {
    %c0_i32 = arith.constant 0 : i32
    %c0_i32_0 = arith.constant 0 : i32
    %c0_i32_1 = arith.constant 0 : i32
    %c0_i32_2 = arith.constant 0 : i32
    return %c0_i32, %c0_i32_0, %c0_i32_1 : i32, i32, i32
  }
  func.func @transform_2(%arg0: i32) -> (i32, i32) {
    %c0_i32 = arith.constant 0 : i32
    %c0_i32_0 = arith.constant 0 : i32
    %c0_i32_1 = arith.constant 0 : i32
    return %c0_i32, %c0_i32_0 : i32, i32
  }
  func.func @transform_3(%arg0: i32) -> (i32, i32, i32) {
    %c0_i32 = arith.constant 0 : i32
    %c0_i32_0 = arith.constant 0 : i32
    %c0_i32_1 = arith.constant 0 : i32
    %c0_i32_2 = arith.constant 0 : i32
    return %c0_i32, %c0_i32_0, %c0_i32_1 : i32, i32, i32
  }
  func.func @transform_4(%arg0: i32) -> (i32, i32) {
    %c0_i32 = arith.constant 0 : i32
    %c0_i32_0 = arith.constant 0 : i32
    %c0_i32_1 = arith.constant 0 : i32
    return %c0_i32, %c0_i32_0 : i32, i32
  }
  func.func @transform_5(%arg0: i32) -> (i32, i32, i32) {
    %c0_i32 = arith.constant 0 : i32
    %c0_i32_0 = arith.constant 0 : i32
    %c0_i32_1 = arith.constant 0 : i32
    return %arg0, %c0_i32, %c0_i32_0 : i32, i32, i32
  }
}

</mosaic_0001>

<llo_original>
// kernel: basic_block_forward.1
$region0: #{basic_block_forward.1}
  #allocation0 [shape = 'u32[]', space=smem, size = 0x4, offset = 0x4, fixed_abs, tag = 'smem constant byte address 0x4 - core index']
  #allocation1 [shape = 'u32[144,128]{1,0:T(1,128)}', space=vmem, size = 0x12000, scoped, tag = 'internal scratch']
  #allocation2 [shape = 'bf16[342,128]{1,0:T(8,128)(2,1)}', space=vmem, size = 0x15800, scoped, tag = 'scratch operand']
  %s0 = inlined_call_operand.vmem [shape: bf16[2,342,128], index: 0, kind: input, shape index: {}]
  %s1 = inlined_call_operand.vmem [shape: bf16[5,256,128], index: 1, kind: input, shape index: {}]
  %s2 = inlined_call_operand.vmem [shape: f32[1,128], index: 2, kind: input, shape index: {}]
  %s3 = inlined_call_operand.vmem [shape: bf16[5,256,128], index: 3, kind: input, shape index: {}]
  %s4 = inlined_call_operand.vmem [shape: f32[1,128], index: 4, kind: input, shape index: {}]
  %s5 = inlined_call_operand.vmem [shape: f32[2,288,128], index: 5, kind: output, shape index: {}]
  %s6 = sld [smem:[#allocation0]]
  $region53: #{basic_block_forward.1} parent=0
    _
  %s8 = ssub.s32 1, %s6
  %s9 = scalar_select 0, %s8, %s6
  loop: start=0, step=1, limit=4
  $region2: #{basic_block_forward.1} parent=0 // loop_pre_header
    _
  $region3: #{basic_block_forward.1} parent=0 // loop_header
    %s11 = sphi 0, %s15
    %p12 = scmp.ge.s32.totalorder %s11, 4
    %s21 = sphi 0, %s23
    %s24 = sphi 0, %s21
    %s25 = sphi 0, %s24
    %s41 = sphi 0, %s25
    %s45 = sphi 0, %s45
    %s47 = sphi 0, %s45
    %s48 = sphi 0, %s47
    %s62 = sphi 0, %s48
    %s66 = sphi 0, %s66
    %s68 = sphi 0, %s66
    %s69 = sphi 0, %s68
    %s83 = sphi 0, %s69
    %s87 = sphi 0, %s87
    %s89 = sphi 0, %s87
    %s90 = sphi 0, %s89
    %s104 = sphi 0, %s90
    %s108 = sphi 0, %s108
    %s110 = sphi 0, %s108
    %s111 = sphi 0, %s110
    %s125 = sphi 0, %s111
    %s131 = sphi 0, %s133
    %s134 = sphi 0, %s131
    %s135 = sphi 0, %s134
    %s151 = sphi 0, %s135
  $region4: #{basic_block_forward.1} parent=0 // loop_header_branch
    %14 = sbr.rel (%p12) target = $region8
  $region5: #{basic_block_forward.1} parent=0 // loop_body
    %s16 = ssub.s32 %s11, 1
    %s17 = ssub.s32 %s11, 2
    %s18 = sadd.s32 %s11, 1
    %s19 = ssub.s32 %s11, %s18
    %p20 = scmp.eq.s32.totalorder %s19, 0
    %s22 = sadd.s32 %s21, 1
    %s23 = scalar_select %p20, %s21, %s22
    %p26 = pneg %p20
    %p27 = scmp.eq.s32.totalorder %s11, 1
    %p28 = por %p26, %p27
    %p29 = scmp.ne.s32.totalorder %s21, %s24
    %p30 = scmp.eq.s32.totalorder %s11, 0
    %p31 = por %p29, %p30
    %p32 = scmp.ne.s32.totalorder %s21, %s24
    %p33 = scmp.eq.s32.totalorder %s16, 1
    %p34 = por %p32, %p33
    %p35 = scmp.ne.s32.totalorder %s24, %s25
    %p36 = scmp.eq.s32.totalorder %s16, 0
    %p37 = por %p35, %p36
    %p38 = scmp.ne.s32.totalorder %s24, %s25
    %p39 = scmp.eq.s32.totalorder %s17, 1
    %p40 = por %p38, %p39
    %p42 = scmp.ne.s32.totalorder %s25, %s41
    %p43 = scmp.eq.s32.totalorder %s17, 0
    %p44 = por %p42, %p43
    %s46 = sadd.s32 %s45, 1
    %p49 = scmp.eq.s32.totalorder %s11, 1
    %p50 = scmp.ne.s32.totalorder %s45, %s47
    %p51 = scmp.eq.s32.totalorder %s11, 0
    %p52 = por %p50, %p51
    %p53 = scmp.ne.s32.totalorder %s45, %s47
    %p54 = scmp.eq.s32.totalorder %s16, 1
    %p55 = por %p53, %p54
    %p56 = scmp.ne.s32.totalorder %s47, %s48
    %p57 = scmp.eq.s32.totalorder %s16, 0
    %p58 = por %p56, %p57
    %p59 = scmp.ne.s32.totalorder %s47, %s48
    %p60 = scmp.eq.s32.totalorder %s17, 1
    %p61 = por %p59, %p60
    %p63 = scmp.ne.s32.totalorder %s48, %s62
    %p64 = scmp.eq.s32.totalorder %s17, 0
    %p65 = por %p63, %p64
    %s67 = sadd.s32 %s66, 1
    %p70 = scmp.eq.s32.totalorder %s11, 1
    %p71 = scmp.ne.s32.totalorder %s66, %s68
    %p72 = scmp.eq.s32.totalorder %s11, 0
    %p73 = por %p71, %p72
    %p74 = scmp.ne.s32.totalorder %s66, %s68
    %p75 = scmp.eq.s32.totalorder %s16, 1
    %p76 = por %p74, %p75
    %p77 = scmp.ne.s32.totalorder %s68, %s69
    %p78 = scmp.eq.s32.totalorder %s16, 0
    %p79 = por %p77, %p78
    %p80 = scmp.ne.s32.totalorder %s68, %s69
    %p81 = scmp.eq.s32.totalorder %s17, 1
    %p82 = por %p80, %p81
    %p84 = scmp.ne.s32.totalorder %s69, %s83
    %p85 = scmp.eq.s32.totalorder %s17, 0
    %p86 = por %p84, %p85
    %s88 = sadd.s32 %s87, 1
    %p91 = scmp.eq.s32.totalorder %s11, 1
    %p92 = scmp.ne.s32.totalorder %s87, %s89
    %p93 = scmp.eq.s32.totalorder %s11, 0
    %p94 = por %p92, %p93
    %p95 = scmp.ne.s32.totalorder %s87, %s89
    %p96 = scmp.eq.s32.totalorder %s16, 1
    %p97 = por %p95, %p96
    %p98 = scmp.ne.s32.totalorder %s89, %s90
    %p99 = scmp.eq.s32.totalorder %s16, 0
    %p100 = por %p98, %p99
    %p101 = scmp.ne.s32.totalorder %s89, %s90
    %p102 = scmp.eq.s32.totalorder %s17, 1
    %p103 = por %p101, %p102
    %p105 = scmp.ne.s32.totalorder %s90, %s104
    %p106 = scmp.eq.s32.totalorder %s17, 0
    %p107 = por %p105, %p106
    %s109 = sadd.s32 %s108, 1
    %p112 = scmp.eq.s32.totalorder %s11, 1
    %p113 = scmp.ne.s32.totalorder %s108, %s110
    %p114 = scmp.eq.s32.totalorder %s11, 0
    %p115 = por %p113, %p114
    %p116 = scmp.ne.s32.totalorder %s108, %s110
    %p117 = scmp.eq.s32.totalorder %s16, 1
    %p118 = por %p116, %p117
    %p119 = scmp.ne.s32.totalorder %s110, %s111
    %p120 = scmp.eq.s32.totalorder %s16, 0
    %p121 = por %p119, %p120
    %p122 = scmp.ne.s32.totalorder %s110, %s111
    %p123 = scmp.eq.s32.totalorder %s17, 1
    %p124 = por %p122, %p123
    %p126 = scmp.ne.s32.totalorder %s111, %s125
    %p127 = scmp.eq.s32.totalorder %s17, 0
    %p128 = por %p126, %p127
    %s129 = ssub.s32 %s11, %s18
    %p130 = scmp.eq.s32.totalorder %s129, 0
    %s132 = sadd.s32 %s131, 1
    %s133 = scalar_select %p130, %s131, %s132
    %p136 = pneg %p130
    %p137 = scmp.eq.s32.totalorder %s11, 1
    %p138 = por %p136, %p137
    %p139 = scmp.ne.s32.totalorder %s131, %s134
    %p140 = scmp.eq.s32.totalorder %s11, 0
    %p141 = por %p139, %p140
    %p142 = scmp.ne.s32.totalorder %s131, %s134
    %p143 = scmp.eq.s32.totalorder %s16, 1
    %p144 = por %p142, %p143
    %p145 = scmp.ne.s32.totalorder %s134, %s135
    %p146 = scmp.eq.s32.totalorder %s16, 0
    %p147 = por %p145, %p146
    %p148 = scmp.ne.s32.totalorder %s134, %s135
    %p149 = scmp.eq.s32.totalorder %s17, 1
    %p150 = por %p148, %p149
    %p152 = scmp.ne.s32.totalorder %s135, %s151
    %p153 = scmp.eq.s32.totalorder %s17, 0
    %p154 = por %p152, %p153
    %p155 = scmp.le.s32.totalorder 1, %s11
    %p156 = scmp.lt.s32.totalorder %s11, 3
    %p157 = pnand %p155, %p156
    %p158 = pneg %p157
    // Predicated region
    $region9: #{basic_block_forward.1} parent=5 // pred_check
      _
    $region10: #{basic_block_forward.1} parent=5 // pred_check_branch
      %160 = sbr.rel (%p157) target = $region12
    $region11: #{basic_block_forward.1} parent=5 // pred_region
      %s161 = ssub.s32 %s11, 1
      // Predicated region
      $region13: #{basic_block_forward.1} parent=11 // pred_check
        %p162 = pneg %p58
      $region14: #{basic_block_forward.1} parent=11 // pred_check_branch
        %164 = sbr.rel (%p162) target = $region16
      $region15: #{basic_block_forward.1} parent=11 // pred_region
        _
      $region16: #{basic_block_forward.1} parent=11 // pred_fallthru
        _
      // Predicated region
      $region17: #{basic_block_forward.1} parent=11 // pred_check
        %p165 = pneg %p79
      $region18: #{basic_block_forward.1} parent=11 // pred_check_branch
        %167 = sbr.rel (%p165) target = $region20
      $region19: #{basic_block_forward.1} parent=11 // pred_region
        _
      $region20: #{basic_block_forward.1} parent=11 // pred_fallthru
        _
      // Predicated region
      $region21: #{basic_block_forward.1} parent=11 // pred_check
        %p168 = pneg %p100
      $region22: #{basic_block_forward.1} parent=11 // pred_check_branch
        %170 = sbr.rel (%p168) target = $region24
      $region23: #{basic_block_forward.1} parent=11 // pred_region
        _
      $region24: #{basic_block_forward.1} parent=11 // pred_fallthru
        _
      // Predicated region
      $region25: #{basic_block_forward.1} parent=11 // pred_check
        %p171 = pneg %p121
      $region26: #{basic_block_forward.1} parent=11 // pred_check_branch
        %173 = sbr.rel (%p171) target = $region28
      $region27: #{basic_block_forward.1} parent=11 // pred_region
        _
      $region28: #{basic_block_forward.1} parent=11 // pred_fallthru
        _
    $region12: #{basic_block_forward.1} parent=5 // pred_fallthru
      _
    %p174 = scmp.lt.s32.totalorder %s11, 2
    // Predicated region
    $region29: #{basic_block_forward.1} parent=5 // pred_check
      %p175 = pneg %p174
    $region30: #{basic_block_forward.1} parent=5 // pred_check_branch
      %177 = sbr.rel (%p175) target = $region32
    $region31: #{basic_block_forward.1} parent=5 // pred_region
      // Predicated region
      $region33: #{basic_block_forward.1} parent=31 // pred_check
        %p178 = pneg %p31
      $region34: #{basic_block_forward.1} parent=31 // pred_check_branch
        %180 = sbr.rel (%p178) target = $region36
      $region35: #{basic_block_forward.1} parent=31 // pred_region
        %p181 = scmp.lt.s32.totalorder %s11, 1
        %s182 = scalar_select %p181, %s11, 1
        %s183 = smul.addr %s182, 43
        %s184 = smul.addr %s183, 4
        %s185 = scalar_lea.vmem %s0, %s184
      $region36: #{basic_block_forward.1} parent=31 // pred_fallthru
        _
    $region32: #{basic_block_forward.1} parent=5 // pred_fallthru
      _
    %p186 = scmp.le.s32.totalorder 1, %s11
    %p187 = scmp.lt.s32.totalorder %s11, 3
    %p188 = pnand %p186, %p187
    %p189 = pneg %p188
    // Predicated region
    $region37: #{basic_block_forward.1} parent=5 // pred_check
      _
    $region38: #{basic_block_forward.1} parent=5 // pred_check_branch
      %191 = sbr.rel (%p188) target = $region40
    $region39: #{basic_block_forward.1} parent=5 // pred_region
      %s192 = ssub.s32 %s11, 1
      %p193 = scmp.lt.s32.totalorder %s16, 1
      %s194 = scalar_select %p193, %s16, 1
      %s195 = smul.addr %s194, 43
      %s196 = smul.addr %s195, 4
      %s197 = scalar_lea.vmem %s0, %s196
      %p198 = pneg %p37
      %p199 = pneg %p34
      %p200 = pneg %p58
      %p201 = pneg %p55
      %p202 = pneg %p79
      %p203 = pneg %p76
      %p204 = pneg %p100
      %p205 = pneg %p97
      %p206 = pneg %p121
      %p207 = pneg %p118
      %p208 = pneg %p147
      %p209 = pneg %p144
      %p210 = scmp.lt.s32.totalorder %s16, 1
      %s211 = scalar_select %p210, %s16, 1
      %s212 = smul.addr %s211, 36
      %s213 = smul.addr %s212, 8
      %s214 = scalar_lea.vmem %s5, %s213
      %p215 = scmp.lt.s32.totalorder %s16, 1
      %s216 = scalar_select %p215, %s16, 1
      %s217 = smul.addr %s216, 43
      %s218 = smul.addr %s217, 4
      %s219 = scalar_lea.vmem %s0, %s218
      %p220 = scmp.lt.s32.totalorder %s16, 1
      %s221 = scalar_select %p220, %s16, 1
      %s222 = smul.addr %s221, 36
      %s223 = smul.addr %s222, 8
      %s224 = scalar_lea.vmem %s5, %s223
      %v226 = vld [vmem:[%s219] sm:$0xf]
      %v227 = vld [vmem:[%s219 + $0x4] sm:$0xf]
      %v228 = vld [vmem:[%s219 + $0x8] sm:$0xf]
      %v229 = vld [vmem:[%s219 + $0xc] sm:$0xf]
      %v230 = vld [vmem:[%s219 + $0x10] sm:$0xf]
      %v231 = vld [vmem:[%s219 + $0x14] sm:$0xf]
      %v232 = vld [vmem:[%s219 + $0x18] sm:$0xf]
      %v233 = vld [vmem:[%s219 + $0x1c] sm:$0xf]
      %v234 = vld [vmem:[%s219 + $0x20] sm:$0xf]
      %v235 = vld [vmem:[%s219 + $0x24] sm:$0xf]
      %v236 = vld [vmem:[%s219 + $0x28] sm:$0xf]
      %v237 = vld [vmem:[%s219 + $0x2c] sm:$0xf]
      %v238 = vld [vmem:[%s219 + $0x30] sm:$0xf]
      %v239 = vld [vmem:[%s219 + $0x34] sm:$0xf]
      %v240 = vld [vmem:[%s219 + $0x38] sm:$0xf]
      %v241 = vld [vmem:[%s219 + $0x3c] sm:$0xf]
      %v242 = vld [vmem:[%s219 + $0x40] sm:$0xf]
      %v243 = vld [vmem:[%s219 + $0x44] sm:$0xf]
      %v244 = vld [vmem:[%s219 + $0x48] sm:$0xf]
      %v245 = vld [vmem:[%s219 + $0x4c] sm:$0xf]
      %v246 = vld [vmem:[%s219 + $0x50] sm:$0xf]
      %v247 = vld [vmem:[%s219 + $0x54] sm:$0xf]
      %v248 = vld [vmem:[%s219 + $0x58] sm:$0xf]
      %v249 = vld [vmem:[%s219 + $0x5c] sm:$0xf]
      %v250 = vld [vmem:[%s219 + $0x60] sm:$0xf]
      %v251 = vld [vmem:[%s219 + $0x64] sm:$0xf]
      %v252 = vld [vmem:[%s219 + $0x68] sm:$0xf]
      %v253 = vld [vmem:[%s219 + $0x6c] sm:$0xf]
      %v254 = vld [vmem:[%s219 + $0x70] sm:$0xf]
      %v255 = vld [vmem:[%s219 + $0x74] sm:$0xf]
      %v256 = vld [vmem:[%s219 + $0x78] sm:$0xf]
      %v257 = vld [vmem:[%s219 + $0x7c] sm:$0xf]
      %v258 = vld [vmem:[%s219 + $0x80] sm:$0xf]
      %v259 = vld [vmem:[%s219 + $0x84] sm:$0xf]
      %v260 = vld [vmem:[%s219 + $0x88] sm:$0xf]
      %v261 = vld [vmem:[%s219 + $0x8c] sm:$0xf]
      %v262 = vld [vmem:[%s219 + $0x90] sm:$0x1]
      %v299 = vunpack.c.l.b16 %v226
      %v300 = vunpack.c.l.b16 %v227
      %v301 = vunpack.c.l.b16 %v228
      %v302 = vunpack.c.l.b16 %v229
      %v303 = vunpack.c.l.b16 %v230
      %v304 = vunpack.c.l.b16 %v231
      %v305 = vunpack.c.l.b16 %v232
      %v306 = vunpack.c.l.b16 %v233
      %v307 = vunpack.c.l.b16 %v234
      %v308 = vunpack.c.l.b16 %v235
      %v309 = vunpack.c.l.b16 %v236
      %v310 = vunpack.c.l.b16 %v237
      %v311 = vunpack.c.l.b16 %v238
      %v312 = vunpack.c.l.b16 %v239
      %v313 = vunpack.c.l.b16 %v240
      %v314 = vunpack.c.l.b16 %v241
      %v315 = vunpack.c.l.b16 %v242
      %v316 = vunpack.c.l.b16 %v243
      %v317 = vunpack.c.l.b16 %v244
      %v318 = vunpack.c.l.b16 %v245
      %v319 = vunpack.c.l.b16 %v246
      %v320 = vunpack.c.l.b16 %v247
      %v321 = vunpack.c.l.b16 %v248
      %v322 = vunpack.c.l.b16 %v249
      %v323 = vunpack.c.l.b16 %v250
      %v324 = vunpack.c.l.b16 %v251
      %v325 = vunpack.c.l.b16 %v252
      %v326 = vunpack.c.l.b16 %v253
      %v327 = vunpack.c.l.b16 %v254
      %v328 = vunpack.c.l.b16 %v255
      %v329 = vunpack.c.l.b16 %v256
      %v330 = vunpack.c.l.b16 %v257
      %v331 = vunpack.c.l.b16 %v258
      %v332 = vunpack.c.l.b16 %v259
      %v333 = vunpack.c.l.b16 %v260
      %v334 = vunpack.c.l.b16 %v261
      %v335 = vpack.c.b16 %v300, %v299
      %v336 = vpack.c.b16 %v302, %v301
      %v337 = vpack.c.b16 %v304, %v303
      %v338 = vpack.c.b16 %v306, %v305
      %v339 = vpack.c.b16 %v308, %v307
      %v340 = vpack.c.b16 %v310, %v309
      %v341 = vpack.c.b16 %v312, %v311
      %v342 = vpack.c.b16 %v314, %v313
      %v343 = vpack.c.b16 %v316, %v315
      %v344 = vpack.c.b16 %v318, %v317
      %v345 = vpack.c.b16 %v320, %v319
      %v346 = vpack.c.b16 %v322, %v321
      %v347 = vpack.c.b16 %v324, %v323
      %v348 = vpack.c.b16 %v326, %v325
      %v349 = vpack.c.b16 %v328, %v327
      %v350 = vpack.c.b16 %v330, %v329
      %v351 = vpack.c.b16 %v332, %v331
      %v352 = vpack.c.b16 %v334, %v333
      %v372 = vunpack.c.l.b16 %v262
      %v373 = vpack.c.b16 %v372, %v372
      %vm374 = vsmask.f32 7424
      %v376 = vshrl.u32 %v335, 16
      %v378 = vshll.u32 %v335, 16
      %v380 = vrot.slane %v378, 1
      %v381 = vor.u32 %v376, %v380
      %v383 = vshll.u32 %v336, 16
      %v385 = vrot.slane %v383, 1
      %v386 = vsel %vm374, %v381, %v385
      %v387 = vshrl.u32 %v336, 16
      %v389 = vor.u32 %v387, %v385
      %v391 = vshll.u32 %v337, 16
      %v393 = vrot.slane %v391, 1
      %v394 = vsel %vm374, %v389, %v393
      %v395 = vshrl.u32 %v337, 16
      %v397 = vor.u32 %v395, %v393
      %v399 = vshll.u32 %v338, 16
      %v401 = vrot.slane %v399, 1
      %v402 = vsel %vm374, %v397, %v401
      %v403 = vshrl.u32 %v338, 16
      %v405 = vor.u32 %v403, %v401
      %v407 = vshll.u32 %v339, 16
      %v409 = vrot.slane %v407, 1
      %v410 = vsel %vm374, %v405, %v409
      %v411 = vshrl.u32 %v339, 16
      %v413 = vor.u32 %v411, %v409
      %v415 = vshll.u32 %v340, 16
      %v417 = vrot.slane %v415, 1
      %v418 = vsel %vm374, %v413, %v417
      %v419 = vshrl.u32 %v340, 16
      %v421 = vor.u32 %v419, %v417
      %v423 = vshll.u32 %v341, 16
      %v425 = vrot.slane %v423, 1
      %v426 = vsel %vm374, %v421, %v425
      %v427 = vshrl.u32 %v341, 16
      %v429 = vor.u32 %v427, %v425
      %v431 = vshll.u32 %v342, 16
      %v433 = vrot.slane %v431, 1
      %v434 = vsel %vm374, %v429, %v433
      %v435 = vshrl.u32 %v342, 16
      %v437 = vor.u32 %v435, %v433
      %v439 = vshll.u32 %v343, 16
      %v441 = vrot.slane %v439, 1
      %v442 = vsel %vm374, %v437, %v441
      %v443 = vshrl.u32 %v343, 16
      %v445 = vor.u32 %v443, %v441
      %v447 = vshll.u32 %v344, 16
      %v449 = vrot.slane %v447, 1
      %v450 = vsel %vm374, %v445, %v449
      %v451 = vshrl.u32 %v344, 16
      %v453 = vor.u32 %v451, %v449
      %v455 = vshll.u32 %v345, 16
      %v457 = vrot.slane %v455, 1
      %v458 = vsel %vm374, %v453, %v457
      %v459 = vshrl.u32 %v345, 16
      %v461 = vor.u32 %v459, %v457
      %v463 = vshll.u32 %v346, 16
      %v465 = vrot.slane %v463, 1
      %v466 = vsel %vm374, %v461, %v465
      %v467 = vshrl.u32 %v346, 16
      %v469 = vor.u32 %v467, %v465
      %v471 = vshll.u32 %v347, 16
      %v473 = vrot.slane %v471, 1
      %v474 = vsel %vm374, %v469, %v473
      %v475 = vshrl.u32 %v347, 16
      %v477 = vor.u32 %v475, %v473
      %v479 = vshll.u32 %v348, 16
      %v481 = vrot.slane %v479, 1
      %v482 = vsel %vm374, %v477, %v481
      %v483 = vshrl.u32 %v348, 16
      %v485 = vor.u32 %v483, %v481
      %v487 = vshll.u32 %v349, 16
      %v489 = vrot.slane %v487, 1
      %v490 = vsel %vm374, %v485, %v489
      %v491 = vshrl.u32 %v349, 16
      %v493 = vor.u32 %v491, %v489
      %v495 = vshll.u32 %v350, 16
      %v497 = vrot.slane %v495, 1
      %v498 = vsel %vm374, %v493, %v497
      %v499 = vshrl.u32 %v350, 16
      %v501 = vor.u32 %v499, %v497
      %v503 = vshll.u32 %v351, 16
      %v505 = vrot.slane %v503, 1
      %v506 = vsel %vm374, %v501, %v505
      %v507 = vshrl.u32 %v351, 16
      %v509 = vor.u32 %v507, %v505
      %v511 = vshll.u32 %v352, 16
      %v513 = vrot.slane %v511, 1
      %v514 = vsel %vm374, %v509, %v513
      %v515 = vshrl.u32 %v352, 16
      %v517 = vor.u32 %v515, %v513
      %v519 = vshll.u32 %v373, 16
      %v521 = vrot.slane %v519, 1
      %v522 = vsel %vm374, %v517, %v521
      %v541 = vld [vmem:[%s1] sm:$0xf]
      %v542 = vld [vmem:[%s1 + $0x4] sm:$0xf]
      %v543 = vld [vmem:[%s1 + $0x8] sm:$0xf]
      %v544 = vld [vmem:[%s1 + $0xc] sm:$0xf]
      %v545 = vld [vmem:[%s1 + $0x10] sm:$0xf]
      %v546 = vld [vmem:[%s1 + $0x14] sm:$0xf]
      %v547 = vld [vmem:[%s1 + $0x18] sm:$0xf]
      %v548 = vld [vmem:[%s1 + $0x1c] sm:$0xf]
      %v549 = vld [vmem:[%s1 + $0x20] sm:$0xf]
      %v550 = vld [vmem:[%s1 + $0x24] sm:$0xf]
      %v551 = vld [vmem:[%s1 + $0x28] sm:$0xf]
      %v552 = vld [vmem:[%s1 + $0x2c] sm:$0xf]
      %v553 = vld [vmem:[%s1 + $0x30] sm:$0xf]
      %v554 = vld [vmem:[%s1 + $0x34] sm:$0xf]
      %v555 = vld [vmem:[%s1 + $0x38] sm:$0xf]
      %v556 = vld [vmem:[%s1 + $0x3c] sm:$0xf]
      %v557 = vld [vmem:[%s1 + $0x40] sm:$0xf]
      %v558 = vld [vmem:[%s1 + $0x44] sm:$0xf]
      %v559 = vld [vmem:[%s1 + $0x48] sm:$0xf]
      %v560 = vld [vmem:[%s1 + $0x4c] sm:$0xf]
      %v561 = vld [vmem:[%s1 + $0x50] sm:$0xf]
      %v562 = vld [vmem:[%s1 + $0x54] sm:$0xf]
      %v563 = vld [vmem:[%s1 + $0x58] sm:$0xf]
      %v564 = vld [vmem:[%s1 + $0x5c] sm:$0xf]
      %v565 = vld [vmem:[%s1 + $0x60] sm:$0xf]
      %v566 = vld [vmem:[%s1 + $0x64] sm:$0xf]
      %v567 = vld [vmem:[%s1 + $0x68] sm:$0xf]
      %v568 = vld [vmem:[%s1 + $0x6c] sm:$0xf]
      %v569 = vld [vmem:[%s1 + $0x70] sm:$0xf]
      %v570 = vld [vmem:[%s1 + $0x74] sm:$0xf]
      %v571 = vld [vmem:[%s1 + $0x78] sm:$0xf]
      %v572 = vld [vmem:[%s1 + $0x7c] sm:$0xf]
      %v573 = vld [vmem:[%s219] sm:$0xe]
      %v574 = vld [vmem:[%s219 + $0x8] sm:$0xe]
      %v575 = vld [vmem:[%s219 + $0x90] sm:$0xf]
      %v576 = vld [vmem:[%s219 + $0x94] sm:$0xf]
      %v577 = vld [vmem:[%s219 + $0x98] sm:$0x1]
      %v579 = vunpack.c.l.b16 %v573
      %v580 = vpack.c.b16 %v300, %v579
      %v585 = vunpack.c.l.b16 %v574
      %v586 = vunpack.c.l.b16 %v575
      %v587 = vunpack.c.l.b16 %v576
      %v588 = vunpack.c.l.b16 %v577
      %v589 = vpack.c.b16 %v302, %v585
      %v590 = vpack.c.b16 %v587, %v586
      %v591 = vpack.c.b16 %v588, %v588
      %s592 = scalar_lea.vmem %s1, 128
      %v593 = vld [vmem:[%s592] sm:$0xf]
      %v594 = vld [vmem:[%s592 + $0x4] sm:$0xf]
      %v595 = vld [vmem:[%s592 + $0x8] sm:$0xf]
      %v596 = vld [vmem:[%s592 + $0xc] sm:$0xf]
      %v597 = vld [vmem:[%s592 + $0x10] sm:$0xf]
      %v598 = vld [vmem:[%s592 + $0x14] sm:$0xf]
      %v599 = vld [vmem:[%s592 + $0x18] sm:$0xf]
      %v600 = vld [vmem:[%s592 + $0x1c] sm:$0xf]
      %v601 = vld [vmem:[%s592 + $0x20] sm:$0xf]
      %v602 = vld [vmem:[%s592 + $0x24] sm:$0xf]
      %v603 = vld [vmem:[%s592 + $0x28] sm:$0xf]
      %v604 = vld [vmem:[%s592 + $0x2c] sm:$0xf]
      %v605 = vld [vmem:[%s592 + $0x30] sm:$0xf]
      %v606 = vld [vmem:[%s592 + $0x34] sm:$0xf]
      %v607 = vld [vmem:[%s592 + $0x38] sm:$0xf]
      %v608 = vld [vmem:[%s592 + $0x3c] sm:$0xf]
      %v609 = vld [vmem:[%s592 + $0x40] sm:$0xf]
      %v610 = vld [vmem:[%s592 + $0x44] sm:$0xf]
      %v611 = vld [vmem:[%s592 + $0x48] sm:$0xf]
      %v612 = vld [vmem:[%s592 + $0x4c] sm:$0xf]
      %v613 = vld [vmem:[%s592 + $0x50] sm:$0xf]
      %v614 = vld [vmem:[%s592 + $0x54] sm:$0xf]
      %v615 = vld [vmem:[%s592 + $0x58] sm:$0xf]
      %v616 = vld [vmem:[%s592 + $0x5c] sm:$0xf]
      %v617 = vld [vmem:[%s592 + $0x60] sm:$0xf]
      %v618 = vld [vmem:[%s592 + $0x64] sm:$0xf]
      %v619 = vld [vmem:[%s592 + $0x68] sm:$0xf]
      %v620 = vld [vmem:[%s592 + $0x6c] sm:$0xf]
      %v621 = vld [vmem:[%s592 + $0x70] sm:$0xf]
      %v622 = vld [vmem:[%s592 + $0x74] sm:$0xf]
      %v623 = vld [vmem:[%s592 + $0x78] sm:$0xf]
      %v624 = vld [vmem:[%s592 + $0x7c] sm:$0xf]
      %vm625 = vcmask 1046528
      %v626 = vrot.slane %v580, 1
      %v627 = vrot.slane %v336, 1
      %v628 = vsel %vm625, %v626, %v627
      %v629 = vrot.slane %v589, 1
      %v630 = vrot.slane %v337, 1
      %v631 = vsel %vm625, %v629, %v630
      %v632 = vsel %vm625, %v627, %v630
      %v633 = vrot.slane %v338, 1
      %v634 = vsel %vm625, %v630, %v633
      %v635 = vrot.slane %v339, 1
      %v636 = vsel %vm625, %v633, %v635
      %v637 = vrot.slane %v340, 1
      %v638 = vsel %vm625, %v635, %v637
      %v639 = vrot.slane %v341, 1
      %v640 = vsel %vm625, %v637, %v639
      %v641 = vrot.slane %v342, 1
      %v642 = vsel %vm625, %v639, %v641
      %v643 = vrot.slane %v343, 1
      %v644 = vsel %vm625, %v641, %v643
      %v645 = vrot.slane %v344, 1
      %v646 = vsel %vm625, %v643, %v645
      %v647 = vrot.slane %v345, 1
      %v648 = vsel %vm625, %v645, %v647
      %v649 = vrot.slane %v346, 1
      %v650 = vsel %vm625, %v647, %v649
      %v651 = vrot.slane %v347, 1
      %v652 = vsel %vm625, %v649, %v651
      %v653 = vrot.slane %v348, 1
      %v654 = vsel %vm625, %v651, %v653
      %v655 = vrot.slane %v349, 1
      %v656 = vsel %vm625, %v653, %v655
      %v657 = vrot.slane %v350, 1
      %v658 = vsel %vm625, %v655, %v657
      %v659 = vrot.slane %v351, 1
      %v660 = vsel %vm625, %v657, %v659
      %v661 = vrot.slane %v352, 1
      %v662 = vsel %vm625, %v659, %v661
      %v663 = vrot.slane %v590, 1
      %v664 = vsel %vm625, %v661, %v663
      %v665 = vrot.slane %v373, 1
      %v666 = vsel %vm625, %v661, %v665
      %v667 = vrot.slane %v591, 1
      %v668 = vsel %vm625, %v663, %v667
      %v722 = vunpack.c.l.b16 %v593
      %v723 = vunpack.c.l.b16 %v594
      %v724 = vunpack.c.l.b16 %v595
      %v725 = vunpack.c.l.b16 %v596
      %v726 = vunpack.c.l.b16 %v597
      %v727 = vunpack.c.l.b16 %v598
      %v728 = vunpack.c.l.b16 %v599
      %v729 = vunpack.c.l.b16 %v600
      %v730 = vunpack.c.l.b16 %v601
      %v731 = vunpack.c.l.b16 %v602
      %v732 = vunpack.c.l.b16 %v603
      %v733 = vunpack.c.l.b16 %v604
      %v734 = vunpack.c.l.b16 %v605
      %v735 = vunpack.c.l.b16 %v606
      %v736 = vunpack.c.l.b16 %v607
      %v737 = vunpack.c.l.b16 %v608
      %v738 = vunpack.c.l.b16 %v609
      %v739 = vunpack.c.l.b16 %v610
      %v740 = vunpack.c.l.b16 %v611
      %v741 = vunpack.c.l.b16 %v612
      %v742 = vunpack.c.l.b16 %v613
      %v743 = vunpack.c.l.b16 %v614
      %v744 = vunpack.c.l.b16 %v615
      %v745 = vunpack.c.l.b16 %v616
      %v746 = vunpack.c.l.b16 %v617
      %v747 = vunpack.c.l.b16 %v618
      %v748 = vunpack.c.l.b16 %v619
      %v749 = vunpack.c.l.b16 %v620
      %v750 = vunpack.c.l.b16 %v621
      %v751 = vunpack.c.l.b16 %v622
      %v752 = vunpack.c.l.b16 %v623
      %v753 = vunpack.c.l.b16 %v624
      %v754 = vpack.c.b16 %v723, %v722
      %v755 = vpack.c.b16 %v725, %v724
      %v756 = vpack.c.b16 %v727, %v726
      %v757 = vpack.c.b16 %v729, %v728
      %v758 = vpack.c.b16 %v731, %v730
      %v759 = vpack.c.b16 %v733, %v732
      %v760 = vpack.c.b16 %v735, %v734
      %v761 = vpack.c.b16 %v737, %v736
      %v762 = vpack.c.b16 %v739, %v738
      %v763 = vpack.c.b16 %v741, %v740
      %v764 = vpack.c.b16 %v743, %v742
      %v765 = vpack.c.b16 %v745, %v744
      %v766 = vpack.c.b16 %v747, %v746
      %v767 = vpack.c.b16 %v749, %v748
      %v768 = vpack.c.b16 %v751, %v750
      %v769 = vpack.c.b16 %v753, %v752
      %786 = vmatprep.subr.bf16.mxu0 0
      %787 = vmatpush1.bf16.msra.mxu0 %v754
      %788 = vmatprep.subr.bf16.mxu0 0
      %789 = vmatpush1.bf16.msra.mxu0 %v755
      %790 = vmatprep.subr.bf16.mxu0 0
      %791 = vmatpush1.bf16.msra.mxu0 %v756
      %792 = vmatprep.subr.bf16.mxu0 0
      %793 = vmatpush1.bf16.msra.mxu0 %v757
      %794 = vmatprep.subr.bf16.mxu0 0
      %795 = vmatpush1.bf16.msra.mxu0 %v758
      %796 = vmatprep.subr.bf16.mxu0 0
      %797 = vmatpush1.bf16.msra.mxu0 %v759
      %798 = vmatprep.subr.bf16.mxu0 0
      %799 = vmatpush1.bf16.msra.mxu0 %v760
      %800 = vmatprep.subr.bf16.mxu0 0
      %801 = vmatpush1.bf16.msra.mxu0 %v761
      %802 = vmatprep.subr.bf16.mxu0 0
      %803 = vmatpush1.bf16.msra.mxu0 %v762
      %804 = vmatprep.subr.bf16.mxu0 0
      %805 = vmatpush1.bf16.msra.mxu0 %v763
      %806 = vmatprep.subr.bf16.mxu0 0
      %807 = vmatpush1.bf16.msra.mxu0 %v764
      %808 = vmatprep.subr.bf16.mxu0 0
      %809 = vmatpush1.bf16.msra.mxu0 %v765
      %810 = vmatprep.subr.bf16.mxu0 0
      %811 = vmatpush1.bf16.msra.mxu0 %v766
      %812 = vmatprep.subr.bf16.mxu0 0
      %813 = vmatpush1.bf16.msra.mxu0 %v767
      %814 = vmatprep.subr.bf16.mxu0 0
      %815 = vmatpush1.bf16.msra.mxu0 %v768
      %816 = vmatprep.subr.bf16.mxu0 0
      %817 = vmatpush1.bf16.msra.mxu0 %v769
      %818 = vmatprep.mubr.bf16.mxu0 %v631
      %819 = vmatmul.mubr.bf16.gmra.mrb[0].mxu0 %v628
      %v820 = vpop.f32.mrb[0].mxu0
      %v821 = vadd.f32 0.0, %v820
      %v822 = vpop.f32.mrb[0].mxu0
      %v823 = vpop.f32.mrb[0].mxu0
      %v824 = vadd.f32 0.0, %v823
      %v825 = vpop.f32.mrb[0].mxu0
      %826 = vmatprep.mubr.bf16.mxu0 %v634
      %827 = vmatmul.mubr.bf16.gmra.mrb[0].mxu0 %v632
      %v828 = vpop.f32.mrb[0].mxu0
      %v829 = vadd.f32 0.0, %v828
      %v830 = vpop.f32.mrb[0].mxu0
      %v831 = vpop.f32.mrb[0].mxu0
      %v832 = vadd.f32 0.0, %v831
      %v833 = vpop.f32.mrb[0].mxu0
      %834 = vmatprep.mubr.bf16.mxu0 %v636
      %835 = vmatmul.mubr.bf16.gmra.mrb[0].mxu0 %v634
      %v836 = vpop.f32.mrb[0].mxu0
      %v837 = vadd.f32 0.0, %v836
      %v838 = vpop.f32.mrb[0].mxu0
      %v839 = vpop.f32.mrb[0].mxu0
      %v840 = vadd.f32 0.0, %v839
      %v841 = vpop.f32.mrb[0].mxu0
      %842 = vmatprep.mubr.bf16.mxu0 %v638
      %843 = vmatmul.mubr.bf16.gmra.mrb[0].mxu0 %v636
      %v844 = vpop.f32.mrb[0].mxu0
      %v845 = vadd.f32 0.0, %v844
      %v846 = vpop.f32.mrb[0].mxu0
      %v847 = vpop.f32.mrb[0].mxu0
      %v848 = vadd.f32 0.0, %v847
      %v849 = vpop.f32.mrb[0].mxu0
      %850 = vmatprep.mubr.bf16.mxu0 %v640
      %851 = vmatmul.mubr.bf16.gmra.mrb[0].mxu0 %v638
      %v852 = vpop.f32.mrb[0].mxu0
      %v853 = vadd.f32 0.0, %v852
      %v854 = vpop.f32.mrb[0].mxu0
      %v855 = vpop.f32.mrb[0].mxu0
      %v856 = vadd.f32 0.0, %v855
      %v857 = vpop.f32.mrb[0].mxu0
      %858 = vmatprep.mubr.bf16.mxu0 %v642
      %859 = vmatmul.mubr.bf16.gmra.mrb[0].mxu0 %v640
      %v860 = vpop.f32.mrb[0].mxu0
      %v861 = vadd.f32 0.0, %v860
      %v862 = vpop.f32.mrb[0].mxu0
      %v863 = vpop.f32.mrb[0].mxu0
      %v864 = vadd.f32 0.0, %v863
      %v865 = vpop.f32.mrb[0].mxu0
      %866 = vmatprep.mubr.bf16.mxu0 %v644
      %867 = vmatmul.mubr.bf16.gmra.mrb[0].mxu0 %v642
      %v868 = vpop.f32.mrb[0].mxu0
      %v869 = vadd.f32 0.0, %v868
      %v870 = vpop.f32.mrb[0].mxu0
      %v871 = vpop.f32.mrb[0].mxu0
      %v872 = vadd.f32 0.0, %v871
      %v873 = vpop.f32.mrb[0].mxu0
      %874 = vmatprep.mubr.bf16.mxu0 %v646
      %875 = vmatmul.mubr.bf16.gmra.mrb[0].mxu0 %v644
      %v876 = vpop.f32.mrb[0].mxu0
      %v877 = vadd.f32 0.0, %v876
      %v878 = vpop.f32.mrb[0].mxu0
      %v879 = vpop.f32.mrb[0].mxu0
      %v880 = vadd.f32 0.0, %v879
      %v881 = vpop.f32.mrb[0].mxu0
      %882 = vmatprep.mubr.bf16.mxu0 %v648
      %883 = vmatmul.mubr.bf16.gmra.mrb[0].mxu0 %v646
      %v884 = vpop.f32.mrb[0].mxu0
      %v885 = vadd.f32 0.0, %v884
      %v886 = vpop.f32.mrb[0].mxu0
      %v887 = vpop.f32.mrb[0].mxu0
      %v888 = vadd.f32 0.0, %v887
      %v889 = vpop.f32.mrb[0].mxu0
      %890 = vmatprep.mubr.bf16.mxu0 %v650
      %891 = vmatmul.mubr.bf16.gmra.mrb[0].mxu0 %v648
      %v892 = vpop.f32.mrb[0].mxu0
      %v893 = vadd.f32 0.0, %v892
      %v894 = vpop.f32.mrb[0].mxu0
      %v895 = vpop.f32.mrb[0].mxu0
      %v896 = vadd.f32 0.0, %v895
      %v897 = vpop.f32.mrb[0].mxu0
      %898 = vmatprep.mubr.bf16.mxu0 %v652
      %899 = vmatmul.mubr.bf16.gmra.mrb[0].mxu0 %v650
      %v900 = vpop.f32.mrb[0].mxu0
      %v901 = vadd.f32 0.0, %v900
      %v902 = vpop.f32.mrb[0].mxu0
      %v903 = vpop.f32.mrb[0].mxu0
      %v904 = vadd.f32 0.0, %v903
      %v905 = vpop.f32.mrb[0].mxu0
      %906 = vmatprep.mubr.bf16.mxu0 %v654
      %907 = vmatmul.mubr.bf16.gmra.mrb[0].mxu0 %v652
      %v908 = vpop.f32.mrb[0].mxu0
      %v909 = vadd.f32 0.0, %v908
      %v910 = vpop.f32.mrb[0].mxu0
      %v911 = vpop.f32.mrb[0].mxu0
      %v912 = vadd.f32 0.0, %v911
      %v913 = vpop.f32.mrb[0].mxu0
      %914 = vmatprep.mubr.bf16.mxu0 %v656
      %915 = vmatmul.mubr.bf16.gmra.mrb[0].mxu0 %v654
      %v916 = vpop.f32.mrb[0].mxu0
      %v917 = vadd.f32 0.0, %v916
      %v918 = vpop.f32.mrb[0].mxu0
      %v919 = vpop.f32.mrb[0].mxu0
      %v920 = vadd.f32 0.0, %v919
      %v921 = vpop.f32.mrb[0].mxu0
      %922 = vmatprep.mubr.bf16.mxu0 %v658
      %923 = vmatmul.mubr.bf16.gmra.mrb[0].mxu0 %v656
      %v924 = vpop.f32.mrb[0].mxu0
      %v925 = vadd.f32 0.0, %v924
      %v926 = vpop.f32.mrb[0].mxu0
      %v927 = vpop.f32.mrb[0].mxu0
      %v928 = vadd.f32 0.0, %v927
      %v929 = vpop.f32.mrb[0].mxu0
      %930 = vmatprep.mubr.bf16.mxu0 %v660
      %931 = vmatmul.mubr.bf16.gmra.mrb[0].mxu0 %v658
      %v932 = vpop.f32.mrb[0].mxu0
      %v933 = vadd.f32 0.0, %v932
      %v934 = vpop.f32.mrb[0].mxu0
      %v935 = vpop.f32.mrb[0].mxu0
      %v936 = vadd.f32 0.0, %v935
      %v937 = vpop.f32.mrb[0].mxu0
      %938 = vmatprep.mubr.bf16.mxu0 %v662
      %939 = vmatmul.mubr.bf16.gmra.mrb[0].mxu0 %v660
      %v940 = vpop.f32.mrb[0].mxu0
      %v941 = vadd.f32 0.0, %v940
      %v942 = vpop.f32.mrb[0].mxu0
      %v943 = vpop.f32.mrb[0].mxu0
      %v944 = vadd.f32 0.0, %v943
      %v945 = vpop.f32.mrb[0].mxu0
      %946 = vmatprep.mubr.bf16.mxu0 %v664
      %947 = vmatmul.mubr.bf16.gmra.mrb[0].mxu0 %v662
      %v948 = vpop.f32.mrb[0].mxu0
      %v949 = vadd.f32 0.0, %v948
      %v950 = vpop.f32.mrb[0].mxu0
      %v951 = vpop.f32.mrb[0].mxu0
      %v952 = vadd.f32 0.0, %v951
      %v953 = vpop.f32.mrb[0].mxu0
      %954 = vmatprep.mubr.bf16.mxu0 %v668
      %955 = vmatmul.mubr.bf16.gmra.mrb[0].mxu0 %v666
      %v956 = vpop.f32.mrb[0].mxu0
      %v957 = vadd.f32 0.0, %v956
      %v958 = vpop.f32.mrb[0].mxu0
      %v959 = vpop.f32.mrb[0].mxu0
      %v960 = vadd.f32 0.0, %v959
      %v961 = vpop.f32.mrb[0].mxu0
      %962 = vdwg.mxu0
      %v995 = vunpack.c.l.b16 %v541
      %v996 = vunpack.c.l.b16 %v542
      %v997 = vunpack.c.l.b16 %v543
      %v998 = vunpack.c.l.b16 %v544
      %v999 = vunpack.c.l.b16 %v545
      %v1000 = vunpack.c.l.b16 %v546
      %v1001 = vunpack.c.l.b16 %v547
      %v1002 = vunpack.c.l.b16 %v548
      %v1003 = vunpack.c.l.b16 %v549
      %v1004 = vunpack.c.l.b16 %v550
      %v1005 = vunpack.c.l.b16 %v551
      %v1006 = vunpack.c.l.b16 %v552
      %v1007 = vunpack.c.l.b16 %v553
      %v1008 = vunpack.c.l.b16 %v554
      %v1009 = vunpack.c.l.b16 %v555
      %v1010 = vunpack.c.l.b16 %v556
      %v1011 = vunpack.c.l.b16 %v557
      %v1012 = vunpack.c.l.b16 %v558
      %v1013 = vunpack.c.l.b16 %v559
      %v1014 = vunpack.c.l.b16 %v560
      %v1015 = vunpack.c.l.b16 %v561
      %v1016 = vunpack.c.l.b16 %v562
      %v1017 = vunpack.c.l.b16 %v563
      %v1018 = vunpack.c.l.b16 %v564
      %v1019 = vunpack.c.l.b16 %v565
      %v1020 = vunpack.c.l.b16 %v566
      %v1021 = vunpack.c.l.b16 %v567
      %v1022 = vunpack.c.l.b16 %v568
      %v1023 = vunpack.c.l.b16 %v569
      %v1024 = vunpack.c.l.b16 %v570
      %v1025 = vunpack.c.l.b16 %v571
      %v1026 = vunpack.c.l.b16 %v572
      %v1027 = vpack.c.b16 %v996, %v995
      %v1028 = vpack.c.b16 %v998, %v997
      %v1029 = vpack.c.b16 %v1000, %v999
      %v1030 = vpack.c.b16 %v1002, %v1001
      %v1031 = vpack.c.b16 %v1004, %v1003
      %v1032 = vpack.c.b16 %v1006, %v1005
      %v1033 = vpack.c.b16 %v1008, %v1007
      %v1034 = vpack.c.b16 %v1010, %v1009
      %v1035 = vpack.c.b16 %v1012, %v1011
      %v1036 = vpack.c.b16 %v1014, %v1013
      %v1037 = vpack.c.b16 %v1016, %v1015
      %v1038 = vpack.c.b16 %v1018, %v1017
      %v1039 = vpack.c.b16 %v1020, %v1019
      %v1040 = vpack.c.b16 %v1022, %v1021
      %v1041 = vpack.c.b16 %v1024, %v1023
      %v1042 = vpack.c.b16 %v1026, %v1025
      %1059 = vmatprep.subr.bf16.mxu0 0
      %1060 = vmatpush1.bf16.msra.mxu0 %v1027
      %1061 = vmatprep.subr.bf16.mxu0 0
      %1062 = vmatpush1.bf16.msra.mxu0 %v1028
      %1063 = vmatprep.subr.bf16.mxu0 0
      %1064 = vmatpush1.bf16.msra.mxu0 %v1029
      %1065 = vmatprep.subr.bf16.mxu0 0
      %1066 = vmatpush1.bf16.msra.mxu0 %v1030
      %1067 = vmatprep.subr.bf16.mxu0 0
      %1068 = vmatpush1.bf16.msra.mxu0 %v1031
      %1069 = vmatprep.subr.bf16.mxu0 0
      %1070 = vmatpush1.bf16.msra.mxu0 %v1032
      %1071 = vmatprep.subr.bf16.mxu0 0
      %1072 = vmatpush1.bf16.msra.mxu0 %v1033
      %1073 = vmatprep.subr.bf16.mxu0 0
      %1074 = vmatpush1.bf16.msra.mxu0 %v1034
      %1075 = vmatprep.subr.bf16.mxu0 0
      %1076 = vmatpush1.bf16.msra.mxu0 %v1035
      %1077 = vmatprep.subr.bf16.mxu0 0
      %1078 = vmatpush1.bf16.msra.mxu0 %v1036
      %1079 = vmatprep.subr.bf16.mxu0 0
      %1080 = vmatpush1.bf16.msra.mxu0 %v1037
      %1081 = vmatprep.subr.bf16.mxu0 0
      %1082 = vmatpush1.bf16.msra.mxu0 %v1038
      %1083 = vmatprep.subr.bf16.mxu0 0
      %1084 = vmatpush1.bf16.msra.mxu0 %v1039
      %1085 = vmatprep.subr.bf16.mxu0 0
      %1086 = vmatpush1.bf16.msra.mxu0 %v1040
      %1087 = vmatprep.subr.bf16.mxu0 0
      %1088 = vmatpush1.bf16.msra.mxu0 %v1041
      %1089 = vmatprep.subr.bf16.mxu0 0
      %1090 = vmatpush1.bf16.msra.mxu0 %v1042
      %1091 = vmatprep.mubr.bf16.mxu0 %v386
      %1092 = vmatmul.mubr.bf16.gmra.mrb[0].mxu0 %v335
      %v1093 = vpop.f32.mrb[0].mxu0
      %v1094 = vadd.f32 %v821, %v1093
      %v1095 = vpop.f32.mrb[0].mxu0
      %v1096 = vpop.f32.mrb[0].mxu0
      %v1097 = vadd.f32 %v824, %v1096
      %v1098 = vpop.f32.mrb[0].mxu0
      %1099 = vmatprep.mubr.bf16.mxu0 %v394
      %1100 = vmatmul.mubr.bf16.gmra.mrb[0].mxu0 %v336
      %v1101 = vpop.f32.mrb[0].mxu0
      %v1102 = vadd.f32 %v829, %v1101
      %v1103 = vpop.f32.mrb[0].mxu0
      %v1104 = vpop.f32.mrb[0].mxu0
      %v1105 = vadd.f32 %v832, %v1104
      %v1106 = vpop.f32.mrb[0].mxu0
      %1107 = vmatprep.mubr.bf16.mxu0 %v402
      %1108 = vmatmul.mubr.bf16.gmra.mrb[0].mxu0 %v337
      %v1109 = vpop.f32.mrb[0].mxu0
      %v1110 = vadd.f32 %v837, %v1109
      %v1111 = vpop.f32.mrb[0].mxu0
      %v1112 = vpop.f32.mrb[0].mxu0
      %v1113 = vadd.f32 %v840, %v1112
      %v1114 = vpop.f32.mrb[0].mxu0
      %1115 = vmatprep.mubr.bf16.mxu0 %v410
      %1116 = vmatmul.mubr.bf16.gmra.mrb[0].mxu0 %v338
      %v1117 = vpop.f32.mrb[0].mxu0
      %v1118 = vadd.f32 %v845, %v1117
      %v1119 = vpop.f32.mrb[0].mxu0
      %v1120 = vpop.f32.mrb[0].mxu0
      %v1121 = vadd.f32 %v848, %v1120
      %v1122 = vpop.f32.mrb[0].mxu0
      %1123 = vmatprep.mubr.bf16.mxu0 %v418
      %1124 = vmatmul.mubr.bf16.gmra.mrb[0].mxu0 %v339
      %v1125 = vpop.f32.mrb[0].mxu0
      %v1126 = vadd.f32 %v853, %v1125
      %v1127 = vpop.f32.mrb[0].mxu0
      %v1128 = vpop.f32.mrb[0].mxu0
      %v1129 = vadd.f32 %v856, %v1128
      %v1130 = vpop.f32.mrb[0].mxu0
      %1131 = vmatprep.mubr.bf16.mxu0 %v426
      %1132 = vmatmul.mubr.bf16.gmra.mrb[0].mxu0 %v340
      %v1133 = vpop.f32.mrb[0].mxu0
      %v1134 = vadd.f32 %v861, %v1133
      %v1135 = vpop.f32.mrb[0].mxu0
      %v1136 = vpop.f32.mrb[0].mxu0
      %v1137 = vadd.f32 %v864, %v1136
      %v1138 = vpop.f32.mrb[0].mxu0
      %1139 = vmatprep.mubr.bf16.mxu0 %v434
      %1140 = vmatmul.mubr.bf16.gmra.mrb[0].mxu0 %v341
      %v1141 = vpop.f32.mrb[0].mxu0
      %v1142 = vadd.f32 %v869, %v1141
      %v1143 = vpop.f32.mrb[0].mxu0
      %v1144 = vpop.f32.mrb[0].mxu0
      %v1145 = vadd.f32 %v872, %v1144
      %v1146 = vpop.f32.mrb[0].mxu0
      %1147 = vmatprep.mubr.bf16.mxu0 %v442
      %1148 = vmatmul.mubr.bf16.gmra.mrb[0].mxu0 %v342
      %v1149 = vpop.f32.mrb[0].mxu0
      %v1150 = vadd.f32 %v877, %v1149
      %v1151 = vpop.f32.mrb[0].mxu0
      %v1152 = vpop.f32.mrb[0].mxu0
      %v1153 = vadd.f32 %v880, %v1152
      %v1154 = vpop.f32.mrb[0].mxu0
      %1155 = vmatprep.mubr.bf16.mxu0 %v450
      %1156 = vmatmul.mubr.bf16.gmra.mrb[0].mxu0 %v343
      %v1157 = vpop.f32.mrb[0].mxu0
      %v1158 = vadd.f32 %v885, %v1157
      %v1159 = vpop.f32.mrb[0].mxu0
      %v1160 = vpop.f32.mrb[0].mxu0
      %v1161 = vadd.f32 %v888, %v1160
      %v1162 = vpop.f32.mrb[0].mxu0
      %1163 = vmatprep.mubr.bf16.mxu0 %v458
      %1164 = vmatmul.mubr.bf16.gmra.mrb[0].mxu0 %v344
      %v1165 = vpop.f32.mrb[0].mxu0
      %v1166 = vadd.f32 %v893, %v1165
      %v1167 = vpop.f32.mrb[0].mxu0
      %v1168 = vpop.f32.mrb[0].mxu0
      %v1169 = vadd.f32 %v896, %v1168
      %v1170 = vpop.f32.mrb[0].mxu0
      %1171 = vmatprep.mubr.bf16.mxu0 %v466
      %1172 = vmatmul.mubr.bf16.gmra.mrb[0].mxu0 %v345
      %v1173 = vpop.f32.mrb[0].mxu0
      %v1174 = vadd.f32 %v901, %v1173
      %v1175 = vpop.f32.mrb[0].mxu0
      %v1176 = vpop.f32.mrb[0].mxu0
      %v1177 = vadd.f32 %v904, %v1176
      %v1178 = vpop.f32.mrb[0].mxu0
      %1179 = vmatprep.mubr.bf16.mxu0 %v474
      %1180 = vmatmul.mubr.bf16.gmra.mrb[0].mxu0 %v346
      %v1181 = vpop.f32.mrb[0].mxu0
      %v1182 = vadd.f32 %v909, %v1181
      %v1183 = vpop.f32.mrb[0].mxu0
      %v1184 = vpop.f32.mrb[0].mxu0
      %v1185 = vadd.f32 %v912, %v1184
      %v1186 = vpop.f32.mrb[0].mxu0
      %1187 = vmatprep.mubr.bf16.mxu0 %v482
      %1188 = vmatmul.mubr.bf16.gmra.mrb[0].mxu0 %v347
      %v1189 = vpop.f32.mrb[0].mxu0
      %v1190 = vadd.f32 %v917, %v1189
      %v1191 = vpop.f32.mrb[0].mxu0
      %v1192 = vpop.f32.mrb[0].mxu0
      %v1193 = vadd.f32 %v920, %v1192
      %v1194 = vpop.f32.mrb[0].mxu0
      %1195 = vmatprep.mubr.bf16.mxu0 %v490
      %1196 = vmatmul.mubr.bf16.gmra.mrb[0].mxu0 %v348
      %v1197 = vpop.f32.mrb[0].mxu0
      %v1198 = vadd.f32 %v925, %v1197
      %v1199 = vpop.f32.mrb[0].mxu0
      %v1200 = vpop.f32.mrb[0].mxu0
      %v1201 = vadd.f32 %v928, %v1200
      %v1202 = vpop.f32.mrb[0].mxu0
      %1203 = vmatprep.mubr.bf16.mxu0 %v498
      %1204 = vmatmul.mubr.bf16.gmra.mrb[0].mxu0 %v349
      %v1205 = vpop.f32.mrb[0].mxu0
      %v1206 = vadd.f32 %v933, %v1205
      %v1207 = vpop.f32.mrb[0].mxu0
      %v1208 = vpop.f32.mrb[0].mxu0
      %v1209 = vadd.f32 %v936, %v1208
      %v1210 = vpop.f32.mrb[0].mxu0
      %1211 = vmatprep.mubr.bf16.mxu0 %v506
      %1212 = vmatmul.mubr.bf16.gmra.mrb[0].mxu0 %v350
      %v1213 = vpop.f32.mrb[0].mxu0
      %v1214 = vadd.f32 %v941, %v1213
      %v1215 = vpop.f32.mrb[0].mxu0
      %v1216 = vpop.f32.mrb[0].mxu0
      %v1217 = vadd.f32 %v944, %v1216
      %v1218 = vpop.f32.mrb[0].mxu0
      %1219 = vmatprep.mubr.bf16.mxu0 %v514
      %1220 = vmatmul.mubr.bf16.gmra.mrb[0].mxu0 %v351
      %v1221 = vpop.f32.mrb[0].mxu0
      %v1222 = vadd.f32 %v949, %v1221
      %v1223 = vpop.f32.mrb[0].mxu0
      %v1224 = vpop.f32.mrb[0].mxu0
      %v1225 = vadd.f32 %v952, %v1224
      %v1226 = vpop.f32.mrb[0].mxu0
      %1227 = vmatprep.mubr.bf16.mxu0 %v522
      %1228 = vmatmul.mubr.bf16.gmra.mrb[0].mxu0 %v352
      %v1229 = vpop.f32.mrb[0].mxu0
      %v1230 = vadd.f32 %v957, %v1229
      %v1231 = vpop.f32.mrb[0].mxu0
      %v1232 = vpop.f32.mrb[0].mxu0
      %v1233 = vadd.f32 %v960, %v1232
      %v1234 = vpop.f32.mrb[0].mxu0
      %1235 = vdwg.mxu0
      %v1236 = vld [vmem:[%s219 + $0x98] sm:$0x3]
      %v1237 = vld [vmem:[%s219 + $0x8] sm:$0xc]
      %v1239 = vunpack.c.l.b16 %v1236
      %v1240 = vpack.c.b16 %v1239, %v1239
      %v1242 = vunpack.c.l.b16 %v1237
      %v1243 = vpack.c.b16 %v302, %v1242
      %v1245 = vshrl.u32 %v1243, 16
      %v1247 = vshll.u32 %v1243, 16
      %v1249 = vrot.slane %v1247, 1
      %v1250 = vor.u32 %v1245, %v1249
      %v1251 = vsel %vm374, %v1250, %v393
      %v1253 = vshll.u32 %v590, 16
      %v1255 = vrot.slane %v1253, 1
      %v1256 = vsel %vm374, %v517, %v1255
      %v1257 = vshrl.u32 %v590, 16
      %v1259 = vor.u32 %v1257, %v1255
      %v1261 = vshll.u32 %v1240, 16
      %v1263 = vrot.slane %v1261, 1
      %v1264 = vsel %vm374, %v1259, %v1263
      %v1265 = vshrl.u32 %v1240, 16
      %v1267 = vor.u32 %v1265, %v1263
      %s1268 = scalar_lea.vmem %s1, 256
      %v1269 = vld [vmem:[%s1268] sm:$0xf]
      %v1270 = vld [vmem:[%s1268 + $0x4] sm:$0xf]
      %v1271 = vld [vmem:[%s1268 + $0x8] sm:$0xf]
      %v1272 = vld [vmem:[%s1268 + $0xc] sm:$0xf]
      %v1273 = vld [vmem:[%s1268 + $0x10] sm:$0xf]
      %v1274 = vld [vmem:[%s1268 + $0x14] sm:$0xf]
      %v1275 = vld [vmem:[%s1268 + $0x18] sm:$0xf]
      %v1276 = vld [vmem:[%s1268 + $0x1c] sm:$0xf]
      %v1277 = vld [vmem:[%s1268 + $0x20] sm:$0xf]
      %v1278 = vld [vmem:[%s1268 + $0x24] sm:$0xf]
      %v1279 = vld [vmem:[%s1268 + $0x28] sm:$0xf]
      %v1280 = vld [vmem:[%s1268 + $0x2c] sm:$0xf]
      %v1281 = vld [vmem:[%s1268 + $0x30] sm:$0xf]
      %v1282 = vld [vmem:[%s1268 + $0x34] sm:$0xf]
      %v1283 = vld [vmem:[%s1268 + $0x38] sm:$0xf]
      %v1284 = vld [vmem:[%s1268 + $0x3c] sm:$0xf]
      %v1285 = vld [vmem:[%s1268 + $0x40] sm:$0xf]
      %v1286 = vld [vmem:[%s1268 + $0x44] sm:$0xf]
      %v1287 = vld [vmem:[%s1268 + $0x48] sm:$0xf]
      %v1288 = vld [vmem:[%s1268 + $0x4c] sm:$0xf]
      %v1289 = vld [vmem:[%s1268 + $0x50] sm:$0xf]
      %v1290 = vld [vmem:[%s1268 + $0x54] sm:$0xf]
      %v1291 = vld [vmem:[%s1268 + $0x58] sm:$0xf]
      %v1292 = vld [vmem:[%s1268 + $0x5c] sm:$0xf]
      %v1293 = vld [vmem:[%s1268 + $0x60] sm:$0xf]
      %v1294 = vld [vmem:[%s1268 + $0x64] sm:$0xf]
      %v1295 = vld [vmem:[%s1268 + $0x68] sm:$0xf]
      %v1296 = vld [vmem:[%s1268 + $0x6c] sm:$0xf]
      %v1297 = vld [vmem:[%s1268 + $0x70] sm:$0xf]
      %v1298 = vld [vmem:[%s1268 + $0x74] sm:$0xf]
      %v1299 = vld [vmem:[%s1268 + $0x78] sm:$0xf]
      %v1300 = vld [vmem:[%s1268 + $0x7c] sm:$0xf]
      %vm1301 = vsmask.f32 6400
      %v1303 = vshrl.u32 %v589, 16
      %v1305 = vrot.slane %v1303, 1
      %v1306 = vshll.u32 %v589, 16
      %v1308 = vrot.slane %v1306, 2
      %v1309 = vor.u32 %v1305, %v1308
      %v1310 = vrot.slane %v395, 1
      %v1311 = vrot.slane %v391, 2
      %v1312 = vor.u32 %v1310, %v1311
      %v1313 = vsel %vm1301, %v1309, %v1312
      %v1315 = vshrl.u32 %v1251, 16
      %v1317 = vrot.slane %v1315, 1
      %v1318 = vshll.u32 %v1251, 16
      %v1320 = vrot.slane %v1318, 2
      %v1321 = vor.u32 %v1317, %v1320
      %v1323 = vshrl.u32 %v402, 16
      %v1325 = vrot.slane %v1323, 1
      %v1326 = vshll.u32 %v402, 16
      %v1328 = vrot.slane %v1326, 2
      %v1329 = vor.u32 %v1325, %v1328
      %v1330 = vsel %vm1301, %v1321, %v1329
      %v1331 = vrot.slane %v403, 1
      %v1332 = vrot.slane %v399, 2
      %v1333 = vor.u32 %v1331, %v1332
      %v1334 = vsel %vm1301, %v1312, %v1333
      %v1336 = vshrl.u32 %v410, 16
      %v1338 = vrot.slane %v1336, 1
      %v1339 = vshll.u32 %v410, 16
      %v1341 = vrot.slane %v1339, 2
      %v1342 = vor.u32 %v1338, %v1341
      %v1343 = vsel %vm1301, %v1329, %v1342
      %v1344 = vrot.slane %v411, 1
      %v1345 = vrot.slane %v407, 2
      %v1346 = vor.u32 %v1344, %v1345
      %v1347 = vsel %vm1301, %v1333, %v1346
      %v1349 = vshrl.u32 %v418, 16
      %v1351 = vrot.slane %v1349, 1
      %v1352 = vshll.u32 %v418, 16
      %v1354 = vrot.slane %v1352, 2
      %v1355 = vor.u32 %v1351, %v1354
      %v1356 = vsel %vm1301, %v1342, %v1355
      %v1357 = vrot.slane %v419, 1
      %v1358 = vrot.slane %v415, 2
      %v1359 = vor.u32 %v1357, %v1358
      %v1360 = vsel %vm1301, %v1346, %v1359
      %v1362 = vshrl.u32 %v426, 16
      %v1364 = vrot.slane %v1362, 1
      %v1365 = vshll.u32 %v426, 16
      %v1367 = vrot.slane %v1365, 2
      %v1368 = vor.u32 %v1364, %v1367
      %v1369 = vsel %vm1301, %v1355, %v1368
      %v1370 = vrot.slane %v427, 1
      %v1371 = vrot.slane %v423, 2
      %v1372 = vor.u32 %v1370, %v1371
      %v1373 = vsel %vm1301, %v1359, %v1372
      %v1375 = vshrl.u32 %v434, 16
      %v1377 = vrot.slane %v1375, 1
      %v1378 = vshll.u32 %v434, 16
      %v1380 = vrot.slane %v1378, 2
      %v1381 = vor.u32 %v1377, %v1380
      %v1382 = vsel %vm1301, %v1368, %v1381
      %v1383 = vrot.slane %v435, 1
      %v1384 = vrot.slane %v431, 2
      %v1385 = vor.u32 %v1383, %v1384
      %v1386 = vsel %vm1301, %v1372, %v1385
      %v1388 = vshrl.u32 %v442, 16
      %v1390 = vrot.slane %v1388, 1
      %v1391 = vshll.u32 %v442, 16
      %v1393 = vrot.slane %v1391, 2
      %v1394 = vor.u32 %v1390, %v1393
      %v1395 = vsel %vm1301, %v1381, %v1394
      %v1396 = vrot.slane %v443, 1
      %v1397 = vrot.slane %v439, 2
      %v1398 = vor.u32 %v1396, %v1397
      %v1399 = vsel %vm1301, %v1385, %v1398
      %v1401 = vshrl.u32 %v450, 16
      %v1403 = vrot.slane %v1401, 1
      %v1404 = vshll.u32 %v450, 16
      %v1406 = vrot.slane %v1404, 2
      %v1407 = vor.u32 %v1403, %v1406
      %v1408 = vsel %vm1301, %v1394, %v1407
      %v1409 = vrot.slane %v451, 1
      %v1410 = vrot.slane %v447, 2
      %v1411 = vor.u32 %v1409, %v1410
      %v1412 = vsel %vm1301, %v1398, %v1411
      %v1414 = vshrl.u32 %v458, 16
      %v1416 = vrot.slane %v1414, 1
      %v1417 = vshll.u32 %v458, 16
      %v1419 = vrot.slane %v1417, 2
      %v1420 = vor.u32 %v1416, %v1419
      %v1421 = vsel %vm1301, %v1407, %v1420
      %v1422 = vrot.slane %v459, 1
      %v1423 = vrot.slane %v455, 2
      %v1424 = vor.u32 %v1422, %v1423
      %v1425 = vsel %vm1301, %v1411, %v1424
      %v1427 = vshrl.u32 %v466, 16
      %v1429 = vrot.slane %v1427, 1
      %v1430 = vshll.u32 %v466, 16
      %v1432 = vrot.slane %v1430, 2
      %v1433 = vor.u32 %v1429, %v1432
      %v1434 = vsel %vm1301, %v1420, %v1433
      %v1435 = vrot.slane %v467, 1
      %v1436 = vrot.slane %v463, 2
      %v1437 = vor.u32 %v1435, %v1436
      %v1438 = vsel %vm1301, %v1424, %v1437
      %v1440 = vshrl.u32 %v474, 16
      %v1442 = vrot.slane %v1440, 1
      %v1443 = vshll.u32 %v474, 16
      %v1445 = vrot.slane %v1443, 2
      %v1446 = vor.u32 %v1442, %v1445
      %v1447 = vsel %vm1301, %v1433, %v1446
      %v1448 = vrot.slane %v475, 1
      %v1449 = vrot.slane %v471, 2
      %v1450 = vor.u32 %v1448, %v1449
      %v1451 = vsel %vm1301, %v1437, %v1450
      %v1453 = vshrl.u32 %v482, 16
      %v1455 = vrot.slane %v1453, 1
      %v1456 = vshll.u32 %v482, 16
      %v1458 = vrot.slane %v1456, 2
      %v1459 = vor.u32 %v1455, %v1458
      %v1460 = vsel %vm1301, %v1446, %v1459
      %v1461 = vrot.slane %v483, 1
      %v1462 = vrot.slane %v479, 2
      %v1463 = vor.u32 %v1461, %v1462
      %v1464 = vsel %vm1301, %v1450, %v1463
      %v1466 = vshrl.u32 %v490, 16
      %v1468 = vrot.slane %v1466, 1
      %v1469 = vshll.u32 %v490, 16
      %v1471 = vrot.slane %v1469, 2
      %v1472 = vor.u32 %v1468, %v1471
      %v1473 = vsel %vm1301, %v1459, %v1472
      %v1474 = vrot.slane %v491, 1
      %v1475 = vrot.slane %v487, 2
      %v1476 = vor.u32 %v1474, %v1475
      %v1477 = vsel %vm1301, %v1463, %v1476
      %v1479 = vshrl.u32 %v498, 16
      %v1481 = vrot.slane %v1479, 1
      %v1482 = vshll.u32 %v498, 16
      %v1484 = vrot.slane %v1482, 2
      %v1485 = vor.u32 %v1481, %v1484
      %v1486 = vsel %vm1301, %v1472, %v1485
      %v1487 = vrot.slane %v499, 1
      %v1488 = vrot.slane %v495, 2
      %v1489 = vor.u32 %v1487, %v1488
      %v1490 = vsel %vm1301, %v1476, %v1489
      %v1492 = vshrl.u32 %v506, 16
      %v1494 = vrot.slane %v1492, 1
      %v1495 = vshll.u32 %v506, 16
      %v1497 = vrot.slane %v1495, 2
      %v1498 = vor.u32 %v1494, %v1497
      %v1499 = vsel %vm1301, %v1485, %v1498
      %v1500 = vrot.slane %v507, 1
      %v1501 = vrot.slane %v503, 2
      %v1502 = vor.u32 %v1500, %v1501
      %v1503 = vsel %vm1301, %v1489, %v1502
      %v1505 = vshrl.u32 %v514, 16
      %v1507 = vrot.slane %v1505, 1
      %v1508 = vshll.u32 %v514, 16
      %v1510 = vrot.slane %v1508, 2
      %v1511 = vor.u32 %v1507, %v1510
      %v1512 = vsel %vm1301, %v1498, %v1511
      %v1513 = vrot.slane %v515, 1
      %v1514 = vrot.slane %v511, 2
      %v1515 = vor.u32 %v1513, %v1514
      %v1516 = vsel %vm1301, %v1502, %v1515
      %v1518 = vshrl.u32 %v1256, 16
      %v1520 = vrot.slane %v1518, 1
      %v1521 = vshll.u32 %v1256, 16
      %v1523 = vrot.slane %v1521, 2
      %v1524 = vor.u32 %v1520, %v1523
      %v1525 = vsel %vm1301, %v1511, %v1524
      %v1526 = vrot.slane %v1257, 1
      %v1527 = vrot.slane %v1253, 2
      %v1528 = vor.u32 %v1526, %v1527
      %v1529 = vsel %vm1301, %v1515, %v1528
      %v1531 = vshrl.u32 %v1264, 16
      %v1533 = vrot.slane %v1531, 1
      %v1534 = vshll.u32 %v1264, 16
      %v1536 = vrot.slane %v1534, 2
      %v1537 = vor.u32 %v1533, %v1536
      %v1538 = vsel %vm1301, %v1524, %v1537
      %v1539 = vrot.slane %v1265, 1
      %v1540 = vrot.slane %v1261, 2
      %v1541 = vor.u32 %v1539, %v1540
      %v1542 = vsel %vm1301, %v1528, %v1541
      %v1544 = vshrl.u32 %v1267, 16
      %v1546 = vrot.slane %v1544, 1
      %v1547 = vshll.u32 %v1267, 16
      %v1549 = vrot.slane %v1547, 2
      %v1550 = vor.u32 %v1546, %v1549
      %v1551 = vsel %vm1301, %v1537, %v1550
      %v1620 = vunpack.c.l.b16 %v1269
      %v1621 = vunpack.c.l.b16 %v1270
      %v1622 = vunpack.c.l.b16 %v1271
      %v1623 = vunpack.c.l.b16 %v1272
      %v1624 = vunpack.c.l.b16 %v1273
      %v1625 = vunpack.c.l.b16 %v1274
      %v1626 = vunpack.c.l.b16 %v1275
      %v1627 = vunpack.c.l.b16 %v1276
      %v1628 = vunpack.c.l.b16 %v1277
      %v1629 = vunpack.c.l.b16 %v1278
      %v1630 = vunpack.c.l.b16 %v1279
      %v1631 = vunpack.c.l.b16 %v1280
      %v1632 = vunpack.c.l.b16 %v1281
      %v1633 = vunpack.c.l.b16 %v1282
      %v1634 = vunpack.c.l.b16 %v1283
      %v1635 = vunpack.c.l.b16 %v1284
      %v1636 = vunpack.c.l.b16 %v1285
      %v1637 = vunpack.c.l.b16 %v1286
      %v1638 = vunpack.c.l.b16 %v1287
      %v1639 = vunpack.c.l.b16 %v1288
      %v1640 = vunpack.c.l.b16 %v1289
      %v1641 = vunpack.c.l.b16 %v1290
      %v1642 = vunpack.c.l.b16 %v1291
      %v1643 = vunpack.c.l.b16 %v1292
      %v1644 = vunpack.c.l.b16 %v1293
      %v1645 = vunpack.c.l.b16 %v1294
      %v1646 = vunpack.c.l.b16 %v1295
      %v1647 = vunpack.c.l.b16 %v1296
      %v1648 = vunpack.c.l.b16 %v1297
      %v1649 = vunpack.c.l.b16 %v1298
      %v1650 = vunpack.c.l.b16 %v1299
      %v1651 = vunpack.c.l.b16 %v1300
      %v1652 = vpack.c.b16 %v1621, %v1620
      %v1653 = vpack.c.b16 %v1623, %v1622
      %v1654 = vpack.c.b16 %v1625, %v1624
      %v1655 = vpack.c.b16 %v1627, %v1626
      %v1656 = vpack.c.b16 %v1629, %v1628
      %v1657 = vpack.c.b16 %v1631, %v1630
      %v1658 = vpack.c.b16 %v1633, %v1632
      %v1659 = vpack.c.b16 %v1635, %v1634
      %v1660 = vpack.c.b16 %v1637, %v1636
      %v1661 = vpack.c.b16 %v1639, %v1638
      %v1662 = vpack.c.b16 %v1641, %v1640
      %v1663 = vpack.c.b16 %v1643, %v1642
      %v1664 = vpack.c.b16 %v1645, %v1644
      %v1665 = vpack.c.b16 %v1647, %v1646
      %v1666 = vpack.c.b16 %v1649, %v1648
      %v1667 = vpack.c.b16 %v1651, %v1650
      %1684 = vmatprep.subr.bf16.mxu0 0
      %1685 = vmatpush1.bf16.msra.mxu0 %v1652
      %1686 = vmatprep.subr.bf16.mxu0 0
      %1687 = vmatpush1.bf16.msra.mxu0 %v1653
      %1688 = vmatprep.subr.bf16.mxu0 0
      %1689 = vmatpush1.bf16.msra.mxu0 %v1654
      %1690 = vmatprep.subr.bf16.mxu0 0
      %1691 = vmatpush1.bf16.msra.mxu0 %v1655
      %1692 = vmatprep.subr.bf16.mxu0 0
      %1693 = vmatpush1.bf16.msra.mxu0 %v1656
      %1694 = vmatprep.subr.bf16.mxu0 0
      %1695 = vmatpush1.bf16.msra.mxu0 %v1657
      %1696 = vmatprep.subr.bf16.mxu0 0
      %1697 = vmatpush1.bf16.msra.mxu0 %v1658
      %1698 = vmatprep.subr.bf16.mxu0 0
      %1699 = vmatpush1.bf16.msra.mxu0 %v1659
      %1700 = vmatprep.subr.bf16.mxu0 0
      %1701 = vmatpush1.bf16.msra.mxu0 %v1660
      %1702 = vmatprep.subr.bf16.mxu0 0
      %1703 = vmatpush1.bf16.msra.mxu0 %v1661
      %1704 = vmatprep.subr.bf16.mxu0 0
      %1705 = vmatpush1.bf16.msra.mxu0 %v1662
      %1706 = vmatprep.subr.bf16.mxu0 0
      %1707 = vmatpush1.bf16.msra.mxu0 %v1663
      %1708 = vmatprep.subr.bf16.mxu0 0
      %1709 = vmatpush1.bf16.msra.mxu0 %v1664
      %1710 = vmatprep.subr.bf16.mxu0 0
      %1711 = vmatpush1.bf16.msra.mxu0 %v1665
      %1712 = vmatprep.subr.bf16.mxu0 0
      %1713 = vmatpush1.bf16.msra.mxu0 %v1666
      %1714 = vmatprep.subr.bf16.mxu0 0
      %1715 = vmatpush1.bf16.msra.mxu0 %v1667
      %1716 = vmatprep.mubr.bf16.mxu0 %v1330
      %1717 = vmatmul.mubr.bf16.gmra.mrb[0].mxu0 %v1313
      %v1718 = vpop.f32.mrb[0].mxu0
      %v1719 = vadd.f32 0.0, %v1718
      %v1720 = vpop.f32.mrb[0].mxu0
      %v1721 = vpop.f32.mrb[0].mxu0
      %v1722 = vadd.f32 0.0, %v1721
      %v1723 = vpop.f32.mrb[0].mxu0
      %1724 = vmatprep.mubr.bf16.mxu0 %v1343
      %1725 = vmatmul.mubr.bf16.gmra.mrb[0].mxu0 %v1334
      %v1726 = vpop.f32.mrb[0].mxu0
      %v1727 = vadd.f32 0.0, %v1726
      %v1728 = vpop.f32.mrb[0].mxu0
      %v1729 = vpop.f32.mrb[0].mxu0
      %v1730 = vadd.f32 0.0, %v1729
      %v1731 = vpop.f32.mrb[0].mxu0
      %1732 = vmatprep.mubr.bf16.mxu0 %v1356
      %1733 = vmatmul.mubr.bf16.gmra.mrb[0].mxu0 %v1347
      %v1734 = vpop.f32.mrb[0].mxu0
      %v1735 = vadd.f32 0.0, %v1734
      %v1736 = vpop.f32.mrb[0].mxu0
      %v1737 = vpop.f32.mrb[0].mxu0
      %v1738 = vadd.f32 0.0, %v1737
      %v1739 = vpop.f32.mrb[0].mxu0
      %1740 = vmatprep.mubr.bf16.mxu0 %v1369
      %1741 = vmatmul.mubr.bf16.gmra.mrb[0].mxu0 %v1360
      %v1742 = vpop.f32.mrb[0].mxu0
      %v1743 = vadd.f32 0.0, %v1742
      %v1744 = vpop.f32.mrb[0].mxu0
      %v1745 = vpop.f32.mrb[0].mxu0
      %v1746 = vadd.f32 0.0, %v1745
      %v1747 = vpop.f32.mrb[0].mxu0
      %1748 = vmatprep.mubr.bf16.mxu0 %v1382
      %1749 = vmatmul.mubr.bf16.gmra.mrb[0].mxu0 %v1373
      %v1750 = vpop.f32.mrb[0].mxu0
      %v1751 = vadd.f32 0.0, %v1750
      %v1752 = vpop.f32.mrb[0].mxu0
      %v1753 = vpop.f32.mrb[0].mxu0
      %v1754 = vadd.f32 0.0, %v1753
      %v1755 = vpop.f32.mrb[0].mxu0
      %1756 = vmatprep.mubr.bf16.mxu0 %v1395
      %1757 = vmatmul.mubr.bf16.gmra.mrb[0].mxu0 %v1386
      %v1758 = vpop.f32.mrb[0].mxu0
      %v1759 = vadd.f32 0.0, %v1758
      %v1760 = vpop.f32.mrb[0].mxu0
      %v1761 = vpop.f32.mrb[0].mxu0
      %v1762 = vadd.f32 0.0, %v1761
      %v1763 = vpop.f32.mrb[0].mxu0
      %1764 = vmatprep.mubr.bf16.mxu0 %v1408
      %1765 = vmatmul.mubr.bf16.gmra.mrb[0].mxu0 %v1399
      %v1766 = vpop.f32.mrb[0].mxu0
      %v1767 = vadd.f32 0.0, %v1766
      %v1768 = vpop.f32.mrb[0].mxu0
      %v1769 = vpop.f32.mrb[0].mxu0
      %v1770 = vadd.f32 0.0, %v1769
      %v1771 = vpop.f32.mrb[0].mxu0
      %1772 = vmatprep.mubr.bf16.mxu0 %v1421
      %1773 = vmatmul.mubr.bf16.gmra.mrb[0].mxu0 %v1412
      %v1774 = vpop.f32.mrb[0].mxu0
      %v1775 = vadd.f32 0.0, %v1774
      %v1776 = vpop.f32.mrb[0].mxu0
      %v1777 = vpop.f32.mrb[0].mxu0
      %v1778 = vadd.f32 0.0, %v1777
      %v1779 = vpop.f32.mrb[0].mxu0
      %1780 = vmatprep.mubr.bf16.mxu0 %v1434
      %1781 = vmatmul.mubr.bf16.gmra.mrb[0].mxu0 %v1425
      %v1782 = vpop.f32.mrb[0].mxu0
      %v1783 = vadd.f32 0.0, %v1782
      %v1784 = vpop.f32.mrb[0].mxu0
      %v1785 = vpop.f32.mrb[0].mxu0
      %v1786 = vadd.f32 0.0, %v1785
      %v1787 = vpop.f32.mrb[0].mxu0
      %1788 = vmatprep.mubr.bf16.mxu0 %v1447
      %1789 = vmatmul.mubr.bf16.gmra.mrb[0].mxu0 %v1438
      %v1790 = vpop.f32.mrb[0].mxu0
      %v1791 = vadd.f32 0.0, %v1790
      %v1792 = vpop.f32.mrb[0].mxu0
      %v1793 = vpop.f32.mrb[0].mxu0
      %v1794 = vadd.f32 0.0, %v1793
      %v1795 = vpop.f32.mrb[0].mxu0
      %1796 = vmatprep.mubr.bf16.mxu0 %v1460
      %1797 = vmatmul.mubr.bf16.gmra.mrb[0].mxu0 %v1451
      %v1798 = vpop.f32.mrb[0].mxu0
      %v1799 = vadd.f32 0.0, %v1798
      %v1800 = vpop.f32.mrb[0].mxu0
      %v1801 = vpop.f32.mrb[0].mxu0
      %v1802 = vadd.f32 0.0, %v1801
      %v1803 = vpop.f32.mrb[0].mxu0
      %1804 = vmatprep.mubr.bf16.mxu0 %v1473
      %1805 = vmatmul.mubr.bf16.gmra.mrb[0].mxu0 %v1464
      %v1806 = vpop.f32.mrb[0].mxu0
      %v1807 = vadd.f32 0.0, %v1806
      %v1808 = vpop.f32.mrb[0].mxu0
      %v1809 = vpop.f32.mrb[0].mxu0
      %v1810 = vadd.f32 0.0, %v1809
      %v1811 = vpop.f32.mrb[0].mxu0
      %1812 = vmatprep.mubr.bf16.mxu0 %v1486
      %1813 = vmatmul.mubr.bf16.gmra.mrb[0].mxu0 %v1477
      %v1814 = vpop.f32.mrb[0].mxu0
      %v1815 = vadd.f32 0.0, %v1814
      %v1816 = vpop.f32.mrb[0].mxu0
      %v1817 = vpop.f32.mrb[0].mxu0
      %v1818 = vadd.f32 0.0, %v1817
      %v1819 = vpop.f32.mrb[0].mxu0
      %1820 = vmatprep.mubr.bf16.mxu0 %v1499
      %1821 = vmatmul.mubr.bf16.gmra.mrb[0].mxu0 %v1490
      %v1822 = vpop.f32.mrb[0].mxu0
      %v1823 = vadd.f32 0.0, %v1822
      %v1824 = vpop.f32.mrb[0].mxu0
      %v1825 = vpop.f32.mrb[0].mxu0
      %v1826 = vadd.f32 0.0, %v1825
      %v1827 = vpop.f32.mrb[0].mxu0
      %1828 = vmatprep.mubr.bf16.mxu0 %v1512
      %1829 = vmatmul.mubr.bf16.gmra.mrb[0].mxu0 %v1503
      %v1830 = vpop.f32.mrb[0].mxu0
      %v1831 = vadd.f32 0.0, %v1830
      %v1832 = vpop.f32.mrb[0].mxu0
      %v1833 = vpop.f32.mrb[0].mxu0
      %v1834 = vadd.f32 0.0, %v1833
      %v1835 = vpop.f32.mrb[0].mxu0
      %1836 = vmatprep.mubr.bf16.mxu0 %v1525
      %1837 = vmatmul.mubr.bf16.gmra.mrb[0].mxu0 %v1516
      %v1838 = vpop.f32.mrb[0].mxu0
      %v1839 = vadd.f32 0.0, %v1838
      %v1840 = vpop.f32.mrb[0].mxu0
      %v1841 = vpop.f32.mrb[0].mxu0
      %v1842 = vadd.f32 0.0, %v1841
      %v1843 = vpop.f32.mrb[0].mxu0
      %1844 = vmatprep.mubr.bf16.mxu0 %v1538
      %1845 = vmatmul.mubr.bf16.gmra.mrb[0].mxu0 %v1529
      %v1846 = vpop.f32.mrb[0].mxu0
      %v1847 = vadd.f32 0.0, %v1846
      %v1848 = vpop.f32.mrb[0].mxu0
      %v1849 = vpop.f32.mrb[0].mxu0
      %v1850 = vadd.f32 0.0, %v1849
      %v1851 = vpop.f32.mrb[0].mxu0
      %1852 = vmatprep.mubr.bf16.mxu0 %v1551
      %1853 = vmatmul.mubr.bf16.gmra.mrb[0].mxu0 %v1542
      %v1854 = vpop.f32.mrb[0].mxu0
      %v1855 = vadd.f32 0.0, %v1854
      %v1856 = vpop.f32.mrb[0].mxu0
      %v1857 = vpop.f32.mrb[0].mxu0
      %v1858 = vadd.f32 0.0, %v1857
      %v1859 = vpop.f32.mrb[0].mxu0
      %1860 = vdwg.mxu0
      %v1861 = vadd.f32 %v1094, %v1719
      %v1862 = vadd.f32 %v1097, %v1722
      %v1863 = vadd.f32 %v1102, %v1727
      %v1864 = vadd.f32 %v1105, %v1730
      %v1865 = vadd.f32 %v1110, %v1735
      %v1866 = vadd.f32 %v1113, %v1738
      %v1867 = vadd.f32 %v1118, %v1743
      %v1868 = vadd.f32 %v1121, %v1746
      %v1869 = vadd.f32 %v1126, %v1751
      %v1870 = vadd.f32 %v1129, %v1754
      %v1871 = vadd.f32 %v1134, %v1759
      %v1872 = vadd.f32 %v1137, %v1762
      %v1873 = vadd.f32 %v1142, %v1767
      %v1874 = vadd.f32 %v1145, %v1770
      %v1875 = vadd.f32 %v1150, %v1775
      %v1876 = vadd.f32 %v1153, %v1778
      %v1877 = vadd.f32 %v1158, %v1783
      %v1878 = vadd.f32 %v1161, %v1786
      %v1879 = vadd.f32 %v1166, %v1791
      %v1880 = vadd.f32 %v1169, %v1794
      %v1881 = vadd.f32 %v1174, %v1799
      %v1882 = vadd.f32 %v1177, %v1802
      %v1883 = vadd.f32 %v1182, %v1807
      %v1884 = vadd.f32 %v1185, %v1810
      %v1885 = vadd.f32 %v1190, %v1815
      %v1886 = vadd.f32 %v1193, %v1818
      %v1887 = vadd.f32 %v1198, %v1823
      %v1888 = vadd.f32 %v1201, %v1826
      %v1889 = vadd.f32 %v1206, %v1831
      %v1890 = vadd.f32 %v1209, %v1834
      %v1891 = vadd.f32 %v1214, %v1839
      %v1892 = vadd.f32 %v1217, %v1842
      %v1893 = vadd.f32 %v1222, %v1847
      %v1894 = vadd.f32 %v1225, %v1850
      %v1895 = vadd.f32 %v1230, %v1855
      %v1896 = vadd.f32 %v1233, %v1858
      %v1897 = vld [vmem:[%s219 + $0x10] sm:$0xc]
      %v1898 = vld [vmem:[%s219 + $0x14] sm:$0xf]
      %v1899 = vld [vmem:[%s219 + $0x18] sm:$0xf]
      %v1900 = vld [vmem:[%s219 + $0x1c] sm:$0xf]
      %v1901 = vld [vmem:[%s219 + $0x20] sm:$0xf]
      %v1902 = vld [vmem:[%s219 + $0x24] sm:$0xf]
      %v1903 = vld [vmem:[%s219 + $0x28] sm:$0xf]
      %v1904 = vld [vmem:[%s219 + $0x2c] sm:$0xf]
      %v1905 = vld [vmem:[%s219 + $0x30] sm:$0xf]
      %v1906 = vld [vmem:[%s219 + $0x34] sm:$0xf]
      %v1907 = vld [vmem:[%s219 + $0x38] sm:$0xf]
      %v1908 = vld [vmem:[%s219 + $0x3c] sm:$0xf]
      %v1909 = vld [vmem:[%s219 + $0x40] sm:$0xf]
      %v1910 = vld [vmem:[%s219 + $0x44] sm:$0xf]
      %v1911 = vld [vmem:[%s219 + $0x48] sm:$0xf]
      %v1912 = vld [vmem:[%s219 + $0x4c] sm:$0xf]
      %v1913 = vld [vmem:[%s219 + $0x50] sm:$0xf]
      %v1914 = vld [vmem:[%s219 + $0x54] sm:$0xf]
      %v1915 = vld [vmem:[%s219 + $0x58] sm:$0xf]
      %v1916 = vld [vmem:[%s219 + $0x5c] sm:$0xf]
      %v1917 = vld [vmem:[%s219 + $0x60] sm:$0xf]
      %v1918 = vld [vmem:[%s219 + $0x64] sm:$0xf]
      %v1919 = vld [vmem:[%s219 + $0x68] sm:$0xf]
      %v1920 = vld [vmem:[%s219 + $0x6c] sm:$0xf]
      %v1921 = vld [vmem:[%s219 + $0x70] sm:$0xf]
      %v1922 = vld [vmem:[%s219 + $0x74] sm:$0xf]
      %v1923 = vld [vmem:[%s219 + $0x78] sm:$0xf]
      %v1924 = vld [vmem:[%s219 + $0x7c] sm:$0xf]
      %v1925 = vld [vmem:[%s219 + $0x80] sm:$0xf]
      %v1926 = vld [vmem:[%s219 + $0x84] sm:$0xf]
      %v1927 = vld [vmem:[%s219 + $0x88] sm:$0xf]
      %v1928 = vld [vmem:[%s219 + $0x8c] sm:$0xf]
      %v1929 = vld [vmem:[%s219 + $0x90] sm:$0xf]
      %v1930 = vld [vmem:[%s219 + $0x94] sm:$0xf]
      %v1931 = vld [vmem:[%s219 + $0x98] sm:$0xf]
      %v1932 = vld [vmem:[%s219 + $0x9c] sm:$0xf]
      %v1933 = vld [vmem:[%s219 + $0xa0] sm:$0x3]
      %v1934 = vld [vmem:[%s219 + $0xa0] sm:$0x7]
      %v1972 = vunpack.c.l.b16 %v1897
      %v1973 = vunpack.c.l.b16 %v1898
      %v1974 = vunpack.c.l.b16 %v1899
      %v1975 = vunpack.c.l.b16 %v1900
      %v1976 = vunpack.c.l.b16 %v1901
      %v1977 = vunpack.c.l.b16 %v1902
      %v1978 = vunpack.c.l.b16 %v1903
      %v1979 = vunpack.c.l.b16 %v1904
      %v1980 = vunpack.c.l.b16 %v1905
      %v1981 = vunpack.c.l.b16 %v1906
      %v1982 = vunpack.c.l.b16 %v1907
      %v1983 = vunpack.c.l.b16 %v1908
      %v1984 = vunpack.c.l.b16 %v1909
      %v1985 = vunpack.c.l.b16 %v1910
      %v1986 = vunpack.c.l.b16 %v1911
      %v1987 = vunpack.c.l.b16 %v1912
      %v1988 = vunpack.c.l.b16 %v1913
      %v1989 = vunpack.c.l.b16 %v1914
      %v1990 = vunpack.c.l.b16 %v1915
      %v1991 = vunpack.c.l.b16 %v1916
      %v1992 = vunpack.c.l.b16 %v1917
      %v1993 = vunpack.c.l.b16 %v1918
      %v1994 = vunpack.c.l.b16 %v1919
      %v1995 = vunpack.c.l.b16 %v1920
      %v1996 = vunpack.c.l.b16 %v1921
      %v1997 = vunpack.c.l.b16 %v1922
      %v1998 = vunpack.c.l.b16 %v1923
      %v1999 = vunpack.c.l.b16 %v1924
      %v2000 = vunpack.c.l.b16 %v1925
      %v2001 = vunpack.c.l.b16 %v1926
      %v2002 = vunpack.c.l.b16 %v1927
      %v2003 = vunpack.c.l.b16 %v1928
      %v2004 = vunpack.c.l.b16 %v1929
      %v2005 = vunpack.c.l.b16 %v1930
      %v2006 = vunpack.c.l.b16 %v1931
      %v2007 = vunpack.c.l.b16 %v1932
      %v2008 = vunpack.c.l.b16 %v1933
      %v2009 = vpack.c.b16 %v1973, %v1972
      %v2010 = vpack.c.b16 %v1975, %v1974
      %v2011 = vpack.c.b16 %v1977, %v1976
      %v2012 = vpack.c.b16 %v1979, %v1978
      %v2013 = vpack.c.b16 %v1981, %v1980
      %v2014 = vpack.c.b16 %v1983, %v1982
      %v2015 = vpack.c.b16 %v1985, %v1984
      %v2016 = vpack.c.b16 %v1987, %v1986
      %v2017 = vpack.c.b16 %v1989, %v1988
      %v2018 = vpack.c.b16 %v1991, %v1990
      %v2019 = vpack.c.b16 %v1993, %v1992
      %v2020 = vpack.c.b16 %v1995, %v1994
      %v2021 = vpack.c.b16 %v1997, %v1996
      %v2022 = vpack.c.b16 %v1999, %v1998
      %v2023 = vpack.c.b16 %v2001, %v2000
      %v2024 = vpack.c.b16 %v2003, %v2002
      %v2025 = vpack.c.b16 %v2005, %v2004
      %v2026 = vpack.c.b16 %v2007, %v2006
      %v2027 = vpack.c.b16 %v2008, %v2008
      %v2029 = vunpack.c.l.b16 %v1934
      %v2030 = vpack.c.b16 %v2029, %v2029
      %v2032 = vshrl.u32 %v2009, 16
      %v2034 = vshll.u32 %v2009, 16
      %v2036 = vrot.slane %v2034, 1
      %v2037 = vor.u32 %v2032, %v2036
      %v2039 = vshll.u32 %v2010, 16
      %v2041 = vrot.slane %v2039, 1
      %v2042 = vsel %vm374, %v2037, %v2041
      %v2043 = vshrl.u32 %v2010, 16
      %v2045 = vor.u32 %v2043, %v2041
      %v2047 = vshll.u32 %v2011, 16
      %v2049 = vrot.slane %v2047, 1
      %v2050 = vsel %vm374, %v2045, %v2049
      %v2051 = vshrl.u32 %v2011, 16
      %v2053 = vor.u32 %v2051, %v2049
      %v2055 = vshll.u32 %v2012, 16
      %v2057 = vrot.slane %v2055, 1
      %v2058 = vsel %vm374, %v2053, %v2057
      %v2059 = vshrl.u32 %v2012, 16
      %v2061 = vor.u32 %v2059, %v2057
      %v2063 = vshll.u32 %v2013, 16
      %v2065 = vrot.slane %v2063, 1
      %v2066 = vsel %vm374, %v2061, %v2065
      %v2067 = vshrl.u32 %v2013, 16
      %v2069 = vor.u32 %v2067, %v2065
      %v2071 = vshll.u32 %v2014, 16
      %v2073 = vrot.slane %v2071, 1
      %v2074 = vsel %vm374, %v2069, %v2073
      %v2075 = vshrl.u32 %v2014, 16
      %v2077 = vor.u32 %v2075, %v2073
      %v2079 = vshll.u32 %v2015, 16
      %v2081 = vrot.slane %v2079, 1
      %v2082 = vsel %vm374, %v2077, %v2081
      %v2083 = vshrl.u32 %v2015, 16
      %v2085 = vor.u32 %v2083, %v2081
      %v2087 = vshll.u32 %v2016, 16
      %v2089 = vrot.slane %v2087, 1
      %v2090 = vsel %vm374, %v2085, %v2089
      %v2091 = vshrl.u32 %v2016, 16
      %v2093 = vor.u32 %v2091, %v2089
      %v2095 = vshll.u32 %v2017, 16
      %v2097 = vrot.slane %v2095, 1
      %v2098 = vsel %vm374, %v2093, %v2097
      %v2099 = vshrl.u32 %v2017, 16
      %v2101 = vor.u32 %v2099, %v2097
      %v2103 = vshll.u32 %v2018, 16
      %v2105 = vrot.slane %v2103, 1
      %v2106 = vsel %vm374, %v2101, %v2105
      %v2107 = vshrl.u32 %v2018, 16
      %v2109 = vor.u32 %v2107, %v2105
      %v2111 = vshll.u32 %v2019, 16
      %v2113 = vrot.slane %v2111, 1
      %v2114 = vsel %vm374, %v2109, %v2113
      %v2115 = vshrl.u32 %v2019, 16
      %v2117 = vor.u32 %v2115, %v2113
      %v2119 = vshll.u32 %v2020, 16
      %v2121 = vrot.slane %v2119, 1
      %v2122 = vsel %vm374, %v2117, %v2121
      %v2123 = vshrl.u32 %v2020, 16
      %v2125 = vor.u32 %v2123, %v2121
      %v2127 = vshll.u32 %v2021, 16
      %v2129 = vrot.slane %v2127, 1
      %v2130 = vsel %vm374, %v2125, %v2129
      %v2131 = vshrl.u32 %v2021, 16
      %v2133 = vor.u32 %v2131, %v2129
      %v2135 = vshll.u32 %v2022, 16
      %v2137 = vrot.slane %v2135, 1
      %v2138 = vsel %vm374, %v2133, %v2137
      %v2139 = vshrl.u32 %v2022, 16
      %v2141 = vor.u32 %v2139, %v2137
      %v2143 = vshll.u32 %v2023, 16
      %v2145 = vrot.slane %v2143, 1
      %v2146 = vsel %vm374, %v2141, %v2145
      %v2147 = vshrl.u32 %v2023, 16
      %v2149 = vor.u32 %v2147, %v2145
      %v2151 = vshll.u32 %v2024, 16
      %v2153 = vrot.slane %v2151, 1
      %v2154 = vsel %vm374, %v2149, %v2153
      %v2155 = vshrl.u32 %v2024, 16
      %v2157 = vor.u32 %v2155, %v2153
      %v2159 = vshll.u32 %v2025, 16
      %v2161 = vrot.slane %v2159, 1
      %v2162 = vsel %vm374, %v2157, %v2161
      %v2163 = vshrl.u32 %v2025, 16
      %v2165 = vor.u32 %v2163, %v2161
      %v2167 = vshll.u32 %v2026, 16
      %v2169 = vrot.slane %v2167, 1
      %v2170 = vsel %vm374, %v2165, %v2169
      %v2171 = vshrl.u32 %v2026, 16
      %v2173 = vor.u32 %v2171, %v2169
      %v2175 = vshll.u32 %v2030, 16
      %v2177 = vrot.slane %v2175, 1
      %v2178 = vsel %vm374, %v2173, %v2177
      %v2179 = vshrl.u32 %v2030, 16
      %v2181 = vor.u32 %v2179, %v2177
      %s2182 = scalar_lea.vmem %s1, 384
      %v2183 = vld [vmem:[%s2182] sm:$0xf]
      %v2184 = vld [vmem:[%s2182 + $0x4] sm:$0xf]
      %v2185 = vld [vmem:[%s2182 + $0x8] sm:$0xf]
      %v2186 = vld [vmem:[%s2182 + $0xc] sm:$0xf]
      %v2187 = vld [vmem:[%s2182 + $0x10] sm:$0xf]
      %v2188 = vld [vmem:[%s2182 + $0x14] sm:$0xf]
      %v2189 = vld [vmem:[%s2182 + $0x18] sm:$0xf]
      %v2190 = vld [vmem:[%s2182 + $0x1c] sm:$0xf]
      %v2191 = vld [vmem:[%s2182 + $0x20] sm:$0xf]
      %v2192 = vld [vmem:[%s2182 + $0x24] sm:$0xf]
      %v2193 = vld [vmem:[%s2182 + $0x28] sm:$0xf]
      %v2194 = vld [vmem:[%s2182 + $0x2c] sm:$0xf]
      %v2195 = vld [vmem:[%s2182 + $0x30] sm:$0xf]
      %v2196 = vld [vmem:[%s2182 + $0x34] sm:$0xf]
      %v2197 = vld [vmem:[%s2182 + $0x38] sm:$0xf]
      %v2198 = vld [vmem:[%s2182 + $0x3c] sm:$0xf]
      %v2199 = vld [vmem:[%s2182 + $0x40] sm:$0xf]
      %v2200 = vld [vmem:[%s2182 + $0x44] sm:$0xf]
      %v2201 = vld [vmem:[%s2182 + $0x48] sm:$0xf]
      %v2202 = vld [vmem:[%s2182 + $0x4c] sm:$0xf]
      %v2203 = vld [vmem:[%s2182 + $0x50] sm:$0xf]
      %v2204 = vld [vmem:[%s2182 + $0x54] sm:$0xf]
      %v2205 = vld [vmem:[%s2182 + $0x58] sm:$0xf]
      %v2206 = vld [vmem:[%s2182 + $0x5c] sm:$0xf]
      %v2207 = vld [vmem:[%s2182 + $0x60] sm:$0xf]
      %v2208 = vld [vmem:[%s2182 + $0x64] sm:$0xf]
      %v2209 = vld [vmem:[%s2182 + $0x68] sm:$0xf]
      %v2210 = vld [vmem:[%s2182 + $0x6c] sm:$0xf]
      %v2211 = vld [vmem:[%s2182 + $0x70] sm:$0xf]
      %v2212 = vld [vmem:[%s2182 + $0x74] sm:$0xf]
      %v2213 = vld [vmem:[%s2182 + $0x78] sm:$0xf]
      %v2214 = vld [vmem:[%s2182 + $0x7c] sm:$0xf]
      %vm2215 = vcmask 1045504
      %v2216 = vrot.slane %v2009, 2
      %v2217 = vrot.slane %v2010, 2
      %v2218 = vsel %vm2215, %v2216, %v2217
      %v2219 = vrot.slane %v2042, 2
      %v2220 = vrot.slane %v2050, 2
      %v2221 = vsel %vm2215, %v2219, %v2220
      %v2222 = vrot.slane %v2011, 2
      %v2223 = vsel %vm2215, %v2217, %v2222
      %v2224 = vrot.slane %v2058, 2
      %v2225 = vsel %vm2215, %v2220, %v2224
      %v2226 = vrot.slane %v2012, 2
      %v2227 = vsel %vm2215, %v2222, %v2226
      %v2228 = vrot.slane %v2066, 2
      %v2229 = vsel %vm2215, %v2224, %v2228
      %v2230 = vrot.slane %v2013, 2
      %v2231 = vsel %vm2215, %v2226, %v2230
      %v2232 = vrot.slane %v2074, 2
      %v2233 = vsel %vm2215, %v2228, %v2232
      %v2234 = vrot.slane %v2014, 2
      %v2235 = vsel %vm2215, %v2230, %v2234
      %v2236 = vrot.slane %v2082, 2
      %v2237 = vsel %vm2215, %v2232, %v2236
      %v2238 = vrot.slane %v2015, 2
      %v2239 = vsel %vm2215, %v2234, %v2238
      %v2240 = vrot.slane %v2090, 2
      %v2241 = vsel %vm2215, %v2236, %v2240
      %v2242 = vrot.slane %v2016, 2
      %v2243 = vsel %vm2215, %v2238, %v2242
      %v2244 = vrot.slane %v2098, 2
      %v2245 = vsel %vm2215, %v2240, %v2244
      %v2246 = vrot.slane %v2017, 2
      %v2247 = vsel %vm2215, %v2242, %v2246
      %v2248 = vrot.slane %v2106, 2
      %v2249 = vsel %vm2215, %v2244, %v2248
      %v2250 = vrot.slane %v2018, 2
      %v2251 = vsel %vm2215, %v2246, %v2250
      %v2252 = vrot.slane %v2114, 2
      %v2253 = vsel %vm2215, %v2248, %v2252
      %v2254 = vrot.slane %v2019, 2
      %v2255 = vsel %vm2215, %v2250, %v2254
      %v2256 = vrot.slane %v2122, 2
      %v2257 = vsel %vm2215, %v2252, %v2256
      %v2258 = vrot.slane %v2020, 2
      %v2259 = vsel %vm2215, %v2254, %v2258
      %v2260 = vrot.slane %v2130, 2
      %v2261 = vsel %vm2215, %v2256, %v2260
      %v2262 = vrot.slane %v2021, 2
      %v2263 = vsel %vm2215, %v2258, %v2262
      %v2264 = vrot.slane %v2138, 2
      %v2265 = vsel %vm2215, %v2260, %v2264
      %v2266 = vrot.slane %v2022, 2
      %v2267 = vsel %vm2215, %v2262, %v2266
      %v2268 = vrot.slane %v2146, 2
      %v2269 = vsel %vm2215, %v2264, %v2268
      %v2270 = vrot.slane %v2023, 2
      %v2271 = vsel %vm2215, %v2266, %v2270
      %v2272 = vrot.slane %v2154, 2
      %v2273 = vsel %vm2215, %v2268, %v2272
      %v2274 = vrot.slane %v2024, 2
      %v2275 = vsel %vm2215, %v2270, %v2274
      %v2276 = vrot.slane %v2162, 2
      %v2277 = vsel %vm2215, %v2272, %v2276
      %v2278 = vrot.slane %v2025, 2
      %v2279 = vsel %vm2215, %v2274, %v2278
      %v2280 = vrot.slane %v2170, 2
      %v2281 = vsel %vm2215, %v2276, %v2280
      %v2282 = vrot.slane %v2026, 2
      %v2283 = vsel %vm2215, %v2278, %v2282
      %v2284 = vrot.slane %v2178, 2
      %v2285 = vsel %vm2215, %v2280, %v2284
      %v2286 = vrot.slane %v2027, 2
      %v2287 = vsel %vm2215, %v2282, %v2286
      %v2288 = vrot.slane %v2181, 2
      %v2289 = vsel %vm2215, %v2284, %v2288
      %v2358 = vunpack.c.l.b16 %v2183
      %v2359 = vunpack.c.l.b16 %v2184
      %v2360 = vunpack.c.l.b16 %v2185
      %v2361 = vunpack.c.l.b16 %v2186
      %v2362 = vunpack.c.l.b16 %v2187
      %v2363 = vunpack.c.l.b16 %v2188
      %v2364 = vunpack.c.l.b16 %v2189
      %v2365 = vunpack.c.l.b16 %v2190
      %v2366 = vunpack.c.l.b16 %v2191
      %v2367 = vunpack.c.l.b16 %v2192
      %v2368 = vunpack.c.l.b16 %v2193
      %v2369 = vunpack.c.l.b16 %v2194
      %v2370 = vunpack.c.l.b16 %v2195
      %v2371 = vunpack.c.l.b16 %v2196
      %v2372 = vunpack.c.l.b16 %v2197
      %v2373 = vunpack.c.l.b16 %v2198
      %v2374 = vunpack.c.l.b16 %v2199
      %v2375 = vunpack.c.l.b16 %v2200
      %v2376 = vunpack.c.l.b16 %v2201
      %v2377 = vunpack.c.l.b16 %v2202
      %v2378 = vunpack.c.l.b16 %v2203
      %v2379 = vunpack.c.l.b16 %v2204
      %v2380 = vunpack.c.l.b16 %v2205
      %v2381 = vunpack.c.l.b16 %v2206
      %v2382 = vunpack.c.l.b16 %v2207
      %v2383 = vunpack.c.l.b16 %v2208
      %v2384 = vunpack.c.l.b16 %v2209
      %v2385 = vunpack.c.l.b16 %v2210
      %v2386 = vunpack.c.l.b16 %v2211
      %v2387 = vunpack.c.l.b16 %v2212
      %v2388 = vunpack.c.l.b16 %v2213
      %v2389 = vunpack.c.l.b16 %v2214
      %v2390 = vpack.c.b16 %v2359, %v2358
      %v2391 = vpack.c.b16 %v2361, %v2360
      %v2392 = vpack.c.b16 %v2363, %v2362
      %v2393 = vpack.c.b16 %v2365, %v2364
      %v2394 = vpack.c.b16 %v2367, %v2366
      %v2395 = vpack.c.b16 %v2369, %v2368
      %v2396 = vpack.c.b16 %v2371, %v2370
      %v2397 = vpack.c.b16 %v2373, %v2372
      %v2398 = vpack.c.b16 %v2375, %v2374
      %v2399 = vpack.c.b16 %v2377, %v2376
      %v2400 = vpack.c.b16 %v2379, %v2378
      %v2401 = vpack.c.b16 %v2381, %v2380
      %v2402 = vpack.c.b16 %v2383, %v2382
      %v2403 = vpack.c.b16 %v2385, %v2384
      %v2404 = vpack.c.b16 %v2387, %v2386
      %v2405 = vpack.c.b16 %v2389, %v2388
      %2422 = vmatprep.subr.bf16.mxu0 0
      %2423 = vmatpush1.bf16.msra.mxu0 %v2390
      %2424 = vmatprep.subr.bf16.mxu0 0
      %2425 = vmatpush1.bf16.msra.mxu0 %v2391
      %2426 = vmatprep.subr.bf16.mxu0 0
      %2427 = vmatpush1.bf16.msra.mxu0 %v2392
      %2428 = vmatprep.subr.bf16.mxu0 0
      %2429 = vmatpush1.bf16.msra.mxu0 %v2393
      %2430 = vmatprep.subr.bf16.mxu0 0
      %2431 = vmatpush1.bf16.msra.mxu0 %v2394
      %2432 = vmatprep.subr.bf16.mxu0 0
      %2433 = vmatpush1.bf16.msra.mxu0 %v2395
      %2434 = vmatprep.subr.bf16.mxu0 0
      %2435 = vmatpush1.bf16.msra.mxu0 %v2396
      %2436 = vmatprep.subr.bf16.mxu0 0
      %2437 = vmatpush1.bf16.msra.mxu0 %v2397
      %2438 = vmatprep.subr.bf16.mxu0 0
      %2439 = vmatpush1.bf16.msra.mxu0 %v2398
      %2440 = vmatprep.subr.bf16.mxu0 0
      %2441 = vmatpush1.bf16.msra.mxu0 %v2399
      %2442 = vmatprep.subr.bf16.mxu0 0
      %2443 = vmatpush1.bf16.msra.mxu0 %v2400
      %2444 = vmatprep.subr.bf16.mxu0 0
      %2445 = vmatpush1.bf16.msra.mxu0 %v2401
      %2446 = vmatprep.subr.bf16.mxu0 0
      %2447 = vmatpush1.bf16.msra.mxu0 %v2402
      %2448 = vmatprep.subr.bf16.mxu0 0
      %2449 = vmatpush1.bf16.msra.mxu0 %v2403
      %2450 = vmatprep.subr.bf16.mxu0 0
      %2451 = vmatpush1.bf16.msra.mxu0 %v2404
      %2452 = vmatprep.subr.bf16.mxu0 0
      %2453 = vmatpush1.bf16.msra.mxu0 %v2405
      %2454 = vmatprep.mubr.bf16.mxu0 %v2221
      %2455 = vmatmul.mubr.bf16.gmra.mrb[0].mxu0 %v2218
      %v2456 = vpop.f32.mrb[0].mxu0
      %v2457 = vadd.f32 0.0, %v2456
      %v2458 = vpop.f32.mrb[0].mxu0
      %v2459 = vpop.f32.mrb[0].mxu0
      %v2460 = vadd.f32 0.0, %v2459
      %v2461 = vpop.f32.mrb[0].mxu0
      %2462 = vmatprep.mubr.bf16.mxu0 %v2225
      %2463 = vmatmul.mubr.bf16.gmra.mrb[0].mxu0 %v2223
      %v2464 = vpop.f32.mrb[0].mxu0
      %v2465 = vadd.f32 0.0, %v2464
      %v2466 = vpop.f32.mrb[0].mxu0
      %v2467 = vpop.f32.mrb[0].mxu0
      %v2468 = vadd.f32 0.0, %v2467
      %v2469 = vpop.f32.mrb[0].mxu0
      %2470 = vmatprep.mubr.bf16.mxu0 %v2229
      %2471 = vmatmul.mubr.bf16.gmra.mrb[0].mxu0 %v2227
      %v2472 = vpop.f32.mrb[0].mxu0
      %v2473 = vadd.f32 0.0, %v2472
      %v2474 = vpop.f32.mrb[0].mxu0
      %v2475 = vpop.f32.mrb[0].mxu0
      %v2476 = vadd.f32 0.0, %v2475
      %v2477 = vpop.f32.mrb[0].mxu0
      %2478 = vmatprep.mubr.bf16.mxu0 %v2233
      %2479 = vmatmul.mubr.bf16.gmra.mrb[0].mxu0 %v2231
      %v2480 = vpop.f32.mrb[0].mxu0
      %v2481 = vadd.f32 0.0, %v2480
      %v2482 = vpop.f32.mrb[0].mxu0
      %v2483 = vpop.f32.mrb[0].mxu0
      %v2484 = vadd.f32 0.0, %v2483
      %v2485 = vpop.f32.mrb[0].mxu0
      %2486 = vmatprep.mubr.bf16.mxu0 %v2237
      %2487 = vmatmul.mubr.bf16.gmra.mrb[0].mxu0 %v2235
      %v2488 = vpop.f32.mrb[0].mxu0
      %v2489 = vadd.f32 0.0, %v2488
      %v2490 = vpop.f32.mrb[0].mxu0
      %v2491 = vpop.f32.mrb[0].mxu0
      %v2492 = vadd.f32 0.0, %v2491
      %v2493 = vpop.f32.mrb[0].mxu0
      %2494 = vmatprep.mubr.bf16.mxu0 %v2241
      %2495 = vmatmul.mubr.bf16.gmra.mrb[0].mxu0 %v2239
      %v2496 = vpop.f32.mrb[0].mxu0
      %v2497 = vadd.f32 0.0, %v2496
      %v2498 = vpop.f32.mrb[0].mxu0
      %v2499 = vpop.f32.mrb[0].mxu0
      %v2500 = vadd.f32 0.0, %v2499
      %v2501 = vpop.f32.mrb[0].mxu0
      %2502 = vmatprep.mubr.bf16.mxu0 %v2245
      %2503 = vmatmul.mubr.bf16.gmra.mrb[0].mxu0 %v2243
      %v2504 = vpop.f32.mrb[0].mxu0
      %v2505 = vadd.f32 0.0, %v2504
      %v2506 = vpop.f32.mrb[0].mxu0
      %v2507 = vpop.f32.mrb[0].mxu0
      %v2508 = vadd.f32 0.0, %v2507
      %v2509 = vpop.f32.mrb[0].mxu0
      %2510 = vmatprep.mubr.bf16.mxu0 %v2249
      %2511 = vmatmul.mubr.bf16.gmra.mrb[0].mxu0 %v2247
      %v2512 = vpop.f32.mrb[0].mxu0
      %v2513 = vadd.f32 0.0, %v2512
      %v2514 = vpop.f32.mrb[0].mxu0
      %v2515 = vpop.f32.mrb[0].mxu0
      %v2516 = vadd.f32 0.0, %v2515
      %v2517 = vpop.f32.mrb[0].mxu0
      %2518 = vmatprep.mubr.bf16.mxu0 %v2253
      %2519 = vmatmul.mubr.bf16.gmra.mrb[0].mxu0 %v2251
      %v2520 = vpop.f32.mrb[0].mxu0
      %v2521 = vadd.f32 0.0, %v2520
      %v2522 = vpop.f32.mrb[0].mxu0
      %v2523 = vpop.f32.mrb[0].mxu0
      %v2524 = vadd.f32 0.0, %v2523
      %v2525 = vpop.f32.mrb[0].mxu0
      %2526 = vmatprep.mubr.bf16.mxu0 %v2257
      %2527 = vmatmul.mubr.bf16.gmra.mrb[0].mxu0 %v2255
      %v2528 = vpop.f32.mrb[0].mxu0
      %v2529 = vadd.f32 0.0, %v2528
      %v2530 = vpop.f32.mrb[0].mxu0
      %v2531 = vpop.f32.mrb[0].mxu0
      %v2532 = vadd.f32 0.0, %v2531
      %v2533 = vpop.f32.mrb[0].mxu0
      %2534 = vmatprep.mubr.bf16.mxu0 %v2261
      %2535 = vmatmul.mubr.bf16.gmra.mrb[0].mxu0 %v2259
      %v2536 = vpop.f32.mrb[0].mxu0
      %v2537 = vadd.f32 0.0, %v2536
      %v2538 = vpop.f32.mrb[0].mxu0
      %v2539 = vpop.f32.mrb[0].mxu0
      %v2540 = vadd.f32 0.0, %v2539
      %v2541 = vpop.f32.mrb[0].mxu0
      %2542 = vmatprep.mubr.bf16.mxu0 %v2265
      %2543 = vmatmul.mubr.bf16.gmra.mrb[0].mxu0 %v2263
      %v2544 = vpop.f32.mrb[0].mxu0
      %v2545 = vadd.f32 0.0, %v2544
      %v2546 = vpop.f32.mrb[0].mxu0
      %v2547 = vpop.f32.mrb[0].mxu0
      %v2548 = vadd.f32 0.0, %v2547
      %v2549 = vpop.f32.mrb[0].mxu0
      %2550 = vmatprep.mubr.bf16.mxu0 %v2269
      %2551 = vmatmul.mubr.bf16.gmra.mrb[0].mxu0 %v2267
      %v2552 = vpop.f32.mrb[0].mxu0
      %v2553 = vadd.f32 0.0, %v2552
      %v2554 = vpop.f32.mrb[0].mxu0
      %v2555 = vpop.f32.mrb[0].mxu0
      %v2556 = vadd.f32 0.0, %v2555
      %v2557 = vpop.f32.mrb[0].mxu0
      %2558 = vmatprep.mubr.bf16.mxu0 %v2273
      %2559 = vmatmul.mubr.bf16.gmra.mrb[0].mxu0 %v2271
      %v2560 = vpop.f32.mrb[0].mxu0
      %v2561 = vadd.f32 0.0, %v2560
      %v2562 = vpop.f32.mrb[0].mxu0
      %v2563 = vpop.f32.mrb[0].mxu0
      %v2564 = vadd.f32 0.0, %v2563
      %v2565 = vpop.f32.mrb[0].mxu0
      %2566 = vmatprep.mubr.bf16.mxu0 %v2277
      %2567 = vmatmul.mubr.bf16.gmra.mrb[0].mxu0 %v2275
      %v2568 = vpop.f32.mrb[0].mxu0
      %v2569 = vadd.f32 0.0, %v2568
      %v2570 = vpop.f32.mrb[0].mxu0
      %v2571 = vpop.f32.mrb[0].mxu0
      %v2572 = vadd.f32 0.0, %v2571
      %v2573 = vpop.f32.mrb[0].mxu0
      %2574 = vmatprep.mubr.bf16.mxu0 %v2281
      %2575 = vmatmul.mubr.bf16.gmra.mrb[0].mxu0 %v2279
      %v2576 = vpop.f32.mrb[0].mxu0
      %v2577 = vadd.f32 0.0, %v2576
      %v2578 = vpop.f32.mrb[0].mxu0
      %v2579 = vpop.f32.mrb[0].mxu0
      %v2580 = vadd.f32 0.0, %v2579
      %v2581 = vpop.f32.mrb[0].mxu0
      %2582 = vmatprep.mubr.bf16.mxu0 %v2285
      %2583 = vmatmul.mubr.bf16.gmra.mrb[0].mxu0 %v2283
      %v2584 = vpop.f32.mrb[0].mxu0
      %v2585 = vadd.f32 0.0, %v2584
      %v2586 = vpop.f32.mrb[0].mxu0
      %v2587 = vpop.f32.mrb[0].mxu0
      %v2588 = vadd.f32 0.0, %v2587
      %v2589 = vpop.f32.mrb[0].mxu0
      %2590 = vmatprep.mubr.bf16.mxu0 %v2289
      %2591 = vmatmul.mubr.bf16.gmra.mrb[0].mxu0 %v2287
      %v2592 = vpop.f32.mrb[0].mxu0
      %v2593 = vadd.f32 0.0, %v2592
      %v2594 = vpop.f32.mrb[0].mxu0
      %v2595 = vpop.f32.mrb[0].mxu0
      %v2596 = vadd.f32 0.0, %v2595
      %v2597 = vpop.f32.mrb[0].mxu0
      %2598 = vdwg.mxu0
      %v2599 = vadd.f32 %v1861, %v2457
      %v2600 = vadd.f32 %v1862, %v2460
      %v2601 = vadd.f32 %v1863, %v2465
      %v2602 = vadd.f32 %v1864, %v2468
      %v2603 = vadd.f32 %v1865, %v2473
      %v2604 = vadd.f32 %v1866, %v2476
      %v2605 = vadd.f32 %v1867, %v2481
      %v2606 = vadd.f32 %v1868, %v2484
      %v2607 = vadd.f32 %v1869, %v2489
      %v2608 = vadd.f32 %v1870, %v2492
      %v2609 = vadd.f32 %v1871, %v2497
      %v2610 = vadd.f32 %v1872, %v2500
      %v2611 = vadd.f32 %v1873, %v2505
      %v2612 = vadd.f32 %v1874, %v2508
      %v2613 = vadd.f32 %v1875, %v2513
      %v2614 = vadd.f32 %v1876, %v2516
      %v2615 = vadd.f32 %v1877, %v2521
      %v2616 = vadd.f32 %v1878, %v2524
      %v2617 = vadd.f32 %v1879, %v2529
      %v2618 = vadd.f32 %v1880, %v2532
      %v2619 = vadd.f32 %v1881, %v2537
      %v2620 = vadd.f32 %v1882, %v2540
      %v2621 = vadd.f32 %v1883, %v2545
      %v2622 = vadd.f32 %v1884, %v2548
      %v2623 = vadd.f32 %v1885, %v2553
      %v2624 = vadd.f32 %v1886, %v2556
      %v2625 = vadd.f32 %v1887, %v2561
      %v2626 = vadd.f32 %v1888, %v2564
      %v2627 = vadd.f32 %v1889, %v2569
      %v2628 = vadd.f32 %v1890, %v2572
      %v2629 = vadd.f32 %v1891, %v2577
      %v2630 = vadd.f32 %v1892, %v2580
      %v2631 = vadd.f32 %v1893, %v2585
      %v2632 = vadd.f32 %v1894, %v2588
      %v2633 = vadd.f32 %v1895, %v2593
      %v2634 = vadd.f32 %v1896, %v2596
      %v2635 = vld [vmem:[%s219 + $0x10] sm:$0x8]
      %s2636 = scalar_lea.vmem %s1, 512
      %v2637 = vld [vmem:[%s2636] sm:$0xf]
      %v2638 = vld [vmem:[%s2636 + $0x4] sm:$0xf]
      %v2639 = vld [vmem:[%s2636 + $0x8] sm:$0xf]
      %v2640 = vld [vmem:[%s2636 + $0xc] sm:$0xf]
      %v2641 = vld [vmem:[%s2636 + $0x10] sm:$0xf]
      %v2642 = vld [vmem:[%s2636 + $0x14] sm:$0xf]
      %v2643 = vld [vmem:[%s2636 + $0x18] sm:$0xf]
      %v2644 = vld [vmem:[%s2636 + $0x1c] sm:$0xf]
      %v2645 = vld [vmem:[%s2636 + $0x20] sm:$0xf]
      %v2646 = vld [vmem:[%s2636 + $0x24] sm:$0xf]
      %v2647 = vld [vmem:[%s2636 + $0x28] sm:$0xf]
      %v2648 = vld [vmem:[%s2636 + $0x2c] sm:$0xf]
      %v2649 = vld [vmem:[%s2636 + $0x30] sm:$0xf]
      %v2650 = vld [vmem:[%s2636 + $0x34] sm:$0xf]
      %v2651 = vld [vmem:[%s2636 + $0x38] sm:$0xf]
      %v2652 = vld [vmem:[%s2636 + $0x3c] sm:$0xf]
      %v2654 = vunpack.c.l.b16 %v2635
      %v2655 = vpack.c.b16 %v1973, %v2654
      %vm2656 = vcmask 1044480
      %v2657 = vrot.slane %v2655, 3
      %v2658 = vrot.slane %v2010, 3
      %v2659 = vsel %vm2656, %v2657, %v2658
      %v2660 = vrot.slane %v2011, 3
      %v2661 = vsel %vm2656, %v2658, %v2660
      %v2662 = vrot.slane %v2012, 3
      %v2663 = vsel %vm2656, %v2660, %v2662
      %v2664 = vrot.slane %v2013, 3
      %v2665 = vsel %vm2656, %v2662, %v2664
      %v2666 = vrot.slane %v2014, 3
      %v2667 = vsel %vm2656, %v2664, %v2666
      %v2668 = vrot.slane %v2015, 3
      %v2669 = vsel %vm2656, %v2666, %v2668
      %v2670 = vrot.slane %v2016, 3
      %v2671 = vsel %vm2656, %v2668, %v2670
      %v2672 = vrot.slane %v2017, 3
      %v2673 = vsel %vm2656, %v2670, %v2672
      %v2674 = vrot.slane %v2018, 3
      %v2675 = vsel %vm2656, %v2672, %v2674
      %v2676 = vrot.slane %v2019, 3
      %v2677 = vsel %vm2656, %v2674, %v2676
      %v2678 = vrot.slane %v2020, 3
      %v2679 = vsel %vm2656, %v2676, %v2678
      %v2680 = vrot.slane %v2021, 3
      %v2681 = vsel %vm2656, %v2678, %v2680
      %v2682 = vrot.slane %v2022, 3
      %v2683 = vsel %vm2656, %v2680, %v2682
      %v2684 = vrot.slane %v2023, 3
      %v2685 = vsel %vm2656, %v2682, %v2684
      %v2686 = vrot.slane %v2024, 3
      %v2687 = vsel %vm2656, %v2684, %v2686
      %v2688 = vrot.slane %v2025, 3
      %v2689 = vsel %vm2656, %v2686, %v2688
      %v2690 = vrot.slane %v2026, 3
      %v2691 = vsel %vm2656, %v2688, %v2690
      %v2692 = vrot.slane %v2030, 3
      %v2693 = vsel %vm2656, %v2690, %v2692
      %v2728 = vunpack.c.l.b16 %v2637
      %v2729 = vunpack.c.l.b16 %v2638
      %v2730 = vunpack.c.l.b16 %v2639
      %v2731 = vunpack.c.l.b16 %v2640
      %v2732 = vunpack.c.l.b16 %v2641
      %v2733 = vunpack.c.l.b16 %v2642
      %v2734 = vunpack.c.l.b16 %v2643
      %v2735 = vunpack.c.l.b16 %v2644
      %v2736 = vunpack.c.l.b16 %v2645
      %v2737 = vunpack.c.l.b16 %v2646
      %v2738 = vunpack.c.l.b16 %v2647
      %v2739 = vunpack.c.l.b16 %v2648
      %v2740 = vunpack.c.l.b16 %v2649
      %v2741 = vunpack.c.l.b16 %v2650
      %v2742 = vunpack.c.l.b16 %v2651
      %v2743 = vunpack.c.l.b16 %v2652
      %v2744 = vpack.c.b16 %v2729, %v2728
      %v2745 = vpack.c.b16 %v2731, %v2730
      %v2746 = vpack.c.b16 %v2733, %v2732
      %v2747 = vpack.c.b16 %v2735, %v2734
      %v2748 = vpack.c.b16 %v2737, %v2736
      %v2749 = vpack.c.b16 %v2739, %v2738
      %v2750 = vpack.c.b16 %v2741, %v2740
      %v2751 = vpack.c.b16 %v2743, %v2742
      %2760 = vmatprep.subr.bf16.mxu0 0
      %2761 = vmatpush1.bf16.msra.mxu0 %v2744
      %2762 = vmatprep.subr.bf16.mxu0 0
      %2763 = vmatpush1.bf16.msra.mxu0 %v2745
      %2764 = vmatprep.subr.bf16.mxu0 0
      %2765 = vmatpush1.bf16.msra.mxu0 %v2746
      %2766 = vmatprep.subr.bf16.mxu0 0
      %2767 = vmatpush1.bf16.msra.mxu0 %v2747
      %2768 = vmatprep.subr.bf16.mxu0 0
      %2769 = vmatpush1.bf16.msra.mxu0 %v2748
      %2770 = vmatprep.subr.bf16.mxu0 0
      %2771 = vmatpush1.bf16.msra.mxu0 %v2749
      %2772 = vmatprep.subr.bf16.mxu0 0
      %2773 = vmatpush1.bf16.msra.mxu0 %v2750
      %2774 = vmatprep.subr.bf16.mxu0 0
      %2775 = vmatpush1.bf16.msra.mxu0 %v2751
      %2776 = vmatprep.subr.bf16.mxu0 0
      %2777 = vmatpush1.bf16.msra.mxu0 0
      %2778 = vmatprep.subr.bf16.mxu0 0
      %2779 = vmatpush1.bf16.msra.mxu0 0
      %2780 = vmatprep.subr.bf16.mxu0 0
      %2781 = vmatpush1.bf16.msra.mxu0 0
      %2782 = vmatprep.subr.bf16.mxu0 0
      %2783 = vmatpush1.bf16.msra.mxu0 0
      %2784 = vmatprep.subr.bf16.mxu0 0
      %2785 = vmatpush1.bf16.msra.mxu0 0
      %2786 = vmatprep.subr.bf16.mxu0 0
      %2787 = vmatpush1.bf16.msra.mxu0 0
      %2788 = vmatprep.subr.bf16.mxu0 0
      %2789 = vmatpush1.bf16.msra.mxu0 0
      %2790 = vmatprep.subr.bf16.mxu0 0
      %2791 = vmatpush1.bf16.msra.mxu0 0
      %2792 = vmatprep.mubr.bf16.mxu0 0
      %2793 = vmatmul.mubr.bf16.gmra.mrb[0].mxu0 %v2659
      %v2794 = vpop.f32.mrb[0].mxu0
      %v2795 = vadd.f32 0.0, %v2794
      %v2796 = vpop.f32.mrb[0].mxu0
      %v2797 = vpop.f32.mrb[0].mxu0
      %v2798 = vadd.f32 0.0, %v2797
      %v2799 = vpop.f32.mrb[0].mxu0
      %2800 = vmatprep.mubr.bf16.mxu0 0
      %2801 = vmatmul.mubr.bf16.gmra.mrb[0].mxu0 %v2661
      %v2802 = vpop.f32.mrb[0].mxu0
      %v2803 = vadd.f32 0.0, %v2802
      %v2804 = vpop.f32.mrb[0].mxu0
      %v2805 = vpop.f32.mrb[0].mxu0
      %v2806 = vadd.f32 0.0, %v2805
      %v2807 = vpop.f32.mrb[0].mxu0
      %2808 = vmatprep.mubr.bf16.mxu0 0
      %2809 = vmatmul.mubr.bf16.gmra.mrb[0].mxu0 %v2663
      %v2810 = vpop.f32.mrb[0].mxu0
      %v2811 = vadd.f32 0.0, %v2810
      %v2812 = vpop.f32.mrb[0].mxu0
      %v2813 = vpop.f32.mrb[0].mxu0
      %v2814 = vadd.f32 0.0, %v2813
      %v2815 = vpop.f32.mrb[0].mxu0
      %2816 = vmatprep.mubr.bf16.mxu0 0
      %2817 = vmatmul.mubr.bf16.gmra.mrb[0].mxu0 %v2665
      %v2818 = vpop.f32.mrb[0].mxu0
      %v2819 = vadd.f32 0.0, %v2818
      %v2820 = vpop.f32.mrb[0].mxu0
      %v2821 = vpop.f32.mrb[0].mxu0
      %v2822 = vadd.f32 0.0, %v2821
      %v2823 = vpop.f32.mrb[0].mxu0
      %2824 = vmatprep.mubr.bf16.mxu0 0
      %2825 = vmatmul.mubr.bf16.gmra.mrb[0].mxu0 %v2667
      %v2826 = vpop.f32.mrb[0].mxu0
      %v2827 = vadd.f32 0.0, %v2826
      %v2828 = vpop.f32.mrb[0].mxu0
      %v2829 = vpop.f32.mrb[0].mxu0
      %v2830 = vadd.f32 0.0, %v2829
      %v2831 = vpop.f32.mrb[0].mxu0
      %2832 = vmatprep.mubr.bf16.mxu0 0
      %2833 = vmatmul.mubr.bf16.gmra.mrb[0].mxu0 %v2669
      %v2834 = vpop.f32.mrb[0].mxu0
      %v2835 = vadd.f32 0.0, %v2834
      %v2836 = vpop.f32.mrb[0].mxu0
      %v2837 = vpop.f32.mrb[0].mxu0
      %v2838 = vadd.f32 0.0, %v2837
      %v2839 = vpop.f32.mrb[0].mxu0
      %2840 = vmatprep.mubr.bf16.mxu0 0
      %2841 = vmatmul.mubr.bf16.gmra.mrb[0].mxu0 %v2671
      %v2842 = vpop.f32.mrb[0].mxu0
      %v2843 = vadd.f32 0.0, %v2842
      %v2844 = vpop.f32.mrb[0].mxu0
      %v2845 = vpop.f32.mrb[0].mxu0
      %v2846 = vadd.f32 0.0, %v2845
      %v2847 = vpop.f32.mrb[0].mxu0
      %2848 = vmatprep.mubr.bf16.mxu0 0
      %2849 = vmatmul.mubr.bf16.gmra.mrb[0].mxu0 %v2673
      %v2850 = vpop.f32.mrb[0].mxu0
      %v2851 = vadd.f32 0.0, %v2850
      %v2852 = vpop.f32.mrb[0].mxu0
      %v2853 = vpop.f32.mrb[0].mxu0
      %v2854 = vadd.f32 0.0, %v2853
      %v2855 = vpop.f32.mrb[0].mxu0
      %2856 = vmatprep.mubr.bf16.mxu0 0
      %2857 = vmatmul.mubr.bf16.gmra.mrb[0].mxu0 %v2675
      %v2858 = vpop.f32.mrb[0].mxu0
      %v2859 = vadd.f32 0.0, %v2858
      %v2860 = vpop.f32.mrb[0].mxu0
      %v2861 = vpop.f32.mrb[0].mxu0
      %v2862 = vadd.f32 0.0, %v2861
      %v2863 = vpop.f32.mrb[0].mxu0
      %2864 = vmatprep.mubr.bf16.mxu0 0
      %2865 = vmatmul.mubr.bf16.gmra.mrb[0].mxu0 %v2677
      %v2866 = vpop.f32.mrb[0].mxu0
      %v2867 = vadd.f32 0.0, %v2866
      %v2868 = vpop.f32.mrb[0].mxu0
      %v2869 = vpop.f32.mrb[0].mxu0
      %v2870 = vadd.f32 0.0, %v2869
      %v2871 = vpop.f32.mrb[0].mxu0
      %2872 = vmatprep.mubr.bf16.mxu0 0
      %2873 = vmatmul.mubr.bf16.gmra.mrb[0].mxu0 %v2679
      %v2874 = vpop.f32.mrb[0].mxu0
      %v2875 = vadd.f32 0.0, %v2874
      %v2876 = vpop.f32.mrb[0].mxu0
      %v2877 = vpop.f32.mrb[0].mxu0
      %v2878 = vadd.f32 0.0, %v2877
      %v2879 = vpop.f32.mrb[0].mxu0
      %2880 = vmatprep.mubr.bf16.mxu0 0
      %2881 = vmatmul.mubr.bf16.gmra.mrb[0].mxu0 %v2681
      %v2882 = vpop.f32.mrb[0].mxu0
      %v2883 = vadd.f32 0.0, %v2882
      %v2884 = vpop.f32.mrb[0].mxu0
      %v2885 = vpop.f32.mrb[0].mxu0
      %v2886 = vadd.f32 0.0, %v2885
      %v2887 = vpop.f32.mrb[0].mxu0
      %2888 = vmatprep.mubr.bf16.mxu0 0
      %2889 = vmatmul.mubr.bf16.gmra.mrb[0].mxu0 %v2683
      %v2890 = vpop.f32.mrb[0].mxu0
      %v2891 = vadd.f32 0.0, %v2890
      %v2892 = vpop.f32.mrb[0].mxu0
      %v2893 = vpop.f32.mrb[0].mxu0
      %v2894 = vadd.f32 0.0, %v2893
      %v2895 = vpop.f32.mrb[0].mxu0
      %2896 = vmatprep.mubr.bf16.mxu0 0
      %2897 = vmatmul.mubr.bf16.gmra.mrb[0].mxu0 %v2685
      %v2898 = vpop.f32.mrb[0].mxu0
      %v2899 = vadd.f32 0.0, %v2898
      %v2900 = vpop.f32.mrb[0].mxu0
      %v2901 = vpop.f32.mrb[0].mxu0
      %v2902 = vadd.f32 0.0, %v2901
      %v2903 = vpop.f32.mrb[0].mxu0
      %2904 = vmatprep.mubr.bf16.mxu0 0
      %2905 = vmatmul.mubr.bf16.gmra.mrb[0].mxu0 %v2687
      %v2906 = vpop.f32.mrb[0].mxu0
      %v2907 = vadd.f32 0.0, %v2906
      %v2908 = vpop.f32.mrb[0].mxu0
      %v2909 = vpop.f32.mrb[0].mxu0
      %v2910 = vadd.f32 0.0, %v2909
      %v2911 = vpop.f32.mrb[0].mxu0
      %2912 = vmatprep.mubr.bf16.mxu0 0
      %2913 = vmatmul.mubr.bf16.gmra.mrb[0].mxu0 %v2689
      %v2914 = vpop.f32.mrb[0].mxu0
      %v2915 = vadd.f32 0.0, %v2914
      %v2916 = vpop.f32.mrb[0].mxu0
      %v2917 = vpop.f32.mrb[0].mxu0
      %v2918 = vadd.f32 0.0, %v2917
      %v2919 = vpop.f32.mrb[0].mxu0
      %2920 = vmatprep.mubr.bf16.mxu0 0
      %2921 = vmatmul.mubr.bf16.gmra.mrb[0].mxu0 %v2691
      %v2922 = vpop.f32.mrb[0].mxu0
      %v2923 = vadd.f32 0.0, %v2922
      %v2924 = vpop.f32.mrb[0].mxu0
      %v2925 = vpop.f32.mrb[0].mxu0
      %v2926 = vadd.f32 0.0, %v2925
      %v2927 = vpop.f32.mrb[0].mxu0
      %2928 = vmatprep.mubr.bf16.mxu0 0
      %2929 = vmatmul.mubr.bf16.gmra.mrb[0].mxu0 %v2693
      %v2930 = vpop.f32.mrb[0].mxu0
      %v2931 = vadd.f32 0.0, %v2930
      %v2932 = vpop.f32.mrb[0].mxu0
      %v2933 = vpop.f32.mrb[0].mxu0
      %v2934 = vadd.f32 0.0, %v2933
      %v2935 = vpop.f32.mrb[0].mxu0
      %2936 = vdwg.mxu0
      %v2937 = vadd.f32 %v2599, %v2795
      %v2938 = vadd.f32 %v2600, %v2798
      %v2939 = vadd.f32 %v2601, %v2803
      %v2940 = vadd.f32 %v2602, %v2806
      %v2941 = vadd.f32 %v2603, %v2811
      %v2942 = vadd.f32 %v2604, %v2814
      %v2943 = vadd.f32 %v2605, %v2819
      %v2944 = vadd.f32 %v2606, %v2822
      %v2945 = vadd.f32 %v2607, %v2827
      %v2946 = vadd.f32 %v2608, %v2830
      %v2947 = vadd.f32 %v2609, %v2835
      %v2948 = vadd.f32 %v2610, %v2838
      %v2949 = vadd.f32 %v2611, %v2843
      %v2950 = vadd.f32 %v2612, %v2846
      %v2951 = vadd.f32 %v2613, %v2851
      %v2952 = vadd.f32 %v2614, %v2854
      %v2953 = vadd.f32 %v2615, %v2859
      %v2954 = vadd.f32 %v2616, %v2862
      %v2955 = vadd.f32 %v2617, %v2867
      %v2956 = vadd.f32 %v2618, %v2870
      %v2957 = vadd.f32 %v2619, %v2875
      %v2958 = vadd.f32 %v2620, %v2878
      %v2959 = vadd.f32 %v2621, %v2883
      %v2960 = vadd.f32 %v2622, %v2886
      %v2961 = vadd.f32 %v2623, %v2891
      %v2962 = vadd.f32 %v2624, %v2894
      %v2963 = vadd.f32 %v2625, %v2899
      %v2964 = vadd.f32 %v2626, %v2902
      %v2965 = vadd.f32 %v2627, %v2907
      %v2966 = vadd.f32 %v2628, %v2910
      %v2967 = vadd.f32 %v2629, %v2915
      %v2968 = vadd.f32 %v2630, %v2918
      %v2969 = vadd.f32 %v2631, %v2923
      %v2970 = vadd.f32 %v2632, %v2926
      %v2971 = vadd.f32 %v2633, %v2931
      %v2972 = vadd.f32 %v2634, %v2934
      %v2973 = vlaneseq
      %v2974 = vshrl.u32 %v2973, 7
      %v2975 = vadd.s32 %v2974, 8
      %v2976 = vadd.s32 %v2974, 16
      %v2977 = vadd.s32 %v2974, 24
      %v2978 = vadd.s32 %v2974, 32
      %v2979 = vadd.s32 %v2974, 40
      %v2980 = vadd.s32 %v2974, 48
      %v2981 = vadd.s32 %v2974, 56
      %v2982 = vadd.s32 %v2974, 64
      %v2983 = vadd.s32 %v2974, 72
      %v2984 = vadd.s32 %v2974, 80
      %v2985 = vadd.s32 %v2974, 88
      %v2986 = vadd.s32 %v2974, 96
      %v2987 = vadd.s32 %v2974, 104
      %v2988 = vadd.s32 %v2974, 112
      %v2989 = vadd.s32 %v2974, 120
      %v2990 = vadd.s32 %v2974, 128
      %v2991 = vadd.s32 %v2974, 136
      %v2992 = vadd.s32 %v2974, 144
      %v2993 = vadd.s32 %v2974, 152
      %v2994 = vadd.s32 %v2974, 160
      %v2995 = vadd.s32 %v2974, 168
      %v2996 = vadd.s32 %v2974, 176
      %v2997 = vadd.s32 %v2974, 184
      %v2998 = vadd.s32 %v2974, 192
      %v2999 = vadd.s32 %v2974, 200
      %v3000 = vadd.s32 %v2974, 208
      %v3001 = vadd.s32 %v2974, 216
      %v3002 = vadd.s32 %v2974, 224
      %v3003 = vadd.s32 %v2974, 232
      %v3004 = vadd.s32 %v2974, 240
      %v3005 = vadd.s32 %v2974, 248
      %v3006 = vadd.s32 %v2974, 256
      %v3007 = vadd.s32 %v2974, 264
      %v3008 = vadd.s32 %v2974, 272
      %v3009 = vadd.s32 %v2974, 280
      %vm3010 = vcmp.lt.s32.totalorder %v2974, 0
      %v3011 = vsub.s32 0, %v2974
      %v3012 = vsel %vm3010, %v3011, %v2974
      %v3013 = vmul.u32.u64.compose %v3012, 3817748708
      %v3014 = vextract.low.u32 %v3013
      %v3015 = vextract.high.u32 %v3013
      %v3016 = vshrl.u32 %v3015, 4
      %v3017 = vmul.u32 %v3016, 18
      %v3018 = vsub.s32 %v3012, %v3017
      %v3019 = vsub.s32 0, %v3018
      %v3020 = vsel %vm3010, %v3019, %v3018
      %vm3021 = vcmp.lt.s32.totalorder %v2975, 0
      %v3022 = vsub.s32 0, %v2975
      %v3023 = vsel %vm3021, %v3022, %v2975
      %v3024 = vmul.u32.u64.compose %v3023, 3817748708
      %v3025 = vextract.low.u32 %v3024
      %v3026 = vextract.high.u32 %v3024
      %v3027 = vshrl.u32 %v3026, 4
      %v3028 = vmul.u32 %v3027, 18
      %v3029 = vsub.s32 %v3023, %v3028
      %v3030 = vsub.s32 0, %v3029
      %v3031 = vsel %vm3021, %v3030, %v3029
      %vm3032 = vcmp.lt.s32.totalorder %v2976, 0
      %v3033 = vsub.s32 0, %v2976
      %v3034 = vsel %vm3032, %v3033, %v2976
      %v3035 = vmul.u32.u64.compose %v3034, 3817748708
      %v3036 = vextract.low.u32 %v3035
      %v3037 = vextract.high.u32 %v3035
      %v3038 = vshrl.u32 %v3037, 4
      %v3039 = vmul.u32 %v3038, 18
      %v3040 = vsub.s32 %v3034, %v3039
      %v3041 = vsub.s32 0, %v3040
      %v3042 = vsel %vm3032, %v3041, %v3040
      %vm3043 = vcmp.lt.s32.totalorder %v2977, 0
      %v3044 = vsub.s32 0, %v2977
      %v3045 = vsel %vm3043, %v3044, %v2977
      %v3046 = vmul.u32.u64.compose %v3045, 3817748708
      %v3047 = vextract.low.u32 %v3046
      %v3048 = vextract.high.u32 %v3046
      %v3049 = vshrl.u32 %v3048, 4
      %v3050 = vmul.u32 %v3049, 18
      %v3051 = vsub.s32 %v3045, %v3050
      %v3052 = vsub.s32 0, %v3051
      %v3053 = vsel %vm3043, %v3052, %v3051
      %vm3054 = vcmp.lt.s32.totalorder %v2978, 0
      %v3055 = vsub.s32 0, %v2978
      %v3056 = vsel %vm3054, %v3055, %v2978
      %v3057 = vmul.u32.u64.compose %v3056, 3817748708
      %v3058 = vextract.low.u32 %v3057
      %v3059 = vextract.high.u32 %v3057
      %v3060 = vshrl.u32 %v3059, 4
      %v3061 = vmul.u32 %v3060, 18
      %v3062 = vsub.s32 %v3056, %v3061
      %v3063 = vsub.s32 0, %v3062
      %v3064 = vsel %vm3054, %v3063, %v3062
      %vm3065 = vcmp.lt.s32.totalorder %v2979, 0
      %v3066 = vsub.s32 0, %v2979
      %v3067 = vsel %vm3065, %v3066, %v2979
      %v3068 = vmul.u32.u64.compose %v3067, 3817748708
      %v3069 = vextract.low.u32 %v3068
      %v3070 = vextract.high.u32 %v3068
      %v3071 = vshrl.u32 %v3070, 4
      %v3072 = vmul.u32 %v3071, 18
      %v3073 = vsub.s32 %v3067, %v3072
      %v3074 = vsub.s32 0, %v3073
      %v3075 = vsel %vm3065, %v3074, %v3073
      %vm3076 = vcmp.lt.s32.totalorder %v2980, 0
      %v3077 = vsub.s32 0, %v2980
      %v3078 = vsel %vm3076, %v3077, %v2980
      %v3079 = vmul.u32.u64.compose %v3078, 3817748708
      %v3080 = vextract.low.u32 %v3079
      %v3081 = vextract.high.u32 %v3079
      %v3082 = vshrl.u32 %v3081, 4
      %v3083 = vmul.u32 %v3082, 18
      %v3084 = vsub.s32 %v3078, %v3083
      %v3085 = vsub.s32 0, %v3084
      %v3086 = vsel %vm3076, %v3085, %v3084
      %vm3087 = vcmp.lt.s32.totalorder %v2981, 0
      %v3088 = vsub.s32 0, %v2981
      %v3089 = vsel %vm3087, %v3088, %v2981
      %v3090 = vmul.u32.u64.compose %v3089, 3817748708
      %v3091 = vextract.low.u32 %v3090
      %v3092 = vextract.high.u32 %v3090
      %v3093 = vshrl.u32 %v3092, 4
      %v3094 = vmul.u32 %v3093, 18
      %v3095 = vsub.s32 %v3089, %v3094
      %v3096 = vsub.s32 0, %v3095
      %v3097 = vsel %vm3087, %v3096, %v3095
      %vm3098 = vcmp.lt.s32.totalorder %v2982, 0
      %v3099 = vsub.s32 0, %v2982
      %v3100 = vsel %vm3098, %v3099, %v2982
      %v3101 = vmul.u32.u64.compose %v3100, 3817748708
      %v3102 = vextract.low.u32 %v3101
      %v3103 = vextract.high.u32 %v3101
      %v3104 = vshrl.u32 %v3103, 4
      %v3105 = vmul.u32 %v3104, 18
      %v3106 = vsub.s32 %v3100, %v3105
      %v3107 = vsub.s32 0, %v3106
      %v3108 = vsel %vm3098, %v3107, %v3106
      %vm3109 = vcmp.lt.s32.totalorder %v2983, 0
      %v3110 = vsub.s32 0, %v2983
      %v3111 = vsel %vm3109, %v3110, %v2983
      %v3112 = vmul.u32.u64.compose %v3111, 3817748708
      %v3113 = vextract.low.u32 %v3112
      %v3114 = vextract.high.u32 %v3112
      %v3115 = vshrl.u32 %v3114, 4
      %v3116 = vmul.u32 %v3115, 18
      %v3117 = vsub.s32 %v3111, %v3116
      %v3118 = vsub.s32 0, %v3117
      %v3119 = vsel %vm3109, %v3118, %v3117
      %vm3120 = vcmp.lt.s32.totalorder %v2984, 0
      %v3121 = vsub.s32 0, %v2984
      %v3122 = vsel %vm3120, %v3121, %v2984
      %v3123 = vmul.u32.u64.compose %v3122, 3817748708
      %v3124 = vextract.low.u32 %v3123
      %v3125 = vextract.high.u32 %v3123
      %v3126 = vshrl.u32 %v3125, 4
      %v3127 = vmul.u32 %v3126, 18
      %v3128 = vsub.s32 %v3122, %v3127
      %v3129 = vsub.s32 0, %v3128
      %v3130 = vsel %vm3120, %v3129, %v3128
      %vm3131 = vcmp.lt.s32.totalorder %v2985, 0
      %v3132 = vsub.s32 0, %v2985
      %v3133 = vsel %vm3131, %v3132, %v2985
      %v3134 = vmul.u32.u64.compose %v3133, 3817748708
      %v3135 = vextract.low.u32 %v3134
      %v3136 = vextract.high.u32 %v3134
      %v3137 = vshrl.u32 %v3136, 4
      %v3138 = vmul.u32 %v3137, 18
      %v3139 = vsub.s32 %v3133, %v3138
      %v3140 = vsub.s32 0, %v3139
      %v3141 = vsel %vm3131, %v3140, %v3139
      %vm3142 = vcmp.lt.s32.totalorder %v2986, 0
      %v3143 = vsub.s32 0, %v2986
      %v3144 = vsel %vm3142, %v3143, %v2986
      %v3145 = vmul.u32.u64.compose %v3144, 3817748708
      %v3146 = vextract.low.u32 %v3145
      %v3147 = vextract.high.u32 %v3145
      %v3148 = vshrl.u32 %v3147, 4
      %v3149 = vmul.u32 %v3148, 18
      %v3150 = vsub.s32 %v3144, %v3149
      %v3151 = vsub.s32 0, %v3150
      %v3152 = vsel %vm3142, %v3151, %v3150
      %vm3153 = vcmp.lt.s32.totalorder %v2987, 0
      %v3154 = vsub.s32 0, %v2987
      %v3155 = vsel %vm3153, %v3154, %v2987
      %v3156 = vmul.u32.u64.compose %v3155, 3817748708
      %v3157 = vextract.low.u32 %v3156
      %v3158 = vextract.high.u32 %v3156
      %v3159 = vshrl.u32 %v3158, 4
      %v3160 = vmul.u32 %v3159, 18
      %v3161 = vsub.s32 %v3155, %v3160
      %v3162 = vsub.s32 0, %v3161
      %v3163 = vsel %vm3153, %v3162, %v3161
      %vm3164 = vcmp.lt.s32.totalorder %v2988, 0
      %v3165 = vsub.s32 0, %v2988
      %v3166 = vsel %vm3164, %v3165, %v2988
      %v3167 = vmul.u32.u64.compose %v3166, 3817748708
      %v3168 = vextract.low.u32 %v3167
      %v3169 = vextract.high.u32 %v3167
      %v3170 = vshrl.u32 %v3169, 4
      %v3171 = vmul.u32 %v3170, 18
      %v3172 = vsub.s32 %v3166, %v3171
      %v3173 = vsub.s32 0, %v3172
      %v3174 = vsel %vm3164, %v3173, %v3172
      %vm3175 = vcmp.lt.s32.totalorder %v2989, 0
      %v3176 = vsub.s32 0, %v2989
      %v3177 = vsel %vm3175, %v3176, %v2989
      %v3178 = vmul.u32.u64.compose %v3177, 3817748708
      %v3179 = vextract.low.u32 %v3178
      %v3180 = vextract.high.u32 %v3178
      %v3181 = vshrl.u32 %v3180, 4
      %v3182 = vmul.u32 %v3181, 18
      %v3183 = vsub.s32 %v3177, %v3182
      %v3184 = vsub.s32 0, %v3183
      %v3185 = vsel %vm3175, %v3184, %v3183
      %vm3186 = vcmp.lt.s32.totalorder %v2990, 0
      %v3187 = vsub.s32 0, %v2990
      %v3188 = vsel %vm3186, %v3187, %v2990
      %v3189 = vmul.u32.u64.compose %v3188, 3817748708
      %v3190 = vextract.low.u32 %v3189
      %v3191 = vextract.high.u32 %v3189
      %v3192 = vshrl.u32 %v3191, 4
      %v3193 = vmul.u32 %v3192, 18
      %v3194 = vsub.s32 %v3188, %v3193
      %v3195 = vsub.s32 0, %v3194
      %v3196 = vsel %vm3186, %v3195, %v3194
      %vm3197 = vcmp.lt.s32.totalorder %v2991, 0
      %v3198 = vsub.s32 0, %v2991
      %v3199 = vsel %vm3197, %v3198, %v2991
      %v3200 = vmul.u32.u64.compose %v3199, 3817748708
      %v3201 = vextract.low.u32 %v3200
      %v3202 = vextract.high.u32 %v3200
      %v3203 = vshrl.u32 %v3202, 4
      %v3204 = vmul.u32 %v3203, 18
      %v3205 = vsub.s32 %v3199, %v3204
      %v3206 = vsub.s32 0, %v3205
      %v3207 = vsel %vm3197, %v3206, %v3205
      %vm3208 = vcmp.lt.s32.totalorder %v2992, 0
      %v3209 = vsub.s32 0, %v2992
      %v3210 = vsel %vm3208, %v3209, %v2992
      %v3211 = vmul.u32.u64.compose %v3210, 3817748708
      %v3212 = vextract.low.u32 %v3211
      %v3213 = vextract.high.u32 %v3211
      %v3214 = vshrl.u32 %v3213, 4
      %v3215 = vmul.u32 %v3214, 18
      %v3216 = vsub.s32 %v3210, %v3215
      %v3217 = vsub.s32 0, %v3216
      %v3218 = vsel %vm3208, %v3217, %v3216
      %vm3219 = vcmp.lt.s32.totalorder %v2993, 0
      %v3220 = vsub.s32 0, %v2993
      %v3221 = vsel %vm3219, %v3220, %v2993
      %v3222 = vmul.u32.u64.compose %v3221, 3817748708
      %v3223 = vextract.low.u32 %v3222
      %v3224 = vextract.high.u32 %v3222
      %v3225 = vshrl.u32 %v3224, 4
      %v3226 = vmul.u32 %v3225, 18
      %v3227 = vsub.s32 %v3221, %v3226
      %v3228 = vsub.s32 0, %v3227
      %v3229 = vsel %vm3219, %v3228, %v3227
      %vm3230 = vcmp.lt.s32.totalorder %v2994, 0
      %v3231 = vsub.s32 0, %v2994
      %v3232 = vsel %vm3230, %v3231, %v2994
      %v3233 = vmul.u32.u64.compose %v3232, 3817748708
      %v3234 = vextract.low.u32 %v3233
      %v3235 = vextract.high.u32 %v3233
      %v3236 = vshrl.u32 %v3235, 4
      %v3237 = vmul.u32 %v3236, 18
      %v3238 = vsub.s32 %v3232, %v3237
      %v3239 = vsub.s32 0, %v3238
      %v3240 = vsel %vm3230, %v3239, %v3238
      %vm3241 = vcmp.lt.s32.totalorder %v2995, 0
      %v3242 = vsub.s32 0, %v2995
      %v3243 = vsel %vm3241, %v3242, %v2995
      %v3244 = vmul.u32.u64.compose %v3243, 3817748708
      %v3245 = vextract.low.u32 %v3244
      %v3246 = vextract.high.u32 %v3244
      %v3247 = vshrl.u32 %v3246, 4
      %v3248 = vmul.u32 %v3247, 18
      %v3249 = vsub.s32 %v3243, %v3248
      %v3250 = vsub.s32 0, %v3249
      %v3251 = vsel %vm3241, %v3250, %v3249
      %vm3252 = vcmp.lt.s32.totalorder %v2996, 0
      %v3253 = vsub.s32 0, %v2996
      %v3254 = vsel %vm3252, %v3253, %v2996
      %v3255 = vmul.u32.u64.compose %v3254, 3817748708
      %v3256 = vextract.low.u32 %v3255
      %v3257 = vextract.high.u32 %v3255
      %v3258 = vshrl.u32 %v3257, 4
      %v3259 = vmul.u32 %v3258, 18
      %v3260 = vsub.s32 %v3254, %v3259
      %v3261 = vsub.s32 0, %v3260
      %v3262 = vsel %vm3252, %v3261, %v3260
      %vm3263 = vcmp.lt.s32.totalorder %v2997, 0
      %v3264 = vsub.s32 0, %v2997
      %v3265 = vsel %vm3263, %v3264, %v2997
      %v3266 = vmul.u32.u64.compose %v3265, 3817748708
      %v3267 = vextract.low.u32 %v3266
      %v3268 = vextract.high.u32 %v3266
      %v3269 = vshrl.u32 %v3268, 4
      %v3270 = vmul.u32 %v3269, 18
      %v3271 = vsub.s32 %v3265, %v3270
      %v3272 = vsub.s32 0, %v3271
      %v3273 = vsel %vm3263, %v3272, %v3271
      %vm3274 = vcmp.lt.s32.totalorder %v2998, 0
      %v3275 = vsub.s32 0, %v2998
      %v3276 = vsel %vm3274, %v3275, %v2998
      %v3277 = vmul.u32.u64.compose %v3276, 3817748708
      %v3278 = vextract.low.u32 %v3277
      %v3279 = vextract.high.u32 %v3277
      %v3280 = vshrl.u32 %v3279, 4
      %v3281 = vmul.u32 %v3280, 18
      %v3282 = vsub.s32 %v3276, %v3281
      %v3283 = vsub.s32 0, %v3282
      %v3284 = vsel %vm3274, %v3283, %v3282
      %vm3285 = vcmp.lt.s32.totalorder %v2999, 0
      %v3286 = vsub.s32 0, %v2999
      %v3287 = vsel %vm3285, %v3286, %v2999
      %v3288 = vmul.u32.u64.compose %v3287, 3817748708
      %v3289 = vextract.low.u32 %v3288
      %v3290 = vextract.high.u32 %v3288
      %v3291 = vshrl.u32 %v3290, 4
      %v3292 = vmul.u32 %v3291, 18
      %v3293 = vsub.s32 %v3287, %v3292
      %v3294 = vsub.s32 0, %v3293
      %v3295 = vsel %vm3285, %v3294, %v3293
      %vm3296 = vcmp.lt.s32.totalorder %v3000, 0
      %v3297 = vsub.s32 0, %v3000
      %v3298 = vsel %vm3296, %v3297, %v3000
      %v3299 = vmul.u32.u64.compose %v3298, 3817748708
      %v3300 = vextract.low.u32 %v3299
      %v3301 = vextract.high.u32 %v3299
      %v3302 = vshrl.u32 %v3301, 4
      %v3303 = vmul.u32 %v3302, 18
      %v3304 = vsub.s32 %v3298, %v3303
      %v3305 = vsub.s32 0, %v3304
      %v3306 = vsel %vm3296, %v3305, %v3304
      %vm3307 = vcmp.lt.s32.totalorder %v3001, 0
      %v3308 = vsub.s32 0, %v3001
      %v3309 = vsel %vm3307, %v3308, %v3001
      %v3310 = vmul.u32.u64.compose %v3309, 3817748708
      %v3311 = vextract.low.u32 %v3310
      %v3312 = vextract.high.u32 %v3310
      %v3313 = vshrl.u32 %v3312, 4
      %v3314 = vmul.u32 %v3313, 18
      %v3315 = vsub.s32 %v3309, %v3314
      %v3316 = vsub.s32 0, %v3315
      %v3317 = vsel %vm3307, %v3316, %v3315
      %vm3318 = vcmp.lt.s32.totalorder %v3002, 0
      %v3319 = vsub.s32 0, %v3002
      %v3320 = vsel %vm3318, %v3319, %v3002
      %v3321 = vmul.u32.u64.compose %v3320, 3817748708
      %v3322 = vextract.low.u32 %v3321
      %v3323 = vextract.high.u32 %v3321
      %v3324 = vshrl.u32 %v3323, 4
      %v3325 = vmul.u32 %v3324, 18
      %v3326 = vsub.s32 %v3320, %v3325
      %v3327 = vsub.s32 0, %v3326
      %v3328 = vsel %vm3318, %v3327, %v3326
      %vm3329 = vcmp.lt.s32.totalorder %v3003, 0
      %v3330 = vsub.s32 0, %v3003
      %v3331 = vsel %vm3329, %v3330, %v3003
      %v3332 = vmul.u32.u64.compose %v3331, 3817748708
      %v3333 = vextract.low.u32 %v3332
      %v3334 = vextract.high.u32 %v3332
      %v3335 = vshrl.u32 %v3334, 4
      %v3336 = vmul.u32 %v3335, 18
      %v3337 = vsub.s32 %v3331, %v3336
      %v3338 = vsub.s32 0, %v3337
      %v3339 = vsel %vm3329, %v3338, %v3337
      %vm3340 = vcmp.lt.s32.totalorder %v3004, 0
      %v3341 = vsub.s32 0, %v3004
      %v3342 = vsel %vm3340, %v3341, %v3004
      %v3343 = vmul.u32.u64.compose %v3342, 3817748708
      %v3344 = vextract.low.u32 %v3343
      %v3345 = vextract.high.u32 %v3343
      %v3346 = vshrl.u32 %v3345, 4
      %v3347 = vmul.u32 %v3346, 18
      %v3348 = vsub.s32 %v3342, %v3347
      %v3349 = vsub.s32 0, %v3348
      %v3350 = vsel %vm3340, %v3349, %v3348
      %vm3351 = vcmp.lt.s32.totalorder %v3005, 0
      %v3352 = vsub.s32 0, %v3005
      %v3353 = vsel %vm3351, %v3352, %v3005
      %v3354 = vmul.u32.u64.compose %v3353, 3817748708
      %v3355 = vextract.low.u32 %v3354
      %v3356 = vextract.high.u32 %v3354
      %v3357 = vshrl.u32 %v3356, 4
      %v3358 = vmul.u32 %v3357, 18
      %v3359 = vsub.s32 %v3353, %v3358
      %v3360 = vsub.s32 0, %v3359
      %v3361 = vsel %vm3351, %v3360, %v3359
      %vm3362 = vcmp.lt.s32.totalorder %v3006, 0
      %v3363 = vsub.s32 0, %v3006
      %v3364 = vsel %vm3362, %v3363, %v3006
      %v3365 = vmul.u32.u64.compose %v3364, 3817748708
      %v3366 = vextract.low.u32 %v3365
      %v3367 = vextract.high.u32 %v3365
      %v3368 = vshrl.u32 %v3367, 4
      %v3369 = vmul.u32 %v3368, 18
      %v3370 = vsub.s32 %v3364, %v3369
      %v3371 = vsub.s32 0, %v3370
      %v3372 = vsel %vm3362, %v3371, %v3370
      %vm3373 = vcmp.lt.s32.totalorder %v3007, 0
      %v3374 = vsub.s32 0, %v3007
      %v3375 = vsel %vm3373, %v3374, %v3007
      %v3376 = vmul.u32.u64.compose %v3375, 3817748708
      %v3377 = vextract.low.u32 %v3376
      %v3378 = vextract.high.u32 %v3376
      %v3379 = vshrl.u32 %v3378, 4
      %v3380 = vmul.u32 %v3379, 18
      %v3381 = vsub.s32 %v3375, %v3380
      %v3382 = vsub.s32 0, %v3381
      %v3383 = vsel %vm3373, %v3382, %v3381
      %vm3384 = vcmp.lt.s32.totalorder %v3008, 0
      %v3385 = vsub.s32 0, %v3008
      %v3386 = vsel %vm3384, %v3385, %v3008
      %v3387 = vmul.u32.u64.compose %v3386, 3817748708
      %v3388 = vextract.low.u32 %v3387
      %v3389 = vextract.high.u32 %v3387
      %v3390 = vshrl.u32 %v3389, 4
      %v3391 = vmul.u32 %v3390, 18
      %v3392 = vsub.s32 %v3386, %v3391
      %v3393 = vsub.s32 0, %v3392
      %v3394 = vsel %vm3384, %v3393, %v3392
      %vm3395 = vcmp.lt.s32.totalorder %v3009, 0
      %v3396 = vsub.s32 0, %v3009
      %v3397 = vsel %vm3395, %v3396, %v3009
      %v3398 = vmul.u32.u64.compose %v3397, 3817748708
      %v3399 = vextract.low.u32 %v3398
      %v3400 = vextract.high.u32 %v3398
      %v3401 = vshrl.u32 %v3400, 4
      %v3402 = vmul.u32 %v3401, 18
      %v3403 = vsub.s32 %v3397, %v3402
      %v3404 = vsub.s32 0, %v3403
      %v3405 = vsel %vm3395, %v3404, %v3403
      %vm3406 = vcmp.ne.s32.totalorder %v3020, 0
      %vm3407 = vcmp.ne.s32.totalorder %v3031, 0
      %vm3408 = vcmp.ne.s32.totalorder %v3042, 0
      %vm3409 = vcmp.ne.s32.totalorder %v3053, 0
      %vm3410 = vcmp.ne.s32.totalorder %v3064, 0
      %vm3411 = vcmp.ne.s32.totalorder %v3075, 0
      %vm3412 = vcmp.ne.s32.totalorder %v3086, 0
      %vm3413 = vcmp.ne.s32.totalorder %v3097, 0
      %vm3414 = vcmp.ne.s32.totalorder %v3108, 0
      %vm3415 = vcmp.ne.s32.totalorder %v3119, 0
      %vm3416 = vcmp.ne.s32.totalorder %v3130, 0
      %vm3417 = vcmp.ne.s32.totalorder %v3141, 0
      %vm3418 = vcmp.ne.s32.totalorder %v3152, 0
      %vm3419 = vcmp.ne.s32.totalorder %v3163, 0
      %vm3420 = vcmp.ne.s32.totalorder %v3174, 0
      %vm3421 = vcmp.ne.s32.totalorder %v3185, 0
      %vm3422 = vcmp.ne.s32.totalorder %v3196, 0
      %vm3423 = vcmp.ne.s32.totalorder %v3207, 0
      %vm3424 = vcmp.ne.s32.totalorder %v3218, 0
      %vm3425 = vcmp.ne.s32.totalorder %v3229, 0
      %vm3426 = vcmp.ne.s32.totalorder %v3240, 0
      %vm3427 = vcmp.ne.s32.totalorder %v3251, 0
      %vm3428 = vcmp.ne.s32.totalorder %v3262, 0
      %vm3429 = vcmp.ne.s32.totalorder %v3273, 0
      %vm3430 = vcmp.ne.s32.totalorder %v3284, 0
      %vm3431 = vcmp.ne.s32.totalorder %v3295, 0
      %vm3432 = vcmp.ne.s32.totalorder %v3306, 0
      %vm3433 = vcmp.ne.s32.totalorder %v3317, 0
      %vm3434 = vcmp.ne.s32.totalorder %v3328, 0
      %vm3435 = vcmp.ne.s32.totalorder %v3339, 0
      %vm3436 = vcmp.ne.s32.totalorder %v3350, 0
      %vm3437 = vcmp.ne.s32.totalorder %v3361, 0
      %vm3438 = vcmp.ne.s32.totalorder %v3372, 0
      %vm3439 = vcmp.ne.s32.totalorder %v3383, 0
      %vm3440 = vcmp.ne.s32.totalorder %v3394, 0
      %vm3441 = vcmp.ne.s32.totalorder %v3405, 0
      %vm3442 = vcmp.lt.s32.totalorder %v3020, 0
      %vm3443 = vcmp.lt.s32.totalorder %v3031, 0
      %vm3444 = vcmp.lt.s32.totalorder %v3042, 0
      %vm3445 = vcmp.lt.s32.totalorder %v3053, 0
      %vm3446 = vcmp.lt.s32.totalorder %v3064, 0
      %vm3447 = vcmp.lt.s32.totalorder %v3075, 0
      %vm3448 = vcmp.lt.s32.totalorder %v3086, 0
      %vm3449 = vcmp.lt.s32.totalorder %v3097, 0
      %vm3450 = vcmp.lt.s32.totalorder %v3108, 0
      %vm3451 = vcmp.lt.s32.totalorder %v3119, 0
      %vm3452 = vcmp.lt.s32.totalorder %v3130, 0
      %vm3453 = vcmp.lt.s32.totalorder %v3141, 0
      %vm3454 = vcmp.lt.s32.totalorder %v3152, 0
      %vm3455 = vcmp.lt.s32.totalorder %v3163, 0
      %vm3456 = vcmp.lt.s32.totalorder %v3174, 0
      %vm3457 = vcmp.lt.s32.totalorder %v3185, 0
      %vm3458 = vcmp.lt.s32.totalorder %v3196, 0
      %vm3459 = vcmp.lt.s32.totalorder %v3207, 0
      %vm3460 = vcmp.lt.s32.totalorder %v3218, 0
      %vm3461 = vcmp.lt.s32.totalorder %v3229, 0
      %vm3462 = vcmp.lt.s32.totalorder %v3240, 0
      %vm3463 = vcmp.lt.s32.totalorder %v3251, 0
      %vm3464 = vcmp.lt.s32.totalorder %v3262, 0
      %vm3465 = vcmp.lt.s32.totalorder %v3273, 0
      %vm3466 = vcmp.lt.s32.totalorder %v3284, 0
      %vm3467 = vcmp.lt.s32.totalorder %v3295, 0
      %vm3468 = vcmp.lt.s32.totalorder %v3306, 0
      %vm3469 = vcmp.lt.s32.totalorder %v3317, 0
      %vm3470 = vcmp.lt.s32.totalorder %v3328, 0
      %vm3471 = vcmp.lt.s32.totalorder %v3339, 0
      %vm3472 = vcmp.lt.s32.totalorder %v3350, 0
      %vm3473 = vcmp.lt.s32.totalorder %v3361, 0
      %vm3474 = vcmp.lt.s32.totalorder %v3372, 0
      %vm3475 = vcmp.lt.s32.totalorder %v3383, 0
      %vm3476 = vcmp.lt.s32.totalorder %v3394, 0
      %vm3477 = vcmp.lt.s32.totalorder %v3405, 0
      %vm3478 = vmand %vm3442, %vm3406
      %vm3479 = vmand %vm3443, %vm3407
      %vm3480 = vmand %vm3444, %vm3408
      %vm3481 = vmand %vm3445, %vm3409
      %vm3482 = vmand %vm3446, %vm3410
      %vm3483 = vmand %vm3447, %vm3411
      %vm3484 = vmand %vm3448, %vm3412
      %vm3485 = vmand %vm3449, %vm3413
      %vm3486 = vmand %vm3450, %vm3414
      %vm3487 = vmand %vm3451, %vm3415
      %vm3488 = vmand %vm3452, %vm3416
      %vm3489 = vmand %vm3453, %vm3417
      %vm3490 = vmand %vm3454, %vm3418
      %vm3491 = vmand %vm3455, %vm3419
      %vm3492 = vmand %vm3456, %vm3420
      %vm3493 = vmand %vm3457, %vm3421
      %vm3494 = vmand %vm3458, %vm3422
      %vm3495 = vmand %vm3459, %vm3423
      %vm3496 = vmand %vm3460, %vm3424
      %vm3497 = vmand %vm3461, %vm3425
      %vm3498 = vmand %vm3462, %vm3426
      %vm3499 = vmand %vm3463, %vm3427
      %vm3500 = vmand %vm3464, %vm3428
      %vm3501 = vmand %vm3465, %vm3429
      %vm3502 = vmand %vm3466, %vm3430
      %vm3503 = vmand %vm3467, %vm3431
      %vm3504 = vmand %vm3468, %vm3432
      %vm3505 = vmand %vm3469, %vm3433
      %vm3506 = vmand %vm3470, %vm3434
      %vm3507 = vmand %vm3471, %vm3435
      %vm3508 = vmand %vm3472, %vm3436
      %vm3509 = vmand %vm3473, %vm3437
      %vm3510 = vmand %vm3474, %vm3438
      %vm3511 = vmand %vm3475, %vm3439
      %vm3512 = vmand %vm3476, %vm3440
      %vm3513 = vmand %vm3477, %vm3441
      %v3514 = vadd.s32 %v3020, 18
      %v3515 = vadd.s32 %v3031, 18
      %v3516 = vadd.s32 %v3042, 18
      %v3517 = vadd.s32 %v3053, 18
      %v3518 = vadd.s32 %v3064, 18
      %v3519 = vadd.s32 %v3075, 18
      %v3520 = vadd.s32 %v3086, 18
      %v3521 = vadd.s32 %v3097, 18
      %v3522 = vadd.s32 %v3108, 18
      %v3523 = vadd.s32 %v3119, 18
      %v3524 = vadd.s32 %v3130, 18
      %v3525 = vadd.s32 %v3141, 18
      %v3526 = vadd.s32 %v3152, 18
      %v3527 = vadd.s32 %v3163, 18
      %v3528 = vadd.s32 %v3174, 18
      %v3529 = vadd.s32 %v3185, 18
      %v3530 = vadd.s32 %v3196, 18
      %v3531 = vadd.s32 %v3207, 18
      %v3532 = vadd.s32 %v3218, 18
      %v3533 = vadd.s32 %v3229, 18
      %v3534 = vadd.s32 %v3240, 18
      %v3535 = vadd.s32 %v3251, 18
      %v3536 = vadd.s32 %v3262, 18
      %v3537 = vadd.s32 %v3273, 18
      %v3538 = vadd.s32 %v3284, 18
      %v3539 = vadd.s32 %v3295, 18
      %v3540 = vadd.s32 %v3306, 18
      %v3541 = vadd.s32 %v3317, 18
      %v3542 = vadd.s32 %v3328, 18
      %v3543 = vadd.s32 %v3339, 18
      %v3544 = vadd.s32 %v3350, 18
      %v3545 = vadd.s32 %v3361, 18
      %v3546 = vadd.s32 %v3372, 18
      %v3547 = vadd.s32 %v3383, 18
      %v3548 = vadd.s32 %v3394, 18
      %v3549 = vadd.s32 %v3405, 18
      %v3550 = vsel %vm3478, %v3514, %v3020
      %v3551 = vsel %vm3479, %v3515, %v3031
      %v3552 = vsel %vm3480, %v3516, %v3042
      %v3553 = vsel %vm3481, %v3517, %v3053
      %v3554 = vsel %vm3482, %v3518, %v3064
      %v3555 = vsel %vm3483, %v3519, %v3075
      %v3556 = vsel %vm3484, %v3520, %v3086
      %v3557 = vsel %vm3485, %v3521, %v3097
      %v3558 = vsel %vm3486, %v3522, %v3108
      %v3559 = vsel %vm3487, %v3523, %v3119
      %v3560 = vsel %vm3488, %v3524, %v3130
      %v3561 = vsel %vm3489, %v3525, %v3141
      %v3562 = vsel %vm3490, %v3526, %v3152
      %v3563 = vsel %vm3491, %v3527, %v3163
      %v3564 = vsel %vm3492, %v3528, %v3174
      %v3565 = vsel %vm3493, %v3529, %v3185
      %v3566 = vsel %vm3494, %v3530, %v3196
      %v3567 = vsel %vm3495, %v3531, %v3207
      %v3568 = vsel %vm3496, %v3532, %v3218
      %v3569 = vsel %vm3497, %v3533, %v3229
      %v3570 = vsel %vm3498, %v3534, %v3240
      %v3571 = vsel %vm3499, %v3535, %v3251
      %v3572 = vsel %vm3500, %v3536, %v3262
      %v3573 = vsel %vm3501, %v3537, %v3273
      %v3574 = vsel %vm3502, %v3538, %v3284
      %v3575 = vsel %vm3503, %v3539, %v3295
      %v3576 = vsel %vm3504, %v3540, %v3306
      %v3577 = vsel %vm3505, %v3541, %v3317
      %v3578 = vsel %vm3506, %v3542, %v3328
      %v3579 = vsel %vm3507, %v3543, %v3339
      %v3580 = vsel %vm3508, %v3544, %v3350
      %v3581 = vsel %vm3509, %v3545, %v3361
      %v3582 = vsel %vm3510, %v3546, %v3372
      %v3583 = vsel %vm3511, %v3547, %v3383
      %v3584 = vsel %vm3512, %v3548, %v3394
      %v3585 = vsel %vm3513, %v3549, %v3405
      %vm3586 = vcmp.lt.s32.totalorder %v3550, 16
      %vm3587 = vcmp.lt.s32.totalorder %v3551, 16
      %vm3588 = vcmp.lt.s32.totalorder %v3552, 16
      %vm3589 = vcmp.lt.s32.totalorder %v3553, 16
      %vm3590 = vcmp.lt.s32.totalorder %v3554, 16
      %vm3591 = vcmp.lt.s32.totalorder %v3555, 16
      %vm3592 = vcmp.lt.s32.totalorder %v3556, 16
      %vm3593 = vcmp.lt.s32.totalorder %v3557, 16
      %vm3594 = vcmp.lt.s32.totalorder %v3558, 16
      %vm3595 = vcmp.lt.s32.totalorder %v3559, 16
      %vm3596 = vcmp.lt.s32.totalorder %v3560, 16
      %vm3597 = vcmp.lt.s32.totalorder %v3561, 16
      %vm3598 = vcmp.lt.s32.totalorder %v3562, 16
      %vm3599 = vcmp.lt.s32.totalorder %v3563, 16
      %vm3600 = vcmp.lt.s32.totalorder %v3564, 16
      %vm3601 = vcmp.lt.s32.totalorder %v3565, 16
      %vm3602 = vcmp.lt.s32.totalorder %v3566, 16
      %vm3603 = vcmp.lt.s32.totalorder %v3567, 16
      %vm3604 = vcmp.lt.s32.totalorder %v3568, 16
      %vm3605 = vcmp.lt.s32.totalorder %v3569, 16
      %vm3606 = vcmp.lt.s32.totalorder %v3570, 16
      %vm3607 = vcmp.lt.s32.totalorder %v3571, 16
      %vm3608 = vcmp.lt.s32.totalorder %v3572, 16
      %vm3609 = vcmp.lt.s32.totalorder %v3573, 16
      %vm3610 = vcmp.lt.s32.totalorder %v3574, 16
      %vm3611 = vcmp.lt.s32.totalorder %v3575, 16
      %vm3612 = vcmp.lt.s32.totalorder %v3576, 16
      %vm3613 = vcmp.lt.s32.totalorder %v3577, 16
      %vm3614 = vcmp.lt.s32.totalorder %v3578, 16
      %vm3615 = vcmp.lt.s32.totalorder %v3579, 16
      %vm3616 = vcmp.lt.s32.totalorder %v3580, 16
      %vm3617 = vcmp.lt.s32.totalorder %v3581, 16
      %vm3618 = vcmp.lt.s32.totalorder %v3582, 16
      %vm3619 = vcmp.lt.s32.totalorder %v3583, 16
      %vm3620 = vcmp.lt.s32.totalorder %v3584, 16
      %vm3621 = vcmp.lt.s32.totalorder %v3585, 16
      %v3622 = vld [vmem:[%s2] sm:$0x1]
      %v3624 = vlaneseq
      %v3625 = vshrl.u32 %v3624, 7
      %v3626 = vsub.s32 0, %v3625
      %v3627 = vrot.slane %v3622, %v3626
      %v3629 = vadd.f32 %v2937, %v3627
      %v3630 = vadd.f32 %v2938, %v3627
      %v3631 = vadd.f32 %v2939, %v3627
      %v3632 = vadd.f32 %v2940, %v3627
      %v3633 = vadd.f32 %v2941, %v3627
      %v3634 = vadd.f32 %v2942, %v3627
      %v3635 = vadd.f32 %v2943, %v3627
      %v3636 = vadd.f32 %v2944, %v3627
      %v3637 = vadd.f32 %v2945, %v3627
      %v3638 = vadd.f32 %v2946, %v3627
      %v3639 = vadd.f32 %v2947, %v3627
      %v3640 = vadd.f32 %v2948, %v3627
      %v3641 = vadd.f32 %v2949, %v3627
      %v3642 = vadd.f32 %v2950, %v3627
      %v3643 = vadd.f32 %v2951, %v3627
      %v3644 = vadd.f32 %v2952, %v3627
      %v3645 = vadd.f32 %v2953, %v3627
      %v3646 = vadd.f32 %v2954, %v3627
      %v3647 = vadd.f32 %v2955, %v3627
      %v3648 = vadd.f32 %v2956, %v3627
      %v3649 = vadd.f32 %v2957, %v3627
      %v3650 = vadd.f32 %v2958, %v3627
      %v3651 = vadd.f32 %v2959, %v3627
      %v3652 = vadd.f32 %v2960, %v3627
      %v3653 = vadd.f32 %v2961, %v3627
      %v3654 = vadd.f32 %v2962, %v3627
      %v3655 = vadd.f32 %v2963, %v3627
      %v3656 = vadd.f32 %v2964, %v3627
      %v3657 = vadd.f32 %v2965, %v3627
      %v3658 = vadd.f32 %v2966, %v3627
      %v3659 = vadd.f32 %v2967, %v3627
      %v3660 = vadd.f32 %v2968, %v3627
      %v3661 = vadd.f32 %v2969, %v3627
      %v3662 = vadd.f32 %v2970, %v3627
      %v3663 = vadd.f32 %v2971, %v3627
      %v3664 = vadd.f32 %v2972, %v3627
      %v3665 = vmax.f32 %v3629, 0.0
      %v3666 = vmax.f32 %v3630, 0.0
      %v3667 = vmax.f32 %v3631, 0.0
      %v3668 = vmax.f32 %v3632, 0.0
      %v3669 = vmax.f32 %v3633, 0.0
      %v3670 = vmax.f32 %v3634, 0.0
      %v3671 = vmax.f32 %v3635, 0.0
      %v3672 = vmax.f32 %v3636, 0.0
      %v3673 = vmax.f32 %v3637, 0.0
      %v3674 = vmax.f32 %v3638, 0.0
      %v3675 = vmax.f32 %v3639, 0.0
      %v3676 = vmax.f32 %v3640, 0.0
      %v3677 = vmax.f32 %v3641, 0.0
      %v3678 = vmax.f32 %v3642, 0.0
      %v3679 = vmax.f32 %v3643, 0.0
      %v3680 = vmax.f32 %v3644, 0.0
      %v3681 = vmax.f32 %v3645, 0.0
      %v3682 = vmax.f32 %v3646, 0.0
      %v3683 = vmax.f32 %v3647, 0.0
      %v3684 = vmax.f32 %v3648, 0.0
      %v3685 = vmax.f32 %v3649, 0.0
      %v3686 = vmax.f32 %v3650, 0.0
      %v3687 = vmax.f32 %v3651, 0.0
      %v3688 = vmax.f32 %v3652, 0.0
      %v3689 = vmax.f32 %v3653, 0.0
      %v3690 = vmax.f32 %v3654, 0.0
      %v3691 = vmax.f32 %v3655, 0.0
      %v3692 = vmax.f32 %v3656, 0.0
      %v3693 = vmax.f32 %v3657, 0.0
      %v3694 = vmax.f32 %v3658, 0.0
      %v3695 = vmax.f32 %v3659, 0.0
      %v3696 = vmax.f32 %v3660, 0.0
      %v3697 = vmax.f32 %v3661, 0.0
      %v3698 = vmax.f32 %v3662, 0.0
      %v3699 = vmax.f32 %v3663, 0.0
      %v3700 = vmax.f32 %v3664, 0.0
      %v3701 = vsel %vm3586, 1, 0
      %v3702 = vsel %vm3587, 1, 0
      %v3703 = vsel %vm3588, 1, 0
      %v3704 = vsel %vm3589, 1, 0
      %v3705 = vsel %vm3590, 1, 0
      %v3706 = vsel %vm3591, 1, 0
      %v3707 = vsel %vm3592, 1, 0
      %v3708 = vsel %vm3593, 1, 0
      %v3709 = vsel %vm3594, 1, 0
      %v3710 = vsel %vm3595, 1, 0
      %v3711 = vsel %vm3596, 1, 0
      %v3712 = vsel %vm3597, 1, 0
      %v3713 = vsel %vm3598, 1, 0
      %v3714 = vsel %vm3599, 1, 0
      %v3715 = vsel %vm3600, 1, 0
      %v3716 = vsel %vm3601, 1, 0
      %v3717 = vsel %vm3602, 1, 0
      %v3718 = vsel %vm3603, 1, 0
      %v3719 = vsel %vm3604, 1, 0
      %v3720 = vsel %vm3605, 1, 0
      %v3721 = vsel %vm3606, 1, 0
      %v3722 = vsel %vm3607, 1, 0
      %v3723 = vsel %vm3608, 1, 0
      %v3724 = vsel %vm3609, 1, 0
      %v3725 = vsel %vm3610, 1, 0
      %v3726 = vsel %vm3611, 1, 0
      %v3727 = vsel %vm3612, 1, 0
      %v3728 = vsel %vm3613, 1, 0
      %v3729 = vsel %vm3614, 1, 0
      %v3730 = vsel %vm3615, 1, 0
      %v3731 = vsel %vm3616, 1, 0
      %v3732 = vsel %vm3617, 1, 0
      %v3733 = vsel %vm3618, 1, 0
      %v3734 = vsel %vm3619, 1, 0
      %v3735 = vsel %vm3620, 1, 0
      %v3736 = vsel %vm3621, 1, 0
      %vm3737 = vcmp.eq.s32.totalorder %v3701, 1
      %vm3738 = vcmp.eq.s32.totalorder %v3702, 1
      %vm3739 = vcmp.eq.s32.totalorder %v3703, 1
      %vm3740 = vcmp.eq.s32.totalorder %v3704, 1
      %vm3741 = vcmp.eq.s32.totalorder %v3705, 1
      %vm3742 = vcmp.eq.s32.totalorder %v3706, 1
      %vm3743 = vcmp.eq.s32.totalorder %v3707, 1
      %vm3744 = vcmp.eq.s32.totalorder %v3708, 1
      %vm3745 = vcmp.eq.s32.totalorder %v3709, 1
      %vm3746 = vcmp.eq.s32.totalorder %v3710, 1
      %vm3747 = vcmp.eq.s32.totalorder %v3711, 1
      %vm3748 = vcmp.eq.s32.totalorder %v3712, 1
      %vm3749 = vcmp.eq.s32.totalorder %v3713, 1
      %vm3750 = vcmp.eq.s32.totalorder %v3714, 1
      %vm3751 = vcmp.eq.s32.totalorder %v3715, 1
      %vm3752 = vcmp.eq.s32.totalorder %v3716, 1
      %vm3753 = vcmp.eq.s32.totalorder %v3717, 1
      %vm3754 = vcmp.eq.s32.totalorder %v3718, 1
      %vm3755 = vcmp.eq.s32.totalorder %v3719, 1
      %vm3756 = vcmp.eq.s32.totalorder %v3720, 1
      %vm3757 = vcmp.eq.s32.totalorder %v3721, 1
      %vm3758 = vcmp.eq.s32.totalorder %v3722, 1
      %vm3759 = vcmp.eq.s32.totalorder %v3723, 1
      %vm3760 = vcmp.eq.s32.totalorder %v3724, 1
      %vm3761 = vcmp.eq.s32.totalorder %v3725, 1
      %vm3762 = vcmp.eq.s32.totalorder %v3726, 1
      %vm3763 = vcmp.eq.s32.totalorder %v3727, 1
      %vm3764 = vcmp.eq.s32.totalorder %v3728, 1
      %vm3765 = vcmp.eq.s32.totalorder %v3729, 1
      %vm3766 = vcmp.eq.s32.totalorder %v3730, 1
      %vm3767 = vcmp.eq.s32.totalorder %v3731, 1
      %vm3768 = vcmp.eq.s32.totalorder %v3732, 1
      %vm3769 = vcmp.eq.s32.totalorder %v3733, 1
      %vm3770 = vcmp.eq.s32.totalorder %v3734, 1
      %vm3771 = vcmp.eq.s32.totalorder %v3735, 1
      %vm3772 = vcmp.eq.s32.totalorder %v3736, 1
      %v3773 = vsel %vm3737, %v3665, 0.0
      %v3774 = vsel %vm3738, %v3666, 0.0
      %v3775 = vsel %vm3739, %v3667, 0.0
      %v3776 = vsel %vm3740, %v3668, 0.0
      %v3777 = vsel %vm3741, %v3669, 0.0
      %v3778 = vsel %vm3742, %v3670, 0.0
      %v3779 = vsel %vm3743, %v3671, 0.0
      %v3780 = vsel %vm3744, %v3672, 0.0
      %v3781 = vsel %vm3745, %v3673, 0.0
      %v3782 = vsel %vm3746, %v3674, 0.0
      %v3783 = vsel %vm3747, %v3675, 0.0
      %v3784 = vsel %vm3748, %v3676, 0.0
      %v3785 = vsel %vm3749, %v3677, 0.0
      %v3786 = vsel %vm3750, %v3678, 0.0
      %v3787 = vsel %vm3751, %v3679, 0.0
      %v3788 = vsel %vm3752, %v3680, 0.0
      %v3789 = vsel %vm3753, %v3681, 0.0
      %v3790 = vsel %vm3754, %v3682, 0.0
      %v3791 = vsel %vm3755, %v3683, 0.0
      %v3792 = vsel %vm3756, %v3684, 0.0
      %v3793 = vsel %vm3757, %v3685, 0.0
      %v3794 = vsel %vm3758, %v3686, 0.0
      %v3795 = vsel %vm3759, %v3687, 0.0
      %v3796 = vsel %vm3760, %v3688, 0.0
      %v3797 = vsel %vm3761, %v3689, 0.0
      %v3798 = vsel %vm3762, %v3690, 0.0
      %v3799 = vsel %vm3763, %v3691, 0.0
      %v3800 = vsel %vm3764, %v3692, 0.0
      %v3801 = vsel %vm3765, %v3693, 0.0
      %v3802 = vsel %vm3766, %v3694, 0.0
      %v3803 = vsel %vm3767, %v3695, 0.0
      %v3804 = vsel %vm3768, %v3696, 0.0
      %v3805 = vsel %vm3769, %v3697, 0.0
      %v3806 = vsel %vm3770, %v3698, 0.0
      %v3807 = vsel %vm3771, %v3699, 0.0
      %v3808 = vsel %vm3772, %v3700, 0.0
      %3809 = vst [vmem:[#allocation2] sm:$0xf] 0
      %3810 = vst [vmem:[#allocation2 + $0x4] sm:$0xf] 0
      %vm3811 = vcmask 1041408
      %vm3812 = vsmask.f32 1280
      %vm3813 = vmand %vm3811, %vm3812
      %v3814 = vld [vmem:[#allocation2 + $0x8] sm:$0x3]
      %v3815 = vsel %vm3813, 0, %v3814
      %3816 = vst [vmem:[#allocation2 + $0x8] sm:$0x3] %v3815
      %vm3817 = vcmask 1043457
      %vm3818 = vsmask.f32 7942
      %vm3819 = vmand %vm3817, %vm3818
      %v3820 = vld [vmem:[#allocation2 + $0x98] sm:$0xe]
      %v3821 = vsel %vm3819, 0, %v3820
      %3822 = vst [vmem:[#allocation2 + $0x98] sm:$0xe] %v3821
      %3823 = vst [vmem:[#allocation2 + $0x9c] sm:$0xf] 0
      %3824 = vst [vmem:[#allocation2 + $0xa0] sm:$0xf] 0
      %3825 = vst [vmem:[#allocation2 + $0xa4] sm:$0xf] 0
      %3826 = vst [vmem:[#allocation2 + $0xa8] sm:$0x7] 0
      %v3827 = vpack.c.bf16 %v3774, %v3773
      %v3828 = vpack.c.bf16 %v3776, %v3775
      %v3829 = vpack.c.bf16 %v3778, %v3777
      %v3830 = vpack.c.bf16 %v3780, %v3779
      %v3831 = vpack.c.bf16 %v3782, %v3781
      %v3832 = vpack.c.bf16 %v3784, %v3783
      %v3833 = vpack.c.bf16 %v3786, %v3785
      %v3834 = vpack.c.bf16 %v3788, %v3787
      %v3835 = vpack.c.bf16 %v3790, %v3789
      %v3836 = vpack.c.bf16 %v3792, %v3791
      %v3837 = vpack.c.bf16 %v3794, %v3793
      %v3838 = vpack.c.bf16 %v3796, %v3795
      %v3839 = vpack.c.bf16 %v3798, %v3797
      %v3840 = vpack.c.bf16 %v3800, %v3799
      %v3841 = vpack.c.bf16 %v3802, %v3801
      %v3842 = vpack.c.bf16 %v3804, %v3803
      %v3843 = vpack.c.bf16 %v3806, %v3805
      %v3844 = vpack.c.bf16 %v3808, %v3807
      %v3863 = vunpack.c.l.b16 %v3827
      %v3864 = vunpack.c.h.b16 %v3827
      %v3865 = vunpack.c.l.b16 %v3828
      %v3866 = vunpack.c.h.b16 %v3828
      %v3867 = vunpack.c.l.b16 %v3829
      %v3868 = vunpack.c.h.b16 %v3829
      %v3869 = vunpack.c.l.b16 %v3830
      %v3870 = vunpack.c.h.b16 %v3830
      %v3871 = vunpack.c.l.b16 %v3831
      %v3872 = vunpack.c.h.b16 %v3831
      %v3873 = vunpack.c.l.b16 %v3832
      %v3874 = vunpack.c.h.b16 %v3832
      %v3875 = vunpack.c.l.b16 %v3833
      %v3876 = vunpack.c.h.b16 %v3833
      %v3877 = vunpack.c.l.b16 %v3834
      %v3878 = vunpack.c.h.b16 %v3834
      %v3879 = vunpack.c.l.b16 %v3835
      %v3880 = vunpack.c.h.b16 %v3835
      %v3881 = vunpack.c.l.b16 %v3836
      %v3882 = vunpack.c.h.b16 %v3836
      %v3883 = vunpack.c.l.b16 %v3837
      %v3884 = vunpack.c.h.b16 %v3837
      %v3885 = vunpack.c.l.b16 %v3838
      %v3886 = vunpack.c.h.b16 %v3838
      %v3887 = vunpack.c.l.b16 %v3839
      %v3888 = vunpack.c.h.b16 %v3839
      %v3889 = vunpack.c.l.b16 %v3840
      %v3890 = vunpack.c.h.b16 %v3840
      %v3891 = vunpack.c.l.b16 %v3841
      %v3892 = vunpack.c.h.b16 %v3841
      %v3893 = vunpack.c.l.b16 %v3842
      %v3894 = vunpack.c.h.b16 %v3842
      %v3895 = vunpack.c.l.b16 %v3843
      %v3896 = vunpack.c.h.b16 %v3843
      %v3897 = vunpack.c.l.b16 %v3844
      %v3898 = vunpack.c.h.b16 %v3844
      %v3899 = vpack.c.b16 %v3863, %v3863
      %v3900 = vpack.c.b16 %v3864, %v3864
      %v3901 = vpack.c.b16 %v3865, %v3865
      %v3902 = vpack.c.b16 %v3866, %v3866
      %v3903 = vpack.c.b16 %v3867, %v3867
      %v3904 = vpack.c.b16 %v3868, %v3868
      %v3905 = vpack.c.b16 %v3869, %v3869
      %v3906 = vpack.c.b16 %v3870, %v3870
      %v3907 = vpack.c.b16 %v3871, %v3871
      %v3908 = vpack.c.b16 %v3872, %v3872
      %v3909 = vpack.c.b16 %v3873, %v3873
      %v3910 = vpack.c.b16 %v3874, %v3874
      %v3911 = vpack.c.b16 %v3875, %v3875
      %v3912 = vpack.c.b16 %v3876, %v3876
      %v3913 = vpack.c.b16 %v3877, %v3877
      %v3914 = vpack.c.b16 %v3878, %v3878
      %v3915 = vpack.c.b16 %v3879, %v3879
      %v3916 = vpack.c.b16 %v3880, %v3880
      %v3917 = vpack.c.b16 %v3881, %v3881
      %v3918 = vpack.c.b16 %v3882, %v3882
      %v3919 = vpack.c.b16 %v3883, %v3883
      %v3920 = vpack.c.b16 %v3884, %v3884
      %v3921 = vpack.c.b16 %v3885, %v3885
      %v3922 = vpack.c.b16 %v3886, %v3886
      %v3923 = vpack.c.b16 %v3887, %v3887
      %v3924 = vpack.c.b16 %v3888, %v3888
      %v3925 = vpack.c.b16 %v3889, %v3889
      %v3926 = vpack.c.b16 %v3890, %v3890
      %v3927 = vpack.c.b16 %v3891, %v3891
      %v3928 = vpack.c.b16 %v3892, %v3892
      %v3929 = vpack.c.b16 %v3893, %v3893
      %v3930 = vpack.c.b16 %v3894, %v3894
      %v3931 = vpack.c.b16 %v3895, %v3895
      %v3932 = vpack.c.b16 %v3896, %v3896
      %v3933 = vpack.c.b16 %v3897, %v3897
      %v3934 = vpack.c.b16 %v3898, %v3898
      %vm3935 = vsmask.f32 5392
      %vm3936 = vmor %vm3812, %vm3935
      %v3938 = vshrl.u32 %v3899, 16
      %v3940 = vrot.slane %v3938, 6
      %v3941 = vshll.u32 %v3899, 16
      %v3943 = vrot.slane %v3941, 7
      %v3944 = vor.u32 %v3940, %v3943
      %v3945 = vrot.slane %v3944, 4
      %v3947 = vshrl.u32 %v3900, 16
      %v3949 = vrot.slane %v3947, 6
      %v3950 = vshll.u32 %v3900, 16
      %v3952 = vrot.slane %v3950, 7
      %v3953 = vor.u32 %v3949, %v3952
      %v3954 = vsel %vm3936, %v3945, %v3953
      %v3955 = vrot.slane %v3953, 4
      %v3957 = vshrl.u32 %v3901, 16
      %v3959 = vrot.slane %v3957, 6
      %v3960 = vshll.u32 %v3901, 16
      %v3962 = vrot.slane %v3960, 7
      %v3963 = vor.u32 %v3959, %v3962
      %v3964 = vsel %vm3936, %v3955, %v3963
      %v3965 = vrot.slane %v3963, 4
      %v3967 = vshrl.u32 %v3902, 16
      %v3969 = vrot.slane %v3967, 6
      %v3970 = vshll.u32 %v3902, 16
      %v3972 = vrot.slane %v3970, 7
      %v3973 = vor.u32 %v3969, %v3972
      %v3974 = vsel %vm3936, %v3965, %v3973
      %v3975 = vrot.slane %v3973, 4
      %v3977 = vshrl.u32 %v3903, 16
      %v3979 = vrot.slane %v3977, 6
      %v3980 = vshll.u32 %v3903, 16
      %v3982 = vrot.slane %v3980, 7
      %v3983 = vor.u32 %v3979, %v3982
      %v3984 = vsel %vm3936, %v3975, %v3983
      %v3985 = vrot.slane %v3983, 4
      %v3987 = vshrl.u32 %v3904, 16
      %v3989 = vrot.slane %v3987, 6
      %v3990 = vshll.u32 %v3904, 16
      %v3992 = vrot.slane %v3990, 7
      %v3993 = vor.u32 %v3989, %v3992
      %v3994 = vsel %vm3936, %v3985, %v3993
      %v3995 = vrot.slane %v3993, 4
      %v3997 = vshrl.u32 %v3905, 16
      %v3999 = vrot.slane %v3997, 6
      %v4000 = vshll.u32 %v3905, 16
      %v4002 = vrot.slane %v4000, 7
      %v4003 = vor.u32 %v3999, %v4002
      %v4004 = vsel %vm3936, %v3995, %v4003
      %v4005 = vrot.slane %v4003, 4
      %v4007 = vshrl.u32 %v3906, 16
      %v4009 = vrot.slane %v4007, 6
      %v4010 = vshll.u32 %v3906, 16
      %v4012 = vrot.slane %v4010, 7
      %v4013 = vor.u32 %v4009, %v4012
      %v4014 = vsel %vm3936, %v4005, %v4013
      %v4015 = vrot.slane %v4013, 4
      %v4017 = vshrl.u32 %v3907, 16
      %v4019 = vrot.slane %v4017, 6
      %v4020 = vshll.u32 %v3907, 16
      %v4022 = vrot.slane %v4020, 7
      %v4023 = vor.u32 %v4019, %v4022
      %v4024 = vsel %vm3936, %v4015, %v4023
      %v4025 = vrot.slane %v4023, 4
      %v4027 = vshrl.u32 %v3908, 16
      %v4029 = vrot.slane %v4027, 6
      %v4030 = vshll.u32 %v3908, 16
      %v4032 = vrot.slane %v4030, 7
      %v4033 = vor.u32 %v4029, %v4032
      %v4034 = vsel %vm3936, %v4025, %v4033
      %v4035 = vrot.slane %v4033, 4
      %v4037 = vshrl.u32 %v3909, 16
      %v4039 = vrot.slane %v4037, 6
      %v4040 = vshll.u32 %v3909, 16
      %v4042 = vrot.slane %v4040, 7
      %v4043 = vor.u32 %v4039, %v4042
      %v4044 = vsel %vm3936, %v4035, %v4043
      %v4045 = vrot.slane %v4043, 4
      %v4047 = vshrl.u32 %v3910, 16
      %v4049 = vrot.slane %v4047, 6
      %v4050 = vshll.u32 %v3910, 16
      %v4052 = vrot.slane %v4050, 7
      %v4053 = vor.u32 %v4049, %v4052
      %v4054 = vsel %vm3936, %v4045, %v4053
      %v4055 = vrot.slane %v4053, 4
      %v4057 = vshrl.u32 %v3911, 16
      %v4059 = vrot.slane %v4057, 6
      %v4060 = vshll.u32 %v3911, 16
      %v4062 = vrot.slane %v4060, 7
      %v4063 = vor.u32 %v4059, %v4062
      %v4064 = vsel %vm3936, %v4055, %v4063
      %v4065 = vrot.slane %v4063, 4
      %v4067 = vshrl.u32 %v3912, 16
      %v4069 = vrot.slane %v4067, 6
      %v4070 = vshll.u32 %v3912, 16
      %v4072 = vrot.slane %v4070, 7
      %v4073 = vor.u32 %v4069, %v4072
      %v4074 = vsel %vm3936, %v4065, %v4073
      %v4075 = vrot.slane %v4073, 4
      %v4077 = vshrl.u32 %v3913, 16
      %v4079 = vrot.slane %v4077, 6
      %v4080 = vshll.u32 %v3913, 16
      %v4082 = vrot.slane %v4080, 7
      %v4083 = vor.u32 %v4079, %v4082
      %v4084 = vsel %vm3936, %v4075, %v4083
      %v4085 = vrot.slane %v4083, 4
      %v4087 = vshrl.u32 %v3914, 16
      %v4089 = vrot.slane %v4087, 6
      %v4090 = vshll.u32 %v3914, 16
      %v4092 = vrot.slane %v4090, 7
      %v4093 = vor.u32 %v4089, %v4092
      %v4094 = vsel %vm3936, %v4085, %v4093
      %v4095 = vrot.slane %v4093, 4
      %v4097 = vshrl.u32 %v3915, 16
      %v4099 = vrot.slane %v4097, 6
      %v4100 = vshll.u32 %v3915, 16
      %v4102 = vrot.slane %v4100, 7
      %v4103 = vor.u32 %v4099, %v4102
      %v4104 = vsel %vm3936, %v4095, %v4103
      %v4105 = vrot.slane %v4103, 4
      %v4107 = vshrl.u32 %v3916, 16
      %v4109 = vrot.slane %v4107, 6
      %v4110 = vshll.u32 %v3916, 16
      %v4112 = vrot.slane %v4110, 7
      %v4113 = vor.u32 %v4109, %v4112
      %v4114 = vsel %vm3936, %v4105, %v4113
      %v4115 = vrot.slane %v4113, 4
      %v4117 = vshrl.u32 %v3917, 16
      %v4119 = vrot.slane %v4117, 6
      %v4120 = vshll.u32 %v3917, 16
      %v4122 = vrot.slane %v4120, 7
      %v4123 = vor.u32 %v4119, %v4122
      %v4124 = vsel %vm3936, %v4115, %v4123
      %v4125 = vrot.slane %v4123, 4
      %v4127 = vshrl.u32 %v3918, 16
      %v4129 = vrot.slane %v4127, 6
      %v4130 = vshll.u32 %v3918, 16
      %v4132 = vrot.slane %v4130, 7
      %v4133 = vor.u32 %v4129, %v4132
      %v4134 = vsel %vm3936, %v4125, %v4133
      %v4135 = vrot.slane %v4133, 4
      %v4137 = vshrl.u32 %v3919, 16
      %v4139 = vrot.slane %v4137, 6
      %v4140 = vshll.u32 %v3919, 16
      %v4142 = vrot.slane %v4140, 7
      %v4143 = vor.u32 %v4139, %v4142
      %v4144 = vsel %vm3936, %v4135, %v4143
      %v4145 = vrot.slane %v4143, 4
      %v4147 = vshrl.u32 %v3920, 16
      %v4149 = vrot.slane %v4147, 6
      %v4150 = vshll.u32 %v3920, 16
      %v4152 = vrot.slane %v4150, 7
      %v4153 = vor.u32 %v4149, %v4152
      %v4154 = vsel %vm3936, %v4145, %v4153
      %v4155 = vrot.slane %v4153, 4
      %v4157 = vshrl.u32 %v3921, 16
      %v4159 = vrot.slane %v4157, 6
      %v4160 = vshll.u32 %v3921, 16
      %v4162 = vrot.slane %v4160, 7
      %v4163 = vor.u32 %v4159, %v4162
      %v4164 = vsel %vm3936, %v4155, %v4163
      %v4165 = vrot.slane %v4163, 4
      %v4167 = vshrl.u32 %v3922, 16
      %v4169 = vrot.slane %v4167, 6
      %v4170 = vshll.u32 %v3922, 16
      %v4172 = vrot.slane %v4170, 7
      %v4173 = vor.u32 %v4169, %v4172
      %v4174 = vsel %vm3936, %v4165, %v4173
      %v4175 = vrot.slane %v4173, 4
      %v4177 = vshrl.u32 %v3923, 16
      %v4179 = vrot.slane %v4177, 6
      %v4180 = vshll.u32 %v3923, 16
      %v4182 = vrot.slane %v4180, 7
      %v4183 = vor.u32 %v4179, %v4182
      %v4184 = vsel %vm3936, %v4175, %v4183
      %v4185 = vrot.slane %v4183, 4
      %v4187 = vshrl.u32 %v3924, 16
      %v4189 = vrot.slane %v4187, 6
      %v4190 = vshll.u32 %v3924, 16
      %v4192 = vrot.slane %v4190, 7
      %v4193 = vor.u32 %v4189, %v4192
      %v4194 = vsel %vm3936, %v4185, %v4193
      %v4195 = vrot.slane %v4193, 4
      %v4197 = vshrl.u32 %v3925, 16
      %v4199 = vrot.slane %v4197, 6
      %v4200 = vshll.u32 %v3925, 16
      %v4202 = vrot.slane %v4200, 7
      %v4203 = vor.u32 %v4199, %v4202
      %v4204 = vsel %vm3936, %v4195, %v4203
      %v4205 = vrot.slane %v4203, 4
      %v4207 = vshrl.u32 %v3926, 16
      %v4209 = vrot.slane %v4207, 6
      %v4210 = vshll.u32 %v3926, 16
      %v4212 = vrot.slane %v4210, 7
      %v4213 = vor.u32 %v4209, %v4212
      %v4214 = vsel %vm3936, %v4205, %v4213
      %v4215 = vrot.slane %v4213, 4
      %v4217 = vshrl.u32 %v3927, 16
      %v4219 = vrot.slane %v4217, 6
      %v4220 = vshll.u32 %v3927, 16
      %v4222 = vrot.slane %v4220, 7
      %v4223 = vor.u32 %v4219, %v4222
      %v4224 = vsel %vm3936, %v4215, %v4223
      %v4225 = vrot.slane %v4223, 4
      %v4227 = vshrl.u32 %v3928, 16
      %v4229 = vrot.slane %v4227, 6
      %v4230 = vshll.u32 %v3928, 16
      %v4232 = vrot.slane %v4230, 7
      %v4233 = vor.u32 %v4229, %v4232
      %v4234 = vsel %vm3936, %v4225, %v4233
      %v4235 = vrot.slane %v4233, 4
      %v4237 = vshrl.u32 %v3929, 16
      %v4239 = vrot.slane %v4237, 6
      %v4240 = vshll.u32 %v3929, 16
      %v4242 = vrot.slane %v4240, 7
      %v4243 = vor.u32 %v4239, %v4242
      %v4244 = vsel %vm3936, %v4235, %v4243
      %v4245 = vrot.slane %v4243, 4
      %v4247 = vshrl.u32 %v3930, 16
      %v4249 = vrot.slane %v4247, 6
      %v4250 = vshll.u32 %v3930, 16
      %v4252 = vrot.slane %v4250, 7
      %v4253 = vor.u32 %v4249, %v4252
      %v4254 = vsel %vm3936, %v4245, %v4253
      %v4255 = vrot.slane %v4253, 4
      %v4257 = vshrl.u32 %v3931, 16
      %v4259 = vrot.slane %v4257, 6
      %v4260 = vshll.u32 %v3931, 16
      %v4262 = vrot.slane %v4260, 7
      %v4263 = vor.u32 %v4259, %v4262
      %v4264 = vsel %vm3936, %v4255, %v4263
      %v4265 = vrot.slane %v4263, 4
      %v4267 = vshrl.u32 %v3932, 16
      %v4269 = vrot.slane %v4267, 6
      %v4270 = vshll.u32 %v3932, 16
      %v4272 = vrot.slane %v4270, 7
      %v4273 = vor.u32 %v4269, %v4272
      %v4274 = vsel %vm3936, %v4265, %v4273
      %v4275 = vrot.slane %v4273, 4
      %v4277 = vshrl.u32 %v3933, 16
      %v4279 = vrot.slane %v4277, 6
      %v4280 = vshll.u32 %v3933, 16
      %v4282 = vrot.slane %v4280, 7
      %v4283 = vor.u32 %v4279, %v4282
      %v4284 = vsel %vm3936, %v4275, %v4283
      %v4285 = vrot.slane %v4283, 4
      %v4287 = vshrl.u32 %v3934, 16
      %v4289 = vrot.slane %v4287, 6
      %v4290 = vshll.u32 %v3934, 16
      %v4292 = vrot.slane %v4290, 7
      %v4293 = vor.u32 %v4289, %v4292
      %v4294 = vsel %vm3936, %v4285, %v4293
      %v4295 = vrot.slane %v4293, 4
      %v4333 = vld [vmem:[#allocation2 + $0x8] sm:$0xe]
      %v4334 = vsel %vm3819, %v3944, %v4333
      %4335 = vst [vmem:[#allocation2 + $0x8] sm:$0xe] %v4334
      %4336 = vst [vmem:[#allocation2 + $0xc] sm:$0xf] %v3954
      %4337 = vst [vmem:[#allocation2 + $0x10] sm:$0xf] %v3964
      %4338 = vst [vmem:[#allocation2 + $0x14] sm:$0xf] %v3974
      %4339 = vst [vmem:[#allocation2 + $0x18] sm:$0xf] %v3984
      %4340 = vst [vmem:[#allocation2 + $0x1c] sm:$0xf] %v3994
      %4341 = vst [vmem:[#allocation2 + $0x20] sm:$0xf] %v4004
      %4342 = vst [vmem:[#allocation2 + $0x24] sm:$0xf] %v4014
      %4343 = vst [vmem:[#allocation2 + $0x28] sm:$0xf] %v4024
      %4344 = vst [vmem:[#allocation2 + $0x2c] sm:$0xf] %v4034
      %4345 = vst [vmem:[#allocation2 + $0x30] sm:$0xf] %v4044
      %4346 = vst [vmem:[#allocation2 + $0x34] sm:$0xf] %v4054
      %4347 = vst [vmem:[#allocation2 + $0x38] sm:$0xf] %v4064
      %4348 = vst [vmem:[#allocation2 + $0x3c] sm:$0xf] %v4074
      %4349 = vst [vmem:[#allocation2 + $0x40] sm:$0xf] %v4084
      %4350 = vst [vmem:[#allocation2 + $0x44] sm:$0xf] %v4094
      %4351 = vst [vmem:[#allocation2 + $0x48] sm:$0xf] %v4104
      %4352 = vst [vmem:[#allocation2 + $0x4c] sm:$0xf] %v4114
      %4353 = vst [vmem:[#allocation2 + $0x50] sm:$0xf] %v4124
      %4354 = vst [vmem:[#allocation2 + $0x54] sm:$0xf] %v4134
      %4355 = vst [vmem:[#allocation2 + $0x58] sm:$0xf] %v4144
      %4356 = vst [vmem:[#allocation2 + $0x5c] sm:$0xf] %v4154
      %4357 = vst [vmem:[#allocation2 + $0x60] sm:$0xf] %v4164
      %4358 = vst [vmem:[#allocation2 + $0x64] sm:$0xf] %v4174
      %4359 = vst [vmem:[#allocation2 + $0x68] sm:$0xf] %v4184
      %4360 = vst [vmem:[#allocation2 + $0x6c] sm:$0xf] %v4194
      %4361 = vst [vmem:[#allocation2 + $0x70] sm:$0xf] %v4204
      %4362 = vst [vmem:[#allocation2 + $0x74] sm:$0xf] %v4214
      %4363 = vst [vmem:[#allocation2 + $0x78] sm:$0xf] %v4224
      %4364 = vst [vmem:[#allocation2 + $0x7c] sm:$0xf] %v4234
      %4365 = vst [vmem:[#allocation2 + $0x80] sm:$0xf] %v4244
      %4366 = vst [vmem:[#allocation2 + $0x84] sm:$0xf] %v4254
      %4367 = vst [vmem:[#allocation2 + $0x88] sm:$0xf] %v4264
      %4368 = vst [vmem:[#allocation2 + $0x8c] sm:$0xf] %v4274
      %4369 = vst [vmem:[#allocation2 + $0x90] sm:$0xf] %v4284
      %4370 = vst [vmem:[#allocation2 + $0x94] sm:$0xf] %v4294
      %v4371 = vld [vmem:[#allocation2 + $0x98] sm:$0x3]
      %v4372 = vsel %vm3813, %v4295, %v4371
      %4373 = vst [vmem:[#allocation2 + $0x98] sm:$0x3] %v4372
      %v4374 = vld [vmem:[#allocation2] sm:$0xf]
      %v4375 = vld [vmem:[#allocation2 + $0x4] sm:$0xf]
      %v4376 = vld [vmem:[#allocation2 + $0x8] sm:$0xf]
      %v4377 = vld [vmem:[#allocation2 + $0xc] sm:$0xf]
      %v4378 = vld [vmem:[#allocation2 + $0x10] sm:$0xf]
      %v4379 = vld [vmem:[#allocation2 + $0x14] sm:$0xf]
      %v4380 = vld [vmem:[#allocation2 + $0x18] sm:$0xf]
      %v4381 = vld [vmem:[#allocation2 + $0x1c] sm:$0xf]
      %v4382 = vld [vmem:[#allocation2 + $0x20] sm:$0xf]
      %v4383 = vld [vmem:[#allocation2 + $0x24] sm:$0xf]
      %v4384 = vld [vmem:[#allocation2 + $0x28] sm:$0xf]
      %v4385 = vld [vmem:[#allocation2 + $0x2c] sm:$0xf]
      %v4386 = vld [vmem:[#allocation2 + $0x30] sm:$0xf]
      %v4387 = vld [vmem:[#allocation2 + $0x34] sm:$0xf]
      %v4388 = vld [vmem:[#allocation2 + $0x38] sm:$0xf]
      %v4389 = vld [vmem:[#allocation2 + $0x3c] sm:$0xf]
      %v4390 = vld [vmem:[#allocation2 + $0x40] sm:$0xf]
      %v4391 = vld [vmem:[#allocation2 + $0x44] sm:$0xf]
      %v4392 = vld [vmem:[#allocation2 + $0x48] sm:$0xf]
      %v4393 = vld [vmem:[#allocation2 + $0x4c] sm:$0xf]
      %v4394 = vld [vmem:[#allocation2 + $0x50] sm:$0xf]
      %v4395 = vld [vmem:[#allocation2 + $0x54] sm:$0xf]
      %v4396 = vld [vmem:[#allocation2 + $0x58] sm:$0xf]
      %v4397 = vld [vmem:[#allocation2 + $0x5c] sm:$0xf]
      %v4398 = vld [vmem:[#allocation2 + $0x60] sm:$0xf]
      %v4399 = vld [vmem:[#allocation2 + $0x64] sm:$0xf]
      %v4400 = vld [vmem:[#allocation2 + $0x68] sm:$0xf]
      %v4401 = vld [vmem:[#allocation2 + $0x6c] sm:$0xf]
      %v4402 = vld [vmem:[#allocation2 + $0x70] sm:$0xf]
      %v4403 = vld [vmem:[#allocation2 + $0x74] sm:$0xf]
      %v4404 = vld [vmem:[#allocation2 + $0x78] sm:$0xf]
      %v4405 = vld [vmem:[#allocation2 + $0x7c] sm:$0xf]
      %v4406 = vld [vmem:[#allocation2 + $0x80] sm:$0xf]
      %v4407 = vld [vmem:[#allocation2 + $0x84] sm:$0xf]
      %v4408 = vld [vmem:[#allocation2 + $0x88] sm:$0xf]
      %v4409 = vld [vmem:[#allocation2 + $0x8c] sm:$0xf]
      %v4410 = vld [vmem:[#allocation2 + $0x90] sm:$0x1]
      %v4447 = vunpack.c.l.b16 %v4374
      %v4448 = vunpack.c.l.b16 %v4375
      %v4449 = vunpack.c.l.b16 %v4376
      %v4450 = vunpack.c.l.b16 %v4377
      %v4451 = vunpack.c.l.b16 %v4378
      %v4452 = vunpack.c.l.b16 %v4379
      %v4453 = vunpack.c.l.b16 %v4380
      %v4454 = vunpack.c.l.b16 %v4381
      %v4455 = vunpack.c.l.b16 %v4382
      %v4456 = vunpack.c.l.b16 %v4383
      %v4457 = vunpack.c.l.b16 %v4384
      %v4458 = vunpack.c.l.b16 %v4385
      %v4459 = vunpack.c.l.b16 %v4386
      %v4460 = vunpack.c.l.b16 %v4387
      %v4461 = vunpack.c.l.b16 %v4388
      %v4462 = vunpack.c.l.b16 %v4389
      %v4463 = vunpack.c.l.b16 %v4390
      %v4464 = vunpack.c.l.b16 %v4391
      %v4465 = vunpack.c.l.b16 %v4392
      %v4466 = vunpack.c.l.b16 %v4393
      %v4467 = vunpack.c.l.b16 %v4394
      %v4468 = vunpack.c.l.b16 %v4395
      %v4469 = vunpack.c.l.b16 %v4396
      %v4470 = vunpack.c.l.b16 %v4397
      %v4471 = vunpack.c.l.b16 %v4398
      %v4472 = vunpack.c.l.b16 %v4399
      %v4473 = vunpack.c.l.b16 %v4400
      %v4474 = vunpack.c.l.b16 %v4401
      %v4475 = vunpack.c.l.b16 %v4402
      %v4476 = vunpack.c.l.b16 %v4403
      %v4477 = vunpack.c.l.b16 %v4404
      %v4478 = vunpack.c.l.b16 %v4405
      %v4479 = vunpack.c.l.b16 %v4406
      %v4480 = vunpack.c.l.b16 %v4407
      %v4481 = vunpack.c.l.b16 %v4408
      %v4482 = vunpack.c.l.b16 %v4409
      %v4483 = vpack.c.b16 %v4448, %v4447
      %v4484 = vpack.c.b16 %v4450, %v4449
      %v4485 = vpack.c.b16 %v4452, %v4451
      %v4486 = vpack.c.b16 %v4454, %v4453
      %v4487 = vpack.c.b16 %v4456, %v4455
      %v4488 = vpack.c.b16 %v4458, %v4457
      %v4489 = vpack.c.b16 %v4460, %v4459
      %v4490 = vpack.c.b16 %v4462, %v4461
      %v4491 = vpack.c.b16 %v4464, %v4463
      %v4492 = vpack.c.b16 %v4466, %v4465
      %v4493 = vpack.c.b16 %v4468, %v4467
      %v4494 = vpack.c.b16 %v4470, %v4469
      %v4495 = vpack.c.b16 %v4472, %v4471
      %v4496 = vpack.c.b16 %v4474, %v4473
      %v4497 = vpack.c.b16 %v4476, %v4475
      %v4498 = vpack.c.b16 %v4478, %v4477
      %v4499 = vpack.c.b16 %v4480, %v4479
      %v4500 = vpack.c.b16 %v4482, %v4481
      %v4520 = vunpack.c.l.b16 %v4410
      %v4521 = vpack.c.b16 %v4520, %v4520
      %v4523 = vshrl.u32 %v4483, 16
      %v4525 = vshll.u32 %v4483, 16
      %v4527 = vrot.slane %v4525, 1
      %v4528 = vor.u32 %v4523, %v4527
      %v4530 = vshll.u32 %v4484, 16
      %v4532 = vrot.slane %v4530, 1
      %v4533 = vsel %vm374, %v4528, %v4532
      %v4534 = vshrl.u32 %v4484, 16
      %v4536 = vor.u32 %v4534, %v4532
      %v4538 = vshll.u32 %v4485, 16
      %v4540 = vrot.slane %v4538, 1
      %v4541 = vsel %vm374, %v4536, %v4540
      %v4542 = vshrl.u32 %v4485, 16
      %v4544 = vor.u32 %v4542, %v4540
      %v4546 = vshll.u32 %v4486, 16
      %v4548 = vrot.slane %v4546, 1
      %v4549 = vsel %vm374, %v4544, %v4548
      %v4550 = vshrl.u32 %v4486, 16
      %v4552 = vor.u32 %v4550, %v4548
      %v4554 = vshll.u32 %v4487, 16
      %v4556 = vrot.slane %v4554, 1
      %v4557 = vsel %vm374, %v4552, %v4556
      %v4558 = vshrl.u32 %v4487, 16
      %v4560 = vor.u32 %v4558, %v4556
      %v4562 = vshll.u32 %v4488, 16
      %v4564 = vrot.slane %v4562, 1
      %v4565 = vsel %vm374, %v4560, %v4564
      %v4566 = vshrl.u32 %v4488, 16
      %v4568 = vor.u32 %v4566, %v4564
      %v4570 = vshll.u32 %v4489, 16
      %v4572 = vrot.slane %v4570, 1
      %v4573 = vsel %vm374, %v4568, %v4572
      %v4574 = vshrl.u32 %v4489, 16
      %v4576 = vor.u32 %v4574, %v4572
      %v4578 = vshll.u32 %v4490, 16
      %v4580 = vrot.slane %v4578, 1
      %v4581 = vsel %vm374, %v4576, %v4580
      %v4582 = vshrl.u32 %v4490, 16
      %v4584 = vor.u32 %v4582, %v4580
      %v4586 = vshll.u32 %v4491, 16
      %v4588 = vrot.slane %v4586, 1
      %v4589 = vsel %vm374, %v4584, %v4588
      %v4590 = vshrl.u32 %v4491, 16
      %v4592 = vor.u32 %v4590, %v4588
      %v4594 = vshll.u32 %v4492, 16
      %v4596 = vrot.slane %v4594, 1
      %v4597 = vsel %vm374, %v4592, %v4596
      %v4598 = vshrl.u32 %v4492, 16
      %v4600 = vor.u32 %v4598, %v4596
      %v4602 = vshll.u32 %v4493, 16
      %v4604 = vrot.slane %v4602, 1
      %v4605 = vsel %vm374, %v4600, %v4604
      %v4606 = vshrl.u32 %v4493, 16
      %v4608 = vor.u32 %v4606, %v4604
      %v4610 = vshll.u32 %v4494, 16
      %v4612 = vrot.slane %v4610, 1
      %v4613 = vsel %vm374, %v4608, %v4612
      %v4614 = vshrl.u32 %v4494, 16
      %v4616 = vor.u32 %v4614, %v4612
      %v4618 = vshll.u32 %v4495, 16
      %v4620 = vrot.slane %v4618, 1
      %v4621 = vsel %vm374, %v4616, %v4620
      %v4622 = vshrl.u32 %v4495, 16
      %v4624 = vor.u32 %v4622, %v4620
      %v4626 = vshll.u32 %v4496, 16
      %v4628 = vrot.slane %v4626, 1
      %v4629 = vsel %vm374, %v4624, %v4628
      %v4630 = vshrl.u32 %v4496, 16
      %v4632 = vor.u32 %v4630, %v4628
      %v4634 = vshll.u32 %v4497, 16
      %v4636 = vrot.slane %v4634, 1
      %v4637 = vsel %vm374, %v4632, %v4636
      %v4638 = vshrl.u32 %v4497, 16
      %v4640 = vor.u32 %v4638, %v4636
      %v4642 = vshll.u32 %v4498, 16
      %v4644 = vrot.slane %v4642, 1
      %v4645 = vsel %vm374, %v4640, %v4644
      %v4646 = vshrl.u32 %v4498, 16
      %v4648 = vor.u32 %v4646, %v4644
      %v4650 = vshll.u32 %v4499, 16
      %v4652 = vrot.slane %v4650, 1
      %v4653 = vsel %vm374, %v4648, %v4652
      %v4654 = vshrl.u32 %v4499, 16
      %v4656 = vor.u32 %v4654, %v4652
      %v4658 = vshll.u32 %v4500, 16
      %v4660 = vrot.slane %v4658, 1
      %v4661 = vsel %vm374, %v4656, %v4660
      %v4662 = vshrl.u32 %v4500, 16
      %v4664 = vor.u32 %v4662, %v4660
      %v4666 = vshll.u32 %v4521, 16
      %v4668 = vrot.slane %v4666, 1
      %v4669 = vsel %vm374, %v4664, %v4668
      %v4688 = vld [vmem:[%s3] sm:$0xf]
      %v4689 = vld [vmem:[%s3 + $0x4] sm:$0xf]
      %v4690 = vld [vmem:[%s3 + $0x8] sm:$0xf]
      %v4691 = vld [vmem:[%s3 + $0xc] sm:$0xf]
      %v4692 = vld [vmem:[%s3 + $0x10] sm:$0xf]
      %v4693 = vld [vmem:[%s3 + $0x14] sm:$0xf]
      %v4694 = vld [vmem:[%s3 + $0x18] sm:$0xf]
      %v4695 = vld [vmem:[%s3 + $0x1c] sm:$0xf]
      %v4696 = vld [vmem:[%s3 + $0x20] sm:$0xf]
      %v4697 = vld [vmem:[%s3 + $0x24] sm:$0xf]
      %v4698 = vld [vmem:[%s3 + $0x28] sm:$0xf]
      %v4699 = vld [vmem:[%s3 + $0x2c] sm:$0xf]
      %v4700 = vld [vmem:[%s3 + $0x30] sm:$0xf]
      %v4701 = vld [vmem:[%s3 + $0x34] sm:$0xf]
      %v4702 = vld [vmem:[%s3 + $0x38] sm:$0xf]
      %v4703 = vld [vmem:[%s3 + $0x3c] sm:$0xf]
      %v4704 = vld [vmem:[%s3 + $0x40] sm:$0xf]
      %v4705 = vld [vmem:[%s3 + $0x44] sm:$0xf]
      %v4706 = vld [vmem:[%s3 + $0x48] sm:$0xf]
      %v4707 = vld [vmem:[%s3 + $0x4c] sm:$0xf]
      %v4708 = vld [vmem:[%s3 + $0x50] sm:$0xf]
      %v4709 = vld [vmem:[%s3 + $0x54] sm:$0xf]
      %v4710 = vld [vmem:[%s3 + $0x58] sm:$0xf]
      %v4711 = vld [vmem:[%s3 + $0x5c] sm:$0xf]
      %v4712 = vld [vmem:[%s3 + $0x60] sm:$0xf]
      %v4713 = vld [vmem:[%s3 + $0x64] sm:$0xf]
      %v4714 = vld [vmem:[%s3 + $0x68] sm:$0xf]
      %v4715 = vld [vmem:[%s3 + $0x6c] sm:$0xf]
      %v4716 = vld [vmem:[%s3 + $0x70] sm:$0xf]
      %v4717 = vld [vmem:[%s3 + $0x74] sm:$0xf]
      %v4718 = vld [vmem:[%s3 + $0x78] sm:$0xf]
      %v4719 = vld [vmem:[%s3 + $0x7c] sm:$0xf]
      %v4720 = vld [vmem:[#allocation2] sm:$0xe]
      %v4721 = vld [vmem:[#allocation2 + $0x8] sm:$0xe]
      %v4722 = vld [vmem:[#allocation2 + $0x90] sm:$0xf]
      %v4723 = vld [vmem:[#allocation2 + $0x94] sm:$0xf]
      %v4724 = vld [vmem:[#allocation2 + $0x98] sm:$0x1]
      %v4726 = vunpack.c.l.b16 %v4720
      %v4727 = vpack.c.b16 %v4448, %v4726
      %v4732 = vunpack.c.l.b16 %v4721
      %v4733 = vunpack.c.l.b16 %v4722
      %v4734 = vunpack.c.l.b16 %v4723
      %v4735 = vunpack.c.l.b16 %v4724
      %v4736 = vpack.c.b16 %v4450, %v4732
      %v4737 = vpack.c.b16 %v4734, %v4733
      %v4738 = vpack.c.b16 %v4735, %v4735
      %s4739 = scalar_lea.vmem %s3, 128
      %v4740 = vld [vmem:[%s4739] sm:$0xf]
      %v4741 = vld [vmem:[%s4739 + $0x4] sm:$0xf]
      %v4742 = vld [vmem:[%s4739 + $0x8] sm:$0xf]
      %v4743 = vld [vmem:[%s4739 + $0xc] sm:$0xf]
      %v4744 = vld [vmem:[%s4739 + $0x10] sm:$0xf]
      %v4745 = vld [vmem:[%s4739 + $0x14] sm:$0xf]
      %v4746 = vld [vmem:[%s4739 + $0x18] sm:$0xf]
      %v4747 = vld [vmem:[%s4739 + $0x1c] sm:$0xf]
      %v4748 = vld [vmem:[%s4739 + $0x20] sm:$0xf]
      %v4749 = vld [vmem:[%s4739 + $0x24] sm:$0xf]
      %v4750 = vld [vmem:[%s4739 + $0x28] sm:$0xf]
      %v4751 = vld [vmem:[%s4739 + $0x2c] sm:$0xf]
      %v4752 = vld [vmem:[%s4739 + $0x30] sm:$0xf]
      %v4753 = vld [vmem:[%s4739 + $0x34] sm:$0xf]
      %v4754 = vld [vmem:[%s4739 + $0x38] sm:$0xf]
      %v4755 = vld [vmem:[%s4739 + $0x3c] sm:$0xf]
      %v4756 = vld [vmem:[%s4739 + $0x40] sm:$0xf]
      %v4757 = vld [vmem:[%s4739 + $0x44] sm:$0xf]
      %v4758 = vld [vmem:[%s4739 + $0x48] sm:$0xf]
      %v4759 = vld [vmem:[%s4739 + $0x4c] sm:$0xf]
      %v4760 = vld [vmem:[%s4739 + $0x50] sm:$0xf]
      %v4761 = vld [vmem:[%s4739 + $0x54] sm:$0xf]
      %v4762 = vld [vmem:[%s4739 + $0x58] sm:$0xf]
      %v4763 = vld [vmem:[%s4739 + $0x5c] sm:$0xf]
      %v4764 = vld [vmem:[%s4739 + $0x60] sm:$0xf]
      %v4765 = vld [vmem:[%s4739 + $0x64] sm:$0xf]
      %v4766 = vld [vmem:[%s4739 + $0x68] sm:$0xf]
      %v4767 = vld [vmem:[%s4739 + $0x6c] sm:$0xf]
      %v4768 = vld [vmem:[%s4739 + $0x70] sm:$0xf]
      %v4769 = vld [vmem:[%s4739 + $0x74] sm:$0xf]
      %v4770 = vld [vmem:[%s4739 + $0x78] sm:$0xf]
      %v4771 = vld [vmem:[%s4739 + $0x7c] sm:$0xf]
      %v4772 = vrot.slane %v4727, 1
      %v4773 = vrot.slane %v4484, 1
      %v4774 = vsel %vm625, %v4772, %v4773
      %v4775 = vrot.slane %v4736, 1
      %v4776 = vrot.slane %v4485, 1
      %v4777 = vsel %vm625, %v4775, %v4776
      %v4778 = vsel %vm625, %v4773, %v4776
      %v4779 = vrot.slane %v4486, 1
      %v4780 = vsel %vm625, %v4776, %v4779
      %v4781 = vrot.slane %v4487, 1
      %v4782 = vsel %vm625, %v4779, %v4781
      %v4783 = vrot.slane %v4488, 1
      %v4784 = vsel %vm625, %v4781, %v4783
      %v4785 = vrot.slane %v4489, 1
      %v4786 = vsel %vm625, %v4783, %v4785
      %v4787 = vrot.slane %v4490, 1
      %v4788 = vsel %vm625, %v4785, %v4787
      %v4789 = vrot.slane %v4491, 1
      %v4790 = vsel %vm625, %v4787, %v4789
      %v4791 = vrot.slane %v4492, 1
      %v4792 = vsel %vm625, %v4789, %v4791
      %v4793 = vrot.slane %v4493, 1
      %v4794 = vsel %vm625, %v4791, %v4793
      %v4795 = vrot.slane %v4494, 1
      %v4796 = vsel %vm625, %v4793, %v4795
      %v4797 = vrot.slane %v4495, 1
      %v4798 = vsel %vm625, %v4795, %v4797
      %v4799 = vrot.slane %v4496, 1
      %v4800 = vsel %vm625, %v4797, %v4799
      %v4801 = vrot.slane %v4497, 1
      %v4802 = vsel %vm625, %v4799, %v4801
      %v4803 = vrot.slane %v4498, 1
      %v4804 = vsel %vm625, %v4801, %v4803
      %v4805 = vrot.slane %v4499, 1
      %v4806 = vsel %vm625, %v4803, %v4805
      %v4807 = vrot.slane %v4500, 1
      %v4808 = vsel %vm625, %v4805, %v4807
      %v4809 = vrot.slane %v4737, 1
      %v4810 = vsel %vm625, %v4807, %v4809
      %v4811 = vrot.slane %v4521, 1
      %v4812 = vsel %vm625, %v4807, %v4811
      %v4813 = vrot.slane %v4738, 1
      %v4814 = vsel %vm625, %v4809, %v4813
      %v4868 = vunpack.c.l.b16 %v4740
      %v4869 = vunpack.c.l.b16 %v4741
      %v4870 = vunpack.c.l.b16 %v4742
      %v4871 = vunpack.c.l.b16 %v4743
      %v4872 = vunpack.c.l.b16 %v4744
      %v4873 = vunpack.c.l.b16 %v4745
      %v4874 = vunpack.c.l.b16 %v4746
      %v4875 = vunpack.c.l.b16 %v4747
      %v4876 = vunpack.c.l.b16 %v4748
      %v4877 = vunpack.c.l.b16 %v4749
      %v4878 = vunpack.c.l.b16 %v4750
      %v4879 = vunpack.c.l.b16 %v4751
      %v4880 = vunpack.c.l.b16 %v4752
      %v4881 = vunpack.c.l.b16 %v4753
      %v4882 = vunpack.c.l.b16 %v4754
      %v4883 = vunpack.c.l.b16 %v4755
      %v4884 = vunpack.c.l.b16 %v4756
      %v4885 = vunpack.c.l.b16 %v4757
      %v4886 = vunpack.c.l.b16 %v4758
      %v4887 = vunpack.c.l.b16 %v4759
      %v4888 = vunpack.c.l.b16 %v4760
      %v4889 = vunpack.c.l.b16 %v4761
      %v4890 = vunpack.c.l.b16 %v4762
      %v4891 = vunpack.c.l.b16 %v4763
      %v4892 = vunpack.c.l.b16 %v4764
      %v4893 = vunpack.c.l.b16 %v4765
      %v4894 = vunpack.c.l.b16 %v4766
      %v4895 = vunpack.c.l.b16 %v4767
      %v4896 = vunpack.c.l.b16 %v4768
      %v4897 = vunpack.c.l.b16 %v4769
      %v4898 = vunpack.c.l.b16 %v4770
      %v4899 = vunpack.c.l.b16 %v4771
      %v4900 = vpack.c.b16 %v4869, %v4868
      %v4901 = vpack.c.b16 %v4871, %v4870
      %v4902 = vpack.c.b16 %v4873, %v4872
      %v4903 = vpack.c.b16 %v4875, %v4874
      %v4904 = vpack.c.b16 %v4877, %v4876
      %v4905 = vpack.c.b16 %v4879, %v4878
      %v4906 = vpack.c.b16 %v4881, %v4880
      %v4907 = vpack.c.b16 %v4883, %v4882
      %v4908 = vpack.c.b16 %v4885, %v4884
      %v4909 = vpack.c.b16 %v4887, %v4886
      %v4910 = vpack.c.b16 %v4889, %v4888
      %v4911 = vpack.c.b16 %v4891, %v4890
      %v4912 = vpack.c.b16 %v4893, %v4892
      %v4913 = vpack.c.b16 %v4895, %v4894
      %v4914 = vpack.c.b16 %v4897, %v4896
      %v4915 = vpack.c.b16 %v4899, %v4898
      %4932 = vmatprep.subr.bf16.mxu0 0
      %4933 = vmatpush1.bf16.msra.mxu0 %v4900
      %4934 = vmatprep.subr.bf16.mxu0 0
      %4935 = vmatpush1.bf16.msra.mxu0 %v4901
      %4936 = vmatprep.subr.bf16.mxu0 0
      %4937 = vmatpush1.bf16.msra.mxu0 %v4902
      %4938 = vmatprep.subr.bf16.mxu0 0
      %4939 = vmatpush1.bf16.msra.mxu0 %v4903
      %4940 = vmatprep.subr.bf16.mxu0 0
      %4941 = vmatpush1.bf16.msra.mxu0 %v4904
      %4942 = vmatprep.subr.bf16.mxu0 0
      %4943 = vmatpush1.bf16.msra.mxu0 %v4905
      %4944 = vmatprep.subr.bf16.mxu0 0
      %4945 = vmatpush1.bf16.msra.mxu0 %v4906
      %4946 = vmatprep.subr.bf16.mxu0 0
      %4947 = vmatpush1.bf16.msra.mxu0 %v4907
      %4948 = vmatprep.subr.bf16.mxu0 0
      %4949 = vmatpush1.bf16.msra.mxu0 %v4908
      %4950 = vmatprep.subr.bf16.mxu0 0
      %4951 = vmatpush1.bf16.msra.mxu0 %v4909
      %4952 = vmatprep.subr.bf16.mxu0 0
      %4953 = vmatpush1.bf16.msra.mxu0 %v4910
      %4954 = vmatprep.subr.bf16.mxu0 0
      %4955 = vmatpush1.bf16.msra.mxu0 %v4911
      %4956 = vmatprep.subr.bf16.mxu0 0
      %4957 = vmatpush1.bf16.msra.mxu0 %v4912
      %4958 = vmatprep.subr.bf16.mxu0 0
      %4959 = vmatpush1.bf16.msra.mxu0 %v4913
      %4960 = vmatprep.subr.bf16.mxu0 0
      %4961 = vmatpush1.bf16.msra.mxu0 %v4914
      %4962 = vmatprep.subr.bf16.mxu0 0
      %4963 = vmatpush1.bf16.msra.mxu0 %v4915
      %4964 = vmatprep.mubr.bf16.mxu0 %v4777
      %4965 = vmatmul.mubr.bf16.gmra.mrb[0].mxu0 %v4774
      %v4966 = vpop.f32.mrb[0].mxu0
      %v4967 = vadd.f32 0.0, %v4966
      %v4968 = vpop.f32.mrb[0].mxu0
      %v4969 = vpop.f32.mrb[0].mxu0
      %v4970 = vadd.f32 0.0, %v4969
      %v4971 = vpop.f32.mrb[0].mxu0
      %4972 = vmatprep.mubr.bf16.mxu0 %v4780
      %4973 = vmatmul.mubr.bf16.gmra.mrb[0].mxu0 %v4778
      %v4974 = vpop.f32.mrb[0].mxu0
      %v4975 = vadd.f32 0.0, %v4974
      %v4976 = vpop.f32.mrb[0].mxu0
      %v4977 = vpop.f32.mrb[0].mxu0
      %v4978 = vadd.f32 0.0, %v4977
      %v4979 = vpop.f32.mrb[0].mxu0
      %4980 = vmatprep.mubr.bf16.mxu0 %v4782
      %4981 = vmatmul.mubr.bf16.gmra.mrb[0].mxu0 %v4780
      %v4982 = vpop.f32.mrb[0].mxu0
      %v4983 = vadd.f32 0.0, %v4982
      %v4984 = vpop.f32.mrb[0].mxu0
      %v4985 = vpop.f32.mrb[0].mxu0
      %v4986 = vadd.f32 0.0, %v4985
      %v4987 = vpop.f32.mrb[0].mxu0
      %4988 = vmatprep.mubr.bf16.mxu0 %v4784
      %4989 = vmatmul.mubr.bf16.gmra.mrb[0].mxu0 %v4782
      %v4990 = vpop.f32.mrb[0].mxu0
      %v4991 = vadd.f32 0.0, %v4990
      %v4992 = vpop.f32.mrb[0].mxu0
      %v4993 = vpop.f32.mrb[0].mxu0
      %v4994 = vadd.f32 0.0, %v4993
      %v4995 = vpop.f32.mrb[0].mxu0
      %4996 = vmatprep.mubr.bf16.mxu0 %v4786
      %4997 = vmatmul.mubr.bf16.gmra.mrb[0].mxu0 %v4784
      %v4998 = vpop.f32.mrb[0].mxu0
      %v4999 = vadd.f32 0.0, %v4998
      %v5000 = vpop.f32.mrb[0].mxu0
      %v5001 = vpop.f32.mrb[0].mxu0
      %v5002 = vadd.f32 0.0, %v5001
      %v5003 = vpop.f32.mrb[0].mxu0
      %5004 = vmatprep.mubr.bf16.mxu0 %v4788
      %5005 = vmatmul.mubr.bf16.gmra.mrb[0].mxu0 %v4786
      %v5006 = vpop.f32.mrb[0].mxu0
      %v5007 = vadd.f32 0.0, %v5006
      %v5008 = vpop.f32.mrb[0].mxu0
      %v5009 = vpop.f32.mrb[0].mxu0
      %v5010 = vadd.f32 0.0, %v5009
      %v5011 = vpop.f32.mrb[0].mxu0
      %5012 = vmatprep.mubr.bf16.mxu0 %v4790
      %5013 = vmatmul.mubr.bf16.gmra.mrb[0].mxu0 %v4788
      %v5014 = vpop.f32.mrb[0].mxu0
      %v5015 = vadd.f32 0.0, %v5014
      %v5016 = vpop.f32.mrb[0].mxu0
      %v5017 = vpop.f32.mrb[0].mxu0
      %v5018 = vadd.f32 0.0, %v5017
      %v5019 = vpop.f32.mrb[0].mxu0
      %5020 = vmatprep.mubr.bf16.mxu0 %v4792
      %5021 = vmatmul.mubr.bf16.gmra.mrb[0].mxu0 %v4790
      %v5022 = vpop.f32.mrb[0].mxu0
      %v5023 = vadd.f32 0.0, %v5022
      %v5024 = vpop.f32.mrb[0].mxu0
      %v5025 = vpop.f32.mrb[0].mxu0
      %v5026 = vadd.f32 0.0, %v5025
      %v5027 = vpop.f32.mrb[0].mxu0
      %5028 = vmatprep.mubr.bf16.mxu0 %v4794
      %5029 = vmatmul.mubr.bf16.gmra.mrb[0].mxu0 %v4792
      %v5030 = vpop.f32.mrb[0].mxu0
      %v5031 = vadd.f32 0.0, %v5030
      %v5032 = vpop.f32.mrb[0].mxu0
      %v5033 = vpop.f32.mrb[0].mxu0
      %v5034 = vadd.f32 0.0, %v5033
      %v5035 = vpop.f32.mrb[0].mxu0
      %5036 = vmatprep.mubr.bf16.mxu0 %v4796
      %5037 = vmatmul.mubr.bf16.gmra.mrb[0].mxu0 %v4794
      %v5038 = vpop.f32.mrb[0].mxu0
      %v5039 = vadd.f32 0.0, %v5038
      %v5040 = vpop.f32.mrb[0].mxu0
      %v5041 = vpop.f32.mrb[0].mxu0
      %v5042 = vadd.f32 0.0, %v5041
      %v5043 = vpop.f32.mrb[0].mxu0
      %5044 = vmatprep.mubr.bf16.mxu0 %v4798
      %5045 = vmatmul.mubr.bf16.gmra.mrb[0].mxu0 %v4796
      %v5046 = vpop.f32.mrb[0].mxu0
      %v5047 = vadd.f32 0.0, %v5046
      %v5048 = vpop.f32.mrb[0].mxu0
      %v5049 = vpop.f32.mrb[0].mxu0
      %v5050 = vadd.f32 0.0, %v5049
      %v5051 = vpop.f32.mrb[0].mxu0
      %5052 = vmatprep.mubr.bf16.mxu0 %v4800
      %5053 = vmatmul.mubr.bf16.gmra.mrb[0].mxu0 %v4798
      %v5054 = vpop.f32.mrb[0].mxu0
      %v5055 = vadd.f32 0.0, %v5054
      %v5056 = vpop.f32.mrb[0].mxu0
      %v5057 = vpop.f32.mrb[0].mxu0
      %v5058 = vadd.f32 0.0, %v5057
      %v5059 = vpop.f32.mrb[0].mxu0
      %5060 = vmatprep.mubr.bf16.mxu0 %v4802
      %5061 = vmatmul.mubr.bf16.gmra.mrb[0].mxu0 %v4800
      %v5062 = vpop.f32.mrb[0].mxu0
      %v5063 = vadd.f32 0.0, %v5062
      %v5064 = vpop.f32.mrb[0].mxu0
      %v5065 = vpop.f32.mrb[0].mxu0
      %v5066 = vadd.f32 0.0, %v5065
      %v5067 = vpop.f32.mrb[0].mxu0
      %5068 = vmatprep.mubr.bf16.mxu0 %v4804
      %5069 = vmatmul.mubr.bf16.gmra.mrb[0].mxu0 %v4802
      %v5070 = vpop.f32.mrb[0].mxu0
      %v5071 = vadd.f32 0.0, %v5070
      %v5072 = vpop.f32.mrb[0].mxu0
      %v5073 = vpop.f32.mrb[0].mxu0
      %v5074 = vadd.f32 0.0, %v5073
      %v5075 = vpop.f32.mrb[0].mxu0
      %5076 = vmatprep.mubr.bf16.mxu0 %v4806
      %5077 = vmatmul.mubr.bf16.gmra.mrb[0].mxu0 %v4804
      %v5078 = vpop.f32.mrb[0].mxu0
      %v5079 = vadd.f32 0.0, %v5078
      %v5080 = vpop.f32.mrb[0].mxu0
      %v5081 = vpop.f32.mrb[0].mxu0
      %v5082 = vadd.f32 0.0, %v5081
      %v5083 = vpop.f32.mrb[0].mxu0
      %5084 = vmatprep.mubr.bf16.mxu0 %v4808
      %5085 = vmatmul.mubr.bf16.gmra.mrb[0].mxu0 %v4806
      %v5086 = vpop.f32.mrb[0].mxu0
      %v5087 = vadd.f32 0.0, %v5086
      %v5088 = vpop.f32.mrb[0].mxu0
      %v5089 = vpop.f32.mrb[0].mxu0
      %v5090 = vadd.f32 0.0, %v5089
      %v5091 = vpop.f32.mrb[0].mxu0
      %5092 = vmatprep.mubr.bf16.mxu0 %v4810
      %5093 = vmatmul.mubr.bf16.gmra.mrb[0].mxu0 %v4808
      %v5094 = vpop.f32.mrb[0].mxu0
      %v5095 = vadd.f32 0.0, %v5094
      %v5096 = vpop.f32.mrb[0].mxu0
      %v5097 = vpop.f32.mrb[0].mxu0
      %v5098 = vadd.f32 0.0, %v5097
      %v5099 = vpop.f32.mrb[0].mxu0
      %5100 = vmatprep.mubr.bf16.mxu0 %v4814
      %5101 = vmatmul.mubr.bf16.gmra.mrb[0].mxu0 %v4812
      %v5102 = vpop.f32.mrb[0].mxu0
      %v5103 = vadd.f32 0.0, %v5102
      %v5104 = vpop.f32.mrb[0].mxu0
      %v5105 = vpop.f32.mrb[0].mxu0
      %v5106 = vadd.f32 0.0, %v5105
      %v5107 = vpop.f32.mrb[0].mxu0
      %5108 = vdwg.mxu0
      %v5141 = vunpack.c.l.b16 %v4688
      %v5142 = vunpack.c.l.b16 %v4689
      %v5143 = vunpack.c.l.b16 %v4690
      %v5144 = vunpack.c.l.b16 %v4691
      %v5145 = vunpack.c.l.b16 %v4692
      %v5146 = vunpack.c.l.b16 %v4693
      %v5147 = vunpack.c.l.b16 %v4694
      %v5148 = vunpack.c.l.b16 %v4695
      %v5149 = vunpack.c.l.b16 %v4696
      %v5150 = vunpack.c.l.b16 %v4697
      %v5151 = vunpack.c.l.b16 %v4698
      %v5152 = vunpack.c.l.b16 %v4699
      %v5153 = vunpack.c.l.b16 %v4700
      %v5154 = vunpack.c.l.b16 %v4701
      %v5155 = vunpack.c.l.b16 %v4702
      %v5156 = vunpack.c.l.b16 %v4703
      %v5157 = vunpack.c.l.b16 %v4704
      %v5158 = vunpack.c.l.b16 %v4705
      %v5159 = vunpack.c.l.b16 %v4706
      %v5160 = vunpack.c.l.b16 %v4707
      %v5161 = vunpack.c.l.b16 %v4708
      %v5162 = vunpack.c.l.b16 %v4709
      %v5163 = vunpack.c.l.b16 %v4710
      %v5164 = vunpack.c.l.b16 %v4711
      %v5165 = vunpack.c.l.b16 %v4712
      %v5166 = vunpack.c.l.b16 %v4713
      %v5167 = vunpack.c.l.b16 %v4714
      %v5168 = vunpack.c.l.b16 %v4715
      %v5169 = vunpack.c.l.b16 %v4716
      %v5170 = vunpack.c.l.b16 %v4717
      %v5171 = vunpack.c.l.b16 %v4718
      %v5172 = vunpack.c.l.b16 %v4719
      %v5173 = vpack.c.b16 %v5142, %v5141
      %v5174 = vpack.c.b16 %v5144, %v5143
      %v5175 = vpack.c.b16 %v5146, %v5145
      %v5176 = vpack.c.b16 %v5148, %v5147
      %v5177 = vpack.c.b16 %v5150, %v5149
      %v5178 = vpack.c.b16 %v5152, %v5151
      %v5179 = vpack.c.b16 %v5154, %v5153
      %v5180 = vpack.c.b16 %v5156, %v5155
      %v5181 = vpack.c.b16 %v5158, %v5157
      %v5182 = vpack.c.b16 %v5160, %v5159
      %v5183 = vpack.c.b16 %v5162, %v5161
      %v5184 = vpack.c.b16 %v5164, %v5163
      %v5185 = vpack.c.b16 %v5166, %v5165
      %v5186 = vpack.c.b16 %v5168, %v5167
      %v5187 = vpack.c.b16 %v5170, %v5169
      %v5188 = vpack.c.b16 %v5172, %v5171
      %5205 = vmatprep.subr.bf16.mxu0 0
      %5206 = vmatpush1.bf16.msra.mxu0 %v5173
      %5207 = vmatprep.subr.bf16.mxu0 0
      %5208 = vmatpush1.bf16.msra.mxu0 %v5174
      %5209 = vmatprep.subr.bf16.mxu0 0
      %5210 = vmatpush1.bf16.msra.mxu0 %v5175
      %5211 = vmatprep.subr.bf16.mxu0 0
      %5212 = vmatpush1.bf16.msra.mxu0 %v5176
      %5213 = vmatprep.subr.bf16.mxu0 0
      %5214 = vmatpush1.bf16.msra.mxu0 %v5177
      %5215 = vmatprep.subr.bf16.mxu0 0
      %5216 = vmatpush1.bf16.msra.mxu0 %v5178
      %5217 = vmatprep.subr.bf16.mxu0 0
      %5218 = vmatpush1.bf16.msra.mxu0 %v5179
      %5219 = vmatprep.subr.bf16.mxu0 0
      %5220 = vmatpush1.bf16.msra.mxu0 %v5180
      %5221 = vmatprep.subr.bf16.mxu0 0
      %5222 = vmatpush1.bf16.msra.mxu0 %v5181
      %5223 = vmatprep.subr.bf16.mxu0 0
      %5224 = vmatpush1.bf16.msra.mxu0 %v5182
      %5225 = vmatprep.subr.bf16.mxu0 0
      %5226 = vmatpush1.bf16.msra.mxu0 %v5183
      %5227 = vmatprep.subr.bf16.mxu0 0
      %5228 = vmatpush1.bf16.msra.mxu0 %v5184
      %5229 = vmatprep.subr.bf16.mxu0 0
      %5230 = vmatpush1.bf16.msra.mxu0 %v5185
      %5231 = vmatprep.subr.bf16.mxu0 0
      %5232 = vmatpush1.bf16.msra.mxu0 %v5186
      %5233 = vmatprep.subr.bf16.mxu0 0
      %5234 = vmatpush1.bf16.msra.mxu0 %v5187
      %5235 = vmatprep.subr.bf16.mxu0 0
      %5236 = vmatpush1.bf16.msra.mxu0 %v5188
      %5237 = vmatprep.mubr.bf16.mxu0 %v4533
      %5238 = vmatmul.mubr.bf16.gmra.mrb[0].mxu0 %v4483
      %v5239 = vpop.f32.mrb[0].mxu0
      %v5240 = vadd.f32 %v4967, %v5239
      %v5241 = vpop.f32.mrb[0].mxu0
      %v5242 = vpop.f32.mrb[0].mxu0
      %v5243 = vadd.f32 %v4970, %v5242
      %v5244 = vpop.f32.mrb[0].mxu0
      %5245 = vmatprep.mubr.bf16.mxu0 %v4541
      %5246 = vmatmul.mubr.bf16.gmra.mrb[0].mxu0 %v4484
      %v5247 = vpop.f32.mrb[0].mxu0
      %v5248 = vadd.f32 %v4975, %v5247
      %v5249 = vpop.f32.mrb[0].mxu0
      %v5250 = vpop.f32.mrb[0].mxu0
      %v5251 = vadd.f32 %v4978, %v5250
      %v5252 = vpop.f32.mrb[0].mxu0
      %5253 = vmatprep.mubr.bf16.mxu0 %v4549
      %5254 = vmatmul.mubr.bf16.gmra.mrb[0].mxu0 %v4485
      %v5255 = vpop.f32.mrb[0].mxu0
      %v5256 = vadd.f32 %v4983, %v5255
      %v5257 = vpop.f32.mrb[0].mxu0
      %v5258 = vpop.f32.mrb[0].mxu0
      %v5259 = vadd.f32 %v4986, %v5258
      %v5260 = vpop.f32.mrb[0].mxu0
      %5261 = vmatprep.mubr.bf16.mxu0 %v4557
      %5262 = vmatmul.mubr.bf16.gmra.mrb[0].mxu0 %v4486
      %v5263 = vpop.f32.mrb[0].mxu0
      %v5264 = vadd.f32 %v4991, %v5263
      %v5265 = vpop.f32.mrb[0].mxu0
      %v5266 = vpop.f32.mrb[0].mxu0
      %v5267 = vadd.f32 %v4994, %v5266
      %v5268 = vpop.f32.mrb[0].mxu0
      %5269 = vmatprep.mubr.bf16.mxu0 %v4565
      %5270 = vmatmul.mubr.bf16.gmra.mrb[0].mxu0 %v4487
      %v5271 = vpop.f32.mrb[0].mxu0
      %v5272 = vadd.f32 %v4999, %v5271
      %v5273 = vpop.f32.mrb[0].mxu0
      %v5274 = vpop.f32.mrb[0].mxu0
      %v5275 = vadd.f32 %v5002, %v5274
      %v5276 = vpop.f32.mrb[0].mxu0
      %5277 = vmatprep.mubr.bf16.mxu0 %v4573
      %5278 = vmatmul.mubr.bf16.gmra.mrb[0].mxu0 %v4488
      %v5279 = vpop.f32.mrb[0].mxu0
      %v5280 = vadd.f32 %v5007, %v5279
      %v5281 = vpop.f32.mrb[0].mxu0
      %v5282 = vpop.f32.mrb[0].mxu0
      %v5283 = vadd.f32 %v5010, %v5282
      %v5284 = vpop.f32.mrb[0].mxu0
      %5285 = vmatprep.mubr.bf16.mxu0 %v4581
      %5286 = vmatmul.mubr.bf16.gmra.mrb[0].mxu0 %v4489
      %v5287 = vpop.f32.mrb[0].mxu0
      %v5288 = vadd.f32 %v5015, %v5287
      %v5289 = vpop.f32.mrb[0].mxu0
      %v5290 = vpop.f32.mrb[0].mxu0
      %v5291 = vadd.f32 %v5018, %v5290
      %v5292 = vpop.f32.mrb[0].mxu0
      %5293 = vmatprep.mubr.bf16.mxu0 %v4589
      %5294 = vmatmul.mubr.bf16.gmra.mrb[0].mxu0 %v4490
      %v5295 = vpop.f32.mrb[0].mxu0
      %v5296 = vadd.f32 %v5023, %v5295
      %v5297 = vpop.f32.mrb[0].mxu0
      %v5298 = vpop.f32.mrb[0].mxu0
      %v5299 = vadd.f32 %v5026, %v5298
      %v5300 = vpop.f32.mrb[0].mxu0
      %5301 = vmatprep.mubr.bf16.mxu0 %v4597
      %5302 = vmatmul.mubr.bf16.gmra.mrb[0].mxu0 %v4491
      %v5303 = vpop.f32.mrb[0].mxu0
      %v5304 = vadd.f32 %v5031, %v5303
      %v5305 = vpop.f32.mrb[0].mxu0
      %v5306 = vpop.f32.mrb[0].mxu0
      %v5307 = vadd.f32 %v5034, %v5306
      %v5308 = vpop.f32.mrb[0].mxu0
      %5309 = vmatprep.mubr.bf16.mxu0 %v4605
      %5310 = vmatmul.mubr.bf16.gmra.mrb[0].mxu0 %v4492
      %v5311 = vpop.f32.mrb[0].mxu0
      %v5312 = vadd.f32 %v5039, %v5311
      %v5313 = vpop.f32.mrb[0].mxu0
      %v5314 = vpop.f32.mrb[0].mxu0
      %v5315 = vadd.f32 %v5042, %v5314
      %v5316 = vpop.f32.mrb[0].mxu0
      %5317 = vmatprep.mubr.bf16.mxu0 %v4613
      %5318 = vmatmul.mubr.bf16.gmra.mrb[0].mxu0 %v4493
      %v5319 = vpop.f32.mrb[0].mxu0
      %v5320 = vadd.f32 %v5047, %v5319
      %v5321 = vpop.f32.mrb[0].mxu0
      %v5322 = vpop.f32.mrb[0].mxu0
      %v5323 = vadd.f32 %v5050, %v5322
      %v5324 = vpop.f32.mrb[0].mxu0
      %5325 = vmatprep.mubr.bf16.mxu0 %v4621
      %5326 = vmatmul.mubr.bf16.gmra.mrb[0].mxu0 %v4494
      %v5327 = vpop.f32.mrb[0].mxu0
      %v5328 = vadd.f32 %v5055, %v5327
      %v5329 = vpop.f32.mrb[0].mxu0
      %v5330 = vpop.f32.mrb[0].mxu0
      %v5331 = vadd.f32 %v5058, %v5330
      %v5332 = vpop.f32.mrb[0].mxu0
      %5333 = vmatprep.mubr.bf16.mxu0 %v4629
      %5334 = vmatmul.mubr.bf16.gmra.mrb[0].mxu0 %v4495
      %v5335 = vpop.f32.mrb[0].mxu0
      %v5336 = vadd.f32 %v5063, %v5335
      %v5337 = vpop.f32.mrb[0].mxu0
      %v5338 = vpop.f32.mrb[0].mxu0
      %v5339 = vadd.f32 %v5066, %v5338
      %v5340 = vpop.f32.mrb[0].mxu0
      %5341 = vmatprep.mubr.bf16.mxu0 %v4637
      %5342 = vmatmul.mubr.bf16.gmra.mrb[0].mxu0 %v4496
      %v5343 = vpop.f32.mrb[0].mxu0
      %v5344 = vadd.f32 %v5071, %v5343
      %v5345 = vpop.f32.mrb[0].mxu0
      %v5346 = vpop.f32.mrb[0].mxu0
      %v5347 = vadd.f32 %v5074, %v5346
      %v5348 = vpop.f32.mrb[0].mxu0
      %5349 = vmatprep.mubr.bf16.mxu0 %v4645
      %5350 = vmatmul.mubr.bf16.gmra.mrb[0].mxu0 %v4497
      %v5351 = vpop.f32.mrb[0].mxu0
      %v5352 = vadd.f32 %v5079, %v5351
      %v5353 = vpop.f32.mrb[0].mxu0
      %v5354 = vpop.f32.mrb[0].mxu0
      %v5355 = vadd.f32 %v5082, %v5354
      %v5356 = vpop.f32.mrb[0].mxu0
      %5357 = vmatprep.mubr.bf16.mxu0 %v4653
      %5358 = vmatmul.mubr.bf16.gmra.mrb[0].mxu0 %v4498
      %v5359 = vpop.f32.mrb[0].mxu0
      %v5360 = vadd.f32 %v5087, %v5359
      %v5361 = vpop.f32.mrb[0].mxu0
      %v5362 = vpop.f32.mrb[0].mxu0
      %v5363 = vadd.f32 %v5090, %v5362
      %v5364 = vpop.f32.mrb[0].mxu0
      %5365 = vmatprep.mubr.bf16.mxu0 %v4661
      %5366 = vmatmul.mubr.bf16.gmra.mrb[0].mxu0 %v4499
      %v5367 = vpop.f32.mrb[0].mxu0
      %v5368 = vadd.f32 %v5095, %v5367
      %v5369 = vpop.f32.mrb[0].mxu0
      %v5370 = vpop.f32.mrb[0].mxu0
      %v5371 = vadd.f32 %v5098, %v5370
      %v5372 = vpop.f32.mrb[0].mxu0
      %5373 = vmatprep.mubr.bf16.mxu0 %v4669
      %5374 = vmatmul.mubr.bf16.gmra.mrb[0].mxu0 %v4500
      %v5375 = vpop.f32.mrb[0].mxu0
      %v5376 = vadd.f32 %v5103, %v5375
      %v5377 = vpop.f32.mrb[0].mxu0
      %v5378 = vpop.f32.mrb[0].mxu0
      %v5379 = vadd.f32 %v5106, %v5378
      %v5380 = vpop.f32.mrb[0].mxu0
      %5381 = vdwg.mxu0
      %v5382 = vld [vmem:[#allocation2 + $0x98] sm:$0x3]
      %v5383 = vld [vmem:[#allocation2 + $0x8] sm:$0xc]
      %v5385 = vunpack.c.l.b16 %v5382
      %v5386 = vpack.c.b16 %v5385, %v5385
      %v5388 = vunpack.c.l.b16 %v5383
      %v5389 = vpack.c.b16 %v4450, %v5388
      %v5391 = vshrl.u32 %v5389, 16
      %v5393 = vshll.u32 %v5389, 16
      %v5395 = vrot.slane %v5393, 1
      %v5396 = vor.u32 %v5391, %v5395
      %v5397 = vsel %vm374, %v5396, %v4540
      %v5399 = vshll.u32 %v4737, 16
      %v5401 = vrot.slane %v5399, 1
      %v5402 = vsel %vm374, %v4664, %v5401
      %v5403 = vshrl.u32 %v4737, 16
      %v5405 = vor.u32 %v5403, %v5401
      %v5407 = vshll.u32 %v5386, 16
      %v5409 = vrot.slane %v5407, 1
      %v5410 = vsel %vm374, %v5405, %v5409
      %v5411 = vshrl.u32 %v5386, 16
      %v5413 = vor.u32 %v5411, %v5409
      %s5414 = scalar_lea.vmem %s3, 256
      %v5415 = vld [vmem:[%s5414] sm:$0xf]
      %v5416 = vld [vmem:[%s5414 + $0x4] sm:$0xf]
      %v5417 = vld [vmem:[%s5414 + $0x8] sm:$0xf]
      %v5418 = vld [vmem:[%s5414 + $0xc] sm:$0xf]
      %v5419 = vld [vmem:[%s5414 + $0x10] sm:$0xf]
      %v5420 = vld [vmem:[%s5414 + $0x14] sm:$0xf]
      %v5421 = vld [vmem:[%s5414 + $0x18] sm:$0xf]
      %v5422 = vld [vmem:[%s5414 + $0x1c] sm:$0xf]
      %v5423 = vld [vmem:[%s5414 + $0x20] sm:$0xf]
      %v5424 = vld [vmem:[%s5414 + $0x24] sm:$0xf]
      %v5425 = vld [vmem:[%s5414 + $0x28] sm:$0xf]
      %v5426 = vld [vmem:[%s5414 + $0x2c] sm:$0xf]
      %v5427 = vld [vmem:[%s5414 + $0x30] sm:$0xf]
      %v5428 = vld [vmem:[%s5414 + $0x34] sm:$0xf]
      %v5429 = vld [vmem:[%s5414 + $0x38] sm:$0xf]
      %v5430 = vld [vmem:[%s5414 + $0x3c] sm:$0xf]
      %v5431 = vld [vmem:[%s5414 + $0x40] sm:$0xf]
      %v5432 = vld [vmem:[%s5414 + $0x44] sm:$0xf]
      %v5433 = vld [vmem:[%s5414 + $0x48] sm:$0xf]
      %v5434 = vld [vmem:[%s5414 + $0x4c] sm:$0xf]
      %v5435 = vld [vmem:[%s5414 + $0x50] sm:$0xf]
      %v5436 = vld [vmem:[%s5414 + $0x54] sm:$0xf]
      %v5437 = vld [vmem:[%s5414 + $0x58] sm:$0xf]
      %v5438 = vld [vmem:[%s5414 + $0x5c] sm:$0xf]
      %v5439 = vld [vmem:[%s5414 + $0x60] sm:$0xf]
      %v5440 = vld [vmem:[%s5414 + $0x64] sm:$0xf]
      %v5441 = vld [vmem:[%s5414 + $0x68] sm:$0xf]
      %v5442 = vld [vmem:[%s5414 + $0x6c] sm:$0xf]
      %v5443 = vld [vmem:[%s5414 + $0x70] sm:$0xf]
      %v5444 = vld [vmem:[%s5414 + $0x74] sm:$0xf]
      %v5445 = vld [vmem:[%s5414 + $0x78] sm:$0xf]
      %v5446 = vld [vmem:[%s5414 + $0x7c] sm:$0xf]
      %v5448 = vshrl.u32 %v4736, 16
      %v5450 = vrot.slane %v5448, 1
      %v5451 = vshll.u32 %v4736, 16
      %v5453 = vrot.slane %v5451, 2
      %v5454 = vor.u32 %v5450, %v5453
      %v5455 = vrot.slane %v4542, 1
      %v5456 = vrot.slane %v4538, 2
      %v5457 = vor.u32 %v5455, %v5456
      %v5458 = vsel %vm1301, %v5454, %v5457
      %v5460 = vshrl.u32 %v5397, 16
      %v5462 = vrot.slane %v5460, 1
      %v5463 = vshll.u32 %v5397, 16
      %v5465 = vrot.slane %v5463, 2
      %v5466 = vor.u32 %v5462, %v5465
      %v5468 = vshrl.u32 %v4549, 16
      %v5470 = vrot.slane %v5468, 1
      %v5471 = vshll.u32 %v4549, 16
      %v5473 = vrot.slane %v5471, 2
      %v5474 = vor.u32 %v5470, %v5473
      %v5475 = vsel %vm1301, %v5466, %v5474
      %v5476 = vrot.slane %v4550, 1
      %v5477 = vrot.slane %v4546, 2
      %v5478 = vor.u32 %v5476, %v5477
      %v5479 = vsel %vm1301, %v5457, %v5478
      %v5481 = vshrl.u32 %v4557, 16
      %v5483 = vrot.slane %v5481, 1
      %v5484 = vshll.u32 %v4557, 16
      %v5486 = vrot.slane %v5484, 2
      %v5487 = vor.u32 %v5483, %v5486
      %v5488 = vsel %vm1301, %v5474, %v5487
      %v5489 = vrot.slane %v4558, 1
      %v5490 = vrot.slane %v4554, 2
      %v5491 = vor.u32 %v5489, %v5490
      %v5492 = vsel %vm1301, %v5478, %v5491
      %v5494 = vshrl.u32 %v4565, 16
      %v5496 = vrot.slane %v5494, 1
      %v5497 = vshll.u32 %v4565, 16
      %v5499 = vrot.slane %v5497, 2
      %v5500 = vor.u32 %v5496, %v5499
      %v5501 = vsel %vm1301, %v5487, %v5500
      %v5502 = vrot.slane %v4566, 1
      %v5503 = vrot.slane %v4562, 2
      %v5504 = vor.u32 %v5502, %v5503
      %v5505 = vsel %vm1301, %v5491, %v5504
      %v5507 = vshrl.u32 %v4573, 16
      %v5509 = vrot.slane %v5507, 1
      %v5510 = vshll.u32 %v4573, 16
      %v5512 = vrot.slane %v5510, 2
      %v5513 = vor.u32 %v5509, %v5512
      %v5514 = vsel %vm1301, %v5500, %v5513
      %v5515 = vrot.slane %v4574, 1
      %v5516 = vrot.slane %v4570, 2
      %v5517 = vor.u32 %v5515, %v5516
      %v5518 = vsel %vm1301, %v5504, %v5517
      %v5520 = vshrl.u32 %v4581, 16
      %v5522 = vrot.slane %v5520, 1
      %v5523 = vshll.u32 %v4581, 16
      %v5525 = vrot.slane %v5523, 2
      %v5526 = vor.u32 %v5522, %v5525
      %v5527 = vsel %vm1301, %v5513, %v5526
      %v5528 = vrot.slane %v4582, 1
      %v5529 = vrot.slane %v4578, 2
      %v5530 = vor.u32 %v5528, %v5529
      %v5531 = vsel %vm1301, %v5517, %v5530
      %v5533 = vshrl.u32 %v4589, 16
      %v5535 = vrot.slane %v5533, 1
      %v5536 = vshll.u32 %v4589, 16
      %v5538 = vrot.slane %v5536, 2
      %v5539 = vor.u32 %v5535, %v5538
      %v5540 = vsel %vm1301, %v5526, %v5539
      %v5541 = vrot.slane %v4590, 1
      %v5542 = vrot.slane %v4586, 2
      %v5543 = vor.u32 %v5541, %v5542
      %v5544 = vsel %vm1301, %v5530, %v5543
      %v5546 = vshrl.u32 %v4597, 16
      %v5548 = vrot.slane %v5546, 1
      %v5549 = vshll.u32 %v4597, 16
      %v5551 = vrot.slane %v5549, 2
      %v5552 = vor.u32 %v5548, %v5551
      %v5553 = vsel %vm1301, %v5539, %v5552
      %v5554 = vrot.slane %v4598, 1
      %v5555 = vrot.slane %v4594, 2
      %v5556 = vor.u32 %v5554, %v5555
      %v5557 = vsel %vm1301, %v5543, %v5556
      %v5559 = vshrl.u32 %v4605, 16
      %v5561 = vrot.slane %v5559, 1
      %v5562 = vshll.u32 %v4605, 16
      %v5564 = vrot.slane %v5562, 2
      %v5565 = vor.u32 %v5561, %v5564
      %v5566 = vsel %vm1301, %v5552, %v5565
      %v5567 = vrot.slane %v4606, 1
      %v5568 = vrot.slane %v4602, 2
      %v5569 = vor.u32 %v5567, %v5568
      %v5570 = vsel %vm1301, %v5556, %v5569
      %v5572 = vshrl.u32 %v4613, 16
      %v5574 = vrot.slane %v5572, 1
      %v5575 = vshll.u32 %v4613, 16
      %v5577 = vrot.slane %v5575, 2
      %v5578 = vor.u32 %v5574, %v5577
      %v5579 = vsel %vm1301, %v5565, %v5578
      %v5580 = vrot.slane %v4614, 1
      %v5581 = vrot.slane %v4610, 2
      %v5582 = vor.u32 %v5580, %v5581
      %v5583 = vsel %vm1301, %v5569, %v5582
      %v5585 = vshrl.u32 %v4621, 16
      %v5587 = vrot.slane %v5585, 1
      %v5588 = vshll.u32 %v4621, 16
      %v5590 = vrot.slane %v5588, 2
      %v5591 = vor.u32 %v5587, %v5590
      %v5592 = vsel %vm1301, %v5578, %v5591
      %v5593 = vrot.slane %v4622, 1
      %v5594 = vrot.slane %v4618, 2
      %v5595 = vor.u32 %v5593, %v5594
      %v5596 = vsel %vm1301, %v5582, %v5595
      %v5598 = vshrl.u32 %v4629, 16
      %v5600 = vrot.slane %v5598, 1
      %v5601 = vshll.u32 %v4629, 16
      %v5603 = vrot.slane %v5601, 2
      %v5604 = vor.u32 %v5600, %v5603
      %v5605 = vsel %vm1301, %v5591, %v5604
      %v5606 = vrot.slane %v4630, 1
      %v5607 = vrot.slane %v4626, 2
      %v5608 = vor.u32 %v5606, %v5607
      %v5609 = vsel %vm1301, %v5595, %v5608
      %v5611 = vshrl.u32 %v4637, 16
      %v5613 = vrot.slane %v5611, 1
      %v5614 = vshll.u32 %v4637, 16
      %v5616 = vrot.slane %v5614, 2
      %v5617 = vor.u32 %v5613, %v5616
      %v5618 = vsel %vm1301, %v5604, %v5617
      %v5619 = vrot.slane %v4638, 1
      %v5620 = vrot.slane %v4634, 2
      %v5621 = vor.u32 %v5619, %v5620
      %v5622 = vsel %vm1301, %v5608, %v5621
      %v5624 = vshrl.u32 %v4645, 16
      %v5626 = vrot.slane %v5624, 1
      %v5627 = vshll.u32 %v4645, 16
      %v5629 = vrot.slane %v5627, 2
      %v5630 = vor.u32 %v5626, %v5629
      %v5631 = vsel %vm1301, %v5617, %v5630
      %v5632 = vrot.slane %v4646, 1
      %v5633 = vrot.slane %v4642, 2
      %v5634 = vor.u32 %v5632, %v5633
      %v5635 = vsel %vm1301, %v5621, %v5634
      %v5637 = vshrl.u32 %v4653, 16
      %v5639 = vrot.slane %v5637, 1
      %v5640 = vshll.u32 %v4653, 16
      %v5642 = vrot.slane %v5640, 2
      %v5643 = vor.u32 %v5639, %v5642
      %v5644 = vsel %vm1301, %v5630, %v5643
      %v5645 = vrot.slane %v4654, 1
      %v5646 = vrot.slane %v4650, 2
      %v5647 = vor.u32 %v5645, %v5646
      %v5648 = vsel %vm1301, %v5634, %v5647
      %v5650 = vshrl.u32 %v4661, 16
      %v5652 = vrot.slane %v5650, 1
      %v5653 = vshll.u32 %v4661, 16
      %v5655 = vrot.slane %v5653, 2
      %v5656 = vor.u32 %v5652, %v5655
      %v5657 = vsel %vm1301, %v5643, %v5656
      %v5658 = vrot.slane %v4662, 1
      %v5659 = vrot.slane %v4658, 2
      %v5660 = vor.u32 %v5658, %v5659
      %v5661 = vsel %vm1301, %v5647, %v5660
      %v5663 = vshrl.u32 %v5402, 16
      %v5665 = vrot.slane %v5663, 1
      %v5666 = vshll.u32 %v5402, 16
      %v5668 = vrot.slane %v5666, 2
      %v5669 = vor.u32 %v5665, %v5668
      %v5670 = vsel %vm1301, %v5656, %v5669
      %v5671 = vrot.slane %v5403, 1
      %v5672 = vrot.slane %v5399, 2
      %v5673 = vor.u32 %v5671, %v5672
      %v5674 = vsel %vm1301, %v5660, %v5673
      %v5676 = vshrl.u32 %v5410, 16
      %v5678 = vrot.slane %v5676, 1
      %v5679 = vshll.u32 %v5410, 16
      %v5681 = vrot.slane %v5679, 2
      %v5682 = vor.u32 %v5678, %v5681
      %v5683 = vsel %vm1301, %v5669, %v5682
      %v5684 = vrot.slane %v5411, 1
      %v5685 = vrot.slane %v5407, 2
      %v5686 = vor.u32 %v5684, %v5685
      %v5687 = vsel %vm1301, %v5673, %v5686
      %v5689 = vshrl.u32 %v5413, 16
      %v5691 = vrot.slane %v5689, 1
      %v5692 = vshll.u32 %v5413, 16
      %v5694 = vrot.slane %v5692, 2
      %v5695 = vor.u32 %v5691, %v5694
      %v5696 = vsel %vm1301, %v5682, %v5695
      %v5765 = vunpack.c.l.b16 %v5415
      %v5766 = vunpack.c.l.b16 %v5416
      %v5767 = vunpack.c.l.b16 %v5417
      %v5768 = vunpack.c.l.b16 %v5418
      %v5769 = vunpack.c.l.b16 %v5419
      %v5770 = vunpack.c.l.b16 %v5420
      %v5771 = vunpack.c.l.b16 %v5421
      %v5772 = vunpack.c.l.b16 %v5422
      %v5773 = vunpack.c.l.b16 %v5423
      %v5774 = vunpack.c.l.b16 %v5424
      %v5775 = vunpack.c.l.b16 %v5425
      %v5776 = vunpack.c.l.b16 %v5426
      %v5777 = vunpack.c.l.b16 %v5427
      %v5778 = vunpack.c.l.b16 %v5428
      %v5779 = vunpack.c.l.b16 %v5429
      %v5780 = vunpack.c.l.b16 %v5430
      %v5781 = vunpack.c.l.b16 %v5431
      %v5782 = vunpack.c.l.b16 %v5432
      %v5783 = vunpack.c.l.b16 %v5433
      %v5784 = vunpack.c.l.b16 %v5434
      %v5785 = vunpack.c.l.b16 %v5435
      %v5786 = vunpack.c.l.b16 %v5436
      %v5787 = vunpack.c.l.b16 %v5437
      %v5788 = vunpack.c.l.b16 %v5438
      %v5789 = vunpack.c.l.b16 %v5439
      %v5790 = vunpack.c.l.b16 %v5440
      %v5791 = vunpack.c.l.b16 %v5441
      %v5792 = vunpack.c.l.b16 %v5442
      %v5793 = vunpack.c.l.b16 %v5443
      %v5794 = vunpack.c.l.b16 %v5444
      %v5795 = vunpack.c.l.b16 %v5445
      %v5796 = vunpack.c.l.b16 %v5446
      %v5797 = vpack.c.b16 %v5766, %v5765
      %v5798 = vpack.c.b16 %v5768, %v5767
      %v5799 = vpack.c.b16 %v5770, %v5769
      %v5800 = vpack.c.b16 %v5772, %v5771
      %v5801 = vpack.c.b16 %v5774, %v5773
      %v5802 = vpack.c.b16 %v5776, %v5775
      %v5803 = vpack.c.b16 %v5778, %v5777
      %v5804 = vpack.c.b16 %v5780, %v5779
      %v5805 = vpack.c.b16 %v5782, %v5781
      %v5806 = vpack.c.b16 %v5784, %v5783
      %v5807 = vpack.c.b16 %v5786, %v5785
      %v5808 = vpack.c.b16 %v5788, %v5787
      %v5809 = vpack.c.b16 %v5790, %v5789
      %v5810 = vpack.c.b16 %v5792, %v5791
      %v5811 = vpack.c.b16 %v5794, %v5793
      %v5812 = vpack.c.b16 %v5796, %v5795
      %5829 = vmatprep.subr.bf16.mxu0 0
      %5830 = vmatpush1.bf16.msra.mxu0 %v5797
      %5831 = vmatprep.subr.bf16.mxu0 0
      %5832 = vmatpush1.bf16.msra.mxu0 %v5798
      %5833 = vmatprep.subr.bf16.mxu0 0
      %5834 = vmatpush1.bf16.msra.mxu0 %v5799
      %5835 = vmatprep.subr.bf16.mxu0 0
      %5836 = vmatpush1.bf16.msra.mxu0 %v5800
      %5837 = vmatprep.subr.bf16.mxu0 0
      %5838 = vmatpush1.bf16.msra.mxu0 %v5801
      %5839 = vmatprep.subr.bf16.mxu0 0
      %5840 = vmatpush1.bf16.msra.mxu0 %v5802
      %5841 = vmatprep.subr.bf16.mxu0 0
      %5842 = vmatpush1.bf16.msra.mxu0 %v5803
      %5843 = vmatprep.subr.bf16.mxu0 0
      %5844 = vmatpush1.bf16.msra.mxu0 %v5804
      %5845 = vmatprep.subr.bf16.mxu0 0
      %5846 = vmatpush1.bf16.msra.mxu0 %v5805
      %5847 = vmatprep.subr.bf16.mxu0 0
      %5848 = vmatpush1.bf16.msra.mxu0 %v5806
      %5849 = vmatprep.subr.bf16.mxu0 0
      %5850 = vmatpush1.bf16.msra.mxu0 %v5807
      %5851 = vmatprep.subr.bf16.mxu0 0
      %5852 = vmatpush1.bf16.msra.mxu0 %v5808
      %5853 = vmatprep.subr.bf16.mxu0 0
      %5854 = vmatpush1.bf16.msra.mxu0 %v5809
      %5855 = vmatprep.subr.bf16.mxu0 0
      %5856 = vmatpush1.bf16.msra.mxu0 %v5810
      %5857 = vmatprep.subr.bf16.mxu0 0
      %5858 = vmatpush1.bf16.msra.mxu0 %v5811
      %5859 = vmatprep.subr.bf16.mxu0 0
      %5860 = vmatpush1.bf16.msra.mxu0 %v5812
      %5861 = vmatprep.mubr.bf16.mxu0 %v5475
      %5862 = vmatmul.mubr.bf16.gmra.mrb[0].mxu0 %v5458
      %v5863 = vpop.f32.mrb[0].mxu0
      %v5864 = vadd.f32 0.0, %v5863
      %v5865 = vpop.f32.mrb[0].mxu0
      %v5866 = vpop.f32.mrb[0].mxu0
      %v5867 = vadd.f32 0.0, %v5866
      %v5868 = vpop.f32.mrb[0].mxu0
      %5869 = vmatprep.mubr.bf16.mxu0 %v5488
      %5870 = vmatmul.mubr.bf16.gmra.mrb[0].mxu0 %v5479
      %v5871 = vpop.f32.mrb[0].mxu0
      %v5872 = vadd.f32 0.0, %v5871
      %v5873 = vpop.f32.mrb[0].mxu0
      %v5874 = vpop.f32.mrb[0].mxu0
      %v5875 = vadd.f32 0.0, %v5874
      %v5876 = vpop.f32.mrb[0].mxu0
      %5877 = vmatprep.mubr.bf16.mxu0 %v5501
      %5878 = vmatmul.mubr.bf16.gmra.mrb[0].mxu0 %v5492
      %v5879 = vpop.f32.mrb[0].mxu0
      %v5880 = vadd.f32 0.0, %v5879
      %v5881 = vpop.f32.mrb[0].mxu0
      %v5882 = vpop.f32.mrb[0].mxu0
      %v5883 = vadd.f32 0.0, %v5882
      %v5884 = vpop.f32.mrb[0].mxu0
      %5885 = vmatprep.mubr.bf16.mxu0 %v5514
      %5886 = vmatmul.mubr.bf16.gmra.mrb[0].mxu0 %v5505
      %v5887 = vpop.f32.mrb[0].mxu0
      %v5888 = vadd.f32 0.0, %v5887
      %v5889 = vpop.f32.mrb[0].mxu0
      %v5890 = vpop.f32.mrb[0].mxu0
      %v5891 = vadd.f32 0.0, %v5890
      %v5892 = vpop.f32.mrb[0].mxu0
      %5893 = vmatprep.mubr.bf16.mxu0 %v5527
      %5894 = vmatmul.mubr.bf16.gmra.mrb[0].mxu0 %v5518
      %v5895 = vpop.f32.mrb[0].mxu0
      %v5896 = vadd.f32 0.0, %v5895
      %v5897 = vpop.f32.mrb[0].mxu0
      %v5898 = vpop.f32.mrb[0].mxu0
      %v5899 = vadd.f32 0.0, %v5898
      %v5900 = vpop.f32.mrb[0].mxu0
      %5901 = vmatprep.mubr.bf16.mxu0 %v5540
      %5902 = vmatmul.mubr.bf16.gmra.mrb[0].mxu0 %v5531
      %v5903 = vpop.f32.mrb[0].mxu0
      %v5904 = vadd.f32 0.0, %v5903
      %v5905 = vpop.f32.mrb[0].mxu0
      %v5906 = vpop.f32.mrb[0].mxu0
      %v5907 = vadd.f32 0.0, %v5906
      %v5908 = vpop.f32.mrb[0].mxu0
      %5909 = vmatprep.mubr.bf16.mxu0 %v5553
      %5910 = vmatmul.mubr.bf16.gmra.mrb[0].mxu0 %v5544
      %v5911 = vpop.f32.mrb[0].mxu0
      %v5912 = vadd.f32 0.0, %v5911
      %v5913 = vpop.f32.mrb[0].mxu0
      %v5914 = vpop.f32.mrb[0].mxu0
      %v5915 = vadd.f32 0.0, %v5914
      %v5916 = vpop.f32.mrb[0].mxu0
      %5917 = vmatprep.mubr.bf16.mxu0 %v5566
      %5918 = vmatmul.mubr.bf16.gmra.mrb[0].mxu0 %v5557
      %v5919 = vpop.f32.mrb[0].mxu0
      %v5920 = vadd.f32 0.0, %v5919
      %v5921 = vpop.f32.mrb[0].mxu0
      %v5922 = vpop.f32.mrb[0].mxu0
      %v5923 = vadd.f32 0.0, %v5922
      %v5924 = vpop.f32.mrb[0].mxu0
      %5925 = vmatprep.mubr.bf16.mxu0 %v5579
      %5926 = vmatmul.mubr.bf16.gmra.mrb[0].mxu0 %v5570
      %v5927 = vpop.f32.mrb[0].mxu0
      %v5928 = vadd.f32 0.0, %v5927
      %v5929 = vpop.f32.mrb[0].mxu0
      %v5930 = vpop.f32.mrb[0].mxu0
      %v5931 = vadd.f32 0.0, %v5930
      %v5932 = vpop.f32.mrb[0].mxu0
      %5933 = vmatprep.mubr.bf16.mxu0 %v5592
      %5934 = vmatmul.mubr.bf16.gmra.mrb[0].mxu0 %v5583
      %v5935 = vpop.f32.mrb[0].mxu0
      %v5936 = vadd.f32 0.0, %v5935
      %v5937 = vpop.f32.mrb[0].mxu0
      %v5938 = vpop.f32.mrb[0].mxu0
      %v5939 = vadd.f32 0.0, %v5938
      %v5940 = vpop.f32.mrb[0].mxu0
      %5941 = vmatprep.mubr.bf16.mxu0 %v5605
      %5942 = vmatmul.mubr.bf16.gmra.mrb[0].mxu0 %v5596
      %v5943 = vpop.f32.mrb[0].mxu0
      %v5944 = vadd.f32 0.0, %v5943
      %v5945 = vpop.f32.mrb[0].mxu0
      %v5946 = vpop.f32.mrb[0].mxu0
      %v5947 = vadd.f32 0.0, %v5946
      %v5948 = vpop.f32.mrb[0].mxu0
      %5949 = vmatprep.mubr.bf16.mxu0 %v5618
      %5950 = vmatmul.mubr.bf16.gmra.mrb[0].mxu0 %v5609
      %v5951 = vpop.f32.mrb[0].mxu0
      %v5952 = vadd.f32 0.0, %v5951
      %v5953 = vpop.f32.mrb[0].mxu0
      %v5954 = vpop.f32.mrb[0].mxu0
      %v5955 = vadd.f32 0.0, %v5954
      %v5956 = vpop.f32.mrb[0].mxu0
      %5957 = vmatprep.mubr.bf16.mxu0 %v5631
      %5958 = vmatmul.mubr.bf16.gmra.mrb[0].mxu0 %v5622
      %v5959 = vpop.f32.mrb[0].mxu0
      %v5960 = vadd.f32 0.0, %v5959
      %v5961 = vpop.f32.mrb[0].mxu0
      %v5962 = vpop.f32.mrb[0].mxu0
      %v5963 = vadd.f32 0.0, %v5962
      %v5964 = vpop.f32.mrb[0].mxu0
      %5965 = vmatprep.mubr.bf16.mxu0 %v5644
      %5966 = vmatmul.mubr.bf16.gmra.mrb[0].mxu0 %v5635
      %v5967 = vpop.f32.mrb[0].mxu0
      %v5968 = vadd.f32 0.0, %v5967
      %v5969 = vpop.f32.mrb[0].mxu0
      %v5970 = vpop.f32.mrb[0].mxu0
      %v5971 = vadd.f32 0.0, %v5970
      %v5972 = vpop.f32.mrb[0].mxu0
      %5973 = vmatprep.mubr.bf16.mxu0 %v5657
      %5974 = vmatmul.mubr.bf16.gmra.mrb[0].mxu0 %v5648
      %v5975 = vpop.f32.mrb[0].mxu0
      %v5976 = vadd.f32 0.0, %v5975
      %v5977 = vpop.f32.mrb[0].mxu0
      %v5978 = vpop.f32.mrb[0].mxu0
      %v5979 = vadd.f32 0.0, %v5978
      %v5980 = vpop.f32.mrb[0].mxu0
      %5981 = vmatprep.mubr.bf16.mxu0 %v5670
      %5982 = vmatmul.mubr.bf16.gmra.mrb[0].mxu0 %v5661
      %v5983 = vpop.f32.mrb[0].mxu0
      %v5984 = vadd.f32 0.0, %v5983
      %v5985 = vpop.f32.mrb[0].mxu0
      %v5986 = vpop.f32.mrb[0].mxu0
      %v5987 = vadd.f32 0.0, %v5986
      %v5988 = vpop.f32.mrb[0].mxu0
      %5989 = vmatprep.mubr.bf16.mxu0 %v5683
      %5990 = vmatmul.mubr.bf16.gmra.mrb[0].mxu0 %v5674
      %v5991 = vpop.f32.mrb[0].mxu0
      %v5992 = vadd.f32 0.0, %v5991
      %v5993 = vpop.f32.mrb[0].mxu0
      %v5994 = vpop.f32.mrb[0].mxu0
      %v5995 = vadd.f32 0.0, %v5994
      %v5996 = vpop.f32.mrb[0].mxu0
      %5997 = vmatprep.mubr.bf16.mxu0 %v5696
      %5998 = vmatmul.mubr.bf16.gmra.mrb[0].mxu0 %v5687
      %v5999 = vpop.f32.mrb[0].mxu0
      %v6000 = vadd.f32 0.0, %v5999
      %v6001 = vpop.f32.mrb[0].mxu0
      %v6002 = vpop.f32.mrb[0].mxu0
      %v6003 = vadd.f32 0.0, %v6002
      %v6004 = vpop.f32.mrb[0].mxu0
      %6005 = vdwg.mxu0
      %v6006 = vadd.f32 %v5240, %v5864
      %v6007 = vadd.f32 %v5243, %v5867
      %v6008 = vadd.f32 %v5248, %v5872
      %v6009 = vadd.f32 %v5251, %v5875
      %v6010 = vadd.f32 %v5256, %v5880
      %v6011 = vadd.f32 %v5259, %v5883
      %v6012 = vadd.f32 %v5264, %v5888
      %v6013 = vadd.f32 %v5267, %v5891
      %v6014 = vadd.f32 %v5272, %v5896
      %v6015 = vadd.f32 %v5275, %v5899
      %v6016 = vadd.f32 %v5280, %v5904
      %v6017 = vadd.f32 %v5283, %v5907
      %v6018 = vadd.f32 %v5288, %v5912
      %v6019 = vadd.f32 %v5291, %v5915
      %v6020 = vadd.f32 %v5296, %v5920
      %v6021 = vadd.f32 %v5299, %v5923
      %v6022 = vadd.f32 %v5304, %v5928
      %v6023 = vadd.f32 %v5307, %v5931
      %v6024 = vadd.f32 %v5312, %v5936
      %v6025 = vadd.f32 %v5315, %v5939
      %v6026 = vadd.f32 %v5320, %v5944
      %v6027 = vadd.f32 %v5323, %v5947
      %v6028 = vadd.f32 %v5328, %v5952
      %v6029 = vadd.f32 %v5331, %v5955
      %v6030 = vadd.f32 %v5336, %v5960
      %v6031 = vadd.f32 %v5339, %v5963
      %v6032 = vadd.f32 %v5344, %v5968
      %v6033 = vadd.f32 %v5347, %v5971
      %v6034 = vadd.f32 %v5352, %v5976
      %v6035 = vadd.f32 %v5355, %v5979
      %v6036 = vadd.f32 %v5360, %v5984
      %v6037 = vadd.f32 %v5363, %v5987
      %v6038 = vadd.f32 %v5368, %v5992
      %v6039 = vadd.f32 %v5371, %v5995
      %v6040 = vadd.f32 %v5376, %v6000
      %v6041 = vadd.f32 %v5379, %v6003
      %v6042 = vld [vmem:[#allocation2 + $0x10] sm:$0xc]
      %v6043 = vld [vmem:[#allocation2 + $0x14] sm:$0xf]
      %v6044 = vld [vmem:[#allocation2 + $0x18] sm:$0xf]
      %v6045 = vld [vmem:[#allocation2 + $0x1c] sm:$0xf]
      %v6046 = vld [vmem:[#allocation2 + $0x20] sm:$0xf]
      %v6047 = vld [vmem:[#allocation2 + $0x24] sm:$0xf]
      %v6048 = vld [vmem:[#allocation2 + $0x28] sm:$0xf]
      %v6049 = vld [vmem:[#allocation2 + $0x2c] sm:$0xf]
      %v6050 = vld [vmem:[#allocation2 + $0x30] sm:$0xf]
      %v6051 = vld [vmem:[#allocation2 + $0x34] sm:$0xf]
      %v6052 = vld [vmem:[#allocation2 + $0x38] sm:$0xf]
      %v6053 = vld [vmem:[#allocation2 + $0x3c] sm:$0xf]
      %v6054 = vld [vmem:[#allocation2 + $0x40] sm:$0xf]
      %v6055 = vld [vmem:[#allocation2 + $0x44] sm:$0xf]
      %v6056 = vld [vmem:[#allocation2 + $0x48] sm:$0xf]
      %v6057 = vld [vmem:[#allocation2 + $0x4c] sm:$0xf]
      %v6058 = vld [vmem:[#allocation2 + $0x50] sm:$0xf]
      %v6059 = vld [vmem:[#allocation2 + $0x54] sm:$0xf]
      %v6060 = vld [vmem:[#allocation2 + $0x58] sm:$0xf]
      %v6061 = vld [vmem:[#allocation2 + $0x5c] sm:$0xf]
      %v6062 = vld [vmem:[#allocation2 + $0x60] sm:$0xf]
      %v6063 = vld [vmem:[#allocation2 + $0x64] sm:$0xf]
      %v6064 = vld [vmem:[#allocation2 + $0x68] sm:$0xf]
      %v6065 = vld [vmem:[#allocation2 + $0x6c] sm:$0xf]
      %v6066 = vld [vmem:[#allocation2 + $0x70] sm:$0xf]
      %v6067 = vld [vmem:[#allocation2 + $0x74] sm:$0xf]
      %v6068 = vld [vmem:[#allocation2 + $0x78] sm:$0xf]
      %v6069 = vld [vmem:[#allocation2 + $0x7c] sm:$0xf]
      %v6070 = vld [vmem:[#allocation2 + $0x80] sm:$0xf]
      %v6071 = vld [vmem:[#allocation2 + $0x84] sm:$0xf]
      %v6072 = vld [vmem:[#allocation2 + $0x88] sm:$0xf]
      %v6073 = vld [vmem:[#allocation2 + $0x8c] sm:$0xf]
      %v6074 = vld [vmem:[#allocation2 + $0x90] sm:$0xf]
      %v6075 = vld [vmem:[#allocation2 + $0x94] sm:$0xf]
      %v6076 = vld [vmem:[#allocation2 + $0x98] sm:$0xf]
      %v6077 = vld [vmem:[#allocation2 + $0x9c] sm:$0xf]
      %v6078 = vld [vmem:[#allocation2 + $0xa0] sm:$0x3]
      %v6079 = vld [vmem:[#allocation2 + $0xa0] sm:$0x7]
      %v6117 = vunpack.c.l.b16 %v6042
      %v6118 = vunpack.c.l.b16 %v6043
      %v6119 = vunpack.c.l.b16 %v6044
      %v6120 = vunpack.c.l.b16 %v6045
      %v6121 = vunpack.c.l.b16 %v6046
      %v6122 = vunpack.c.l.b16 %v6047
      %v6123 = vunpack.c.l.b16 %v6048
      %v6124 = vunpack.c.l.b16 %v6049
      %v6125 = vunpack.c.l.b16 %v6050
      %v6126 = vunpack.c.l.b16 %v6051
      %v6127 = vunpack.c.l.b16 %v6052
      %v6128 = vunpack.c.l.b16 %v6053
      %v6129 = vunpack.c.l.b16 %v6054
      %v6130 = vunpack.c.l.b16 %v6055
      %v6131 = vunpack.c.l.b16 %v6056
      %v6132 = vunpack.c.l.b16 %v6057
      %v6133 = vunpack.c.l.b16 %v6058
      %v6134 = vunpack.c.l.b16 %v6059
      %v6135 = vunpack.c.l.b16 %v6060
      %v6136 = vunpack.c.l.b16 %v6061
      %v6137 = vunpack.c.l.b16 %v6062
      %v6138 = vunpack.c.l.b16 %v6063
      %v6139 = vunpack.c.l.b16 %v6064
      %v6140 = vunpack.c.l.b16 %v6065
      %v6141 = vunpack.c.l.b16 %v6066
      %v6142 = vunpack.c.l.b16 %v6067
      %v6143 = vunpack.c.l.b16 %v6068
      %v6144 = vunpack.c.l.b16 %v6069
      %v6145 = vunpack.c.l.b16 %v6070
      %v6146 = vunpack.c.l.b16 %v6071
      %v6147 = vunpack.c.l.b16 %v6072
      %v6148 = vunpack.c.l.b16 %v6073
      %v6149 = vunpack.c.l.b16 %v6074
      %v6150 = vunpack.c.l.b16 %v6075
      %v6151 = vunpack.c.l.b16 %v6076
      %v6152 = vunpack.c.l.b16 %v6077
      %v6153 = vunpack.c.l.b16 %v6078
      %v6154 = vpack.c.b16 %v6118, %v6117
      %v6155 = vpack.c.b16 %v6120, %v6119
      %v6156 = vpack.c.b16 %v6122, %v6121
      %v6157 = vpack.c.b16 %v6124, %v6123
      %v6158 = vpack.c.b16 %v6126, %v6125
      %v6159 = vpack.c.b16 %v6128, %v6127
      %v6160 = vpack.c.b16 %v6130, %v6129
      %v6161 = vpack.c.b16 %v6132, %v6131
      %v6162 = vpack.c.b16 %v6134, %v6133
      %v6163 = vpack.c.b16 %v6136, %v6135
      %v6164 = vpack.c.b16 %v6138, %v6137
      %v6165 = vpack.c.b16 %v6140, %v6139
      %v6166 = vpack.c.b16 %v6142, %v6141
      %v6167 = vpack.c.b16 %v6144, %v6143
      %v6168 = vpack.c.b16 %v6146, %v6145
      %v6169 = vpack.c.b16 %v6148, %v6147
      %v6170 = vpack.c.b16 %v6150, %v6149
      %v6171 = vpack.c.b16 %v6152, %v6151
      %v6172 = vpack.c.b16 %v6153, %v6153
      %v6174 = vunpack.c.l.b16 %v6079
      %v6175 = vpack.c.b16 %v6174, %v6174
      %v6177 = vshrl.u32 %v6154, 16
      %v6179 = vshll.u32 %v6154, 16
      %v6181 = vrot.slane %v6179, 1
      %v6182 = vor.u32 %v6177, %v6181
      %v6184 = vshll.u32 %v6155, 16
      %v6186 = vrot.slane %v6184, 1
      %v6187 = vsel %vm374, %v6182, %v6186
      %v6188 = vshrl.u32 %v6155, 16
      %v6190 = vor.u32 %v6188, %v6186
      %v6192 = vshll.u32 %v6156, 16
      %v6194 = vrot.slane %v6192, 1
      %v6195 = vsel %vm374, %v6190, %v6194
      %v6196 = vshrl.u32 %v6156, 16
      %v6198 = vor.u32 %v6196, %v6194
      %v6200 = vshll.u32 %v6157, 16
      %v6202 = vrot.slane %v6200, 1
      %v6203 = vsel %vm374, %v6198, %v6202
      %v6204 = vshrl.u32 %v6157, 16
      %v6206 = vor.u32 %v6204, %v6202
      %v6208 = vshll.u32 %v6158, 16
      %v6210 = vrot.slane %v6208, 1
      %v6211 = vsel %vm374, %v6206, %v6210
      %v6212 = vshrl.u32 %v6158, 16
      %v6214 = vor.u32 %v6212, %v6210
      %v6216 = vshll.u32 %v6159, 16
      %v6218 = vrot.slane %v6216, 1
      %v6219 = vsel %vm374, %v6214, %v6218
      %v6220 = vshrl.u32 %v6159, 16
      %v6222 = vor.u32 %v6220, %v6218
      %v6224 = vshll.u32 %v6160, 16
      %v6226 = vrot.slane %v6224, 1
      %v6227 = vsel %vm374, %v6222, %v6226
      %v6228 = vshrl.u32 %v6160, 16
      %v6230 = vor.u32 %v6228, %v6226
      %v6232 = vshll.u32 %v6161, 16
      %v6234 = vrot.slane %v6232, 1
      %v6235 = vsel %vm374, %v6230, %v6234
      %v6236 = vshrl.u32 %v6161, 16
      %v6238 = vor.u32 %v6236, %v6234
      %v6240 = vshll.u32 %v6162, 16
      %v6242 = vrot.slane %v6240, 1
      %v6243 = vsel %vm374, %v6238, %v6242
      %v6244 = vshrl.u32 %v6162, 16
      %v6246 = vor.u32 %v6244, %v6242
      %v6248 = vshll.u32 %v6163, 16
      %v6250 = vrot.slane %v6248, 1
      %v6251 = vsel %vm374, %v6246, %v6250
      %v6252 = vshrl.u32 %v6163, 16
      %v6254 = vor.u32 %v6252, %v6250
      %v6256 = vshll.u32 %v6164, 16
      %v6258 = vrot.slane %v6256, 1
      %v6259 = vsel %vm374, %v6254, %v6258
      %v6260 = vshrl.u32 %v6164, 16
      %v6262 = vor.u32 %v6260, %v6258
      %v6264 = vshll.u32 %v6165, 16
      %v6266 = vrot.slane %v6264, 1
      %v6267 = vsel %vm374, %v6262, %v6266
      %v6268 = vshrl.u32 %v6165, 16
      %v6270 = vor.u32 %v6268, %v6266
      %v6272 = vshll.u32 %v6166, 16
      %v6274 = vrot.slane %v6272, 1
      %v6275 = vsel %vm374, %v6270, %v6274
      %v6276 = vshrl.u32 %v6166, 16
      %v6278 = vor.u32 %v6276, %v6274
      %v6280 = vshll.u32 %v6167, 16
      %v6282 = vrot.slane %v6280, 1
      %v6283 = vsel %vm374, %v6278, %v6282
      %v6284 = vshrl.u32 %v6167, 16
      %v6286 = vor.u32 %v6284, %v6282
      %v6288 = vshll.u32 %v6168, 16
      %v6290 = vrot.slane %v6288, 1
      %v6291 = vsel %vm374, %v6286, %v6290
      %v6292 = vshrl.u32 %v6168, 16
      %v6294 = vor.u32 %v6292, %v6290
      %v6296 = vshll.u32 %v6169, 16
      %v6298 = vrot.slane %v6296, 1
      %v6299 = vsel %vm374, %v6294, %v6298
      %v6300 = vshrl.u32 %v6169, 16
      %v6302 = vor.u32 %v6300, %v6298
      %v6304 = vshll.u32 %v6170, 16
      %v6306 = vrot.slane %v6304, 1
      %v6307 = vsel %vm374, %v6302, %v6306
      %v6308 = vshrl.u32 %v6170, 16
      %v6310 = vor.u32 %v6308, %v6306
      %v6312 = vshll.u32 %v6171, 16
      %v6314 = vrot.slane %v6312, 1
      %v6315 = vsel %vm374, %v6310, %v6314
      %v6316 = vshrl.u32 %v6171, 16
      %v6318 = vor.u32 %v6316, %v6314
      %v6320 = vshll.u32 %v6175, 16
      %v6322 = vrot.slane %v6320, 1
      %v6323 = vsel %vm374, %v6318, %v6322
      %v6324 = vshrl.u32 %v6175, 16
      %v6326 = vor.u32 %v6324, %v6322
      %s6327 = scalar_lea.vmem %s3, 384
      %v6328 = vld [vmem:[%s6327] sm:$0xf]
      %v6329 = vld [vmem:[%s6327 + $0x4] sm:$0xf]
      %v6330 = vld [vmem:[%s6327 + $0x8] sm:$0xf]
      %v6331 = vld [vmem:[%s6327 + $0xc] sm:$0xf]
      %v6332 = vld [vmem:[%s6327 + $0x10] sm:$0xf]
      %v6333 = vld [vmem:[%s6327 + $0x14] sm:$0xf]
      %v6334 = vld [vmem:[%s6327 + $0x18] sm:$0xf]
      %v6335 = vld [vmem:[%s6327 + $0x1c] sm:$0xf]
      %v6336 = vld [vmem:[%s6327 + $0x20] sm:$0xf]
      %v6337 = vld [vmem:[%s6327 + $0x24] sm:$0xf]
      %v6338 = vld [vmem:[%s6327 + $0x28] sm:$0xf]
      %v6339 = vld [vmem:[%s6327 + $0x2c] sm:$0xf]
      %v6340 = vld [vmem:[%s6327 + $0x30] sm:$0xf]
      %v6341 = vld [vmem:[%s6327 + $0x34] sm:$0xf]
      %v6342 = vld [vmem:[%s6327 + $0x38] sm:$0xf]
      %v6343 = vld [vmem:[%s6327 + $0x3c] sm:$0xf]
      %v6344 = vld [vmem:[%s6327 + $0x40] sm:$0xf]
      %v6345 = vld [vmem:[%s6327 + $0x44] sm:$0xf]
      %v6346 = vld [vmem:[%s6327 + $0x48] sm:$0xf]
      %v6347 = vld [vmem:[%s6327 + $0x4c] sm:$0xf]
      %v6348 = vld [vmem:[%s6327 + $0x50] sm:$0xf]
      %v6349 = vld [vmem:[%s6327 + $0x54] sm:$0xf]
      %v6350 = vld [vmem:[%s6327 + $0x58] sm:$0xf]
      %v6351 = vld [vmem:[%s6327 + $0x5c] sm:$0xf]
      %v6352 = vld [vmem:[%s6327 + $0x60] sm:$0xf]
      %v6353 = vld [vmem:[%s6327 + $0x64] sm:$0xf]
      %v6354 = vld [vmem:[%s6327 + $0x68] sm:$0xf]
      %v6355 = vld [vmem:[%s6327 + $0x6c] sm:$0xf]
      %v6356 = vld [vmem:[%s6327 + $0x70] sm:$0xf]
      %v6357 = vld [vmem:[%s6327 + $0x74] sm:$0xf]
      %v6358 = vld [vmem:[%s6327 + $0x78] sm:$0xf]
      %v6359 = vld [vmem:[%s6327 + $0x7c] sm:$0xf]
      %v6360 = vrot.slane %v6154, 2
      %v6361 = vrot.slane %v6155, 2
      %v6362 = vsel %vm2215, %v6360, %v6361
      %v6363 = vrot.slane %v6187, 2
      %v6364 = vrot.slane %v6195, 2
      %v6365 = vsel %vm2215, %v6363, %v6364
      %v6366 = vrot.slane %v6156, 2
      %v6367 = vsel %vm2215, %v6361, %v6366
      %v6368 = vrot.slane %v6203, 2
      %v6369 = vsel %vm2215, %v6364, %v6368
      %v6370 = vrot.slane %v6157, 2
      %v6371 = vsel %vm2215, %v6366, %v6370
      %v6372 = vrot.slane %v6211, 2
      %v6373 = vsel %vm2215, %v6368, %v6372
      %v6374 = vrot.slane %v6158, 2
      %v6375 = vsel %vm2215, %v6370, %v6374
      %v6376 = vrot.slane %v6219, 2
      %v6377 = vsel %vm2215, %v6372, %v6376
      %v6378 = vrot.slane %v6159, 2
      %v6379 = vsel %vm2215, %v6374, %v6378
      %v6380 = vrot.slane %v6227, 2
      %v6381 = vsel %vm2215, %v6376, %v6380
      %v6382 = vrot.slane %v6160, 2
      %v6383 = vsel %vm2215, %v6378, %v6382
      %v6384 = vrot.slane %v6235, 2
      %v6385 = vsel %vm2215, %v6380, %v6384
      %v6386 = vrot.slane %v6161, 2
      %v6387 = vsel %vm2215, %v6382, %v6386
      %v6388 = vrot.slane %v6243, 2
      %v6389 = vsel %vm2215, %v6384, %v6388
      %v6390 = vrot.slane %v6162, 2
      %v6391 = vsel %vm2215, %v6386, %v6390
      %v6392 = vrot.slane %v6251, 2
      %v6393 = vsel %vm2215, %v6388, %v6392
      %v6394 = vrot.slane %v6163, 2
      %v6395 = vsel %vm2215, %v6390, %v6394
      %v6396 = vrot.slane %v6259, 2
      %v6397 = vsel %vm2215, %v6392, %v6396
      %v6398 = vrot.slane %v6164, 2
      %v6399 = vsel %vm2215, %v6394, %v6398
      %v6400 = vrot.slane %v6267, 2
      %v6401 = vsel %vm2215, %v6396, %v6400
      %v6402 = vrot.slane %v6165, 2
      %v6403 = vsel %vm2215, %v6398, %v6402
      %v6404 = vrot.slane %v6275, 2
      %v6405 = vsel %vm2215, %v6400, %v6404
      %v6406 = vrot.slane %v6166, 2
      %v6407 = vsel %vm2215, %v6402, %v6406
      %v6408 = vrot.slane %v6283, 2
      %v6409 = vsel %vm2215, %v6404, %v6408
      %v6410 = vrot.slane %v6167, 2
      %v6411 = vsel %vm2215, %v6406, %v6410
      %v6412 = vrot.slane %v6291, 2
      %v6413 = vsel %vm2215, %v6408, %v6412
      %v6414 = vrot.slane %v6168, 2
      %v6415 = vsel %vm2215, %v6410, %v6414
      %v6416 = vrot.slane %v6299, 2
      %v6417 = vsel %vm2215, %v6412, %v6416
      %v6418 = vrot.slane %v6169, 2
      %v6419 = vsel %vm2215, %v6414, %v6418
      %v6420 = vrot.slane %v6307, 2
      %v6421 = vsel %vm2215, %v6416, %v6420
      %v6422 = vrot.slane %v6170, 2
      %v6423 = vsel %vm2215, %v6418, %v6422
      %v6424 = vrot.slane %v6315, 2
      %v6425 = vsel %vm2215, %v6420, %v6424
      %v6426 = vrot.slane %v6171, 2
      %v6427 = vsel %vm2215, %v6422, %v6426
      %v6428 = vrot.slane %v6323, 2
      %v6429 = vsel %vm2215, %v6424, %v6428
      %v6430 = vrot.slane %v6172, 2
      %v6431 = vsel %vm2215, %v6426, %v6430
      %v6432 = vrot.slane %v6326, 2
      %v6433 = vsel %vm2215, %v6428, %v6432
      %v6502 = vunpack.c.l.b16 %v6328
      %v6503 = vunpack.c.l.b16 %v6329
      %v6504 = vunpack.c.l.b16 %v6330
      %v6505 = vunpack.c.l.b16 %v6331
      %v6506 = vunpack.c.l.b16 %v6332
      %v6507 = vunpack.c.l.b16 %v6333
      %v6508 = vunpack.c.l.b16 %v6334
      %v6509 = vunpack.c.l.b16 %v6335
      %v6510 = vunpack.c.l.b16 %v6336
      %v6511 = vunpack.c.l.b16 %v6337
      %v6512 = vunpack.c.l.b16 %v6338
      %v6513 = vunpack.c.l.b16 %v6339
      %v6514 = vunpack.c.l.b16 %v6340
      %v6515 = vunpack.c.l.b16 %v6341
      %v6516 = vunpack.c.l.b16 %v6342
      %v6517 = vunpack.c.l.b16 %v6343
      %v6518 = vunpack.c.l.b16 %v6344
      %v6519 = vunpack.c.l.b16 %v6345
      %v6520 = vunpack.c.l.b16 %v6346
      %v6521 = vunpack.c.l.b16 %v6347
      %v6522 = vunpack.c.l.b16 %v6348
      %v6523 = vunpack.c.l.b16 %v6349
      %v6524 = vunpack.c.l.b16 %v6350
      %v6525 = vunpack.c.l.b16 %v6351
      %v6526 = vunpack.c.l.b16 %v6352
      %v6527 = vunpack.c.l.b16 %v6353
      %v6528 = vunpack.c.l.b16 %v6354
      %v6529 = vunpack.c.l.b16 %v6355
      %v6530 = vunpack.c.l.b16 %v6356
      %v6531 = vunpack.c.l.b16 %v6357
      %v6532 = vunpack.c.l.b16 %v6358
      %v6533 = vunpack.c.l.b16 %v6359
      %v6534 = vpack.c.b16 %v6503, %v6502
      %v6535 = vpack.c.b16 %v6505, %v6504
      %v6536 = vpack.c.b16 %v6507, %v6506
      %v6537 = vpack.c.b16 %v6509, %v6508
      %v6538 = vpack.c.b16 %v6511, %v6510
      %v6539 = vpack.c.b16 %v6513, %v6512
      %v6540 = vpack.c.b16 %v6515, %v6514
      %v6541 = vpack.c.b16 %v6517, %v6516
      %v6542 = vpack.c.b16 %v6519, %v6518
      %v6543 = vpack.c.b16 %v6521, %v6520
      %v6544 = vpack.c.b16 %v6523, %v6522
      %v6545 = vpack.c.b16 %v6525, %v6524
      %v6546 = vpack.c.b16 %v6527, %v6526
      %v6547 = vpack.c.b16 %v6529, %v6528
      %v6548 = vpack.c.b16 %v6531, %v6530
      %v6549 = vpack.c.b16 %v6533, %v6532
      %6566 = vmatprep.subr.bf16.mxu0 0
      %6567 = vmatpush1.bf16.msra.mxu0 %v6534
      %6568 = vmatprep.subr.bf16.mxu0 0
      %6569 = vmatpush1.bf16.msra.mxu0 %v6535
      %6570 = vmatprep.subr.bf16.mxu0 0
      %6571 = vmatpush1.bf16.msra.mxu0 %v6536
      %6572 = vmatprep.subr.bf16.mxu0 0
      %6573 = vmatpush1.bf16.msra.mxu0 %v6537
      %6574 = vmatprep.subr.bf16.mxu0 0
      %6575 = vmatpush1.bf16.msra.mxu0 %v6538
      %6576 = vmatprep.subr.bf16.mxu0 0
      %6577 = vmatpush1.bf16.msra.mxu0 %v6539
      %6578 = vmatprep.subr.bf16.mxu0 0
      %6579 = vmatpush1.bf16.msra.mxu0 %v6540
      %6580 = vmatprep.subr.bf16.mxu0 0
      %6581 = vmatpush1.bf16.msra.mxu0 %v6541
      %6582 = vmatprep.subr.bf16.mxu0 0
      %6583 = vmatpush1.bf16.msra.mxu0 %v6542
      %6584 = vmatprep.subr.bf16.mxu0 0
      %6585 = vmatpush1.bf16.msra.mxu0 %v6543
      %6586 = vmatprep.subr.bf16.mxu0 0
      %6587 = vmatpush1.bf16.msra.mxu0 %v6544
      %6588 = vmatprep.subr.bf16.mxu0 0
      %6589 = vmatpush1.bf16.msra.mxu0 %v6545
      %6590 = vmatprep.subr.bf16.mxu0 0
      %6591 = vmatpush1.bf16.msra.mxu0 %v6546
      %6592 = vmatprep.subr.bf16.mxu0 0
      %6593 = vmatpush1.bf16.msra.mxu0 %v6547
      %6594 = vmatprep.subr.bf16.mxu0 0
      %6595 = vmatpush1.bf16.msra.mxu0 %v6548
      %6596 = vmatprep.subr.bf16.mxu0 0
      %6597 = vmatpush1.bf16.msra.mxu0 %v6549
      %6598 = vmatprep.mubr.bf16.mxu0 %v6365
      %6599 = vmatmul.mubr.bf16.gmra.mrb[0].mxu0 %v6362
      %v6600 = vpop.f32.mrb[0].mxu0
      %v6601 = vadd.f32 0.0, %v6600
      %v6602 = vpop.f32.mrb[0].mxu0
      %v6603 = vpop.f32.mrb[0].mxu0
      %v6604 = vadd.f32 0.0, %v6603
      %v6605 = vpop.f32.mrb[0].mxu0
      %6606 = vmatprep.mubr.bf16.mxu0 %v6369
      %6607 = vmatmul.mubr.bf16.gmra.mrb[0].mxu0 %v6367
      %v6608 = vpop.f32.mrb[0].mxu0
      %v6609 = vadd.f32 0.0, %v6608
      %v6610 = vpop.f32.mrb[0].mxu0
      %v6611 = vpop.f32.mrb[0].mxu0
      %v6612 = vadd.f32 0.0, %v6611
      %v6613 = vpop.f32.mrb[0].mxu0
      %6614 = vmatprep.mubr.bf16.mxu0 %v6373
      %6615 = vmatmul.mubr.bf16.gmra.mrb[0].mxu0 %v6371
      %v6616 = vpop.f32.mrb[0].mxu0
      %v6617 = vadd.f32 0.0, %v6616
      %v6618 = vpop.f32.mrb[0].mxu0
      %v6619 = vpop.f32.mrb[0].mxu0
      %v6620 = vadd.f32 0.0, %v6619
      %v6621 = vpop.f32.mrb[0].mxu0
      %6622 = vmatprep.mubr.bf16.mxu0 %v6377
      %6623 = vmatmul.mubr.bf16.gmra.mrb[0].mxu0 %v6375
      %v6624 = vpop.f32.mrb[0].mxu0
      %v6625 = vadd.f32 0.0, %v6624
      %v6626 = vpop.f32.mrb[0].mxu0
      %v6627 = vpop.f32.mrb[0].mxu0
      %v6628 = vadd.f32 0.0, %v6627
      %v6629 = vpop.f32.mrb[0].mxu0
      %6630 = vmatprep.mubr.bf16.mxu0 %v6381
      %6631 = vmatmul.mubr.bf16.gmra.mrb[0].mxu0 %v6379
      %v6632 = vpop.f32.mrb[0].mxu0
      %v6633 = vadd.f32 0.0, %v6632
      %v6634 = vpop.f32.mrb[0].mxu0
      %v6635 = vpop.f32.mrb[0].mxu0
      %v6636 = vadd.f32 0.0, %v6635
      %v6637 = vpop.f32.mrb[0].mxu0
      %6638 = vmatprep.mubr.bf16.mxu0 %v6385
      %6639 = vmatmul.mubr.bf16.gmra.mrb[0].mxu0 %v6383
      %v6640 = vpop.f32.mrb[0].mxu0
      %v6641 = vadd.f32 0.0, %v6640
      %v6642 = vpop.f32.mrb[0].mxu0
      %v6643 = vpop.f32.mrb[0].mxu0
      %v6644 = vadd.f32 0.0, %v6643
      %v6645 = vpop.f32.mrb[0].mxu0
      %6646 = vmatprep.mubr.bf16.mxu0 %v6389
      %6647 = vmatmul.mubr.bf16.gmra.mrb[0].mxu0 %v6387
      %v6648 = vpop.f32.mrb[0].mxu0
      %v6649 = vadd.f32 0.0, %v6648
      %v6650 = vpop.f32.mrb[0].mxu0
      %v6651 = vpop.f32.mrb[0].mxu0
      %v6652 = vadd.f32 0.0, %v6651
      %v6653 = vpop.f32.mrb[0].mxu0
      %6654 = vmatprep.mubr.bf16.mxu0 %v6393
      %6655 = vmatmul.mubr.bf16.gmra.mrb[0].mxu0 %v6391
      %v6656 = vpop.f32.mrb[0].mxu0
      %v6657 = vadd.f32 0.0, %v6656
      %v6658 = vpop.f32.mrb[0].mxu0
      %v6659 = vpop.f32.mrb[0].mxu0
      %v6660 = vadd.f32 0.0, %v6659
      %v6661 = vpop.f32.mrb[0].mxu0
      %6662 = vmatprep.mubr.bf16.mxu0 %v6397
      %6663 = vmatmul.mubr.bf16.gmra.mrb[0].mxu0 %v6395
      %v6664 = vpop.f32.mrb[0].mxu0
      %v6665 = vadd.f32 0.0, %v6664
      %v6666 = vpop.f32.mrb[0].mxu0
      %v6667 = vpop.f32.mrb[0].mxu0
      %v6668 = vadd.f32 0.0, %v6667
      %v6669 = vpop.f32.mrb[0].mxu0
      %6670 = vmatprep.mubr.bf16.mxu0 %v6401
      %6671 = vmatmul.mubr.bf16.gmra.mrb[0].mxu0 %v6399
      %v6672 = vpop.f32.mrb[0].mxu0
      %v6673 = vadd.f32 0.0, %v6672
      %v6674 = vpop.f32.mrb[0].mxu0
      %v6675 = vpop.f32.mrb[0].mxu0
      %v6676 = vadd.f32 0.0, %v6675
      %v6677 = vpop.f32.mrb[0].mxu0
      %6678 = vmatprep.mubr.bf16.mxu0 %v6405
      %6679 = vmatmul.mubr.bf16.gmra.mrb[0].mxu0 %v6403
      %v6680 = vpop.f32.mrb[0].mxu0
      %v6681 = vadd.f32 0.0, %v6680
      %v6682 = vpop.f32.mrb[0].mxu0
      %v6683 = vpop.f32.mrb[0].mxu0
      %v6684 = vadd.f32 0.0, %v6683
      %v6685 = vpop.f32.mrb[0].mxu0
      %6686 = vmatprep.mubr.bf16.mxu0 %v6409
      %6687 = vmatmul.mubr.bf16.gmra.mrb[0].mxu0 %v6407
      %v6688 = vpop.f32.mrb[0].mxu0
      %v6689 = vadd.f32 0.0, %v6688
      %v6690 = vpop.f32.mrb[0].mxu0
      %v6691 = vpop.f32.mrb[0].mxu0
      %v6692 = vadd.f32 0.0, %v6691
      %v6693 = vpop.f32.mrb[0].mxu0
      %6694 = vmatprep.mubr.bf16.mxu0 %v6413
      %6695 = vmatmul.mubr.bf16.gmra.mrb[0].mxu0 %v6411
      %v6696 = vpop.f32.mrb[0].mxu0
      %v6697 = vadd.f32 0.0, %v6696
      %v6698 = vpop.f32.mrb[0].mxu0
      %v6699 = vpop.f32.mrb[0].mxu0
      %v6700 = vadd.f32 0.0, %v6699
      %v6701 = vpop.f32.mrb[0].mxu0
      %6702 = vmatprep.mubr.bf16.mxu0 %v6417
      %6703 = vmatmul.mubr.bf16.gmra.mrb[0].mxu0 %v6415
      %v6704 = vpop.f32.mrb[0].mxu0
      %v6705 = vadd.f32 0.0, %v6704
      %v6706 = vpop.f32.mrb[0].mxu0
      %v6707 = vpop.f32.mrb[0].mxu0
      %v6708 = vadd.f32 0.0, %v6707
      %v6709 = vpop.f32.mrb[0].mxu0
      %6710 = vmatprep.mubr.bf16.mxu0 %v6421
      %6711 = vmatmul.mubr.bf16.gmra.mrb[0].mxu0 %v6419
      %v6712 = vpop.f32.mrb[0].mxu0
      %v6713 = vadd.f32 0.0, %v6712
      %v6714 = vpop.f32.mrb[0].mxu0
      %v6715 = vpop.f32.mrb[0].mxu0
      %v6716 = vadd.f32 0.0, %v6715
      %v6717 = vpop.f32.mrb[0].mxu0
      %6718 = vmatprep.mubr.bf16.mxu0 %v6425
      %6719 = vmatmul.mubr.bf16.gmra.mrb[0].mxu0 %v6423
      %v6720 = vpop.f32.mrb[0].mxu0
      %v6721 = vadd.f32 0.0, %v6720
      %v6722 = vpop.f32.mrb[0].mxu0
      %v6723 = vpop.f32.mrb[0].mxu0
      %v6724 = vadd.f32 0.0, %v6723
      %v6725 = vpop.f32.mrb[0].mxu0
      %6726 = vmatprep.mubr.bf16.mxu0 %v6429
      %6727 = vmatmul.mubr.bf16.gmra.mrb[0].mxu0 %v6427
      %v6728 = vpop.f32.mrb[0].mxu0
      %v6729 = vadd.f32 0.0, %v6728
      %v6730 = vpop.f32.mrb[0].mxu0
      %v6731 = vpop.f32.mrb[0].mxu0
      %v6732 = vadd.f32 0.0, %v6731
      %v6733 = vpop.f32.mrb[0].mxu0
      %6734 = vmatprep.mubr.bf16.mxu0 %v6433
      %6735 = vmatmul.mubr.bf16.gmra.mrb[0].mxu0 %v6431
      %v6736 = vpop.f32.mrb[0].mxu0
      %v6737 = vadd.f32 0.0, %v6736
      %v6738 = vpop.f32.mrb[0].mxu0
      %v6739 = vpop.f32.mrb[0].mxu0
      %v6740 = vadd.f32 0.0, %v6739
      %v6741 = vpop.f32.mrb[0].mxu0
      %6742 = vdwg.mxu0
      %v6743 = vadd.f32 %v6006, %v6601
      %v6744 = vadd.f32 %v6007, %v6604
      %v6745 = vadd.f32 %v6008, %v6609
      %v6746 = vadd.f32 %v6009, %v6612
      %v6747 = vadd.f32 %v6010, %v6617
      %v6748 = vadd.f32 %v6011, %v6620
      %v6749 = vadd.f32 %v6012, %v6625
      %v6750 = vadd.f32 %v6013, %v6628
      %v6751 = vadd.f32 %v6014, %v6633
      %v6752 = vadd.f32 %v6015, %v6636
      %v6753 = vadd.f32 %v6016, %v6641
      %v6754 = vadd.f32 %v6017, %v6644
      %v6755 = vadd.f32 %v6018, %v6649
      %v6756 = vadd.f32 %v6019, %v6652
      %v6757 = vadd.f32 %v6020, %v6657
      %v6758 = vadd.f32 %v6021, %v6660
      %v6759 = vadd.f32 %v6022, %v6665
      %v6760 = vadd.f32 %v6023, %v6668
      %v6761 = vadd.f32 %v6024, %v6673
      %v6762 = vadd.f32 %v6025, %v6676
      %v6763 = vadd.f32 %v6026, %v6681
      %v6764 = vadd.f32 %v6027, %v6684
      %v6765 = vadd.f32 %v6028, %v6689
      %v6766 = vadd.f32 %v6029, %v6692
      %v6767 = vadd.f32 %v6030, %v6697
      %v6768 = vadd.f32 %v6031, %v6700
      %v6769 = vadd.f32 %v6032, %v6705
      %v6770 = vadd.f32 %v6033, %v6708
      %v6771 = vadd.f32 %v6034, %v6713
      %v6772 = vadd.f32 %v6035, %v6716
      %v6773 = vadd.f32 %v6036, %v6721
      %v6774 = vadd.f32 %v6037, %v6724
      %v6775 = vadd.f32 %v6038, %v6729
      %v6776 = vadd.f32 %v6039, %v6732
      %v6777 = vadd.f32 %v6040, %v6737
      %v6778 = vadd.f32 %v6041, %v6740
      %v6779 = vld [vmem:[#allocation2 + $0x10] sm:$0x8]
      %s6780 = scalar_lea.vmem %s3, 512
      %v6781 = vld [vmem:[%s6780] sm:$0xf]
      %v6782 = vld [vmem:[%s6780 + $0x4] sm:$0xf]
      %v6783 = vld [vmem:[%s6780 + $0x8] sm:$0xf]
      %v6784 = vld [vmem:[%s6780 + $0xc] sm:$0xf]
      %v6785 = vld [vmem:[%s6780 + $0x10] sm:$0xf]
      %v6786 = vld [vmem:[%s6780 + $0x14] sm:$0xf]
      %v6787 = vld [vmem:[%s6780 + $0x18] sm:$0xf]
      %v6788 = vld [vmem:[%s6780 + $0x1c] sm:$0xf]
      %v6789 = vld [vmem:[%s6780 + $0x20] sm:$0xf]
      %v6790 = vld [vmem:[%s6780 + $0x24] sm:$0xf]
      %v6791 = vld [vmem:[%s6780 + $0x28] sm:$0xf]
      %v6792 = vld [vmem:[%s6780 + $0x2c] sm:$0xf]
      %v6793 = vld [vmem:[%s6780 + $0x30] sm:$0xf]
      %v6794 = vld [vmem:[%s6780 + $0x34] sm:$0xf]
      %v6795 = vld [vmem:[%s6780 + $0x38] sm:$0xf]
      %v6796 = vld [vmem:[%s6780 + $0x3c] sm:$0xf]
      %v6798 = vunpack.c.l.b16 %v6779
      %v6799 = vpack.c.b16 %v6118, %v6798
      %v6800 = vrot.slane %v6799, 3
      %v6801 = vrot.slane %v6155, 3
      %v6802 = vsel %vm2656, %v6800, %v6801
      %v6803 = vrot.slane %v6156, 3
      %v6804 = vsel %vm2656, %v6801, %v6803
      %v6805 = vrot.slane %v6157, 3
      %v6806 = vsel %vm2656, %v6803, %v6805
      %v6807 = vrot.slane %v6158, 3
      %v6808 = vsel %vm2656, %v6805, %v6807
      %v6809 = vrot.slane %v6159, 3
      %v6810 = vsel %vm2656, %v6807, %v6809
      %v6811 = vrot.slane %v6160, 3
      %v6812 = vsel %vm2656, %v6809, %v6811
      %v6813 = vrot.slane %v6161, 3
      %v6814 = vsel %vm2656, %v6811, %v6813
      %v6815 = vrot.slane %v6162, 3
      %v6816 = vsel %vm2656, %v6813, %v6815
      %v6817 = vrot.slane %v6163, 3
      %v6818 = vsel %vm2656, %v6815, %v6817
      %v6819 = vrot.slane %v6164, 3
      %v6820 = vsel %vm2656, %v6817, %v6819
      %v6821 = vrot.slane %v6165, 3
      %v6822 = vsel %vm2656, %v6819, %v6821
      %v6823 = vrot.slane %v6166, 3
      %v6824 = vsel %vm2656, %v6821, %v6823
      %v6825 = vrot.slane %v6167, 3
      %v6826 = vsel %vm2656, %v6823, %v6825
      %v6827 = vrot.slane %v6168, 3
      %v6828 = vsel %vm2656, %v6825, %v6827
      %v6829 = vrot.slane %v6169, 3
      %v6830 = vsel %vm2656, %v6827, %v6829
      %v6831 = vrot.slane %v6170, 3
      %v6832 = vsel %vm2656, %v6829, %v6831
      %v6833 = vrot.slane %v6171, 3
      %v6834 = vsel %vm2656, %v6831, %v6833
      %v6835 = vrot.slane %v6175, 3
      %v6836 = vsel %vm2656, %v6833, %v6835
      %v6871 = vunpack.c.l.b16 %v6781
      %v6872 = vunpack.c.l.b16 %v6782
      %v6873 = vunpack.c.l.b16 %v6783
      %v6874 = vunpack.c.l.b16 %v6784
      %v6875 = vunpack.c.l.b16 %v6785
      %v6876 = vunpack.c.l.b16 %v6786
      %v6877 = vunpack.c.l.b16 %v6787
      %v6878 = vunpack.c.l.b16 %v6788
      %v6879 = vunpack.c.l.b16 %v6789
      %v6880 = vunpack.c.l.b16 %v6790
      %v6881 = vunpack.c.l.b16 %v6791
      %v6882 = vunpack.c.l.b16 %v6792
      %v6883 = vunpack.c.l.b16 %v6793
      %v6884 = vunpack.c.l.b16 %v6794
      %v6885 = vunpack.c.l.b16 %v6795
      %v6886 = vunpack.c.l.b16 %v6796
      %v6887 = vpack.c.b16 %v6872, %v6871
      %v6888 = vpack.c.b16 %v6874, %v6873
      %v6889 = vpack.c.b16 %v6876, %v6875
      %v6890 = vpack.c.b16 %v6878, %v6877
      %v6891 = vpack.c.b16 %v6880, %v6879
      %v6892 = vpack.c.b16 %v6882, %v6881
      %v6893 = vpack.c.b16 %v6884, %v6883
      %v6894 = vpack.c.b16 %v6886, %v6885
      %6903 = vmatprep.subr.bf16.mxu0 0
      %6904 = vmatpush1.bf16.msra.mxu0 %v6887
      %6905 = vmatprep.subr.bf16.mxu0 0
      %6906 = vmatpush1.bf16.msra.mxu0 %v6888
      %6907 = vmatprep.subr.bf16.mxu0 0
      %6908 = vmatpush1.bf16.msra.mxu0 %v6889
      %6909 = vmatprep.subr.bf16.mxu0 0
      %6910 = vmatpush1.bf16.msra.mxu0 %v6890
      %6911 = vmatprep.subr.bf16.mxu0 0
      %6912 = vmatpush1.bf16.msra.mxu0 %v6891
      %6913 = vmatprep.subr.bf16.mxu0 0
      %6914 = vmatpush1.bf16.msra.mxu0 %v6892
      %6915 = vmatprep.subr.bf16.mxu0 0
      %6916 = vmatpush1.bf16.msra.mxu0 %v6893
      %6917 = vmatprep.subr.bf16.mxu0 0
      %6918 = vmatpush1.bf16.msra.mxu0 %v6894
      %6919 = vmatprep.subr.bf16.mxu0 0
      %6920 = vmatpush1.bf16.msra.mxu0 0
      %6921 = vmatprep.subr.bf16.mxu0 0
      %6922 = vmatpush1.bf16.msra.mxu0 0
      %6923 = vmatprep.subr.bf16.mxu0 0
      %6924 = vmatpush1.bf16.msra.mxu0 0
      %6925 = vmatprep.subr.bf16.mxu0 0
      %6926 = vmatpush1.bf16.msra.mxu0 0
      %6927 = vmatprep.subr.bf16.mxu0 0
      %6928 = vmatpush1.bf16.msra.mxu0 0
      %6929 = vmatprep.subr.bf16.mxu0 0
      %6930 = vmatpush1.bf16.msra.mxu0 0
      %6931 = vmatprep.subr.bf16.mxu0 0
      %6932 = vmatpush1.bf16.msra.mxu0 0
      %6933 = vmatprep.subr.bf16.mxu0 0
      %6934 = vmatpush1.bf16.msra.mxu0 0
      %6935 = vmatprep.mubr.bf16.mxu0 0
      %6936 = vmatmul.mubr.bf16.gmra.mrb[0].mxu0 %v6802
      %v6937 = vpop.f32.mrb[0].mxu0
      %v6938 = vadd.f32 0.0, %v6937
      %v6939 = vpop.f32.mrb[0].mxu0
      %v6940 = vpop.f32.mrb[0].mxu0
      %v6941 = vadd.f32 0.0, %v6940
      %v6942 = vpop.f32.mrb[0].mxu0
      %6943 = vmatprep.mubr.bf16.mxu0 0
      %6944 = vmatmul.mubr.bf16.gmra.mrb[0].mxu0 %v6804
      %v6945 = vpop.f32.mrb[0].mxu0
      %v6946 = vadd.f32 0.0, %v6945
      %v6947 = vpop.f32.mrb[0].mxu0
      %v6948 = vpop.f32.mrb[0].mxu0
      %v6949 = vadd.f32 0.0, %v6948
      %v6950 = vpop.f32.mrb[0].mxu0
      %6951 = vmatprep.mubr.bf16.mxu0 0
      %6952 = vmatmul.mubr.bf16.gmra.mrb[0].mxu0 %v6806
      %v6953 = vpop.f32.mrb[0].mxu0
      %v6954 = vadd.f32 0.0, %v6953
      %v6955 = vpop.f32.mrb[0].mxu0
      %v6956 = vpop.f32.mrb[0].mxu0
      %v6957 = vadd.f32 0.0, %v6956
      %v6958 = vpop.f32.mrb[0].mxu0
      %6959 = vmatprep.mubr.bf16.mxu0 0
      %6960 = vmatmul.mubr.bf16.gmra.mrb[0].mxu0 %v6808
      %v6961 = vpop.f32.mrb[0].mxu0
      %v6962 = vadd.f32 0.0, %v6961
      %v6963 = vpop.f32.mrb[0].mxu0
      %v6964 = vpop.f32.mrb[0].mxu0
      %v6965 = vadd.f32 0.0, %v6964
      %v6966 = vpop.f32.mrb[0].mxu0
      %6967 = vmatprep.mubr.bf16.mxu0 0
      %6968 = vmatmul.mubr.bf16.gmra.mrb[0].mxu0 %v6810
      %v6969 = vpop.f32.mrb[0].mxu0
      %v6970 = vadd.f32 0.0, %v6969
      %v6971 = vpop.f32.mrb[0].mxu0
      %v6972 = vpop.f32.mrb[0].mxu0
      %v6973 = vadd.f32 0.0, %v6972
      %v6974 = vpop.f32.mrb[0].mxu0
      %6975 = vmatprep.mubr.bf16.mxu0 0
      %6976 = vmatmul.mubr.bf16.gmra.mrb[0].mxu0 %v6812
      %v6977 = vpop.f32.mrb[0].mxu0
      %v6978 = vadd.f32 0.0, %v6977
      %v6979 = vpop.f32.mrb[0].mxu0
      %v6980 = vpop.f32.mrb[0].mxu0
      %v6981 = vadd.f32 0.0, %v6980
      %v6982 = vpop.f32.mrb[0].mxu0
      %6983 = vmatprep.mubr.bf16.mxu0 0
      %6984 = vmatmul.mubr.bf16.gmra.mrb[0].mxu0 %v6814
      %v6985 = vpop.f32.mrb[0].mxu0
      %v6986 = vadd.f32 0.0, %v6985
      %v6987 = vpop.f32.mrb[0].mxu0
      %v6988 = vpop.f32.mrb[0].mxu0
      %v6989 = vadd.f32 0.0, %v6988
      %v6990 = vpop.f32.mrb[0].mxu0
      %6991 = vmatprep.mubr.bf16.mxu0 0
      %6992 = vmatmul.mubr.bf16.gmra.mrb[0].mxu0 %v6816
      %v6993 = vpop.f32.mrb[0].mxu0
      %v6994 = vadd.f32 0.0, %v6993
      %v6995 = vpop.f32.mrb[0].mxu0
      %v6996 = vpop.f32.mrb[0].mxu0
      %v6997 = vadd.f32 0.0, %v6996
      %v6998 = vpop.f32.mrb[0].mxu0
      %6999 = vmatprep.mubr.bf16.mxu0 0
      %7000 = vmatmul.mubr.bf16.gmra.mrb[0].mxu0 %v6818
      %v7001 = vpop.f32.mrb[0].mxu0
      %v7002 = vadd.f32 0.0, %v7001
      %v7003 = vpop.f32.mrb[0].mxu0
      %v7004 = vpop.f32.mrb[0].mxu0
      %v7005 = vadd.f32 0.0, %v7004
      %v7006 = vpop.f32.mrb[0].mxu0
      %7007 = vmatprep.mubr.bf16.mxu0 0
      %7008 = vmatmul.mubr.bf16.gmra.mrb[0].mxu0 %v6820
      %v7009 = vpop.f32.mrb[0].mxu0
      %v7010 = vadd.f32 0.0, %v7009
      %v7011 = vpop.f32.mrb[0].mxu0
      %v7012 = vpop.f32.mrb[0].mxu0
      %v7013 = vadd.f32 0.0, %v7012
      %v7014 = vpop.f32.mrb[0].mxu0
      %7015 = vmatprep.mubr.bf16.mxu0 0
      %7016 = vmatmul.mubr.bf16.gmra.mrb[0].mxu0 %v6822
      %v7017 = vpop.f32.mrb[0].mxu0
      %v7018 = vadd.f32 0.0, %v7017
      %v7019 = vpop.f32.mrb[0].mxu0
      %v7020 = vpop.f32.mrb[0].mxu0
      %v7021 = vadd.f32 0.0, %v7020
      %v7022 = vpop.f32.mrb[0].mxu0
      %7023 = vmatprep.mubr.bf16.mxu0 0
      %7024 = vmatmul.mubr.bf16.gmra.mrb[0].mxu0 %v6824
      %v7025 = vpop.f32.mrb[0].mxu0
      %v7026 = vadd.f32 0.0, %v7025
      %v7027 = vpop.f32.mrb[0].mxu0
      %v7028 = vpop.f32.mrb[0].mxu0
      %v7029 = vadd.f32 0.0, %v7028
      %v7030 = vpop.f32.mrb[0].mxu0
      %7031 = vmatprep.mubr.bf16.mxu0 0
      %7032 = vmatmul.mubr.bf16.gmra.mrb[0].mxu0 %v6826
      %v7033 = vpop.f32.mrb[0].mxu0
      %v7034 = vadd.f32 0.0, %v7033
      %v7035 = vpop.f32.mrb[0].mxu0
      %v7036 = vpop.f32.mrb[0].mxu0
      %v7037 = vadd.f32 0.0, %v7036
      %v7038 = vpop.f32.mrb[0].mxu0
      %7039 = vmatprep.mubr.bf16.mxu0 0
      %7040 = vmatmul.mubr.bf16.gmra.mrb[0].mxu0 %v6828
      %v7041 = vpop.f32.mrb[0].mxu0
      %v7042 = vadd.f32 0.0, %v7041
      %v7043 = vpop.f32.mrb[0].mxu0
      %v7044 = vpop.f32.mrb[0].mxu0
      %v7045 = vadd.f32 0.0, %v7044
      %v7046 = vpop.f32.mrb[0].mxu0
      %7047 = vmatprep.mubr.bf16.mxu0 0
      %7048 = vmatmul.mubr.bf16.gmra.mrb[0].mxu0 %v6830
      %v7049 = vpop.f32.mrb[0].mxu0
      %v7050 = vadd.f32 0.0, %v7049
      %v7051 = vpop.f32.mrb[0].mxu0
      %v7052 = vpop.f32.mrb[0].mxu0
      %v7053 = vadd.f32 0.0, %v7052
      %v7054 = vpop.f32.mrb[0].mxu0
      %7055 = vmatprep.mubr.bf16.mxu0 0
      %7056 = vmatmul.mubr.bf16.gmra.mrb[0].mxu0 %v6832
      %v7057 = vpop.f32.mrb[0].mxu0
      %v7058 = vadd.f32 0.0, %v7057
      %v7059 = vpop.f32.mrb[0].mxu0
      %v7060 = vpop.f32.mrb[0].mxu0
      %v7061 = vadd.f32 0.0, %v7060
      %v7062 = vpop.f32.mrb[0].mxu0
      %7063 = vmatprep.mubr.bf16.mxu0 0
      %7064 = vmatmul.mubr.bf16.gmra.mrb[0].mxu0 %v6834
      %v7065 = vpop.f32.mrb[0].mxu0
      %v7066 = vadd.f32 0.0, %v7065
      %v7067 = vpop.f32.mrb[0].mxu0
      %v7068 = vpop.f32.mrb[0].mxu0
      %v7069 = vadd.f32 0.0, %v7068
      %v7070 = vpop.f32.mrb[0].mxu0
      %7071 = vmatprep.mubr.bf16.mxu0 0
      %7072 = vmatmul.mubr.bf16.gmra.mrb[0].mxu0 %v6836
      %v7073 = vpop.f32.mrb[0].mxu0
      %v7074 = vadd.f32 0.0, %v7073
      %v7075 = vpop.f32.mrb[0].mxu0
      %v7076 = vpop.f32.mrb[0].mxu0
      %v7077 = vadd.f32 0.0, %v7076
      %v7078 = vpop.f32.mrb[0].mxu0
      %7079 = vdwg.mxu0
      %v7080 = vadd.f32 %v6743, %v6938
      %v7081 = vadd.f32 %v6744, %v6941
      %v7082 = vadd.f32 %v6745, %v6946
      %v7083 = vadd.f32 %v6746, %v6949
      %v7084 = vadd.f32 %v6747, %v6954
      %v7085 = vadd.f32 %v6748, %v6957
      %v7086 = vadd.f32 %v6749, %v6962
      %v7087 = vadd.f32 %v6750, %v6965
      %v7088 = vadd.f32 %v6751, %v6970
      %v7089 = vadd.f32 %v6752, %v6973
      %v7090 = vadd.f32 %v6753, %v6978
      %v7091 = vadd.f32 %v6754, %v6981
      %v7092 = vadd.f32 %v6755, %v6986
      %v7093 = vadd.f32 %v6756, %v6989
      %v7094 = vadd.f32 %v6757, %v6994
      %v7095 = vadd.f32 %v6758, %v6997
      %v7096 = vadd.f32 %v6759, %v7002
      %v7097 = vadd.f32 %v6760, %v7005
      %v7098 = vadd.f32 %v6761, %v7010
      %v7099 = vadd.f32 %v6762, %v7013
      %v7100 = vadd.f32 %v6763, %v7018
      %v7101 = vadd.f32 %v6764, %v7021
      %v7102 = vadd.f32 %v6765, %v7026
      %v7103 = vadd.f32 %v6766, %v7029
      %v7104 = vadd.f32 %v6767, %v7034
      %v7105 = vadd.f32 %v6768, %v7037
      %v7106 = vadd.f32 %v6769, %v7042
      %v7107 = vadd.f32 %v6770, %v7045
      %v7108 = vadd.f32 %v6771, %v7050
      %v7109 = vadd.f32 %v6772, %v7053
      %v7110 = vadd.f32 %v6773, %v7058
      %v7111 = vadd.f32 %v6774, %v7061
      %v7112 = vadd.f32 %v6775, %v7066
      %v7113 = vadd.f32 %v6776, %v7069
      %v7114 = vadd.f32 %v6777, %v7074
      %v7115 = vadd.f32 %v6778, %v7077
      %v7116 = vld [vmem:[%s219 + $0x8] sm:$0xe]
      %v7117 = vld [vmem:[%s219 + $0xc] sm:$0xf]
      %v7118 = vld [vmem:[%s219 + $0x10] sm:$0xf]
      %v7119 = vld [vmem:[%s219 + $0x14] sm:$0xf]
      %v7120 = vld [vmem:[%s219 + $0x18] sm:$0xf]
      %v7121 = vld [vmem:[%s219 + $0x1c] sm:$0xf]
      %v7122 = vld [vmem:[%s219 + $0x20] sm:$0xf]
      %v7123 = vld [vmem:[%s219 + $0x24] sm:$0xf]
      %v7124 = vld [vmem:[%s219 + $0x28] sm:$0xf]
      %v7125 = vld [vmem:[%s219 + $0x2c] sm:$0xf]
      %v7126 = vld [vmem:[%s219 + $0x30] sm:$0xf]
      %v7127 = vld [vmem:[%s219 + $0x34] sm:$0xf]
      %v7128 = vld [vmem:[%s219 + $0x38] sm:$0xf]
      %v7129 = vld [vmem:[%s219 + $0x3c] sm:$0xf]
      %v7130 = vld [vmem:[%s219 + $0x40] sm:$0xf]
      %v7131 = vld [vmem:[%s219 + $0x44] sm:$0xf]
      %v7132 = vld [vmem:[%s219 + $0x48] sm:$0xf]
      %v7133 = vld [vmem:[%s219 + $0x4c] sm:$0xf]
      %v7134 = vld [vmem:[%s219 + $0x50] sm:$0xf]
      %v7135 = vld [vmem:[%s219 + $0x54] sm:$0xf]
      %v7136 = vld [vmem:[%s219 + $0x58] sm:$0xf]
      %v7137 = vld [vmem:[%s219 + $0x5c] sm:$0xf]
      %v7138 = vld [vmem:[%s219 + $0x60] sm:$0xf]
      %v7139 = vld [vmem:[%s219 + $0x64] sm:$0xf]
      %v7140 = vld [vmem:[%s219 + $0x68] sm:$0xf]
      %v7141 = vld [vmem:[%s219 + $0x6c] sm:$0xf]
      %v7142 = vld [vmem:[%s219 + $0x70] sm:$0xf]
      %v7143 = vld [vmem:[%s219 + $0x74] sm:$0xf]
      %v7144 = vld [vmem:[%s219 + $0x78] sm:$0xf]
      %v7145 = vld [vmem:[%s219 + $0x7c] sm:$0xf]
      %v7146 = vld [vmem:[%s219 + $0x80] sm:$0xf]
      %v7147 = vld [vmem:[%s219 + $0x84] sm:$0xf]
      %v7148 = vld [vmem:[%s219 + $0x88] sm:$0xf]
      %v7149 = vld [vmem:[%s219 + $0x8c] sm:$0xf]
      %v7150 = vld [vmem:[%s219 + $0x90] sm:$0xf]
      %v7151 = vld [vmem:[%s219 + $0x94] sm:$0xf]
      %v7152 = vld [vmem:[%s219 + $0x98] sm:$0x3]
      %v7153 = vunpack.c.l.bf16 %v7116
      %v7154 = vunpack.c.l.bf16 %v7117
      %v7155 = vunpack.c.l.bf16 %v7118
      %v7156 = vunpack.c.l.bf16 %v7119
      %v7157 = vunpack.c.l.bf16 %v7120
      %v7158 = vunpack.c.l.bf16 %v7121
      %v7159 = vunpack.c.l.bf16 %v7122
      %v7160 = vunpack.c.l.bf16 %v7123
      %v7161 = vunpack.c.l.bf16 %v7124
      %v7162 = vunpack.c.l.bf16 %v7125
      %v7163 = vunpack.c.l.bf16 %v7126
      %v7164 = vunpack.c.l.bf16 %v7127
      %v7165 = vunpack.c.l.bf16 %v7128
      %v7166 = vunpack.c.l.bf16 %v7129
      %v7167 = vunpack.c.l.bf16 %v7130
      %v7168 = vunpack.c.l.bf16 %v7131
      %v7169 = vunpack.c.l.bf16 %v7132
      %v7170 = vunpack.c.l.bf16 %v7133
      %v7171 = vunpack.c.l.bf16 %v7134
      %v7172 = vunpack.c.l.bf16 %v7135
      %v7173 = vunpack.c.l.bf16 %v7136
      %v7174 = vunpack.c.l.bf16 %v7137
      %v7175 = vunpack.c.l.bf16 %v7138
      %v7176 = vunpack.c.l.bf16 %v7139
      %v7177 = vunpack.c.l.bf16 %v7140
      %v7178 = vunpack.c.l.bf16 %v7141
      %v7179 = vunpack.c.l.bf16 %v7142
      %v7180 = vunpack.c.l.bf16 %v7143
      %v7181 = vunpack.c.l.bf16 %v7144
      %v7182 = vunpack.c.l.bf16 %v7145
      %v7183 = vunpack.c.l.bf16 %v7146
      %v7184 = vunpack.c.l.bf16 %v7147
      %v7185 = vunpack.c.l.bf16 %v7148
      %v7186 = vunpack.c.l.bf16 %v7149
      %v7187 = vunpack.c.l.bf16 %v7150
      %v7188 = vunpack.c.l.bf16 %v7151
      %v7189 = vunpack.c.l.bf16 %v7152
      %v7190 = vld [vmem:[%s4] sm:$0x1]
      %v7192 = vlaneseq
      %v7193 = vshrl.u32 %v7192, 7
      %v7194 = vsub.s32 0, %v7193
      %v7195 = vrot.slane %v7190, %v7194
      %v7197 = vadd.f32 %v7080, %v7195
      %v7198 = vadd.f32 %v7081, %v7195
      %v7199 = vadd.f32 %v7082, %v7195
      %v7200 = vadd.f32 %v7083, %v7195
      %v7201 = vadd.f32 %v7084, %v7195
      %v7202 = vadd.f32 %v7085, %v7195
      %v7203 = vadd.f32 %v7086, %v7195
      %v7204 = vadd.f32 %v7087, %v7195
      %v7205 = vadd.f32 %v7088, %v7195
      %v7206 = vadd.f32 %v7089, %v7195
      %v7207 = vadd.f32 %v7090, %v7195
      %v7208 = vadd.f32 %v7091, %v7195
      %v7209 = vadd.f32 %v7092, %v7195
      %v7210 = vadd.f32 %v7093, %v7195
      %v7211 = vadd.f32 %v7094, %v7195
      %v7212 = vadd.f32 %v7095, %v7195
      %v7213 = vadd.f32 %v7096, %v7195
      %v7214 = vadd.f32 %v7097, %v7195
      %v7215 = vadd.f32 %v7098, %v7195
      %v7216 = vadd.f32 %v7099, %v7195
      %v7217 = vadd.f32 %v7100, %v7195
      %v7218 = vadd.f32 %v7101, %v7195
      %v7219 = vadd.f32 %v7102, %v7195
      %v7220 = vadd.f32 %v7103, %v7195
      %v7221 = vadd.f32 %v7104, %v7195
      %v7222 = vadd.f32 %v7105, %v7195
      %v7223 = vadd.f32 %v7106, %v7195
      %v7224 = vadd.f32 %v7107, %v7195
      %v7225 = vadd.f32 %v7108, %v7195
      %v7226 = vadd.f32 %v7109, %v7195
      %v7227 = vadd.f32 %v7110, %v7195
      %v7228 = vadd.f32 %v7111, %v7195
      %v7229 = vadd.f32 %v7112, %v7195
      %v7230 = vadd.f32 %v7113, %v7195
      %v7231 = vadd.f32 %v7114, %v7195
      %v7232 = vadd.f32 %v7115, %v7195
      %vm7270 = vcmask 1044480
      %v7271 = vrot.slane %v7153, 3
      %v7272 = vrot.slane %v7154, 3
      %v7273 = vsel %vm7270, %v7271, %v7272
      %v7274 = vrot.slane %v7155, 3
      %v7275 = vsel %vm7270, %v7272, %v7274
      %v7276 = vrot.slane %v7156, 3
      %v7277 = vsel %vm7270, %v7274, %v7276
      %v7278 = vrot.slane %v7157, 3
      %v7279 = vsel %vm7270, %v7276, %v7278
      %v7280 = vrot.slane %v7158, 3
      %v7281 = vsel %vm7270, %v7278, %v7280
      %v7282 = vrot.slane %v7159, 3
      %v7283 = vsel %vm7270, %v7280, %v7282
      %v7284 = vrot.slane %v7160, 3
      %v7285 = vsel %vm7270, %v7282, %v7284
      %v7286 = vrot.slane %v7161, 3
      %v7287 = vsel %vm7270, %v7284, %v7286
      %v7288 = vrot.slane %v7162, 3
      %v7289 = vsel %vm7270, %v7286, %v7288
      %v7290 = vrot.slane %v7163, 3
      %v7291 = vsel %vm7270, %v7288, %v7290
      %v7292 = vrot.slane %v7164, 3
      %v7293 = vsel %vm7270, %v7290, %v7292
      %v7294 = vrot.slane %v7165, 3
      %v7295 = vsel %vm7270, %v7292, %v7294
      %v7296 = vrot.slane %v7166, 3
      %v7297 = vsel %vm7270, %v7294, %v7296
      %v7298 = vrot.slane %v7167, 3
      %v7299 = vsel %vm7270, %v7296, %v7298
      %v7300 = vrot.slane %v7168, 3
      %v7301 = vsel %vm7270, %v7298, %v7300
      %v7302 = vrot.slane %v7169, 3
      %v7303 = vsel %vm7270, %v7300, %v7302
      %v7304 = vrot.slane %v7170, 3
      %v7305 = vsel %vm7270, %v7302, %v7304
      %v7306 = vrot.slane %v7171, 3
      %v7307 = vsel %vm7270, %v7304, %v7306
      %v7308 = vrot.slane %v7172, 3
      %v7309 = vsel %vm7270, %v7306, %v7308
      %v7310 = vrot.slane %v7173, 3
      %v7311 = vsel %vm7270, %v7308, %v7310
      %v7312 = vrot.slane %v7174, 3
      %v7313 = vsel %vm7270, %v7310, %v7312
      %v7314 = vrot.slane %v7175, 3
      %v7315 = vsel %vm7270, %v7312, %v7314
      %v7316 = vrot.slane %v7176, 3
      %v7317 = vsel %vm7270, %v7314, %v7316
      %v7318 = vrot.slane %v7177, 3
      %v7319 = vsel %vm7270, %v7316, %v7318
      %v7320 = vrot.slane %v7178, 3
      %v7321 = vsel %vm7270, %v7318, %v7320
      %v7322 = vrot.slane %v7179, 3
      %v7323 = vsel %vm7270, %v7320, %v7322
      %v7324 = vrot.slane %v7180, 3
      %v7325 = vsel %vm7270, %v7322, %v7324
      %v7326 = vrot.slane %v7181, 3
      %v7327 = vsel %vm7270, %v7324, %v7326
      %v7328 = vrot.slane %v7182, 3
      %v7329 = vsel %vm7270, %v7326, %v7328
      %v7330 = vrot.slane %v7183, 3
      %v7331 = vsel %vm7270, %v7328, %v7330
      %v7332 = vrot.slane %v7184, 3
      %v7333 = vsel %vm7270, %v7330, %v7332
      %v7334 = vrot.slane %v7185, 3
      %v7335 = vsel %vm7270, %v7332, %v7334
      %v7336 = vrot.slane %v7186, 3
      %v7337 = vsel %vm7270, %v7334, %v7336
      %v7338 = vrot.slane %v7187, 3
      %v7339 = vsel %vm7270, %v7336, %v7338
      %v7340 = vrot.slane %v7188, 3
      %v7341 = vsel %vm7270, %v7338, %v7340
      %v7342 = vrot.slane %v7189, 3
      %v7343 = vsel %vm7270, %v7340, %v7342
      %v7380 = vadd.f32 %v7197, %v7273
      %v7381 = vadd.f32 %v7198, %v7275
      %v7382 = vadd.f32 %v7199, %v7277
      %v7383 = vadd.f32 %v7200, %v7279
      %v7384 = vadd.f32 %v7201, %v7281
      %v7385 = vadd.f32 %v7202, %v7283
      %v7386 = vadd.f32 %v7203, %v7285
      %v7387 = vadd.f32 %v7204, %v7287
      %v7388 = vadd.f32 %v7205, %v7289
      %v7389 = vadd.f32 %v7206, %v7291
      %v7390 = vadd.f32 %v7207, %v7293
      %v7391 = vadd.f32 %v7208, %v7295
      %v7392 = vadd.f32 %v7209, %v7297
      %v7393 = vadd.f32 %v7210, %v7299
      %v7394 = vadd.f32 %v7211, %v7301
      %v7395 = vadd.f32 %v7212, %v7303
      %v7396 = vadd.f32 %v7213, %v7305
      %v7397 = vadd.f32 %v7214, %v7307
      %v7398 = vadd.f32 %v7215, %v7309
      %v7399 = vadd.f32 %v7216, %v7311
      %v7400 = vadd.f32 %v7217, %v7313
      %v7401 = vadd.f32 %v7218, %v7315
      %v7402 = vadd.f32 %v7219, %v7317
      %v7403 = vadd.f32 %v7220, %v7319
      %v7404 = vadd.f32 %v7221, %v7321
      %v7405 = vadd.f32 %v7222, %v7323
      %v7406 = vadd.f32 %v7223, %v7325
      %v7407 = vadd.f32 %v7224, %v7327
      %v7408 = vadd.f32 %v7225, %v7329
      %v7409 = vadd.f32 %v7226, %v7331
      %v7410 = vadd.f32 %v7227, %v7333
      %v7411 = vadd.f32 %v7228, %v7335
      %v7412 = vadd.f32 %v7229, %v7337
      %v7413 = vadd.f32 %v7230, %v7339
      %v7414 = vadd.f32 %v7231, %v7341
      %v7415 = vadd.f32 %v7232, %v7343
      %v7416 = vmax.f32 %v7380, 0.0
      %v7417 = vmax.f32 %v7381, 0.0
      %v7418 = vmax.f32 %v7382, 0.0
      %v7419 = vmax.f32 %v7383, 0.0
      %v7420 = vmax.f32 %v7384, 0.0
      %v7421 = vmax.f32 %v7385, 0.0
      %v7422 = vmax.f32 %v7386, 0.0
      %v7423 = vmax.f32 %v7387, 0.0
      %v7424 = vmax.f32 %v7388, 0.0
      %v7425 = vmax.f32 %v7389, 0.0
      %v7426 = vmax.f32 %v7390, 0.0
      %v7427 = vmax.f32 %v7391, 0.0
      %v7428 = vmax.f32 %v7392, 0.0
      %v7429 = vmax.f32 %v7393, 0.0
      %v7430 = vmax.f32 %v7394, 0.0
      %v7431 = vmax.f32 %v7395, 0.0
      %v7432 = vmax.f32 %v7396, 0.0
      %v7433 = vmax.f32 %v7397, 0.0
      %v7434 = vmax.f32 %v7398, 0.0
      %v7435 = vmax.f32 %v7399, 0.0
      %v7436 = vmax.f32 %v7400, 0.0
      %v7437 = vmax.f32 %v7401, 0.0
      %v7438 = vmax.f32 %v7402, 0.0
      %v7439 = vmax.f32 %v7403, 0.0
      %v7440 = vmax.f32 %v7404, 0.0
      %v7441 = vmax.f32 %v7405, 0.0
      %v7442 = vmax.f32 %v7406, 0.0
      %v7443 = vmax.f32 %v7407, 0.0
      %v7444 = vmax.f32 %v7408, 0.0
      %v7445 = vmax.f32 %v7409, 0.0
      %v7446 = vmax.f32 %v7410, 0.0
      %v7447 = vmax.f32 %v7411, 0.0
      %v7448 = vmax.f32 %v7412, 0.0
      %v7449 = vmax.f32 %v7413, 0.0
      %v7450 = vmax.f32 %v7414, 0.0
      %v7451 = vmax.f32 %v7415, 0.0
      %7452 = vst [vmem:[%s224] sm:$0xff] %v7416
      %7453 = vst [vmem:[%s224 + $0x8] sm:$0xff] %v7417
      %7454 = vst [vmem:[%s224 + $0x10] sm:$0xff] %v7418
      %7455 = vst [vmem:[%s224 + $0x18] sm:$0xff] %v7419
      %7456 = vst [vmem:[%s224 + $0x20] sm:$0xff] %v7420
      %7457 = vst [vmem:[%s224 + $0x28] sm:$0xff] %v7421
      %7458 = vst [vmem:[%s224 + $0x30] sm:$0xff] %v7422
      %7459 = vst [vmem:[%s224 + $0x38] sm:$0xff] %v7423
      %7460 = vst [vmem:[%s224 + $0x40] sm:$0xff] %v7424
      %7461 = vst [vmem:[%s224 + $0x48] sm:$0xff] %v7425
      %7462 = vst [vmem:[%s224 + $0x50] sm:$0xff] %v7426
      %7463 = vst [vmem:[%s224 + $0x58] sm:$0xff] %v7427
      %7464 = vst [vmem:[%s224 + $0x60] sm:$0xff] %v7428
      %7465 = vst [vmem:[%s224 + $0x68] sm:$0xff] %v7429
      %7466 = vst [vmem:[%s224 + $0x70] sm:$0xff] %v7430
      %7467 = vst [vmem:[%s224 + $0x78] sm:$0xff] %v7431
      %7468 = vst [vmem:[%s224 + $0x80] sm:$0xff] %v7432
      %7469 = vst [vmem:[%s224 + $0x88] sm:$0xff] %v7433
      %7470 = vst [vmem:[%s224 + $0x90] sm:$0xff] %v7434
      %7471 = vst [vmem:[%s224 + $0x98] sm:$0xff] %v7435
      %7472 = vst [vmem:[%s224 + $0xa0] sm:$0xff] %v7436
      %7473 = vst [vmem:[%s224 + $0xa8] sm:$0xff] %v7437
      %7474 = vst [vmem:[%s224 + $0xb0] sm:$0xff] %v7438
      %7475 = vst [vmem:[%s224 + $0xb8] sm:$0xff] %v7439
      %7476 = vst [vmem:[%s224 + $0xc0] sm:$0xff] %v7440
      %7477 = vst [vmem:[%s224 + $0xc8] sm:$0xff] %v7441
      %7478 = vst [vmem:[%s224 + $0xd0] sm:$0xff] %v7442
      %7479 = vst [vmem:[%s224 + $0xd8] sm:$0xff] %v7443
      %7480 = vst [vmem:[%s224 + $0xe0] sm:$0xff] %v7444
      %7481 = vst [vmem:[%s224 + $0xe8] sm:$0xff] %v7445
      %7482 = vst [vmem:[%s224 + $0xf0] sm:$0xff] %v7446
      %7483 = vst [vmem:[%s224 + $0xf8] sm:$0xff] %v7447
      %7484 = vst [vmem:[%s224 + $0x100] sm:$0xff] %v7448
      %7485 = vst [vmem:[%s224 + $0x108] sm:$0xff] %v7449
      %7486 = vst [vmem:[%s224 + $0x110] sm:$0xff] %v7450
      %7487 = vst [vmem:[%s224 + $0x118] sm:$0xff] %v7451
      %p7488 = scmp.lt.s32.totalorder %s16, 1
      %s7489 = scalar_select %p7488, %s16, 1
      %s7490 = smul.addr %s7489, 36
      %s7491 = smul.addr %s7490, 8
      %s7492 = scalar_lea.vmem %s5, %s7491
      // Predicated region
      $region41: #{basic_block_forward.1} parent=39 // pred_check
        %p7493 = pneg %p144
      $region42: #{basic_block_forward.1} parent=39 // pred_check_branch
        %7495 = sbr.rel (%p7493) target = $region44
      $region43: #{basic_block_forward.1} parent=39 // pred_region
        _
      $region44: #{basic_block_forward.1} parent=39 // pred_fallthru
        _
    $region40: #{basic_block_forward.1} parent=5 // pred_fallthru
      _
    %p7496 = scmp.le.s32.totalorder 2, %s11
    // Predicated region
    $region45: #{basic_block_forward.1} parent=5 // pred_check
      %p7497 = pneg %p7496
    $region46: #{basic_block_forward.1} parent=5 // pred_check_branch
      %7499 = sbr.rel (%p7497) target = $region48
    $region47: #{basic_block_forward.1} parent=5 // pred_region
      %s7500 = ssub.s32 %s11, 2
      // Predicated region
      $region49: #{basic_block_forward.1} parent=47 // pred_check
        %p7501 = pneg %p150
      $region50: #{basic_block_forward.1} parent=47 // pred_check_branch
        %7503 = sbr.rel (%p7501) target = $region52
      $region51: #{basic_block_forward.1} parent=47 // pred_region
        %p7504 = scmp.lt.s32.totalorder %s17, 1
        %s7505 = scalar_select %p7504, %s17, 1
        %s7506 = smul.addr %s7505, 36
        %s7507 = smul.addr %s7506, 8
        %s7508 = scalar_lea.vmem %s5, %s7507
      $region52: #{basic_block_forward.1} parent=47 // pred_fallthru
        _
    $region48: #{basic_block_forward.1} parent=5 // pred_fallthru
      _
  $region6: #{basic_block_forward.1} parent=0 // loop_footer
    %s15 = sadd.s32 1, %s11
  $region7: #{basic_block_forward.1} parent=0 // loop_footer_branch
    %10 = sbr.rel target = $region3
  $region8: #{basic_block_forward.1} parent=0 // loop_exit
    _

</llo_original>
